<compile_context>
chip_gen: v7x
topology: tpu7x:2x2x1
jax: 0.10.0
libtpu: 0.0.40
codegen_flags: <defaults>
</compile_context>

<pallas_src>
import functools
import math

import jax
import jax.numpy as jnp
from jax.experimental import pallas as pl
from jax.experimental.pallas import tpu as pltpu


# ----------------------------------------------------------------------------
# Fused whole-model kernel
# ----------------------------------------------------------------------------
def _fused_forward_kernel(x_ref, slab_ref, dec_ref, enc_ref, *,
                          layout, B, L, D, n_heads, n_layers, eps):
    f32 = jnp.float32
    hd = D // n_heads
    M = B * L

    def P(name):
        off, r, c = layout[name]           # static Python ints
        return slab_ref[off:off + r, :c]   # static slice of the weight slab

    def matmul(a, w, b):
        return jnp.dot(a, w, preferred_element_type=f32) + b

    def layer_norm(v, g, b):
        mu = jnp.mean(v, axis=-1, keepdims=True)
        var = jnp.mean(jnp.square(v - mu), axis=-1, keepdims=True)
        return (v - mu) * jax.lax.rsqrt(var + eps) * g + b

    # nn.Transformer* layers use batch_first=False: axis 0 of the (B, L, D)
    # activations is the *sequence* axis and the L tokens are the attention
    # batch, so attention only mixes rows sharing the same token index l.
    # Precomputed additive bias (0 where same l, -1e30 otherwise):
    attn_bias = P("attn_bias")                                        # (M, M)

    def attention(q, k, v, out_w, out_b):
        # q columns already carry the 1/sqrt(hd) scale (folded on the host).
        acc = out_b                                                   # (1, D)
        for h in range(n_heads):
            sl = slice(h * hd, (h + 1) * hd)
            s = jax.lax.dot_general(q[:, sl], k[:, sl],
                                    (((1,), (1,)), ((), ())),
                                    preferred_element_type=f32)       # (M, M)
            s = s + attn_bias
            m = jnp.max(s, axis=-1, keepdims=True)
            e = jnp.exp(s - m)
            prob = e * pl.reciprocal(jnp.sum(e, axis=-1, keepdims=True),
                                     approx=True)
            o_h = jnp.dot(prob, v[:, sl], preferred_element_type=f32)  # (M,hd)
            # Fold the output projection per head (no head concatenate):
            acc = acc + jnp.dot(o_h, out_w[sl, :],
                                preferred_element_type=f32)
        return acc                                                    # (M, D)

    def mha_self(xin, prefix):
        qkv = matmul(xin, P(prefix + "qkv_w"), P(prefix + "qkv_b"))   # (M, 3D)
        return attention(qkv[:, :D], qkv[:, D:2 * D], qkv[:, 2 * D:],
                         P(prefix + "out_w"), P(prefix + "out_b"))

    def mha_cross(xq, xkv, prefix):
        q = matmul(xq, P(prefix + "q_w"), P(prefix + "q_b"))          # (M, D)
        kv = matmul(xkv, P(prefix + "kv_w"), P(prefix + "kv_b"))      # (M, 2D)
        return attention(q, kv[:, :D], kv[:, D:],
                         P(prefix + "out_w"), P(prefix + "out_b"))

    # ---- patch embedding + (pre-tiled) positional embedding ----
    h = matmul(x_ref[...], P("enc_emb_w"), P("enc_emb_b")) + P("pos")  # (M, D)

    # ---- encoder stack (post-norm, PyTorch norm_first=False) ----
    for l in range(n_layers):
        pre = f"enc{l}_"
        a = mha_self(h, pre + "sa_")
        h = layer_norm(h + a, P(pre + "ln1_g"), P(pre + "ln1_b"))
        ff = jnp.maximum(matmul(h, P(pre + "ff1_w"), P(pre + "ff1_b")), 0.0)
        ff = matmul(ff, P(pre + "ff2_w"), P(pre + "ff2_b"))
        h = layer_norm(h + ff, P(pre + "ln2_g"), P(pre + "ln2_b"))

    mem = h
    enc_ref[...] = mem.astype(enc_ref.dtype)

    # ---- decoder stack (tgt = memory = encoder output) ----
    g = mem
    for l in range(n_layers):
        pre = f"dec{l}_"
        a = mha_self(g, pre + "sa_")
        g = layer_norm(g + a, P(pre + "ln1_g"), P(pre + "ln1_b"))
        a2 = mha_cross(g, mem, pre + "ca_")
        g = layer_norm(g + a2, P(pre + "ln2_g"), P(pre + "ln2_b"))
        ff = jnp.maximum(matmul(g, P(pre + "ff1_w"), P(pre + "ff1_b")), 0.0)
        ff = matmul(ff, P(pre + "ff2_w"), P(pre + "ff2_b"))
        g = layer_norm(g + ff, P(pre + "ln3_g"), P(pre + "ln3_b"))

    # ---- patch de-embedding ----
    dec_ref[...] = matmul(g, P("dec_emb_w"),
                          P("dec_emb_b")).astype(dec_ref.dtype)


# ----------------------------------------------------------------------------
# Forward wrapper: one pallas_call, no grid, two inputs (x + weight slab).
# ----------------------------------------------------------------------------
def vit_tiny_autoencoder_forward(x, slab, *, layout, cfg):
    B, F, C, H, W = x.shape
    num_patches = cfg["num_patches"]
    D = cfg["hidden_dim"]
    L = F * num_patches
    PD = (C * H * W) // num_patches
    M = B * L
    assert layout["attn_bias"][1] == M, "slab was packed for a different B*L"

    kernel = functools.partial(
        _fused_forward_kernel, layout=layout,
        B=B, L=L, D=D, n_heads=cfg["n_heads"],
        n_layers=cfg["transformer_layer"], eps=1e-5)

    # Single invocation, no grid: the whole working set (<1 MiB) lives in VMEM
    # and the workload is launch-latency bound.  A parallel grid (v7x second
    # TensorCore) or bf16 casts would only add overhead at M=16.
    vmem = pl.BlockSpec(memory_space=pltpu.MemorySpace.VMEM)
    dec_flat, enc_flat = pl.pallas_call(
        kernel,
        out_shape=(jax.ShapeDtypeStruct((M, PD), jnp.float32),
                   jax.ShapeDtypeStruct((M, D), jnp.float32)),
        in_specs=[vmem, vmem],
        out_specs=(vmem, vmem),
    )(x.reshape(M, PD), slab)

    x_decoder = dec_flat.reshape(B, F, C, H, W)
    x_encoder = enc_flat.reshape(B, L * D)
    return x_decoder, x_encoder


# ----------------------------------------------------------------------------
# Parameters: init in PyTorch layout, then one-time repack into a single slab.
# ----------------------------------------------------------------------------
def init_params(key, cfg):
    """Synthetic parameters in PyTorch nn.Module layout:
    Linear.weight is (out, in); MultiheadAttention.in_proj_weight is (3D, D),
    out_proj.weight is (D, D) in (out, in)."""
    D = cfg["hidden_dim"]
    PD = cfg["patch_dim"]
    FF = 2 * D
    Lmax = cfg["sequence_length"] * cfg["num_patches"] + 1
    keys = iter(jax.random.split(key, 256))

    def w(shape, scale=0.02):
        return (scale * jax.random.normal(next(keys), shape)).astype(jnp.float32)

    ones = lambda n: jnp.ones((n,), jnp.float32)
    zeros = lambda n: jnp.zeros((n,), jnp.float32)

    def attn():
        return dict(in_proj_weight=w((3 * D, D)), in_proj_bias=w((3 * D,)),
                    out_proj_weight=w((D, D)), out_proj_bias=w((D,)))

    def enc_layer():
        return dict(self_attn=attn(),
                    linear1_weight=w((FF, D)), linear1_bias=w((FF,)),
                    linear2_weight=w((D, FF)), linear2_bias=w((D,)),
                    norm1_weight=ones(D), norm1_bias=zeros(D),
                    norm2_weight=ones(D), norm2_bias=zeros(D))

    def dec_layer():
        d = enc_layer()
        d["multihead_attn"] = attn()
        d["norm3_weight"] = ones(D)
        d["norm3_bias"] = zeros(D)
        return d

    return dict(
        encoder_patch_embedding_weight=w((D, PD)),
        encoder_patch_embedding_bias=w((D,)),
        positional_embedding=w((1, Lmax, D), scale=1.0),
        encoder_layers=[enc_layer() for _ in range(cfg["transformer_layer"])],
        decoder_layers=[dec_layer() for _ in range(cfg["transformer_layer"])],
        decoder_patch_embedding_weight=w((PD, D)),
        decoder_patch_embedding_bias=w((PD,)),
    )


def prepare_params(raw, cfg, batch_size):
    """One-time host-side repack:
      * all weights as (in, out), QKV packed into one (D, 3D) matrix,
        biases as (1, N) rows,
      * 1/sqrt(head_dim) folded into the q columns,
      * positional embedding pre-tiled to (B*L, D),
      * the batch_first=False attention mask precomputed as an additive bias,
      * everything concatenated into ONE lane-dense (rows, 128) f32 slab with
        a static {name: (row_offset, rows, cols)} table.
    Done once outside the jitted forward, so the kernel slices the slab with
    static offsets and the call does a single weight DMA."""
    D = cfg["hidden_dim"]
    L = cfg["sequence_length"] * cfg["num_patches"]
    B = batch_size
    M = B * L
    scale = 1.0 / math.sqrt(D // cfg["n_heads"])
    row = lambda b: b[None, :]

    params = {}

    def add_self_attn(prefix, a):
        w = a["in_proj_weight"].T            # (D, 3D), cols [q|k|v]
        b = row(a["in_proj_bias"])           # (1, 3D)
        params[prefix + "qkv_w"] = w.at[:, :D].multiply(scale)
        params[prefix + "qkv_b"] = b.at[:, :D].multiply(scale)
        params[prefix + "out_w"] = a["out_proj_weight"].T
        params[prefix + "out_b"] = row(a["out_proj_bias"])

    def add_cross_attn(prefix, a):
        w = a["in_proj_weight"].T
        b = row(a["in_proj_bias"])
        params[prefix + "q_w"] = w[:, :D] * scale
        params[prefix + "q_b"] = b[:, :D] * scale
        params[prefix + "kv_w"] = w[:, D:]     # (D, 2D), cols [k|v]
        params[prefix + "kv_b"] = b[:, D:]
        params[prefix + "out_w"] = a["out_proj_weight"].T
        params[prefix + "out_b"] = row(a["out_proj_bias"])

    params["enc_emb_w"] = raw["encoder_patch_embedding_weight"].T     # (PD, D)
    params["enc_emb_b"] = row(raw["encoder_patch_embedding_bias"])
    params["pos"] = jnp.tile(raw["positional_embedding"][0, :L, :], (B, 1))

    # Additive "same-token" mask: rows flattened as (b, l); attention only
    # mixes rows with equal l (batch_first=False semantics).
    row_l = jnp.arange(M, dtype=jnp.int32) % L
    params["attn_bias"] = jnp.where(row_l[:, None] == row_l[None, :],
                                    0.0, -1e30).astype(jnp.float32)

    for i, lp in enumerate(raw["encoder_layers"]):
        pre = f"enc{i}_"
        add_self_attn(pre + "sa_", lp["self_attn"])
        params[pre + "ln1_g"] = row(lp["norm1_weight"])
        params[pre + "ln1_b"] = row(lp["norm1_bias"])
        params[pre + "ff1_w"] = lp["linear1_weight"].T
        params[pre + "ff1_b"] = row(lp["linear1_bias"])
        params[pre + "ff2_w"] = lp["linear2_weight"].T
        params[pre + "ff2_b"] = row(lp["linear2_bias"])
        params[pre + "ln2_g"] = row(lp["norm2_weight"])
        params[pre + "ln2_b"] = row(lp["norm2_bias"])

    for i, lp in enumerate(raw["decoder_layers"]):
        pre = f"dec{i}_"
        add_self_attn(pre + "sa_", lp["self_attn"])
        add_cross_attn(pre + "ca_", lp["multihead_attn"])
        params[pre + "ln1_g"] = row(lp["norm1_weight"])
        params[pre + "ln1_b"] = row(lp["norm1_bias"])
        params[pre + "ln2_g"] = row(lp["norm2_weight"])
        params[pre + "ln2_b"] = row(lp["norm2_bias"])
        params[pre + "ff1_w"] = lp["linear1_weight"].T
        params[pre + "ff1_b"] = row(lp["linear1_bias"])
        params[pre + "ff2_w"] = lp["linear2_weight"].T
        params[pre + "ff2_b"] = row(lp["linear2_bias"])
        params[pre + "ln3_g"] = row(lp["norm3_weight"])
        params[pre + "ln3_b"] = row(lp["norm3_bias"])

    params["dec_emb_w"] = raw["decoder_patch_embedding_weight"].T     # (D, PD)
    params["dec_emb_b"] = row(raw["decoder_patch_embedding_bias"])

    # ---- pack into one lane-dense (rows, 128) slab + static offset table ----
    LANES = 128
    layout = {}
    pieces = []
    off = 0
    for name, arr in params.items():
        arr = jnp.asarray(arr, jnp.float32)
        r, c = arr.shape
        assert c <= LANES
        r_pad = -(-r // 8) * 8                      # keep offsets 8-aligned
        piece = jnp.zeros((r_pad, LANES), jnp.float32).at[:r, :c].set(arr)
        pieces.append(piece)
        layout[name] = (off, r, c)
        off += r_pad
    slab = jnp.concatenate(pieces, axis=0)          # ~600 KiB, one DMA
    return slab, layout


# ----------------------------------------------------------------------------
if __name__ == "__main__":
    # args: image_size=8, patch_size=4, in_channel=3, hidden_dim=32,
    #       sequence_length=2 (frames), n_heads=4, transformer_layer=2
    cfg = dict(
        image_size=8, patch_size=4, in_channel=3,
        hidden_dim=32, sequence_length=2, n_heads=4, transformer_layer=2,
    )
    cfg["num_patches"] = (cfg["image_size"] // cfg["patch_size"]) ** 2      # 4
    cfg["patch_dim"] = cfg["in_channel"] * cfg["patch_size"] ** 2           # 48

    key = jax.random.PRNGKey(0)
    k_params, k_x = jax.random.split(key)
    raw_params = init_params(k_params, cfg)

    B = 2
    slab, layout = prepare_params(raw_params, cfg, batch_size=B)

    x = jax.random.normal(
        k_x,
        (B, cfg["sequence_length"], cfg["in_channel"],
         cfg["image_size"], cfg["image_size"]),
        dtype=jnp.float32,
    )

    fwd = jax.jit(functools.partial(vit_tiny_autoencoder_forward,
                                    layout=layout, cfg=cfg))
    x_decoder, x_encoder = fwd(x, slab)
    jax.block_until_ready((x_decoder, x_encoder))

    assert x_decoder.shape == x.shape
    assert x_encoder.shape == (
        B, cfg["sequence_length"] * cfg["num_patches"] * cfg["hidden_dim"])
    assert bool(jnp.all(jnp.isfinite(x_decoder)))
    assert bool(jnp.all(jnp.isfinite(x_encoder)))
    print("KERNEL_OK")
</pallas_src>

<mosaic_0001>
module attributes {stable_mosaic.version = 11 : i64} {
  func.func @_fused_forward_kernel(%arg0: memref<16x48xf32, #tpu.memory_space<vmem>>, %arg1: memref<1296x128xf32, #tpu.memory_space<vmem>>, %arg2: memref<16x48xf32, #tpu.memory_space<vmem>>, %arg3: memref<16x32xf32, #tpu.memory_space<vmem>>) attributes {dimension_semantics = [], scalar_prefetch = 0 : i64, scratch_operands = 0 : i64, tpu.core_type = #tpu.core_type<tc>} {
    %c72 = arith.constant 72 : index
    %c0 = arith.constant 0 : index
    %0 = vector.load %arg1[%c72, %c0] : memref<1296x128xf32, #tpu.memory_space<vmem>>, vector<16x16xf32>
    %c0_0 = arith.constant 0 : index
    %c0_1 = arith.constant 0 : index
    %1 = vector.load %arg0[%c0_0, %c0_1] : memref<16x48xf32, #tpu.memory_space<vmem>>, vector<16x48xf32>
    %c0_2 = arith.constant 0 : index
    %c0_3 = arith.constant 0 : index
    %2 = vector.load %arg1[%c0_2, %c0_3] : memref<1296x128xf32, #tpu.memory_space<vmem>>, vector<48x32xf32>
    %c48 = arith.constant 48 : index
    %c0_4 = arith.constant 0 : index
    %3 = vector.load %arg1[%c48, %c0_4] : memref<1296x128xf32, #tpu.memory_space<vmem>>, vector<1x32xf32>
    %cst = arith.constant dense<0.000000e+00> : vector<16x32xf32>
    %4 = tpu.matmul %1, %2, %cst {dimension_numbers = #tpu.dot_dimension_numbers<[1], [0], [0], [1], [0, 0, 1, 1], [], []>} : vector<16x48xf32>, vector<48x32xf32>, vector<16x32xf32> -> vector<16x32xf32>
    %5 = vector.broadcast %3 : vector<1x32xf32> to vector<16x32xf32>
    %6 = arith.addf %4, %5 : vector<16x32xf32>
    %c56 = arith.constant 56 : index
    %c0_5 = arith.constant 0 : index
    %7 = vector.load %arg1[%c56, %c0_5] : memref<1296x128xf32, #tpu.memory_space<vmem>>, vector<16x32xf32>
    %8 = arith.addf %6, %7 : vector<16x32xf32>
    %c88 = arith.constant 88 : index
    %c0_6 = arith.constant 0 : index
    %9 = vector.load %arg1[%c88, %c0_6] : memref<1296x128xf32, #tpu.memory_space<vmem>>, vector<32x96xf32>
    %c120 = arith.constant 120 : index
    %c0_7 = arith.constant 0 : index
    %10 = vector.load %arg1[%c120, %c0_7] : memref<1296x128xf32, #tpu.memory_space<vmem>>, vector<1x96xf32>
    %cst_8 = arith.constant dense<0.000000e+00> : vector<16x96xf32>
    %11 = tpu.matmul %8, %9, %cst_8 {dimension_numbers = #tpu.dot_dimension_numbers<[1], [0], [0], [1], [0, 0, 1, 1], [], []>} : vector<16x32xf32>, vector<32x96xf32>, vector<16x96xf32> -> vector<16x96xf32>
    %12 = vector.broadcast %10 : vector<1x96xf32> to vector<16x96xf32>
    %13 = arith.addf %11, %12 : vector<16x96xf32>
    %14 = vector.extract_strided_slice %13 {offsets = [0, 0], sizes = [16, 32], strides = [1, 1]} : vector<16x96xf32> to vector<16x32xf32>
    %15 = vector.extract_strided_slice %13 {offsets = [0, 32], sizes = [16, 32], strides = [1, 1]} : vector<16x96xf32> to vector<16x32xf32>
    %16 = vector.extract_strided_slice %13 {offsets = [0, 64], sizes = [16, 32], strides = [1, 1]} : vector<16x96xf32> to vector<16x32xf32>
    %c128 = arith.constant 128 : index
    %c0_9 = arith.constant 0 : index
    %17 = vector.load %arg1[%c128, %c0_9] : memref<1296x128xf32, #tpu.memory_space<vmem>>, vector<32x32xf32>
    %c160 = arith.constant 160 : index
    %c0_10 = arith.constant 0 : index
    %18 = vector.load %arg1[%c160, %c0_10] : memref<1296x128xf32, #tpu.memory_space<vmem>>, vector<1x32xf32>
    %19 = vector.extract_strided_slice %14 {offsets = [0, 0], sizes = [16, 8], strides = [1, 1]} : vector<16x32xf32> to vector<16x8xf32>
    %20 = vector.extract_strided_slice %15 {offsets = [0, 0], sizes = [16, 8], strides = [1, 1]} : vector<16x32xf32> to vector<16x8xf32>
    %cst_11 = arith.constant dense<0.000000e+00> : vector<16x16xf32>
    %21 = tpu.matmul %19, %20, %cst_11 {dimension_numbers = #tpu.dot_dimension_numbers<[1], [1], [0], [0], [0, 0, 1, 0], [], []>} : vector<16x8xf32>, vector<16x8xf32>, vector<16x16xf32> -> vector<16x16xf32>
    %22 = arith.addf %21, %0 : vector<16x16xf32>
    %cst_12 = arith.constant dense<0xFF800000> : vector<16xf32>
    %23 = vector.multi_reduction <maximumf>, %22, %cst_12 [1] : vector<16x16xf32> to vector<16xf32>
    %24 = vector.shape_cast %23 : vector<16xf32> to vector<16x1xf32>
    %25 = vector.broadcast %24 : vector<16x1xf32> to vector<16x16xf32>
    %26 = arith.subf %22, %25 : vector<16x16xf32>
    %27 = math.exp %26 : vector<16x16xf32>
    %cst_13 = arith.constant dense<0.000000e+00> : vector<16xf32>
    %28 = vector.multi_reduction <add>, %27, %cst_13 [1] : vector<16x16xf32> to vector<16xf32>
    %29 = vector.shape_cast %28 : vector<16xf32> to vector<16x1xf32>
    %30 = tpu.reciprocal %29 {approx = true} : vector<16x1xf32> -> vector<16x1xf32>
    %31 = vector.broadcast %30 : vector<16x1xf32> to vector<16x16xf32>
    %32 = arith.mulf %27, %31 : vector<16x16xf32>
    %33 = vector.extract_strided_slice %16 {offsets = [0, 0], sizes = [16, 8], strides = [1, 1]} : vector<16x32xf32> to vector<16x8xf32>
    %cst_14 = arith.constant dense<0.000000e+00> : vector<16x8xf32>
    %34 = tpu.matmul %32, %33, %cst_14 {dimension_numbers = #tpu.dot_dimension_numbers<[1], [0], [0], [1], [0, 0, 1, 1], [], []>} : vector<16x16xf32>, vector<16x8xf32>, vector<16x8xf32> -> vector<16x8xf32>
    %35 = vector.extract_strided_slice %17 {offsets = [0, 0], sizes = [8, 32], strides = [1, 1]} : vector<32x32xf32> to vector<8x32xf32>
    %cst_15 = arith.constant dense<0.000000e+00> : vector<16x32xf32>
    %36 = tpu.matmul %34, %35, %cst_15 {dimension_numbers = #tpu.dot_dimension_numbers<[1], [0], [0], [1], [0, 0, 1, 1], [], []>} : vector<16x8xf32>, vector<8x32xf32>, vector<16x32xf32> -> vector<16x32xf32>
    %37 = vector.broadcast %18 : vector<1x32xf32> to vector<16x32xf32>
    %38 = arith.addf %37, %36 : vector<16x32xf32>
    %39 = vector.extract_strided_slice %14 {offsets = [0, 8], sizes = [16, 8], strides = [1, 1]} : vector<16x32xf32> to vector<16x8xf32>
    %40 = vector.extract_strided_slice %15 {offsets = [0, 8], sizes = [16, 8], strides = [1, 1]} : vector<16x32xf32> to vector<16x8xf32>
    %cst_16 = arith.constant dense<0.000000e+00> : vector<16x16xf32>
    %41 = tpu.matmul %39, %40, %cst_16 {dimension_numbers = #tpu.dot_dimension_numbers<[1], [1], [0], [0], [0, 0, 1, 0], [], []>} : vector<16x8xf32>, vector<16x8xf32>, vector<16x16xf32> -> vector<16x16xf32>
    %42 = arith.addf %41, %0 : vector<16x16xf32>
    %cst_17 = arith.constant dense<0xFF800000> : vector<16xf32>
    %43 = vector.multi_reduction <maximumf>, %42, %cst_17 [1] : vector<16x16xf32> to vector<16xf32>
    %44 = vector.shape_cast %43 : vector<16xf32> to vector<16x1xf32>
    %45 = vector.broadcast %44 : vector<16x1xf32> to vector<16x16xf32>
    %46 = arith.subf %42, %45 : vector<16x16xf32>
    %47 = math.exp %46 : vector<16x16xf32>
    %cst_18 = arith.constant dense<0.000000e+00> : vector<16xf32>
    %48 = vector.multi_reduction <add>, %47, %cst_18 [1] : vector<16x16xf32> to vector<16xf32>
    %49 = vector.shape_cast %48 : vector<16xf32> to vector<16x1xf32>
    %50 = tpu.reciprocal %49 {approx = true} : vector<16x1xf32> -> vector<16x1xf32>
    %51 = vector.broadcast %50 : vector<16x1xf32> to vector<16x16xf32>
    %52 = arith.mulf %47, %51 : vector<16x16xf32>
    %53 = vector.extract_strided_slice %16 {offsets = [0, 8], sizes = [16, 8], strides = [1, 1]} : vector<16x32xf32> to vector<16x8xf32>
    %cst_19 = arith.constant dense<0.000000e+00> : vector<16x8xf32>
    %54 = tpu.matmul %52, %53, %cst_19 {dimension_numbers = #tpu.dot_dimension_numbers<[1], [0], [0], [1], [0, 0, 1, 1], [], []>} : vector<16x16xf32>, vector<16x8xf32>, vector<16x8xf32> -> vector<16x8xf32>
    %55 = vector.extract_strided_slice %17 {offsets = [8, 0], sizes = [8, 32], strides = [1, 1]} : vector<32x32xf32> to vector<8x32xf32>
    %cst_20 = arith.constant dense<0.000000e+00> : vector<16x32xf32>
    %56 = tpu.matmul %54, %55, %cst_20 {dimension_numbers = #tpu.dot_dimension_numbers<[1], [0], [0], [1], [0, 0, 1, 1], [], []>} : vector<16x8xf32>, vector<8x32xf32>, vector<16x32xf32> -> vector<16x32xf32>
    %57 = arith.addf %38, %56 : vector<16x32xf32>
    %58 = vector.extract_strided_slice %14 {offsets = [0, 16], sizes = [16, 8], strides = [1, 1]} : vector<16x32xf32> to vector<16x8xf32>
    %59 = vector.extract_strided_slice %15 {offsets = [0, 16], sizes = [16, 8], strides = [1, 1]} : vector<16x32xf32> to vector<16x8xf32>
    %cst_21 = arith.constant dense<0.000000e+00> : vector<16x16xf32>
    %60 = tpu.matmul %58, %59, %cst_21 {dimension_numbers = #tpu.dot_dimension_numbers<[1], [1], [0], [0], [0, 0, 1, 0], [], []>} : vector<16x8xf32>, vector<16x8xf32>, vector<16x16xf32> -> vector<16x16xf32>
    %61 = arith.addf %60, %0 : vector<16x16xf32>
    %cst_22 = arith.constant dense<0xFF800000> : vector<16xf32>
    %62 = vector.multi_reduction <maximumf>, %61, %cst_22 [1] : vector<16x16xf32> to vector<16xf32>
    %63 = vector.shape_cast %62 : vector<16xf32> to vector<16x1xf32>
    %64 = vector.broadcast %63 : vector<16x1xf32> to vector<16x16xf32>
    %65 = arith.subf %61, %64 : vector<16x16xf32>
    %66 = math.exp %65 : vector<16x16xf32>
    %cst_23 = arith.constant dense<0.000000e+00> : vector<16xf32>
    %67 = vector.multi_reduction <add>, %66, %cst_23 [1] : vector<16x16xf32> to vector<16xf32>
    %68 = vector.shape_cast %67 : vector<16xf32> to vector<16x1xf32>
    %69 = tpu.reciprocal %68 {approx = true} : vector<16x1xf32> -> vector<16x1xf32>
    %70 = vector.broadcast %69 : vector<16x1xf32> to vector<16x16xf32>
    %71 = arith.mulf %66, %70 : vector<16x16xf32>
    %72 = vector.extract_strided_slice %16 {offsets = [0, 16], sizes = [16, 8], strides = [1, 1]} : vector<16x32xf32> to vector<16x8xf32>
    %cst_24 = arith.constant dense<0.000000e+00> : vector<16x8xf32>
    %73 = tpu.matmul %71, %72, %cst_24 {dimension_numbers = #tpu.dot_dimension_numbers<[1], [0], [0], [1], [0, 0, 1, 1], [], []>} : vector<16x16xf32>, vector<16x8xf32>, vector<16x8xf32> -> vector<16x8xf32>
    %74 = vector.extract_strided_slice %17 {offsets = [16, 0], sizes = [8, 32], strides = [1, 1]} : vector<32x32xf32> to vector<8x32xf32>
    %cst_25 = arith.constant dense<0.000000e+00> : vector<16x32xf32>
    %75 = tpu.matmul %73, %74, %cst_25 {dimension_numbers = #tpu.dot_dimension_numbers<[1], [0], [0], [1], [0, 0, 1, 1], [], []>} : vector<16x8xf32>, vector<8x32xf32>, vector<16x32xf32> -> vector<16x32xf32>
    %76 = arith.addf %57, %75 : vector<16x32xf32>
    %77 = vector.extract_strided_slice %14 {offsets = [0, 24], sizes = [16, 8], strides = [1, 1]} : vector<16x32xf32> to vector<16x8xf32>
    %78 = vector.extract_strided_slice %15 {offsets = [0, 24], sizes = [16, 8], strides = [1, 1]} : vector<16x32xf32> to vector<16x8xf32>
    %cst_26 = arith.constant dense<0.000000e+00> : vector<16x16xf32>
    %79 = tpu.matmul %77, %78, %cst_26 {dimension_numbers = #tpu.dot_dimension_numbers<[1], [1], [0], [0], [0, 0, 1, 0], [], []>} : vector<16x8xf32>, vector<16x8xf32>, vector<16x16xf32> -> vector<16x16xf32>
    %80 = arith.addf %79, %0 : vector<16x16xf32>
    %cst_27 = arith.constant dense<0xFF800000> : vector<16xf32>
    %81 = vector.multi_reduction <maximumf>, %80, %cst_27 [1] : vector<16x16xf32> to vector<16xf32>
    %82 = vector.shape_cast %81 : vector<16xf32> to vector<16x1xf32>
    %83 = vector.broadcast %82 : vector<16x1xf32> to vector<16x16xf32>
    %84 = arith.subf %80, %83 : vector<16x16xf32>
    %85 = math.exp %84 : vector<16x16xf32>
    %cst_28 = arith.constant dense<0.000000e+00> : vector<16xf32>
    %86 = vector.multi_reduction <add>, %85, %cst_28 [1] : vector<16x16xf32> to vector<16xf32>
    %87 = vector.shape_cast %86 : vector<16xf32> to vector<16x1xf32>
    %88 = tpu.reciprocal %87 {approx = true} : vector<16x1xf32> -> vector<16x1xf32>
    %89 = vector.broadcast %88 : vector<16x1xf32> to vector<16x16xf32>
    %90 = arith.mulf %85, %89 : vector<16x16xf32>
    %91 = vector.extract_strided_slice %16 {offsets = [0, 24], sizes = [16, 8], strides = [1, 1]} : vector<16x32xf32> to vector<16x8xf32>
    %cst_29 = arith.constant dense<0.000000e+00> : vector<16x8xf32>
    %92 = tpu.matmul %90, %91, %cst_29 {dimension_numbers = #tpu.dot_dimension_numbers<[1], [0], [0], [1], [0, 0, 1, 1], [], []>} : vector<16x16xf32>, vector<16x8xf32>, vector<16x8xf32> -> vector<16x8xf32>
    %93 = vector.extract_strided_slice %17 {offsets = [24, 0], sizes = [8, 32], strides = [1, 1]} : vector<32x32xf32> to vector<8x32xf32>
    %cst_30 = arith.constant dense<0.000000e+00> : vector<16x32xf32>
    %94 = tpu.matmul %92, %93, %cst_30 {dimension_numbers = #tpu.dot_dimension_numbers<[1], [0], [0], [1], [0, 0, 1, 1], [], []>} : vector<16x8xf32>, vector<8x32xf32>, vector<16x32xf32> -> vector<16x32xf32>
    %95 = arith.addf %76, %94 : vector<16x32xf32>
    %96 = arith.addf %8, %95 : vector<16x32xf32>
    %c168 = arith.constant 168 : index
    %c0_31 = arith.constant 0 : index
    %97 = vector.load %arg1[%c168, %c0_31] : memref<1296x128xf32, #tpu.memory_space<vmem>>, vector<1x32xf32>
    %c176 = arith.constant 176 : index
    %c0_32 = arith.constant 0 : index
    %98 = vector.load %arg1[%c176, %c0_32] : memref<1296x128xf32, #tpu.memory_space<vmem>>, vector<1x32xf32>
    %cst_33 = arith.constant dense<0.000000e+00> : vector<16xf32>
    %99 = vector.multi_reduction <add>, %96, %cst_33 [1] : vector<16x32xf32> to vector<16xf32>
    %100 = vector.shape_cast %99 : vector<16xf32> to vector<16x1xf32>
    %cst_34 = arith.constant 3.200000e+01 : f32
    %101 = vector.broadcast %cst_34 : f32 to vector<16x1xf32>
    %102 = arith.divf %100, %101 : vector<16x1xf32>
    %103 = vector.broadcast %102 : vector<16x1xf32> to vector<16x32xf32>
    %104 = arith.subf %96, %103 : vector<16x32xf32>
    %105 = arith.mulf %104, %104 : vector<16x32xf32>
    %cst_35 = arith.constant dense<0.000000e+00> : vector<16xf32>
    %106 = vector.multi_reduction <add>, %105, %cst_35 [1] : vector<16x32xf32> to vector<16xf32>
    %107 = vector.shape_cast %106 : vector<16xf32> to vector<16x1xf32>
    %cst_36 = arith.constant 3.200000e+01 : f32
    %108 = vector.broadcast %cst_36 : f32 to vector<16x1xf32>
    %109 = arith.divf %107, %108 : vector<16x1xf32>
    %110 = vector.broadcast %102 : vector<16x1xf32> to vector<16x32xf32>
    %111 = arith.subf %96, %110 : vector<16x32xf32>
    %cst_37 = arith.constant 9.99999974E-6 : f32
    %112 = vector.broadcast %cst_37 : f32 to vector<16x1xf32>
    %113 = arith.addf %109, %112 : vector<16x1xf32>
    %114 = math.rsqrt %113 : vector<16x1xf32>
    %115 = vector.broadcast %114 : vector<16x1xf32> to vector<16x32xf32>
    %116 = arith.mulf %111, %115 : vector<16x32xf32>
    %117 = vector.broadcast %97 : vector<1x32xf32> to vector<16x32xf32>
    %118 = arith.mulf %116, %117 : vector<16x32xf32>
    %119 = vector.broadcast %98 : vector<1x32xf32> to vector<16x32xf32>
    %120 = arith.addf %118, %119 : vector<16x32xf32>
    %c184 = arith.constant 184 : index
    %c0_38 = arith.constant 0 : index
    %121 = vector.load %arg1[%c184, %c0_38] : memref<1296x128xf32, #tpu.memory_space<vmem>>, vector<32x64xf32>
    %c216 = arith.constant 216 : index
    %c0_39 = arith.constant 0 : index
    %122 = vector.load %arg1[%c216, %c0_39] : memref<1296x128xf32, #tpu.memory_space<vmem>>, vector<1x64xf32>
    %cst_40 = arith.constant dense<0.000000e+00> : vector<16x64xf32>
    %123 = tpu.matmul %120, %121, %cst_40 {dimension_numbers = #tpu.dot_dimension_numbers<[1], [0], [0], [1], [0, 0, 1, 1], [], []>} : vector<16x32xf32>, vector<32x64xf32>, vector<16x64xf32> -> vector<16x64xf32>
    %124 = vector.broadcast %122 : vector<1x64xf32> to vector<16x64xf32>
    %125 = arith.addf %123, %124 : vector<16x64xf32>
    %cst_41 = arith.constant 0.000000e+00 : f32
    %126 = vector.broadcast %cst_41 : f32 to vector<16x64xf32>
    %127 = arith.maximumf %125, %126 : vector<16x64xf32>
    %c224 = arith.constant 224 : index
    %c0_42 = arith.constant 0 : index
    %128 = vector.load %arg1[%c224, %c0_42] : memref<1296x128xf32, #tpu.memory_space<vmem>>, vector<64x32xf32>
    %c288 = arith.constant 288 : index
    %c0_43 = arith.constant 0 : index
    %129 = vector.load %arg1[%c288, %c0_43] : memref<1296x128xf32, #tpu.memory_space<vmem>>, vector<1x32xf32>
    %cst_44 = arith.constant dense<0.000000e+00> : vector<16x32xf32>
    %130 = tpu.matmul %127, %128, %cst_44 {dimension_numbers = #tpu.dot_dimension_numbers<[1], [0], [0], [1], [0, 0, 1, 1], [], []>} : vector<16x64xf32>, vector<64x32xf32>, vector<16x32xf32> -> vector<16x32xf32>
    %131 = vector.broadcast %129 : vector<1x32xf32> to vector<16x32xf32>
    %132 = arith.addf %130, %131 : vector<16x32xf32>
    %133 = arith.addf %120, %132 : vector<16x32xf32>
    %c296 = arith.constant 296 : index
    %c0_45 = arith.constant 0 : index
    %134 = vector.load %arg1[%c296, %c0_45] : memref<1296x128xf32, #tpu.memory_space<vmem>>, vector<1x32xf32>
    %c304 = arith.constant 304 : index
    %c0_46 = arith.constant 0 : index
    %135 = vector.load %arg1[%c304, %c0_46] : memref<1296x128xf32, #tpu.memory_space<vmem>>, vector<1x32xf32>
    %cst_47 = arith.constant dense<0.000000e+00> : vector<16xf32>
    %136 = vector.multi_reduction <add>, %133, %cst_47 [1] : vector<16x32xf32> to vector<16xf32>
    %137 = vector.shape_cast %136 : vector<16xf32> to vector<16x1xf32>
    %cst_48 = arith.constant 3.200000e+01 : f32
    %138 = vector.broadcast %cst_48 : f32 to vector<16x1xf32>
    %139 = arith.divf %137, %138 : vector<16x1xf32>
    %140 = vector.broadcast %139 : vector<16x1xf32> to vector<16x32xf32>
    %141 = arith.subf %133, %140 : vector<16x32xf32>
    %142 = arith.mulf %141, %141 : vector<16x32xf32>
    %cst_49 = arith.constant dense<0.000000e+00> : vector<16xf32>
    %143 = vector.multi_reduction <add>, %142, %cst_49 [1] : vector<16x32xf32> to vector<16xf32>
    %144 = vector.shape_cast %143 : vector<16xf32> to vector<16x1xf32>
    %cst_50 = arith.constant 3.200000e+01 : f32
    %145 = vector.broadcast %cst_50 : f32 to vector<16x1xf32>
    %146 = arith.divf %144, %145 : vector<16x1xf32>
    %147 = vector.broadcast %139 : vector<16x1xf32> to vector<16x32xf32>
    %148 = arith.subf %133, %147 : vector<16x32xf32>
    %cst_51 = arith.constant 9.99999974E-6 : f32
    %149 = vector.broadcast %cst_51 : f32 to vector<16x1xf32>
    %150 = arith.addf %146, %149 : vector<16x1xf32>
    %151 = math.rsqrt %150 : vector<16x1xf32>
    %152 = vector.broadcast %151 : vector<16x1xf32> to vector<16x32xf32>
    %153 = arith.mulf %148, %152 : vector<16x32xf32>
    %154 = vector.broadcast %134 : vector<1x32xf32> to vector<16x32xf32>
    %155 = arith.mulf %153, %154 : vector<16x32xf32>
    %156 = vector.broadcast %135 : vector<1x32xf32> to vector<16x32xf32>
    %157 = arith.addf %155, %156 : vector<16x32xf32>
    %c312 = arith.constant 312 : index
    %c0_52 = arith.constant 0 : index
    %158 = vector.load %arg1[%c312, %c0_52] : memref<1296x128xf32, #tpu.memory_space<vmem>>, vector<32x96xf32>
    %c344 = arith.constant 344 : index
    %c0_53 = arith.constant 0 : index
    %159 = vector.load %arg1[%c344, %c0_53] : memref<1296x128xf32, #tpu.memory_space<vmem>>, vector<1x96xf32>
    %cst_54 = arith.constant dense<0.000000e+00> : vector<16x96xf32>
    %160 = tpu.matmul %157, %158, %cst_54 {dimension_numbers = #tpu.dot_dimension_numbers<[1], [0], [0], [1], [0, 0, 1, 1], [], []>} : vector<16x32xf32>, vector<32x96xf32>, vector<16x96xf32> -> vector<16x96xf32>
    %161 = vector.broadcast %159 : vector<1x96xf32> to vector<16x96xf32>
    %162 = arith.addf %160, %161 : vector<16x96xf32>
    %163 = vector.extract_strided_slice %162 {offsets = [0, 0], sizes = [16, 32], strides = [1, 1]} : vector<16x96xf32> to vector<16x32xf32>
    %164 = vector.extract_strided_slice %162 {offsets = [0, 32], sizes = [16, 32], strides = [1, 1]} : vector<16x96xf32> to vector<16x32xf32>
    %165 = vector.extract_strided_slice %162 {offsets = [0, 64], sizes = [16, 32], strides = [1, 1]} : vector<16x96xf32> to vector<16x32xf32>
    %c352 = arith.constant 352 : index
    %c0_55 = arith.constant 0 : index
    %166 = vector.load %arg1[%c352, %c0_55] : memref<1296x128xf32, #tpu.memory_space<vmem>>, vector<32x32xf32>
    %c384 = arith.constant 384 : index
    %c0_56 = arith.constant 0 : index
    %167 = vector.load %arg1[%c384, %c0_56] : memref<1296x128xf32, #tpu.memory_space<vmem>>, vector<1x32xf32>
    %168 = vector.extract_strided_slice %163 {offsets = [0, 0], sizes = [16, 8], strides = [1, 1]} : vector<16x32xf32> to vector<16x8xf32>
    %169 = vector.extract_strided_slice %164 {offsets = [0, 0], sizes = [16, 8], strides = [1, 1]} : vector<16x32xf32> to vector<16x8xf32>
    %cst_57 = arith.constant dense<0.000000e+00> : vector<16x16xf32>
    %170 = tpu.matmul %168, %169, %cst_57 {dimension_numbers = #tpu.dot_dimension_numbers<[1], [1], [0], [0], [0, 0, 1, 0], [], []>} : vector<16x8xf32>, vector<16x8xf32>, vector<16x16xf32> -> vector<16x16xf32>
    %171 = arith.addf %170, %0 : vector<16x16xf32>
    %cst_58 = arith.constant dense<0xFF800000> : vector<16xf32>
    %172 = vector.multi_reduction <maximumf>, %171, %cst_58 [1] : vector<16x16xf32> to vector<16xf32>
    %173 = vector.shape_cast %172 : vector<16xf32> to vector<16x1xf32>
    %174 = vector.broadcast %173 : vector<16x1xf32> to vector<16x16xf32>
    %175 = arith.subf %171, %174 : vector<16x16xf32>
    %176 = math.exp %175 : vector<16x16xf32>
    %cst_59 = arith.constant dense<0.000000e+00> : vector<16xf32>
    %177 = vector.multi_reduction <add>, %176, %cst_59 [1] : vector<16x16xf32> to vector<16xf32>
    %178 = vector.shape_cast %177 : vector<16xf32> to vector<16x1xf32>
    %179 = tpu.reciprocal %178 {approx = true} : vector<16x1xf32> -> vector<16x1xf32>
    %180 = vector.broadcast %179 : vector<16x1xf32> to vector<16x16xf32>
    %181 = arith.mulf %176, %180 : vector<16x16xf32>
    %182 = vector.extract_strided_slice %165 {offsets = [0, 0], sizes = [16, 8], strides = [1, 1]} : vector<16x32xf32> to vector<16x8xf32>
    %cst_60 = arith.constant dense<0.000000e+00> : vector<16x8xf32>
    %183 = tpu.matmul %181, %182, %cst_60 {dimension_numbers = #tpu.dot_dimension_numbers<[1], [0], [0], [1], [0, 0, 1, 1], [], []>} : vector<16x16xf32>, vector<16x8xf32>, vector<16x8xf32> -> vector<16x8xf32>
    %184 = vector.extract_strided_slice %166 {offsets = [0, 0], sizes = [8, 32], strides = [1, 1]} : vector<32x32xf32> to vector<8x32xf32>
    %cst_61 = arith.constant dense<0.000000e+00> : vector<16x32xf32>
    %185 = tpu.matmul %183, %184, %cst_61 {dimension_numbers = #tpu.dot_dimension_numbers<[1], [0], [0], [1], [0, 0, 1, 1], [], []>} : vector<16x8xf32>, vector<8x32xf32>, vector<16x32xf32> -> vector<16x32xf32>
    %186 = vector.broadcast %167 : vector<1x32xf32> to vector<16x32xf32>
    %187 = arith.addf %186, %185 : vector<16x32xf32>
    %188 = vector.extract_strided_slice %163 {offsets = [0, 8], sizes = [16, 8], strides = [1, 1]} : vector<16x32xf32> to vector<16x8xf32>
    %189 = vector.extract_strided_slice %164 {offsets = [0, 8], sizes = [16, 8], strides = [1, 1]} : vector<16x32xf32> to vector<16x8xf32>
    %cst_62 = arith.constant dense<0.000000e+00> : vector<16x16xf32>
    %190 = tpu.matmul %188, %189, %cst_62 {dimension_numbers = #tpu.dot_dimension_numbers<[1], [1], [0], [0], [0, 0, 1, 0], [], []>} : vector<16x8xf32>, vector<16x8xf32>, vector<16x16xf32> -> vector<16x16xf32>
    %191 = arith.addf %190, %0 : vector<16x16xf32>
    %cst_63 = arith.constant dense<0xFF800000> : vector<16xf32>
    %192 = vector.multi_reduction <maximumf>, %191, %cst_63 [1] : vector<16x16xf32> to vector<16xf32>
    %193 = vector.shape_cast %192 : vector<16xf32> to vector<16x1xf32>
    %194 = vector.broadcast %193 : vector<16x1xf32> to vector<16x16xf32>
    %195 = arith.subf %191, %194 : vector<16x16xf32>
    %196 = math.exp %195 : vector<16x16xf32>
    %cst_64 = arith.constant dense<0.000000e+00> : vector<16xf32>
    %197 = vector.multi_reduction <add>, %196, %cst_64 [1] : vector<16x16xf32> to vector<16xf32>
    %198 = vector.shape_cast %197 : vector<16xf32> to vector<16x1xf32>
    %199 = tpu.reciprocal %198 {approx = true} : vector<16x1xf32> -> vector<16x1xf32>
    %200 = vector.broadcast %199 : vector<16x1xf32> to vector<16x16xf32>
    %201 = arith.mulf %196, %200 : vector<16x16xf32>
    %202 = vector.extract_strided_slice %165 {offsets = [0, 8], sizes = [16, 8], strides = [1, 1]} : vector<16x32xf32> to vector<16x8xf32>
    %cst_65 = arith.constant dense<0.000000e+00> : vector<16x8xf32>
    %203 = tpu.matmul %201, %202, %cst_65 {dimension_numbers = #tpu.dot_dimension_numbers<[1], [0], [0], [1], [0, 0, 1, 1], [], []>} : vector<16x16xf32>, vector<16x8xf32>, vector<16x8xf32> -> vector<16x8xf32>
    %204 = vector.extract_strided_slice %166 {offsets = [8, 0], sizes = [8, 32], strides = [1, 1]} : vector<32x32xf32> to vector<8x32xf32>
    %cst_66 = arith.constant dense<0.000000e+00> : vector<16x32xf32>
    %205 = tpu.matmul %203, %204, %cst_66 {dimension_numbers = #tpu.dot_dimension_numbers<[1], [0], [0], [1], [0, 0, 1, 1], [], []>} : vector<16x8xf32>, vector<8x32xf32>, vector<16x32xf32> -> vector<16x32xf32>
    %206 = arith.addf %187, %205 : vector<16x32xf32>
    %207 = vector.extract_strided_slice %163 {offsets = [0, 16], sizes = [16, 8], strides = [1, 1]} : vector<16x32xf32> to vector<16x8xf32>
    %208 = vector.extract_strided_slice %164 {offsets = [0, 16], sizes = [16, 8], strides = [1, 1]} : vector<16x32xf32> to vector<16x8xf32>
    %cst_67 = arith.constant dense<0.000000e+00> : vector<16x16xf32>
    %209 = tpu.matmul %207, %208, %cst_67 {dimension_numbers = #tpu.dot_dimension_numbers<[1], [1], [0], [0], [0, 0, 1, 0], [], []>} : vector<16x8xf32>, vector<16x8xf32>, vector<16x16xf32> -> vector<16x16xf32>
    %210 = arith.addf %209, %0 : vector<16x16xf32>
    %cst_68 = arith.constant dense<0xFF800000> : vector<16xf32>
    %211 = vector.multi_reduction <maximumf>, %210, %cst_68 [1] : vector<16x16xf32> to vector<16xf32>
    %212 = vector.shape_cast %211 : vector<16xf32> to vector<16x1xf32>
    %213 = vector.broadcast %212 : vector<16x1xf32> to vector<16x16xf32>
    %214 = arith.subf %210, %213 : vector<16x16xf32>
    %215 = math.exp %214 : vector<16x16xf32>
    %cst_69 = arith.constant dense<0.000000e+00> : vector<16xf32>
    %216 = vector.multi_reduction <add>, %215, %cst_69 [1] : vector<16x16xf32> to vector<16xf32>
    %217 = vector.shape_cast %216 : vector<16xf32> to vector<16x1xf32>
    %218 = tpu.reciprocal %217 {approx = true} : vector<16x1xf32> -> vector<16x1xf32>
    %219 = vector.broadcast %218 : vector<16x1xf32> to vector<16x16xf32>
    %220 = arith.mulf %215, %219 : vector<16x16xf32>
    %221 = vector.extract_strided_slice %165 {offsets = [0, 16], sizes = [16, 8], strides = [1, 1]} : vector<16x32xf32> to vector<16x8xf32>
    %cst_70 = arith.constant dense<0.000000e+00> : vector<16x8xf32>
    %222 = tpu.matmul %220, %221, %cst_70 {dimension_numbers = #tpu.dot_dimension_numbers<[1], [0], [0], [1], [0, 0, 1, 1], [], []>} : vector<16x16xf32>, vector<16x8xf32>, vector<16x8xf32> -> vector<16x8xf32>
    %223 = vector.extract_strided_slice %166 {offsets = [16, 0], sizes = [8, 32], strides = [1, 1]} : vector<32x32xf32> to vector<8x32xf32>
    %cst_71 = arith.constant dense<0.000000e+00> : vector<16x32xf32>
    %224 = tpu.matmul %222, %223, %cst_71 {dimension_numbers = #tpu.dot_dimension_numbers<[1], [0], [0], [1], [0, 0, 1, 1], [], []>} : vector<16x8xf32>, vector<8x32xf32>, vector<16x32xf32> -> vector<16x32xf32>
    %225 = arith.addf %206, %224 : vector<16x32xf32>
    %226 = vector.extract_strided_slice %163 {offsets = [0, 24], sizes = [16, 8], strides = [1, 1]} : vector<16x32xf32> to vector<16x8xf32>
    %227 = vector.extract_strided_slice %164 {offsets = [0, 24], sizes = [16, 8], strides = [1, 1]} : vector<16x32xf32> to vector<16x8xf32>
    %cst_72 = arith.constant dense<0.000000e+00> : vector<16x16xf32>
    %228 = tpu.matmul %226, %227, %cst_72 {dimension_numbers = #tpu.dot_dimension_numbers<[1], [1], [0], [0], [0, 0, 1, 0], [], []>} : vector<16x8xf32>, vector<16x8xf32>, vector<16x16xf32> -> vector<16x16xf32>
    %229 = arith.addf %228, %0 : vector<16x16xf32>
    %cst_73 = arith.constant dense<0xFF800000> : vector<16xf32>
    %230 = vector.multi_reduction <maximumf>, %229, %cst_73 [1] : vector<16x16xf32> to vector<16xf32>
    %231 = vector.shape_cast %230 : vector<16xf32> to vector<16x1xf32>
    %232 = vector.broadcast %231 : vector<16x1xf32> to vector<16x16xf32>
    %233 = arith.subf %229, %232 : vector<16x16xf32>
    %234 = math.exp %233 : vector<16x16xf32>
    %cst_74 = arith.constant dense<0.000000e+00> : vector<16xf32>
    %235 = vector.multi_reduction <add>, %234, %cst_74 [1] : vector<16x16xf32> to vector<16xf32>
    %236 = vector.shape_cast %235 : vector<16xf32> to vector<16x1xf32>
    %237 = tpu.reciprocal %236 {approx = true} : vector<16x1xf32> -> vector<16x1xf32>
    %238 = vector.broadcast %237 : vector<16x1xf32> to vector<16x16xf32>
    %239 = arith.mulf %234, %238 : vector<16x16xf32>
    %240 = vector.extract_strided_slice %165 {offsets = [0, 24], sizes = [16, 8], strides = [1, 1]} : vector<16x32xf32> to vector<16x8xf32>
    %cst_75 = arith.constant dense<0.000000e+00> : vector<16x8xf32>
    %241 = tpu.matmul %239, %240, %cst_75 {dimension_numbers = #tpu.dot_dimension_numbers<[1], [0], [0], [1], [0, 0, 1, 1], [], []>} : vector<16x16xf32>, vector<16x8xf32>, vector<16x8xf32> -> vector<16x8xf32>
    %242 = vector.extract_strided_slice %166 {offsets = [24, 0], sizes = [8, 32], strides = [1, 1]} : vector<32x32xf32> to vector<8x32xf32>
    %cst_76 = arith.constant dense<0.000000e+00> : vector<16x32xf32>
    %243 = tpu.matmul %241, %242, %cst_76 {dimension_numbers = #tpu.dot_dimension_numbers<[1], [0], [0], [1], [0, 0, 1, 1], [], []>} : vector<16x8xf32>, vector<8x32xf32>, vector<16x32xf32> -> vector<16x32xf32>
    %244 = arith.addf %225, %243 : vector<16x32xf32>
    %245 = arith.addf %157, %244 : vector<16x32xf32>
    %c392 = arith.constant 392 : index
    %c0_77 = arith.constant 0 : index
    %246 = vector.load %arg1[%c392, %c0_77] : memref<1296x128xf32, #tpu.memory_space<vmem>>, vector<1x32xf32>
    %c400 = arith.constant 400 : index
    %c0_78 = arith.constant 0 : index
    %247 = vector.load %arg1[%c400, %c0_78] : memref<1296x128xf32, #tpu.memory_space<vmem>>, vector<1x32xf32>
    %cst_79 = arith.constant dense<0.000000e+00> : vector<16xf32>
    %248 = vector.multi_reduction <add>, %245, %cst_79 [1] : vector<16x32xf32> to vector<16xf32>
    %249 = vector.shape_cast %248 : vector<16xf32> to vector<16x1xf32>
    %cst_80 = arith.constant 3.200000e+01 : f32
    %250 = vector.broadcast %cst_80 : f32 to vector<16x1xf32>
    %251 = arith.divf %249, %250 : vector<16x1xf32>
    %252 = vector.broadcast %251 : vector<16x1xf32> to vector<16x32xf32>
    %253 = arith.subf %245, %252 : vector<16x32xf32>
    %254 = arith.mulf %253, %253 : vector<16x32xf32>
    %cst_81 = arith.constant dense<0.000000e+00> : vector<16xf32>
    %255 = vector.multi_reduction <add>, %254, %cst_81 [1] : vector<16x32xf32> to vector<16xf32>
    %256 = vector.shape_cast %255 : vector<16xf32> to vector<16x1xf32>
    %cst_82 = arith.constant 3.200000e+01 : f32
    %257 = vector.broadcast %cst_82 : f32 to vector<16x1xf32>
    %258 = arith.divf %256, %257 : vector<16x1xf32>
    %259 = vector.broadcast %251 : vector<16x1xf32> to vector<16x32xf32>
    %260 = arith.subf %245, %259 : vector<16x32xf32>
    %cst_83 = arith.constant 9.99999974E-6 : f32
    %261 = vector.broadcast %cst_83 : f32 to vector<16x1xf32>
    %262 = arith.addf %258, %261 : vector<16x1xf32>
    %263 = math.rsqrt %262 : vector<16x1xf32>
    %264 = vector.broadcast %263 : vector<16x1xf32> to vector<16x32xf32>
    %265 = arith.mulf %260, %264 : vector<16x32xf32>
    %266 = vector.broadcast %246 : vector<1x32xf32> to vector<16x32xf32>
    %267 = arith.mulf %265, %266 : vector<16x32xf32>
    %268 = vector.broadcast %247 : vector<1x32xf32> to vector<16x32xf32>
    %269 = arith.addf %267, %268 : vector<16x32xf32>
    %c408 = arith.constant 408 : index
    %c0_84 = arith.constant 0 : index
    %270 = vector.load %arg1[%c408, %c0_84] : memref<1296x128xf32, #tpu.memory_space<vmem>>, vector<32x64xf32>
    %c440 = arith.constant 440 : index
    %c0_85 = arith.constant 0 : index
    %271 = vector.load %arg1[%c440, %c0_85] : memref<1296x128xf32, #tpu.memory_space<vmem>>, vector<1x64xf32>
    %cst_86 = arith.constant dense<0.000000e+00> : vector<16x64xf32>
    %272 = tpu.matmul %269, %270, %cst_86 {dimension_numbers = #tpu.dot_dimension_numbers<[1], [0], [0], [1], [0, 0, 1, 1], [], []>} : vector<16x32xf32>, vector<32x64xf32>, vector<16x64xf32> -> vector<16x64xf32>
    %273 = vector.broadcast %271 : vector<1x64xf32> to vector<16x64xf32>
    %274 = arith.addf %272, %273 : vector<16x64xf32>
    %cst_87 = arith.constant 0.000000e+00 : f32
    %275 = vector.broadcast %cst_87 : f32 to vector<16x64xf32>
    %276 = arith.maximumf %274, %275 : vector<16x64xf32>
    %c448 = arith.constant 448 : index
    %c0_88 = arith.constant 0 : index
    %277 = vector.load %arg1[%c448, %c0_88] : memref<1296x128xf32, #tpu.memory_space<vmem>>, vector<64x32xf32>
    %c512 = arith.constant 512 : index
    %c0_89 = arith.constant 0 : index
    %278 = vector.load %arg1[%c512, %c0_89] : memref<1296x128xf32, #tpu.memory_space<vmem>>, vector<1x32xf32>
    %cst_90 = arith.constant dense<0.000000e+00> : vector<16x32xf32>
    %279 = tpu.matmul %276, %277, %cst_90 {dimension_numbers = #tpu.dot_dimension_numbers<[1], [0], [0], [1], [0, 0, 1, 1], [], []>} : vector<16x64xf32>, vector<64x32xf32>, vector<16x32xf32> -> vector<16x32xf32>
    %280 = vector.broadcast %278 : vector<1x32xf32> to vector<16x32xf32>
    %281 = arith.addf %279, %280 : vector<16x32xf32>
    %282 = arith.addf %269, %281 : vector<16x32xf32>
    %c520 = arith.constant 520 : index
    %c0_91 = arith.constant 0 : index
    %283 = vector.load %arg1[%c520, %c0_91] : memref<1296x128xf32, #tpu.memory_space<vmem>>, vector<1x32xf32>
    %c528 = arith.constant 528 : index
    %c0_92 = arith.constant 0 : index
    %284 = vector.load %arg1[%c528, %c0_92] : memref<1296x128xf32, #tpu.memory_space<vmem>>, vector<1x32xf32>
    %cst_93 = arith.constant dense<0.000000e+00> : vector<16xf32>
    %285 = vector.multi_reduction <add>, %282, %cst_93 [1] : vector<16x32xf32> to vector<16xf32>
    %286 = vector.shape_cast %285 : vector<16xf32> to vector<16x1xf32>
    %cst_94 = arith.constant 3.200000e+01 : f32
    %287 = vector.broadcast %cst_94 : f32 to vector<16x1xf32>
    %288 = arith.divf %286, %287 : vector<16x1xf32>
    %289 = vector.broadcast %288 : vector<16x1xf32> to vector<16x32xf32>
    %290 = arith.subf %282, %289 : vector<16x32xf32>
    %291 = arith.mulf %290, %290 : vector<16x32xf32>
    %cst_95 = arith.constant dense<0.000000e+00> : vector<16xf32>
    %292 = vector.multi_reduction <add>, %291, %cst_95 [1] : vector<16x32xf32> to vector<16xf32>
    %293 = vector.shape_cast %292 : vector<16xf32> to vector<16x1xf32>
    %cst_96 = arith.constant 3.200000e+01 : f32
    %294 = vector.broadcast %cst_96 : f32 to vector<16x1xf32>
    %295 = arith.divf %293, %294 : vector<16x1xf32>
    %296 = vector.broadcast %288 : vector<16x1xf32> to vector<16x32xf32>
    %297 = arith.subf %282, %296 : vector<16x32xf32>
    %cst_97 = arith.constant 9.99999974E-6 : f32
    %298 = vector.broadcast %cst_97 : f32 to vector<16x1xf32>
    %299 = arith.addf %295, %298 : vector<16x1xf32>
    %300 = math.rsqrt %299 : vector<16x1xf32>
    %301 = vector.broadcast %300 : vector<16x1xf32> to vector<16x32xf32>
    %302 = arith.mulf %297, %301 : vector<16x32xf32>
    %303 = vector.broadcast %283 : vector<1x32xf32> to vector<16x32xf32>
    %304 = arith.mulf %302, %303 : vector<16x32xf32>
    %305 = vector.broadcast %284 : vector<1x32xf32> to vector<16x32xf32>
    %306 = arith.addf %304, %305 : vector<16x32xf32>
    %c0_98 = arith.constant 0 : index
    %c0_99 = arith.constant 0 : index
    %307 = vector.load %arg3[%c0_98, %c0_99] : memref<16x32xf32, #tpu.memory_space<vmem>>, vector<16x32xf32>
    tpu.vector_store %arg3[%c0_98, %c0_99], %306 {strides = array<i32>} : memref<16x32xf32, #tpu.memory_space<vmem>>, vector<16x32xf32>,
    %c536 = arith.constant 536 : index
    %c0_100 = arith.constant 0 : index
    %308 = vector.load %arg1[%c536, %c0_100] : memref<1296x128xf32, #tpu.memory_space<vmem>>, vector<32x96xf32>
    %c568 = arith.constant 568 : index
    %c0_101 = arith.constant 0 : index
    %309 = vector.load %arg1[%c568, %c0_101] : memref<1296x128xf32, #tpu.memory_space<vmem>>, vector<1x96xf32>
    %cst_102 = arith.constant dense<0.000000e+00> : vector<16x96xf32>
    %310 = tpu.matmul %306, %308, %cst_102 {dimension_numbers = #tpu.dot_dimension_numbers<[1], [0], [0], [1], [0, 0, 1, 1], [], []>} : vector<16x32xf32>, vector<32x96xf32>, vector<16x96xf32> -> vector<16x96xf32>
    %311 = vector.broadcast %309 : vector<1x96xf32> to vector<16x96xf32>
    %312 = arith.addf %310, %311 : vector<16x96xf32>
    %313 = vector.extract_strided_slice %312 {offsets = [0, 0], sizes = [16, 32], strides = [1, 1]} : vector<16x96xf32> to vector<16x32xf32>
    %314 = vector.extract_strided_slice %312 {offsets = [0, 32], sizes = [16, 32], strides = [1, 1]} : vector<16x96xf32> to vector<16x32xf32>
    %315 = vector.extract_strided_slice %312 {offsets = [0, 64], sizes = [16, 32], strides = [1, 1]} : vector<16x96xf32> to vector<16x32xf32>
    %c576 = arith.constant 576 : index
    %c0_103 = arith.constant 0 : index
    %316 = vector.load %arg1[%c576, %c0_103] : memref<1296x128xf32, #tpu.memory_space<vmem>>, vector<32x32xf32>
    %c608 = arith.constant 608 : index
    %c0_104 = arith.constant 0 : index
    %317 = vector.load %arg1[%c608, %c0_104] : memref<1296x128xf32, #tpu.memory_space<vmem>>, vector<1x32xf32>
    %318 = vector.extract_strided_slice %313 {offsets = [0, 0], sizes = [16, 8], strides = [1, 1]} : vector<16x32xf32> to vector<16x8xf32>
    %319 = vector.extract_strided_slice %314 {offsets = [0, 0], sizes = [16, 8], strides = [1, 1]} : vector<16x32xf32> to vector<16x8xf32>
    %cst_105 = arith.constant dense<0.000000e+00> : vector<16x16xf32>
    %320 = tpu.matmul %318, %319, %cst_105 {dimension_numbers = #tpu.dot_dimension_numbers<[1], [1], [0], [0], [0, 0, 1, 0], [], []>} : vector<16x8xf32>, vector<16x8xf32>, vector<16x16xf32> -> vector<16x16xf32>
    %321 = arith.addf %320, %0 : vector<16x16xf32>
    %cst_106 = arith.constant dense<0xFF800000> : vector<16xf32>
    %322 = vector.multi_reduction <maximumf>, %321, %cst_106 [1] : vector<16x16xf32> to vector<16xf32>
    %323 = vector.shape_cast %322 : vector<16xf32> to vector<16x1xf32>
    %324 = vector.broadcast %323 : vector<16x1xf32> to vector<16x16xf32>
    %325 = arith.subf %321, %324 : vector<16x16xf32>
    %326 = math.exp %325 : vector<16x16xf32>
    %cst_107 = arith.constant dense<0.000000e+00> : vector<16xf32>
    %327 = vector.multi_reduction <add>, %326, %cst_107 [1] : vector<16x16xf32> to vector<16xf32>
    %328 = vector.shape_cast %327 : vector<16xf32> to vector<16x1xf32>
    %329 = tpu.reciprocal %328 {approx = true} : vector<16x1xf32> -> vector<16x1xf32>
    %330 = vector.broadcast %329 : vector<16x1xf32> to vector<16x16xf32>
    %331 = arith.mulf %326, %330 : vector<16x16xf32>
    %332 = vector.extract_strided_slice %315 {offsets = [0, 0], sizes = [16, 8], strides = [1, 1]} : vector<16x32xf32> to vector<16x8xf32>
    %cst_108 = arith.constant dense<0.000000e+00> : vector<16x8xf32>
    %333 = tpu.matmul %331, %332, %cst_108 {dimension_numbers = #tpu.dot_dimension_numbers<[1], [0], [0], [1], [0, 0, 1, 1], [], []>} : vector<16x16xf32>, vector<16x8xf32>, vector<16x8xf32> -> vector<16x8xf32>
    %334 = vector.extract_strided_slice %316 {offsets = [0, 0], sizes = [8, 32], strides = [1, 1]} : vector<32x32xf32> to vector<8x32xf32>
    %cst_109 = arith.constant dense<0.000000e+00> : vector<16x32xf32>
    %335 = tpu.matmul %333, %334, %cst_109 {dimension_numbers = #tpu.dot_dimension_numbers<[1], [0], [0], [1], [0, 0, 1, 1], [], []>} : vector<16x8xf32>, vector<8x32xf32>, vector<16x32xf32> -> vector<16x32xf32>
    %336 = vector.broadcast %317 : vector<1x32xf32> to vector<16x32xf32>
    %337 = arith.addf %336, %335 : vector<16x32xf32>
    %338 = vector.extract_strided_slice %313 {offsets = [0, 8], sizes = [16, 8], strides = [1, 1]} : vector<16x32xf32> to vector<16x8xf32>
    %339 = vector.extract_strided_slice %314 {offsets = [0, 8], sizes = [16, 8], strides = [1, 1]} : vector<16x32xf32> to vector<16x8xf32>
    %cst_110 = arith.constant dense<0.000000e+00> : vector<16x16xf32>
    %340 = tpu.matmul %338, %339, %cst_110 {dimension_numbers = #tpu.dot_dimension_numbers<[1], [1], [0], [0], [0, 0, 1, 0], [], []>} : vector<16x8xf32>, vector<16x8xf32>, vector<16x16xf32> -> vector<16x16xf32>
    %341 = arith.addf %340, %0 : vector<16x16xf32>
    %cst_111 = arith.constant dense<0xFF800000> : vector<16xf32>
    %342 = vector.multi_reduction <maximumf>, %341, %cst_111 [1] : vector<16x16xf32> to vector<16xf32>
    %343 = vector.shape_cast %342 : vector<16xf32> to vector<16x1xf32>
    %344 = vector.broadcast %343 : vector<16x1xf32> to vector<16x16xf32>
    %345 = arith.subf %341, %344 : vector<16x16xf32>
    %346 = math.exp %345 : vector<16x16xf32>
    %cst_112 = arith.constant dense<0.000000e+00> : vector<16xf32>
    %347 = vector.multi_reduction <add>, %346, %cst_112 [1] : vector<16x16xf32> to vector<16xf32>
    %348 = vector.shape_cast %347 : vector<16xf32> to vector<16x1xf32>
    %349 = tpu.reciprocal %348 {approx = true} : vector<16x1xf32> -> vector<16x1xf32>
    %350 = vector.broadcast %349 : vector<16x1xf32> to vector<16x16xf32>
    %351 = arith.mulf %346, %350 : vector<16x16xf32>
    %352 = vector.extract_strided_slice %315 {offsets = [0, 8], sizes = [16, 8], strides = [1, 1]} : vector<16x32xf32> to vector<16x8xf32>
    %cst_113 = arith.constant dense<0.000000e+00> : vector<16x8xf32>
    %353 = tpu.matmul %351, %352, %cst_113 {dimension_numbers = #tpu.dot_dimension_numbers<[1], [0], [0], [1], [0, 0, 1, 1], [], []>} : vector<16x16xf32>, vector<16x8xf32>, vector<16x8xf32> -> vector<16x8xf32>
    %354 = vector.extract_strided_slice %316 {offsets = [8, 0], sizes = [8, 32], strides = [1, 1]} : vector<32x32xf32> to vector<8x32xf32>
    %cst_114 = arith.constant dense<0.000000e+00> : vector<16x32xf32>
    %355 = tpu.matmul %353, %354, %cst_114 {dimension_numbers = #tpu.dot_dimension_numbers<[1], [0], [0], [1], [0, 0, 1, 1], [], []>} : vector<16x8xf32>, vector<8x32xf32>, vector<16x32xf32> -> vector<16x32xf32>
    %356 = arith.addf %337, %355 : vector<16x32xf32>
    %357 = vector.extract_strided_slice %313 {offsets = [0, 16], sizes = [16, 8], strides = [1, 1]} : vector<16x32xf32> to vector<16x8xf32>
    %358 = vector.extract_strided_slice %314 {offsets = [0, 16], sizes = [16, 8], strides = [1, 1]} : vector<16x32xf32> to vector<16x8xf32>
    %cst_115 = arith.constant dense<0.000000e+00> : vector<16x16xf32>
    %359 = tpu.matmul %357, %358, %cst_115 {dimension_numbers = #tpu.dot_dimension_numbers<[1], [1], [0], [0], [0, 0, 1, 0], [], []>} : vector<16x8xf32>, vector<16x8xf32>, vector<16x16xf32> -> vector<16x16xf32>
    %360 = arith.addf %359, %0 : vector<16x16xf32>
    %cst_116 = arith.constant dense<0xFF800000> : vector<16xf32>
    %361 = vector.multi_reduction <maximumf>, %360, %cst_116 [1] : vector<16x16xf32> to vector<16xf32>
    %362 = vector.shape_cast %361 : vector<16xf32> to vector<16x1xf32>
    %363 = vector.broadcast %362 : vector<16x1xf32> to vector<16x16xf32>
    %364 = arith.subf %360, %363 : vector<16x16xf32>
    %365 = math.exp %364 : vector<16x16xf32>
    %cst_117 = arith.constant dense<0.000000e+00> : vector<16xf32>
    %366 = vector.multi_reduction <add>, %365, %cst_117 [1] : vector<16x16xf32> to vector<16xf32>
    %367 = vector.shape_cast %366 : vector<16xf32> to vector<16x1xf32>
    %368 = tpu.reciprocal %367 {approx = true} : vector<16x1xf32> -> vector<16x1xf32>
    %369 = vector.broadcast %368 : vector<16x1xf32> to vector<16x16xf32>
    %370 = arith.mulf %365, %369 : vector<16x16xf32>
    %371 = vector.extract_strided_slice %315 {offsets = [0, 16], sizes = [16, 8], strides = [1, 1]} : vector<16x32xf32> to vector<16x8xf32>
    %cst_118 = arith.constant dense<0.000000e+00> : vector<16x8xf32>
    %372 = tpu.matmul %370, %371, %cst_118 {dimension_numbers = #tpu.dot_dimension_numbers<[1], [0], [0], [1], [0, 0, 1, 1], [], []>} : vector<16x16xf32>, vector<16x8xf32>, vector<16x8xf32> -> vector<16x8xf32>
    %373 = vector.extract_strided_slice %316 {offsets = [16, 0], sizes = [8, 32], strides = [1, 1]} : vector<32x32xf32> to vector<8x32xf32>
    %cst_119 = arith.constant dense<0.000000e+00> : vector<16x32xf32>
    %374 = tpu.matmul %372, %373, %cst_119 {dimension_numbers = #tpu.dot_dimension_numbers<[1], [0], [0], [1], [0, 0, 1, 1], [], []>} : vector<16x8xf32>, vector<8x32xf32>, vector<16x32xf32> -> vector<16x32xf32>
    %375 = arith.addf %356, %374 : vector<16x32xf32>
    %376 = vector.extract_strided_slice %313 {offsets = [0, 24], sizes = [16, 8], strides = [1, 1]} : vector<16x32xf32> to vector<16x8xf32>
    %377 = vector.extract_strided_slice %314 {offsets = [0, 24], sizes = [16, 8], strides = [1, 1]} : vector<16x32xf32> to vector<16x8xf32>
    %cst_120 = arith.constant dense<0.000000e+00> : vector<16x16xf32>
    %378 = tpu.matmul %376, %377, %cst_120 {dimension_numbers = #tpu.dot_dimension_numbers<[1], [1], [0], [0], [0, 0, 1, 0], [], []>} : vector<16x8xf32>, vector<16x8xf32>, vector<16x16xf32> -> vector<16x16xf32>
    %379 = arith.addf %378, %0 : vector<16x16xf32>
    %cst_121 = arith.constant dense<0xFF800000> : vector<16xf32>
    %380 = vector.multi_reduction <maximumf>, %379, %cst_121 [1] : vector<16x16xf32> to vector<16xf32>
    %381 = vector.shape_cast %380 : vector<16xf32> to vector<16x1xf32>
    %382 = vector.broadcast %381 : vector<16x1xf32> to vector<16x16xf32>
    %383 = arith.subf %379, %382 : vector<16x16xf32>
    %384 = math.exp %383 : vector<16x16xf32>
    %cst_122 = arith.constant dense<0.000000e+00> : vector<16xf32>
    %385 = vector.multi_reduction <add>, %384, %cst_122 [1] : vector<16x16xf32> to vector<16xf32>
    %386 = vector.shape_cast %385 : vector<16xf32> to vector<16x1xf32>
    %387 = tpu.reciprocal %386 {approx = true} : vector<16x1xf32> -> vector<16x1xf32>
    %388 = vector.broadcast %387 : vector<16x1xf32> to vector<16x16xf32>
    %389 = arith.mulf %384, %388 : vector<16x16xf32>
    %390 = vector.extract_strided_slice %315 {offsets = [0, 24], sizes = [16, 8], strides = [1, 1]} : vector<16x32xf32> to vector<16x8xf32>
    %cst_123 = arith.constant dense<0.000000e+00> : vector<16x8xf32>
    %391 = tpu.matmul %389, %390, %cst_123 {dimension_numbers = #tpu.dot_dimension_numbers<[1], [0], [0], [1], [0, 0, 1, 1], [], []>} : vector<16x16xf32>, vector<16x8xf32>, vector<16x8xf32> -> vector<16x8xf32>
    %392 = vector.extract_strided_slice %316 {offsets = [24, 0], sizes = [8, 32], strides = [1, 1]} : vector<32x32xf32> to vector<8x32xf32>
    %cst_124 = arith.constant dense<0.000000e+00> : vector<16x32xf32>
    %393 = tpu.matmul %391, %392, %cst_124 {dimension_numbers = #tpu.dot_dimension_numbers<[1], [0], [0], [1], [0, 0, 1, 1], [], []>} : vector<16x8xf32>, vector<8x32xf32>, vector<16x32xf32> -> vector<16x32xf32>
    %394 = arith.addf %375, %393 : vector<16x32xf32>
    %395 = arith.addf %306, %394 : vector<16x32xf32>
    %c736 = arith.constant 736 : index
    %c0_125 = arith.constant 0 : index
    %396 = vector.load %arg1[%c736, %c0_125] : memref<1296x128xf32, #tpu.memory_space<vmem>>, vector<1x32xf32>
    %c744 = arith.constant 744 : index
    %c0_126 = arith.constant 0 : index
    %397 = vector.load %arg1[%c744, %c0_126] : memref<1296x128xf32, #tpu.memory_space<vmem>>, vector<1x32xf32>
    %cst_127 = arith.constant dense<0.000000e+00> : vector<16xf32>
    %398 = vector.multi_reduction <add>, %395, %cst_127 [1] : vector<16x32xf32> to vector<16xf32>
    %399 = vector.shape_cast %398 : vector<16xf32> to vector<16x1xf32>
    %cst_128 = arith.constant 3.200000e+01 : f32
    %400 = vector.broadcast %cst_128 : f32 to vector<16x1xf32>
    %401 = arith.divf %399, %400 : vector<16x1xf32>
    %402 = vector.broadcast %401 : vector<16x1xf32> to vector<16x32xf32>
    %403 = arith.subf %395, %402 : vector<16x32xf32>
    %404 = arith.mulf %403, %403 : vector<16x32xf32>
    %cst_129 = arith.constant dense<0.000000e+00> : vector<16xf32>
    %405 = vector.multi_reduction <add>, %404, %cst_129 [1] : vector<16x32xf32> to vector<16xf32>
    %406 = vector.shape_cast %405 : vector<16xf32> to vector<16x1xf32>
    %cst_130 = arith.constant 3.200000e+01 : f32
    %407 = vector.broadcast %cst_130 : f32 to vector<16x1xf32>
    %408 = arith.divf %406, %407 : vector<16x1xf32>
    %409 = vector.broadcast %401 : vector<16x1xf32> to vector<16x32xf32>
    %410 = arith.subf %395, %409 : vector<16x32xf32>
    %cst_131 = arith.constant 9.99999974E-6 : f32
    %411 = vector.broadcast %cst_131 : f32 to vector<16x1xf32>
    %412 = arith.addf %408, %411 : vector<16x1xf32>
    %413 = math.rsqrt %412 : vector<16x1xf32>
    %414 = vector.broadcast %413 : vector<16x1xf32> to vector<16x32xf32>
    %415 = arith.mulf %410, %414 : vector<16x32xf32>
    %416 = vector.broadcast %396 : vector<1x32xf32> to vector<16x32xf32>
    %417 = arith.mulf %415, %416 : vector<16x32xf32>
    %418 = vector.broadcast %397 : vector<1x32xf32> to vector<16x32xf32>
    %419 = arith.addf %417, %418 : vector<16x32xf32>
    %c616 = arith.constant 616 : index
    %c0_132 = arith.constant 0 : index
    %420 = vector.load %arg1[%c616, %c0_132] : memref<1296x128xf32, #tpu.memory_space<vmem>>, vector<32x32xf32>
    %c648 = arith.constant 648 : index
    %c0_133 = arith.constant 0 : index
    %421 = vector.load %arg1[%c648, %c0_133] : memref<1296x128xf32, #tpu.memory_space<vmem>>, vector<1x32xf32>
    %cst_134 = arith.constant dense<0.000000e+00> : vector<16x32xf32>
    %422 = tpu.matmul %419, %420, %cst_134 {dimension_numbers = #tpu.dot_dimension_numbers<[1], [0], [0], [1], [0, 0, 1, 1], [], []>} : vector<16x32xf32>, vector<32x32xf32>, vector<16x32xf32> -> vector<16x32xf32>
    %423 = vector.broadcast %421 : vector<1x32xf32> to vector<16x32xf32>
    %424 = arith.addf %422, %423 : vector<16x32xf32>
    %c656 = arith.constant 656 : index
    %c0_135 = arith.constant 0 : index
    %425 = vector.load %arg1[%c656, %c0_135] : memref<1296x128xf32, #tpu.memory_space<vmem>>, vector<32x64xf32>
    %c688 = arith.constant 688 : index
    %c0_136 = arith.constant 0 : index
    %426 = vector.load %arg1[%c688, %c0_136] : memref<1296x128xf32, #tpu.memory_space<vmem>>, vector<1x64xf32>
    %cst_137 = arith.constant dense<0.000000e+00> : vector<16x64xf32>
    %427 = tpu.matmul %306, %425, %cst_137 {dimension_numbers = #tpu.dot_dimension_numbers<[1], [0], [0], [1], [0, 0, 1, 1], [], []>} : vector<16x32xf32>, vector<32x64xf32>, vector<16x64xf32> -> vector<16x64xf32>
    %428 = vector.broadcast %426 : vector<1x64xf32> to vector<16x64xf32>
    %429 = arith.addf %427, %428 : vector<16x64xf32>
    %430 = vector.extract_strided_slice %429 {offsets = [0, 0], sizes = [16, 32], strides = [1, 1]} : vector<16x64xf32> to vector<16x32xf32>
    %431 = vector.extract_strided_slice %429 {offsets = [0, 32], sizes = [16, 32], strides = [1, 1]} : vector<16x64xf32> to vector<16x32xf32>
    %c696 = arith.constant 696 : index
    %c0_138 = arith.constant 0 : index
    %432 = vector.load %arg1[%c696, %c0_138] : memref<1296x128xf32, #tpu.memory_space<vmem>>, vector<32x32xf32>
    %c728 = arith.constant 728 : index
    %c0_139 = arith.constant 0 : index
    %433 = vector.load %arg1[%c728, %c0_139] : memref<1296x128xf32, #tpu.memory_space<vmem>>, vector<1x32xf32>
    %434 = vector.extract_strided_slice %424 {offsets = [0, 0], sizes = [16, 8], strides = [1, 1]} : vector<16x32xf32> to vector<16x8xf32>
    %435 = vector.extract_strided_slice %430 {offsets = [0, 0], sizes = [16, 8], strides = [1, 1]} : vector<16x32xf32> to vector<16x8xf32>
    %cst_140 = arith.constant dense<0.000000e+00> : vector<16x16xf32>
    %436 = tpu.matmul %434, %435, %cst_140 {dimension_numbers = #tpu.dot_dimension_numbers<[1], [1], [0], [0], [0, 0, 1, 0], [], []>} : vector<16x8xf32>, vector<16x8xf32>, vector<16x16xf32> -> vector<16x16xf32>
    %437 = arith.addf %436, %0 : vector<16x16xf32>
    %cst_141 = arith.constant dense<0xFF800000> : vector<16xf32>
    %438 = vector.multi_reduction <maximumf>, %437, %cst_141 [1] : vector<16x16xf32> to vector<16xf32>
    %439 = vector.shape_cast %438 : vector<16xf32> to vector<16x1xf32>
    %440 = vector.broadcast %439 : vector<16x1xf32> to vector<16x16xf32>
    %441 = arith.subf %437, %440 : vector<16x16xf32>
    %442 = math.exp %441 : vector<16x16xf32>
    %cst_142 = arith.constant dense<0.000000e+00> : vector<16xf32>
    %443 = vector.multi_reduction <add>, %442, %cst_142 [1] : vector<16x16xf32> to vector<16xf32>
    %444 = vector.shape_cast %443 : vector<16xf32> to vector<16x1xf32>
    %445 = tpu.reciprocal %444 {approx = true} : vector<16x1xf32> -> vector<16x1xf32>
    %446 = vector.broadcast %445 : vector<16x1xf32> to vector<16x16xf32>
    %447 = arith.mulf %442, %446 : vector<16x16xf32>
    %448 = vector.extract_strided_slice %431 {offsets = [0, 0], sizes = [16, 8], strides = [1, 1]} : vector<16x32xf32> to vector<16x8xf32>
    %cst_143 = arith.constant dense<0.000000e+00> : vector<16x8xf32>
    %449 = tpu.matmul %447, %448, %cst_143 {dimension_numbers = #tpu.dot_dimension_numbers<[1], [0], [0], [1], [0, 0, 1, 1], [], []>} : vector<16x16xf32>, vector<16x8xf32>, vector<16x8xf32> -> vector<16x8xf32>
    %450 = vector.extract_strided_slice %432 {offsets = [0, 0], sizes = [8, 32], strides = [1, 1]} : vector<32x32xf32> to vector<8x32xf32>
    %cst_144 = arith.constant dense<0.000000e+00> : vector<16x32xf32>
    %451 = tpu.matmul %449, %450, %cst_144 {dimension_numbers = #tpu.dot_dimension_numbers<[1], [0], [0], [1], [0, 0, 1, 1], [], []>} : vector<16x8xf32>, vector<8x32xf32>, vector<16x32xf32> -> vector<16x32xf32>
    %452 = vector.broadcast %433 : vector<1x32xf32> to vector<16x32xf32>
    %453 = arith.addf %452, %451 : vector<16x32xf32>
    %454 = vector.extract_strided_slice %424 {offsets = [0, 8], sizes = [16, 8], strides = [1, 1]} : vector<16x32xf32> to vector<16x8xf32>
    %455 = vector.extract_strided_slice %430 {offsets = [0, 8], sizes = [16, 8], strides = [1, 1]} : vector<16x32xf32> to vector<16x8xf32>
    %cst_145 = arith.constant dense<0.000000e+00> : vector<16x16xf32>
    %456 = tpu.matmul %454, %455, %cst_145 {dimension_numbers = #tpu.dot_dimension_numbers<[1], [1], [0], [0], [0, 0, 1, 0], [], []>} : vector<16x8xf32>, vector<16x8xf32>, vector<16x16xf32> -> vector<16x16xf32>
    %457 = arith.addf %456, %0 : vector<16x16xf32>
    %cst_146 = arith.constant dense<0xFF800000> : vector<16xf32>
    %458 = vector.multi_reduction <maximumf>, %457, %cst_146 [1] : vector<16x16xf32> to vector<16xf32>
    %459 = vector.shape_cast %458 : vector<16xf32> to vector<16x1xf32>
    %460 = vector.broadcast %459 : vector<16x1xf32> to vector<16x16xf32>
    %461 = arith.subf %457, %460 : vector<16x16xf32>
    %462 = math.exp %461 : vector<16x16xf32>
    %cst_147 = arith.constant dense<0.000000e+00> : vector<16xf32>
    %463 = vector.multi_reduction <add>, %462, %cst_147 [1] : vector<16x16xf32> to vector<16xf32>
    %464 = vector.shape_cast %463 : vector<16xf32> to vector<16x1xf32>
    %465 = tpu.reciprocal %464 {approx = true} : vector<16x1xf32> -> vector<16x1xf32>
    %466 = vector.broadcast %465 : vector<16x1xf32> to vector<16x16xf32>
    %467 = arith.mulf %462, %466 : vector<16x16xf32>
    %468 = vector.extract_strided_slice %431 {offsets = [0, 8], sizes = [16, 8], strides = [1, 1]} : vector<16x32xf32> to vector<16x8xf32>
    %cst_148 = arith.constant dense<0.000000e+00> : vector<16x8xf32>
    %469 = tpu.matmul %467, %468, %cst_148 {dimension_numbers = #tpu.dot_dimension_numbers<[1], [0], [0], [1], [0, 0, 1, 1], [], []>} : vector<16x16xf32>, vector<16x8xf32>, vector<16x8xf32> -> vector<16x8xf32>
    %470 = vector.extract_strided_slice %432 {offsets = [8, 0], sizes = [8, 32], strides = [1, 1]} : vector<32x32xf32> to vector<8x32xf32>
    %cst_149 = arith.constant dense<0.000000e+00> : vector<16x32xf32>
    %471 = tpu.matmul %469, %470, %cst_149 {dimension_numbers = #tpu.dot_dimension_numbers<[1], [0], [0], [1], [0, 0, 1, 1], [], []>} : vector<16x8xf32>, vector<8x32xf32>, vector<16x32xf32> -> vector<16x32xf32>
    %472 = arith.addf %453, %471 : vector<16x32xf32>
    %473 = vector.extract_strided_slice %424 {offsets = [0, 16], sizes = [16, 8], strides = [1, 1]} : vector<16x32xf32> to vector<16x8xf32>
    %474 = vector.extract_strided_slice %430 {offsets = [0, 16], sizes = [16, 8], strides = [1, 1]} : vector<16x32xf32> to vector<16x8xf32>
    %cst_150 = arith.constant dense<0.000000e+00> : vector<16x16xf32>
    %475 = tpu.matmul %473, %474, %cst_150 {dimension_numbers = #tpu.dot_dimension_numbers<[1], [1], [0], [0], [0, 0, 1, 0], [], []>} : vector<16x8xf32>, vector<16x8xf32>, vector<16x16xf32> -> vector<16x16xf32>
    %476 = arith.addf %475, %0 : vector<16x16xf32>
    %cst_151 = arith.constant dense<0xFF800000> : vector<16xf32>
    %477 = vector.multi_reduction <maximumf>, %476, %cst_151 [1] : vector<16x16xf32> to vector<16xf32>
    %478 = vector.shape_cast %477 : vector<16xf32> to vector<16x1xf32>
    %479 = vector.broadcast %478 : vector<16x1xf32> to vector<16x16xf32>
    %480 = arith.subf %476, %479 : vector<16x16xf32>
    %481 = math.exp %480 : vector<16x16xf32>
    %cst_152 = arith.constant dense<0.000000e+00> : vector<16xf32>
    %482 = vector.multi_reduction <add>, %481, %cst_152 [1] : vector<16x16xf32> to vector<16xf32>
    %483 = vector.shape_cast %482 : vector<16xf32> to vector<16x1xf32>
    %484 = tpu.reciprocal %483 {approx = true} : vector<16x1xf32> -> vector<16x1xf32>
    %485 = vector.broadcast %484 : vector<16x1xf32> to vector<16x16xf32>
    %486 = arith.mulf %481, %485 : vector<16x16xf32>
    %487 = vector.extract_strided_slice %431 {offsets = [0, 16], sizes = [16, 8], strides = [1, 1]} : vector<16x32xf32> to vector<16x8xf32>
    %cst_153 = arith.constant dense<0.000000e+00> : vector<16x8xf32>
    %488 = tpu.matmul %486, %487, %cst_153 {dimension_numbers = #tpu.dot_dimension_numbers<[1], [0], [0], [1], [0, 0, 1, 1], [], []>} : vector<16x16xf32>, vector<16x8xf32>, vector<16x8xf32> -> vector<16x8xf32>
    %489 = vector.extract_strided_slice %432 {offsets = [16, 0], sizes = [8, 32], strides = [1, 1]} : vector<32x32xf32> to vector<8x32xf32>
    %cst_154 = arith.constant dense<0.000000e+00> : vector<16x32xf32>
    %490 = tpu.matmul %488, %489, %cst_154 {dimension_numbers = #tpu.dot_dimension_numbers<[1], [0], [0], [1], [0, 0, 1, 1], [], []>} : vector<16x8xf32>, vector<8x32xf32>, vector<16x32xf32> -> vector<16x32xf32>
    %491 = arith.addf %472, %490 : vector<16x32xf32>
    %492 = vector.extract_strided_slice %424 {offsets = [0, 24], sizes = [16, 8], strides = [1, 1]} : vector<16x32xf32> to vector<16x8xf32>
    %493 = vector.extract_strided_slice %430 {offsets = [0, 24], sizes = [16, 8], strides = [1, 1]} : vector<16x32xf32> to vector<16x8xf32>
    %cst_155 = arith.constant dense<0.000000e+00> : vector<16x16xf32>
    %494 = tpu.matmul %492, %493, %cst_155 {dimension_numbers = #tpu.dot_dimension_numbers<[1], [1], [0], [0], [0, 0, 1, 0], [], []>} : vector<16x8xf32>, vector<16x8xf32>, vector<16x16xf32> -> vector<16x16xf32>
    %495 = arith.addf %494, %0 : vector<16x16xf32>
    %cst_156 = arith.constant dense<0xFF800000> : vector<16xf32>
    %496 = vector.multi_reduction <maximumf>, %495, %cst_156 [1] : vector<16x16xf32> to vector<16xf32>
    %497 = vector.shape_cast %496 : vector<16xf32> to vector<16x1xf32>
    %498 = vector.broadcast %497 : vector<16x1xf32> to vector<16x16xf32>
    %499 = arith.subf %495, %498 : vector<16x16xf32>
    %500 = math.exp %499 : vector<16x16xf32>
    %cst_157 = arith.constant dense<0.000000e+00> : vector<16xf32>
    %501 = vector.multi_reduction <add>, %500, %cst_157 [1] : vector<16x16xf32> to vector<16xf32>
    %502 = vector.shape_cast %501 : vector<16xf32> to vector<16x1xf32>
    %503 = tpu.reciprocal %502 {approx = true} : vector<16x1xf32> -> vector<16x1xf32>
    %504 = vector.broadcast %503 : vector<16x1xf32> to vector<16x16xf32>
    %505 = arith.mulf %500, %504 : vector<16x16xf32>
    %506 = vector.extract_strided_slice %431 {offsets = [0, 24], sizes = [16, 8], strides = [1, 1]} : vector<16x32xf32> to vector<16x8xf32>
    %cst_158 = arith.constant dense<0.000000e+00> : vector<16x8xf32>
    %507 = tpu.matmul %505, %506, %cst_158 {dimension_numbers = #tpu.dot_dimension_numbers<[1], [0], [0], [1], [0, 0, 1, 1], [], []>} : vector<16x16xf32>, vector<16x8xf32>, vector<16x8xf32> -> vector<16x8xf32>
    %508 = vector.extract_strided_slice %432 {offsets = [24, 0], sizes = [8, 32], strides = [1, 1]} : vector<32x32xf32> to vector<8x32xf32>
    %cst_159 = arith.constant dense<0.000000e+00> : vector<16x32xf32>
    %509 = tpu.matmul %507, %508, %cst_159 {dimension_numbers = #tpu.dot_dimension_numbers<[1], [0], [0], [1], [0, 0, 1, 1], [], []>} : vector<16x8xf32>, vector<8x32xf32>, vector<16x32xf32> -> vector<16x32xf32>
    %510 = arith.addf %491, %509 : vector<16x32xf32>
    %511 = arith.addf %419, %510 : vector<16x32xf32>
    %c752 = arith.constant 752 : index
    %c0_160 = arith.constant 0 : index
    %512 = vector.load %arg1[%c752, %c0_160] : memref<1296x128xf32, #tpu.memory_space<vmem>>, vector<1x32xf32>
    %c760 = arith.constant 760 : index
    %c0_161 = arith.constant 0 : index
    %513 = vector.load %arg1[%c760, %c0_161] : memref<1296x128xf32, #tpu.memory_space<vmem>>, vector<1x32xf32>
    %cst_162 = arith.constant dense<0.000000e+00> : vector<16xf32>
    %514 = vector.multi_reduction <add>, %511, %cst_162 [1] : vector<16x32xf32> to vector<16xf32>
    %515 = vector.shape_cast %514 : vector<16xf32> to vector<16x1xf32>
    %cst_163 = arith.constant 3.200000e+01 : f32
    %516 = vector.broadcast %cst_163 : f32 to vector<16x1xf32>
    %517 = arith.divf %515, %516 : vector<16x1xf32>
    %518 = vector.broadcast %517 : vector<16x1xf32> to vector<16x32xf32>
    %519 = arith.subf %511, %518 : vector<16x32xf32>
    %520 = arith.mulf %519, %519 : vector<16x32xf32>
    %cst_164 = arith.constant dense<0.000000e+00> : vector<16xf32>
    %521 = vector.multi_reduction <add>, %520, %cst_164 [1] : vector<16x32xf32> to vector<16xf32>
    %522 = vector.shape_cast %521 : vector<16xf32> to vector<16x1xf32>
    %cst_165 = arith.constant 3.200000e+01 : f32
    %523 = vector.broadcast %cst_165 : f32 to vector<16x1xf32>
    %524 = arith.divf %522, %523 : vector<16x1xf32>
    %525 = vector.broadcast %517 : vector<16x1xf32> to vector<16x32xf32>
    %526 = arith.subf %511, %525 : vector<16x32xf32>
    %cst_166 = arith.constant 9.99999974E-6 : f32
    %527 = vector.broadcast %cst_166 : f32 to vector<16x1xf32>
    %528 = arith.addf %524, %527 : vector<16x1xf32>
    %529 = math.rsqrt %528 : vector<16x1xf32>
    %530 = vector.broadcast %529 : vector<16x1xf32> to vector<16x32xf32>
    %531 = arith.mulf %526, %530 : vector<16x32xf32>
    %532 = vector.broadcast %512 : vector<1x32xf32> to vector<16x32xf32>
    %533 = arith.mulf %531, %532 : vector<16x32xf32>
    %534 = vector.broadcast %513 : vector<1x32xf32> to vector<16x32xf32>
    %535 = arith.addf %533, %534 : vector<16x32xf32>
    %c768 = arith.constant 768 : index
    %c0_167 = arith.constant 0 : index
    %536 = vector.load %arg1[%c768, %c0_167] : memref<1296x128xf32, #tpu.memory_space<vmem>>, vector<32x64xf32>
    %c800 = arith.constant 800 : index
    %c0_168 = arith.constant 0 : index
    %537 = vector.load %arg1[%c800, %c0_168] : memref<1296x128xf32, #tpu.memory_space<vmem>>, vector<1x64xf32>
    %cst_169 = arith.constant dense<0.000000e+00> : vector<16x64xf32>
    %538 = tpu.matmul %535, %536, %cst_169 {dimension_numbers = #tpu.dot_dimension_numbers<[1], [0], [0], [1], [0, 0, 1, 1], [], []>} : vector<16x32xf32>, vector<32x64xf32>, vector<16x64xf32> -> vector<16x64xf32>
    %539 = vector.broadcast %537 : vector<1x64xf32> to vector<16x64xf32>
    %540 = arith.addf %538, %539 : vector<16x64xf32>
    %cst_170 = arith.constant 0.000000e+00 : f32
    %541 = vector.broadcast %cst_170 : f32 to vector<16x64xf32>
    %542 = arith.maximumf %540, %541 : vector<16x64xf32>
    %c808 = arith.constant 808 : index
    %c0_171 = arith.constant 0 : index
    %543 = vector.load %arg1[%c808, %c0_171] : memref<1296x128xf32, #tpu.memory_space<vmem>>, vector<64x32xf32>
    %c872 = arith.constant 872 : index
    %c0_172 = arith.constant 0 : index
    %544 = vector.load %arg1[%c872, %c0_172] : memref<1296x128xf32, #tpu.memory_space<vmem>>, vector<1x32xf32>
    %cst_173 = arith.constant dense<0.000000e+00> : vector<16x32xf32>
    %545 = tpu.matmul %542, %543, %cst_173 {dimension_numbers = #tpu.dot_dimension_numbers<[1], [0], [0], [1], [0, 0, 1, 1], [], []>} : vector<16x64xf32>, vector<64x32xf32>, vector<16x32xf32> -> vector<16x32xf32>
    %546 = vector.broadcast %544 : vector<1x32xf32> to vector<16x32xf32>
    %547 = arith.addf %545, %546 : vector<16x32xf32>
    %548 = arith.addf %535, %547 : vector<16x32xf32>
    %c880 = arith.constant 880 : index
    %c0_174 = arith.constant 0 : index
    %549 = vector.load %arg1[%c880, %c0_174] : memref<1296x128xf32, #tpu.memory_space<vmem>>, vector<1x32xf32>
    %c888 = arith.constant 888 : index
    %c0_175 = arith.constant 0 : index
    %550 = vector.load %arg1[%c888, %c0_175] : memref<1296x128xf32, #tpu.memory_space<vmem>>, vector<1x32xf32>
    %cst_176 = arith.constant dense<0.000000e+00> : vector<16xf32>
    %551 = vector.multi_reduction <add>, %548, %cst_176 [1] : vector<16x32xf32> to vector<16xf32>
    %552 = vector.shape_cast %551 : vector<16xf32> to vector<16x1xf32>
    %cst_177 = arith.constant 3.200000e+01 : f32
    %553 = vector.broadcast %cst_177 : f32 to vector<16x1xf32>
    %554 = arith.divf %552, %553 : vector<16x1xf32>
    %555 = vector.broadcast %554 : vector<16x1xf32> to vector<16x32xf32>
    %556 = arith.subf %548, %555 : vector<16x32xf32>
    %557 = arith.mulf %556, %556 : vector<16x32xf32>
    %cst_178 = arith.constant dense<0.000000e+00> : vector<16xf32>
    %558 = vector.multi_reduction <add>, %557, %cst_178 [1] : vector<16x32xf32> to vector<16xf32>
    %559 = vector.shape_cast %558 : vector<16xf32> to vector<16x1xf32>
    %cst_179 = arith.constant 3.200000e+01 : f32
    %560 = vector.broadcast %cst_179 : f32 to vector<16x1xf32>
    %561 = arith.divf %559, %560 : vector<16x1xf32>
    %562 = vector.broadcast %554 : vector<16x1xf32> to vector<16x32xf32>
    %563 = arith.subf %548, %562 : vector<16x32xf32>
    %cst_180 = arith.constant 9.99999974E-6 : f32
    %564 = vector.broadcast %cst_180 : f32 to vector<16x1xf32>
    %565 = arith.addf %561, %564 : vector<16x1xf32>
    %566 = math.rsqrt %565 : vector<16x1xf32>
    %567 = vector.broadcast %566 : vector<16x1xf32> to vector<16x32xf32>
    %568 = arith.mulf %563, %567 : vector<16x32xf32>
    %569 = vector.broadcast %549 : vector<1x32xf32> to vector<16x32xf32>
    %570 = arith.mulf %568, %569 : vector<16x32xf32>
    %571 = vector.broadcast %550 : vector<1x32xf32> to vector<16x32xf32>
    %572 = arith.addf %570, %571 : vector<16x32xf32>
    %c896 = arith.constant 896 : index
    %c0_181 = arith.constant 0 : index
    %573 = vector.load %arg1[%c896, %c0_181] : memref<1296x128xf32, #tpu.memory_space<vmem>>, vector<32x96xf32>
    %c928 = arith.constant 928 : index
    %c0_182 = arith.constant 0 : index
    %574 = vector.load %arg1[%c928, %c0_182] : memref<1296x128xf32, #tpu.memory_space<vmem>>, vector<1x96xf32>
    %cst_183 = arith.constant dense<0.000000e+00> : vector<16x96xf32>
    %575 = tpu.matmul %572, %573, %cst_183 {dimension_numbers = #tpu.dot_dimension_numbers<[1], [0], [0], [1], [0, 0, 1, 1], [], []>} : vector<16x32xf32>, vector<32x96xf32>, vector<16x96xf32> -> vector<16x96xf32>
    %576 = vector.broadcast %574 : vector<1x96xf32> to vector<16x96xf32>
    %577 = arith.addf %575, %576 : vector<16x96xf32>
    %578 = vector.extract_strided_slice %577 {offsets = [0, 0], sizes = [16, 32], strides = [1, 1]} : vector<16x96xf32> to vector<16x32xf32>
    %579 = vector.extract_strided_slice %577 {offsets = [0, 32], sizes = [16, 32], strides = [1, 1]} : vector<16x96xf32> to vector<16x32xf32>
    %580 = vector.extract_strided_slice %577 {offsets = [0, 64], sizes = [16, 32], strides = [1, 1]} : vector<16x96xf32> to vector<16x32xf32>
    %c936 = arith.constant 936 : index
    %c0_184 = arith.constant 0 : index
    %581 = vector.load %arg1[%c936, %c0_184] : memref<1296x128xf32, #tpu.memory_space<vmem>>, vector<32x32xf32>
    %c968 = arith.constant 968 : index
    %c0_185 = arith.constant 0 : index
    %582 = vector.load %arg1[%c968, %c0_185] : memref<1296x128xf32, #tpu.memory_space<vmem>>, vector<1x32xf32>
    %583 = vector.extract_strided_slice %578 {offsets = [0, 0], sizes = [16, 8], strides = [1, 1]} : vector<16x32xf32> to vector<16x8xf32>
    %584 = vector.extract_strided_slice %579 {offsets = [0, 0], sizes = [16, 8], strides = [1, 1]} : vector<16x32xf32> to vector<16x8xf32>
    %cst_186 = arith.constant dense<0.000000e+00> : vector<16x16xf32>
    %585 = tpu.matmul %583, %584, %cst_186 {dimension_numbers = #tpu.dot_dimension_numbers<[1], [1], [0], [0], [0, 0, 1, 0], [], []>} : vector<16x8xf32>, vector<16x8xf32>, vector<16x16xf32> -> vector<16x16xf32>
    %586 = arith.addf %585, %0 : vector<16x16xf32>
    %cst_187 = arith.constant dense<0xFF800000> : vector<16xf32>
    %587 = vector.multi_reduction <maximumf>, %586, %cst_187 [1] : vector<16x16xf32> to vector<16xf32>
    %588 = vector.shape_cast %587 : vector<16xf32> to vector<16x1xf32>
    %589 = vector.broadcast %588 : vector<16x1xf32> to vector<16x16xf32>
    %590 = arith.subf %586, %589 : vector<16x16xf32>
    %591 = math.exp %590 : vector<16x16xf32>
    %cst_188 = arith.constant dense<0.000000e+00> : vector<16xf32>
    %592 = vector.multi_reduction <add>, %591, %cst_188 [1] : vector<16x16xf32> to vector<16xf32>
    %593 = vector.shape_cast %592 : vector<16xf32> to vector<16x1xf32>
    %594 = tpu.reciprocal %593 {approx = true} : vector<16x1xf32> -> vector<16x1xf32>
    %595 = vector.broadcast %594 : vector<16x1xf32> to vector<16x16xf32>
    %596 = arith.mulf %591, %595 : vector<16x16xf32>
    %597 = vector.extract_strided_slice %580 {offsets = [0, 0], sizes = [16, 8], strides = [1, 1]} : vector<16x32xf32> to vector<16x8xf32>
    %cst_189 = arith.constant dense<0.000000e+00> : vector<16x8xf32>
    %598 = tpu.matmul %596, %597, %cst_189 {dimension_numbers = #tpu.dot_dimension_numbers<[1], [0], [0], [1], [0, 0, 1, 1], [], []>} : vector<16x16xf32>, vector<16x8xf32>, vector<16x8xf32> -> vector<16x8xf32>
    %599 = vector.extract_strided_slice %581 {offsets = [0, 0], sizes = [8, 32], strides = [1, 1]} : vector<32x32xf32> to vector<8x32xf32>
    %cst_190 = arith.constant dense<0.000000e+00> : vector<16x32xf32>
    %600 = tpu.matmul %598, %599, %cst_190 {dimension_numbers = #tpu.dot_dimension_numbers<[1], [0], [0], [1], [0, 0, 1, 1], [], []>} : vector<16x8xf32>, vector<8x32xf32>, vector<16x32xf32> -> vector<16x32xf32>
    %601 = vector.broadcast %582 : vector<1x32xf32> to vector<16x32xf32>
    %602 = arith.addf %601, %600 : vector<16x32xf32>
    %603 = vector.extract_strided_slice %578 {offsets = [0, 8], sizes = [16, 8], strides = [1, 1]} : vector<16x32xf32> to vector<16x8xf32>
    %604 = vector.extract_strided_slice %579 {offsets = [0, 8], sizes = [16, 8], strides = [1, 1]} : vector<16x32xf32> to vector<16x8xf32>
    %cst_191 = arith.constant dense<0.000000e+00> : vector<16x16xf32>
    %605 = tpu.matmul %603, %604, %cst_191 {dimension_numbers = #tpu.dot_dimension_numbers<[1], [1], [0], [0], [0, 0, 1, 0], [], []>} : vector<16x8xf32>, vector<16x8xf32>, vector<16x16xf32> -> vector<16x16xf32>
    %606 = arith.addf %605, %0 : vector<16x16xf32>
    %cst_192 = arith.constant dense<0xFF800000> : vector<16xf32>
    %607 = vector.multi_reduction <maximumf>, %606, %cst_192 [1] : vector<16x16xf32> to vector<16xf32>
    %608 = vector.shape_cast %607 : vector<16xf32> to vector<16x1xf32>
    %609 = vector.broadcast %608 : vector<16x1xf32> to vector<16x16xf32>
    %610 = arith.subf %606, %609 : vector<16x16xf32>
    %611 = math.exp %610 : vector<16x16xf32>
    %cst_193 = arith.constant dense<0.000000e+00> : vector<16xf32>
    %612 = vector.multi_reduction <add>, %611, %cst_193 [1] : vector<16x16xf32> to vector<16xf32>
    %613 = vector.shape_cast %612 : vector<16xf32> to vector<16x1xf32>
    %614 = tpu.reciprocal %613 {approx = true} : vector<16x1xf32> -> vector<16x1xf32>
    %615 = vector.broadcast %614 : vector<16x1xf32> to vector<16x16xf32>
    %616 = arith.mulf %611, %615 : vector<16x16xf32>
    %617 = vector.extract_strided_slice %580 {offsets = [0, 8], sizes = [16, 8], strides = [1, 1]} : vector<16x32xf32> to vector<16x8xf32>
    %cst_194 = arith.constant dense<0.000000e+00> : vector<16x8xf32>
    %618 = tpu.matmul %616, %617, %cst_194 {dimension_numbers = #tpu.dot_dimension_numbers<[1], [0], [0], [1], [0, 0, 1, 1], [], []>} : vector<16x16xf32>, vector<16x8xf32>, vector<16x8xf32> -> vector<16x8xf32>
    %619 = vector.extract_strided_slice %581 {offsets = [8, 0], sizes = [8, 32], strides = [1, 1]} : vector<32x32xf32> to vector<8x32xf32>
    %cst_195 = arith.constant dense<0.000000e+00> : vector<16x32xf32>
    %620 = tpu.matmul %618, %619, %cst_195 {dimension_numbers = #tpu.dot_dimension_numbers<[1], [0], [0], [1], [0, 0, 1, 1], [], []>} : vector<16x8xf32>, vector<8x32xf32>, vector<16x32xf32> -> vector<16x32xf32>
    %621 = arith.addf %602, %620 : vector<16x32xf32>
    %622 = vector.extract_strided_slice %578 {offsets = [0, 16], sizes = [16, 8], strides = [1, 1]} : vector<16x32xf32> to vector<16x8xf32>
    %623 = vector.extract_strided_slice %579 {offsets = [0, 16], sizes = [16, 8], strides = [1, 1]} : vector<16x32xf32> to vector<16x8xf32>
    %cst_196 = arith.constant dense<0.000000e+00> : vector<16x16xf32>
    %624 = tpu.matmul %622, %623, %cst_196 {dimension_numbers = #tpu.dot_dimension_numbers<[1], [1], [0], [0], [0, 0, 1, 0], [], []>} : vector<16x8xf32>, vector<16x8xf32>, vector<16x16xf32> -> vector<16x16xf32>
    %625 = arith.addf %624, %0 : vector<16x16xf32>
    %cst_197 = arith.constant dense<0xFF800000> : vector<16xf32>
    %626 = vector.multi_reduction <maximumf>, %625, %cst_197 [1] : vector<16x16xf32> to vector<16xf32>
    %627 = vector.shape_cast %626 : vector<16xf32> to vector<16x1xf32>
    %628 = vector.broadcast %627 : vector<16x1xf32> to vector<16x16xf32>
    %629 = arith.subf %625, %628 : vector<16x16xf32>
    %630 = math.exp %629 : vector<16x16xf32>
    %cst_198 = arith.constant dense<0.000000e+00> : vector<16xf32>
    %631 = vector.multi_reduction <add>, %630, %cst_198 [1] : vector<16x16xf32> to vector<16xf32>
    %632 = vector.shape_cast %631 : vector<16xf32> to vector<16x1xf32>
    %633 = tpu.reciprocal %632 {approx = true} : vector<16x1xf32> -> vector<16x1xf32>
    %634 = vector.broadcast %633 : vector<16x1xf32> to vector<16x16xf32>
    %635 = arith.mulf %630, %634 : vector<16x16xf32>
    %636 = vector.extract_strided_slice %580 {offsets = [0, 16], sizes = [16, 8], strides = [1, 1]} : vector<16x32xf32> to vector<16x8xf32>
    %cst_199 = arith.constant dense<0.000000e+00> : vector<16x8xf32>
    %637 = tpu.matmul %635, %636, %cst_199 {dimension_numbers = #tpu.dot_dimension_numbers<[1], [0], [0], [1], [0, 0, 1, 1], [], []>} : vector<16x16xf32>, vector<16x8xf32>, vector<16x8xf32> -> vector<16x8xf32>
    %638 = vector.extract_strided_slice %581 {offsets = [16, 0], sizes = [8, 32], strides = [1, 1]} : vector<32x32xf32> to vector<8x32xf32>
    %cst_200 = arith.constant dense<0.000000e+00> : vector<16x32xf32>
    %639 = tpu.matmul %637, %638, %cst_200 {dimension_numbers = #tpu.dot_dimension_numbers<[1], [0], [0], [1], [0, 0, 1, 1], [], []>} : vector<16x8xf32>, vector<8x32xf32>, vector<16x32xf32> -> vector<16x32xf32>
    %640 = arith.addf %621, %639 : vector<16x32xf32>
    %641 = vector.extract_strided_slice %578 {offsets = [0, 24], sizes = [16, 8], strides = [1, 1]} : vector<16x32xf32> to vector<16x8xf32>
    %642 = vector.extract_strided_slice %579 {offsets = [0, 24], sizes = [16, 8], strides = [1, 1]} : vector<16x32xf32> to vector<16x8xf32>
    %cst_201 = arith.constant dense<0.000000e+00> : vector<16x16xf32>
    %643 = tpu.matmul %641, %642, %cst_201 {dimension_numbers = #tpu.dot_dimension_numbers<[1], [1], [0], [0], [0, 0, 1, 0], [], []>} : vector<16x8xf32>, vector<16x8xf32>, vector<16x16xf32> -> vector<16x16xf32>
    %644 = arith.addf %643, %0 : vector<16x16xf32>
    %cst_202 = arith.constant dense<0xFF800000> : vector<16xf32>
    %645 = vector.multi_reduction <maximumf>, %644, %cst_202 [1] : vector<16x16xf32> to vector<16xf32>
    %646 = vector.shape_cast %645 : vector<16xf32> to vector<16x1xf32>
    %647 = vector.broadcast %646 : vector<16x1xf32> to vector<16x16xf32>
    %648 = arith.subf %644, %647 : vector<16x16xf32>
    %649 = math.exp %648 : vector<16x16xf32>
    %cst_203 = arith.constant dense<0.000000e+00> : vector<16xf32>
    %650 = vector.multi_reduction <add>, %649, %cst_203 [1] : vector<16x16xf32> to vector<16xf32>
    %651 = vector.shape_cast %650 : vector<16xf32> to vector<16x1xf32>
    %652 = tpu.reciprocal %651 {approx = true} : vector<16x1xf32> -> vector<16x1xf32>
    %653 = vector.broadcast %652 : vector<16x1xf32> to vector<16x16xf32>
    %654 = arith.mulf %649, %653 : vector<16x16xf32>
    %655 = vector.extract_strided_slice %580 {offsets = [0, 24], sizes = [16, 8], strides = [1, 1]} : vector<16x32xf32> to vector<16x8xf32>
    %cst_204 = arith.constant dense<0.000000e+00> : vector<16x8xf32>
    %656 = tpu.matmul %654, %655, %cst_204 {dimension_numbers = #tpu.dot_dimension_numbers<[1], [0], [0], [1], [0, 0, 1, 1], [], []>} : vector<16x16xf32>, vector<16x8xf32>, vector<16x8xf32> -> vector<16x8xf32>
    %657 = vector.extract_strided_slice %581 {offsets = [24, 0], sizes = [8, 32], strides = [1, 1]} : vector<32x32xf32> to vector<8x32xf32>
    %cst_205 = arith.constant dense<0.000000e+00> : vector<16x32xf32>
    %658 = tpu.matmul %656, %657, %cst_205 {dimension_numbers = #tpu.dot_dimension_numbers<[1], [0], [0], [1], [0, 0, 1, 1], [], []>} : vector<16x8xf32>, vector<8x32xf32>, vector<16x32xf32> -> vector<16x32xf32>
    %659 = arith.addf %640, %658 : vector<16x32xf32>
    %660 = arith.addf %572, %659 : vector<16x32xf32>
    %c1096 = arith.constant 1096 : index
    %c0_206 = arith.constant 0 : index
    %661 = vector.load %arg1[%c1096, %c0_206] : memref<1296x128xf32, #tpu.memory_space<vmem>>, vector<1x32xf32>
    %c1104 = arith.constant 1104 : index
    %c0_207 = arith.constant 0 : index
    %662 = vector.load %arg1[%c1104, %c0_207] : memref<1296x128xf32, #tpu.memory_space<vmem>>, vector<1x32xf32>
    %cst_208 = arith.constant dense<0.000000e+00> : vector<16xf32>
    %663 = vector.multi_reduction <add>, %660, %cst_208 [1] : vector<16x32xf32> to vector<16xf32>
    %664 = vector.shape_cast %663 : vector<16xf32> to vector<16x1xf32>
    %cst_209 = arith.constant 3.200000e+01 : f32
    %665 = vector.broadcast %cst_209 : f32 to vector<16x1xf32>
    %666 = arith.divf %664, %665 : vector<16x1xf32>
    %667 = vector.broadcast %666 : vector<16x1xf32> to vector<16x32xf32>
    %668 = arith.subf %660, %667 : vector<16x32xf32>
    %669 = arith.mulf %668, %668 : vector<16x32xf32>
    %cst_210 = arith.constant dense<0.000000e+00> : vector<16xf32>
    %670 = vector.multi_reduction <add>, %669, %cst_210 [1] : vector<16x32xf32> to vector<16xf32>
    %671 = vector.shape_cast %670 : vector<16xf32> to vector<16x1xf32>
    %cst_211 = arith.constant 3.200000e+01 : f32
    %672 = vector.broadcast %cst_211 : f32 to vector<16x1xf32>
    %673 = arith.divf %671, %672 : vector<16x1xf32>
    %674 = vector.broadcast %666 : vector<16x1xf32> to vector<16x32xf32>
    %675 = arith.subf %660, %674 : vector<16x32xf32>
    %cst_212 = arith.constant 9.99999974E-6 : f32
    %676 = vector.broadcast %cst_212 : f32 to vector<16x1xf32>
    %677 = arith.addf %673, %676 : vector<16x1xf32>
    %678 = math.rsqrt %677 : vector<16x1xf32>
    %679 = vector.broadcast %678 : vector<16x1xf32> to vector<16x32xf32>
    %680 = arith.mulf %675, %679 : vector<16x32xf32>
    %681 = vector.broadcast %661 : vector<1x32xf32> to vector<16x32xf32>
    %682 = arith.mulf %680, %681 : vector<16x32xf32>
    %683 = vector.broadcast %662 : vector<1x32xf32> to vector<16x32xf32>
    %684 = arith.addf %682, %683 : vector<16x32xf32>
    %c976 = arith.constant 976 : index
    %c0_213 = arith.constant 0 : index
    %685 = vector.load %arg1[%c976, %c0_213] : memref<1296x128xf32, #tpu.memory_space<vmem>>, vector<32x32xf32>
    %c1008 = arith.constant 1008 : index
    %c0_214 = arith.constant 0 : index
    %686 = vector.load %arg1[%c1008, %c0_214] : memref<1296x128xf32, #tpu.memory_space<vmem>>, vector<1x32xf32>
    %cst_215 = arith.constant dense<0.000000e+00> : vector<16x32xf32>
    %687 = tpu.matmul %684, %685, %cst_215 {dimension_numbers = #tpu.dot_dimension_numbers<[1], [0], [0], [1], [0, 0, 1, 1], [], []>} : vector<16x32xf32>, vector<32x32xf32>, vector<16x32xf32> -> vector<16x32xf32>
    %688 = vector.broadcast %686 : vector<1x32xf32> to vector<16x32xf32>
    %689 = arith.addf %687, %688 : vector<16x32xf32>
    %c1016 = arith.constant 1016 : index
    %c0_216 = arith.constant 0 : index
    %690 = vector.load %arg1[%c1016, %c0_216] : memref<1296x128xf32, #tpu.memory_space<vmem>>, vector<32x64xf32>
    %c1048 = arith.constant 1048 : index
    %c0_217 = arith.constant 0 : index
    %691 = vector.load %arg1[%c1048, %c0_217] : memref<1296x128xf32, #tpu.memory_space<vmem>>, vector<1x64xf32>
    %cst_218 = arith.constant dense<0.000000e+00> : vector<16x64xf32>
    %692 = tpu.matmul %306, %690, %cst_218 {dimension_numbers = #tpu.dot_dimension_numbers<[1], [0], [0], [1], [0, 0, 1, 1], [], []>} : vector<16x32xf32>, vector<32x64xf32>, vector<16x64xf32> -> vector<16x64xf32>
    %693 = vector.broadcast %691 : vector<1x64xf32> to vector<16x64xf32>
    %694 = arith.addf %692, %693 : vector<16x64xf32>
    %695 = vector.extract_strided_slice %694 {offsets = [0, 0], sizes = [16, 32], strides = [1, 1]} : vector<16x64xf32> to vector<16x32xf32>
    %696 = vector.extract_strided_slice %694 {offsets = [0, 32], sizes = [16, 32], strides = [1, 1]} : vector<16x64xf32> to vector<16x32xf32>
    %c1056 = arith.constant 1056 : index
    %c0_219 = arith.constant 0 : index
    %697 = vector.load %arg1[%c1056, %c0_219] : memref<1296x128xf32, #tpu.memory_space<vmem>>, vector<32x32xf32>
    %c1088 = arith.constant 1088 : index
    %c0_220 = arith.constant 0 : index
    %698 = vector.load %arg1[%c1088, %c0_220] : memref<1296x128xf32, #tpu.memory_space<vmem>>, vector<1x32xf32>
    %699 = vector.extract_strided_slice %689 {offsets = [0, 0], sizes = [16, 8], strides = [1, 1]} : vector<16x32xf32> to vector<16x8xf32>
    %700 = vector.extract_strided_slice %695 {offsets = [0, 0], sizes = [16, 8], strides = [1, 1]} : vector<16x32xf32> to vector<16x8xf32>
    %cst_221 = arith.constant dense<0.000000e+00> : vector<16x16xf32>
    %701 = tpu.matmul %699, %700, %cst_221 {dimension_numbers = #tpu.dot_dimension_numbers<[1], [1], [0], [0], [0, 0, 1, 0], [], []>} : vector<16x8xf32>, vector<16x8xf32>, vector<16x16xf32> -> vector<16x16xf32>
    %702 = arith.addf %701, %0 : vector<16x16xf32>
    %cst_222 = arith.constant dense<0xFF800000> : vector<16xf32>
    %703 = vector.multi_reduction <maximumf>, %702, %cst_222 [1] : vector<16x16xf32> to vector<16xf32>
    %704 = vector.shape_cast %703 : vector<16xf32> to vector<16x1xf32>
    %705 = vector.broadcast %704 : vector<16x1xf32> to vector<16x16xf32>
    %706 = arith.subf %702, %705 : vector<16x16xf32>
    %707 = math.exp %706 : vector<16x16xf32>
    %cst_223 = arith.constant dense<0.000000e+00> : vector<16xf32>
    %708 = vector.multi_reduction <add>, %707, %cst_223 [1] : vector<16x16xf32> to vector<16xf32>
    %709 = vector.shape_cast %708 : vector<16xf32> to vector<16x1xf32>
    %710 = tpu.reciprocal %709 {approx = true} : vector<16x1xf32> -> vector<16x1xf32>
    %711 = vector.broadcast %710 : vector<16x1xf32> to vector<16x16xf32>
    %712 = arith.mulf %707, %711 : vector<16x16xf32>
    %713 = vector.extract_strided_slice %696 {offsets = [0, 0], sizes = [16, 8], strides = [1, 1]} : vector<16x32xf32> to vector<16x8xf32>
    %cst_224 = arith.constant dense<0.000000e+00> : vector<16x8xf32>
    %714 = tpu.matmul %712, %713, %cst_224 {dimension_numbers = #tpu.dot_dimension_numbers<[1], [0], [0], [1], [0, 0, 1, 1], [], []>} : vector<16x16xf32>, vector<16x8xf32>, vector<16x8xf32> -> vector<16x8xf32>
    %715 = vector.extract_strided_slice %697 {offsets = [0, 0], sizes = [8, 32], strides = [1, 1]} : vector<32x32xf32> to vector<8x32xf32>
    %cst_225 = arith.constant dense<0.000000e+00> : vector<16x32xf32>
    %716 = tpu.matmul %714, %715, %cst_225 {dimension_numbers = #tpu.dot_dimension_numbers<[1], [0], [0], [1], [0, 0, 1, 1], [], []>} : vector<16x8xf32>, vector<8x32xf32>, vector<16x32xf32> -> vector<16x32xf32>
    %717 = vector.broadcast %698 : vector<1x32xf32> to vector<16x32xf32>
    %718 = arith.addf %717, %716 : vector<16x32xf32>
    %719 = vector.extract_strided_slice %689 {offsets = [0, 8], sizes = [16, 8], strides = [1, 1]} : vector<16x32xf32> to vector<16x8xf32>
    %720 = vector.extract_strided_slice %695 {offsets = [0, 8], sizes = [16, 8], strides = [1, 1]} : vector<16x32xf32> to vector<16x8xf32>
    %cst_226 = arith.constant dense<0.000000e+00> : vector<16x16xf32>
    %721 = tpu.matmul %719, %720, %cst_226 {dimension_numbers = #tpu.dot_dimension_numbers<[1], [1], [0], [0], [0, 0, 1, 0], [], []>} : vector<16x8xf32>, vector<16x8xf32>, vector<16x16xf32> -> vector<16x16xf32>
    %722 = arith.addf %721, %0 : vector<16x16xf32>
    %cst_227 = arith.constant dense<0xFF800000> : vector<16xf32>
    %723 = vector.multi_reduction <maximumf>, %722, %cst_227 [1] : vector<16x16xf32> to vector<16xf32>
    %724 = vector.shape_cast %723 : vector<16xf32> to vector<16x1xf32>
    %725 = vector.broadcast %724 : vector<16x1xf32> to vector<16x16xf32>
    %726 = arith.subf %722, %725 : vector<16x16xf32>
    %727 = math.exp %726 : vector<16x16xf32>
    %cst_228 = arith.constant dense<0.000000e+00> : vector<16xf32>
    %728 = vector.multi_reduction <add>, %727, %cst_228 [1] : vector<16x16xf32> to vector<16xf32>
    %729 = vector.shape_cast %728 : vector<16xf32> to vector<16x1xf32>
    %730 = tpu.reciprocal %729 {approx = true} : vector<16x1xf32> -> vector<16x1xf32>
    %731 = vector.broadcast %730 : vector<16x1xf32> to vector<16x16xf32>
    %732 = arith.mulf %727, %731 : vector<16x16xf32>
    %733 = vector.extract_strided_slice %696 {offsets = [0, 8], sizes = [16, 8], strides = [1, 1]} : vector<16x32xf32> to vector<16x8xf32>
    %cst_229 = arith.constant dense<0.000000e+00> : vector<16x8xf32>
    %734 = tpu.matmul %732, %733, %cst_229 {dimension_numbers = #tpu.dot_dimension_numbers<[1], [0], [0], [1], [0, 0, 1, 1], [], []>} : vector<16x16xf32>, vector<16x8xf32>, vector<16x8xf32> -> vector<16x8xf32>
    %735 = vector.extract_strided_slice %697 {offsets = [8, 0], sizes = [8, 32], strides = [1, 1]} : vector<32x32xf32> to vector<8x32xf32>
    %cst_230 = arith.constant dense<0.000000e+00> : vector<16x32xf32>
    %736 = tpu.matmul %734, %735, %cst_230 {dimension_numbers = #tpu.dot_dimension_numbers<[1], [0], [0], [1], [0, 0, 1, 1], [], []>} : vector<16x8xf32>, vector<8x32xf32>, vector<16x32xf32> -> vector<16x32xf32>
    %737 = arith.addf %718, %736 : vector<16x32xf32>
    %738 = vector.extract_strided_slice %689 {offsets = [0, 16], sizes = [16, 8], strides = [1, 1]} : vector<16x32xf32> to vector<16x8xf32>
    %739 = vector.extract_strided_slice %695 {offsets = [0, 16], sizes = [16, 8], strides = [1, 1]} : vector<16x32xf32> to vector<16x8xf32>
    %cst_231 = arith.constant dense<0.000000e+00> : vector<16x16xf32>
    %740 = tpu.matmul %738, %739, %cst_231 {dimension_numbers = #tpu.dot_dimension_numbers<[1], [1], [0], [0], [0, 0, 1, 0], [], []>} : vector<16x8xf32>, vector<16x8xf32>, vector<16x16xf32> -> vector<16x16xf32>
    %741 = arith.addf %740, %0 : vector<16x16xf32>
    %cst_232 = arith.constant dense<0xFF800000> : vector<16xf32>
    %742 = vector.multi_reduction <maximumf>, %741, %cst_232 [1] : vector<16x16xf32> to vector<16xf32>
    %743 = vector.shape_cast %742 : vector<16xf32> to vector<16x1xf32>
    %744 = vector.broadcast %743 : vector<16x1xf32> to vector<16x16xf32>
    %745 = arith.subf %741, %744 : vector<16x16xf32>
    %746 = math.exp %745 : vector<16x16xf32>
    %cst_233 = arith.constant dense<0.000000e+00> : vector<16xf32>
    %747 = vector.multi_reduction <add>, %746, %cst_233 [1] : vector<16x16xf32> to vector<16xf32>
    %748 = vector.shape_cast %747 : vector<16xf32> to vector<16x1xf32>
    %749 = tpu.reciprocal %748 {approx = true} : vector<16x1xf32> -> vector<16x1xf32>
    %750 = vector.broadcast %749 : vector<16x1xf32> to vector<16x16xf32>
    %751 = arith.mulf %746, %750 : vector<16x16xf32>
    %752 = vector.extract_strided_slice %696 {offsets = [0, 16], sizes = [16, 8], strides = [1, 1]} : vector<16x32xf32> to vector<16x8xf32>
    %cst_234 = arith.constant dense<0.000000e+00> : vector<16x8xf32>
    %753 = tpu.matmul %751, %752, %cst_234 {dimension_numbers = #tpu.dot_dimension_numbers<[1], [0], [0], [1], [0, 0, 1, 1], [], []>} : vector<16x16xf32>, vector<16x8xf32>, vector<16x8xf32> -> vector<16x8xf32>
    %754 = vector.extract_strided_slice %697 {offsets = [16, 0], sizes = [8, 32], strides = [1, 1]} : vector<32x32xf32> to vector<8x32xf32>
    %cst_235 = arith.constant dense<0.000000e+00> : vector<16x32xf32>
    %755 = tpu.matmul %753, %754, %cst_235 {dimension_numbers = #tpu.dot_dimension_numbers<[1], [0], [0], [1], [0, 0, 1, 1], [], []>} : vector<16x8xf32>, vector<8x32xf32>, vector<16x32xf32> -> vector<16x32xf32>
    %756 = arith.addf %737, %755 : vector<16x32xf32>
    %757 = vector.extract_strided_slice %689 {offsets = [0, 24], sizes = [16, 8], strides = [1, 1]} : vector<16x32xf32> to vector<16x8xf32>
    %758 = vector.extract_strided_slice %695 {offsets = [0, 24], sizes = [16, 8], strides = [1, 1]} : vector<16x32xf32> to vector<16x8xf32>
    %cst_236 = arith.constant dense<0.000000e+00> : vector<16x16xf32>
    %759 = tpu.matmul %757, %758, %cst_236 {dimension_numbers = #tpu.dot_dimension_numbers<[1], [1], [0], [0], [0, 0, 1, 0], [], []>} : vector<16x8xf32>, vector<16x8xf32>, vector<16x16xf32> -> vector<16x16xf32>
    %760 = arith.addf %759, %0 : vector<16x16xf32>
    %cst_237 = arith.constant dense<0xFF800000> : vector<16xf32>
    %761 = vector.multi_reduction <maximumf>, %760, %cst_237 [1] : vector<16x16xf32> to vector<16xf32>
    %762 = vector.shape_cast %761 : vector<16xf32> to vector<16x1xf32>
    %763 = vector.broadcast %762 : vector<16x1xf32> to vector<16x16xf32>
    %764 = arith.subf %760, %763 : vector<16x16xf32>
    %765 = math.exp %764 : vector<16x16xf32>
    %cst_238 = arith.constant dense<0.000000e+00> : vector<16xf32>
    %766 = vector.multi_reduction <add>, %765, %cst_238 [1] : vector<16x16xf32> to vector<16xf32>
    %767 = vector.shape_cast %766 : vector<16xf32> to vector<16x1xf32>
    %768 = tpu.reciprocal %767 {approx = true} : vector<16x1xf32> -> vector<16x1xf32>
    %769 = vector.broadcast %768 : vector<16x1xf32> to vector<16x16xf32>
    %770 = arith.mulf %765, %769 : vector<16x16xf32>
    %771 = vector.extract_strided_slice %696 {offsets = [0, 24], sizes = [16, 8], strides = [1, 1]} : vector<16x32xf32> to vector<16x8xf32>
    %cst_239 = arith.constant dense<0.000000e+00> : vector<16x8xf32>
    %772 = tpu.matmul %770, %771, %cst_239 {dimension_numbers = #tpu.dot_dimension_numbers<[1], [0], [0], [1], [0, 0, 1, 1], [], []>} : vector<16x16xf32>, vector<16x8xf32>, vector<16x8xf32> -> vector<16x8xf32>
    %773 = vector.extract_strided_slice %697 {offsets = [24, 0], sizes = [8, 32], strides = [1, 1]} : vector<32x32xf32> to vector<8x32xf32>
    %cst_240 = arith.constant dense<0.000000e+00> : vector<16x32xf32>
    %774 = tpu.matmul %772, %773, %cst_240 {dimension_numbers = #tpu.dot_dimension_numbers<[1], [0], [0], [1], [0, 0, 1, 1], [], []>} : vector<16x8xf32>, vector<8x32xf32>, vector<16x32xf32> -> vector<16x32xf32>
    %775 = arith.addf %756, %774 : vector<16x32xf32>
    %776 = arith.addf %684, %775 : vector<16x32xf32>
    %c1112 = arith.constant 1112 : index
    %c0_241 = arith.constant 0 : index
    %777 = vector.load %arg1[%c1112, %c0_241] : memref<1296x128xf32, #tpu.memory_space<vmem>>, vector<1x32xf32>
    %c1120 = arith.constant 1120 : index
    %c0_242 = arith.constant 0 : index
    %778 = vector.load %arg1[%c1120, %c0_242] : memref<1296x128xf32, #tpu.memory_space<vmem>>, vector<1x32xf32>
    %cst_243 = arith.constant dense<0.000000e+00> : vector<16xf32>
    %779 = vector.multi_reduction <add>, %776, %cst_243 [1] : vector<16x32xf32> to vector<16xf32>
    %780 = vector.shape_cast %779 : vector<16xf32> to vector<16x1xf32>
    %cst_244 = arith.constant 3.200000e+01 : f32
    %781 = vector.broadcast %cst_244 : f32 to vector<16x1xf32>
    %782 = arith.divf %780, %781 : vector<16x1xf32>
    %783 = vector.broadcast %782 : vector<16x1xf32> to vector<16x32xf32>
    %784 = arith.subf %776, %783 : vector<16x32xf32>
    %785 = arith.mulf %784, %784 : vector<16x32xf32>
    %cst_245 = arith.constant dense<0.000000e+00> : vector<16xf32>
    %786 = vector.multi_reduction <add>, %785, %cst_245 [1] : vector<16x32xf32> to vector<16xf32>
    %787 = vector.shape_cast %786 : vector<16xf32> to vector<16x1xf32>
    %cst_246 = arith.constant 3.200000e+01 : f32
    %788 = vector.broadcast %cst_246 : f32 to vector<16x1xf32>
    %789 = arith.divf %787, %788 : vector<16x1xf32>
    %790 = vector.broadcast %782 : vector<16x1xf32> to vector<16x32xf32>
    %791 = arith.subf %776, %790 : vector<16x32xf32>
    %cst_247 = arith.constant 9.99999974E-6 : f32
    %792 = vector.broadcast %cst_247 : f32 to vector<16x1xf32>
    %793 = arith.addf %789, %792 : vector<16x1xf32>
    %794 = math.rsqrt %793 : vector<16x1xf32>
    %795 = vector.broadcast %794 : vector<16x1xf32> to vector<16x32xf32>
    %796 = arith.mulf %791, %795 : vector<16x32xf32>
    %797 = vector.broadcast %777 : vector<1x32xf32> to vector<16x32xf32>
    %798 = arith.mulf %796, %797 : vector<16x32xf32>
    %799 = vector.broadcast %778 : vector<1x32xf32> to vector<16x32xf32>
    %800 = arith.addf %798, %799 : vector<16x32xf32>
    %c1128 = arith.constant 1128 : index
    %c0_248 = arith.constant 0 : index
    %801 = vector.load %arg1[%c1128, %c0_248] : memref<1296x128xf32, #tpu.memory_space<vmem>>, vector<32x64xf32>
    %c1160 = arith.constant 1160 : index
    %c0_249 = arith.constant 0 : index
    %802 = vector.load %arg1[%c1160, %c0_249] : memref<1296x128xf32, #tpu.memory_space<vmem>>, vector<1x64xf32>
    %cst_250 = arith.constant dense<0.000000e+00> : vector<16x64xf32>
    %803 = tpu.matmul %800, %801, %cst_250 {dimension_numbers = #tpu.dot_dimension_numbers<[1], [0], [0], [1], [0, 0, 1, 1], [], []>} : vector<16x32xf32>, vector<32x64xf32>, vector<16x64xf32> -> vector<16x64xf32>
    %804 = vector.broadcast %802 : vector<1x64xf32> to vector<16x64xf32>
    %805 = arith.addf %803, %804 : vector<16x64xf32>
    %cst_251 = arith.constant 0.000000e+00 : f32
    %806 = vector.broadcast %cst_251 : f32 to vector<16x64xf32>
    %807 = arith.maximumf %805, %806 : vector<16x64xf32>
    %c1168 = arith.constant 1168 : index
    %c0_252 = arith.constant 0 : index
    %808 = vector.load %arg1[%c1168, %c0_252] : memref<1296x128xf32, #tpu.memory_space<vmem>>, vector<64x32xf32>
    %c1232 = arith.constant 1232 : index
    %c0_253 = arith.constant 0 : index
    %809 = vector.load %arg1[%c1232, %c0_253] : memref<1296x128xf32, #tpu.memory_space<vmem>>, vector<1x32xf32>
    %cst_254 = arith.constant dense<0.000000e+00> : vector<16x32xf32>
    %810 = tpu.matmul %807, %808, %cst_254 {dimension_numbers = #tpu.dot_dimension_numbers<[1], [0], [0], [1], [0, 0, 1, 1], [], []>} : vector<16x64xf32>, vector<64x32xf32>, vector<16x32xf32> -> vector<16x32xf32>
    %811 = vector.broadcast %809 : vector<1x32xf32> to vector<16x32xf32>
    %812 = arith.addf %810, %811 : vector<16x32xf32>
    %813 = arith.addf %800, %812 : vector<16x32xf32>
    %c1240 = arith.constant 1240 : index
    %c0_255 = arith.constant 0 : index
    %814 = vector.load %arg1[%c1240, %c0_255] : memref<1296x128xf32, #tpu.memory_space<vmem>>, vector<1x32xf32>
    %c1248 = arith.constant 1248 : index
    %c0_256 = arith.constant 0 : index
    %815 = vector.load %arg1[%c1248, %c0_256] : memref<1296x128xf32, #tpu.memory_space<vmem>>, vector<1x32xf32>
    %cst_257 = arith.constant dense<0.000000e+00> : vector<16xf32>
    %816 = vector.multi_reduction <add>, %813, %cst_257 [1] : vector<16x32xf32> to vector<16xf32>
    %817 = vector.shape_cast %816 : vector<16xf32> to vector<16x1xf32>
    %cst_258 = arith.constant 3.200000e+01 : f32
    %818 = vector.broadcast %cst_258 : f32 to vector<16x1xf32>
    %819 = arith.divf %817, %818 : vector<16x1xf32>
    %820 = vector.broadcast %819 : vector<16x1xf32> to vector<16x32xf32>
    %821 = arith.subf %813, %820 : vector<16x32xf32>
    %822 = arith.mulf %821, %821 : vector<16x32xf32>
    %cst_259 = arith.constant dense<0.000000e+00> : vector<16xf32>
    %823 = vector.multi_reduction <add>, %822, %cst_259 [1] : vector<16x32xf32> to vector<16xf32>
    %824 = vector.shape_cast %823 : vector<16xf32> to vector<16x1xf32>
    %cst_260 = arith.constant 3.200000e+01 : f32
    %825 = vector.broadcast %cst_260 : f32 to vector<16x1xf32>
    %826 = arith.divf %824, %825 : vector<16x1xf32>
    %827 = vector.broadcast %819 : vector<16x1xf32> to vector<16x32xf32>
    %828 = arith.subf %813, %827 : vector<16x32xf32>
    %cst_261 = arith.constant 9.99999974E-6 : f32
    %829 = vector.broadcast %cst_261 : f32 to vector<16x1xf32>
    %830 = arith.addf %826, %829 : vector<16x1xf32>
    %831 = math.rsqrt %830 : vector<16x1xf32>
    %832 = vector.broadcast %831 : vector<16x1xf32> to vector<16x32xf32>
    %833 = arith.mulf %828, %832 : vector<16x32xf32>
    %834 = vector.broadcast %814 : vector<1x32xf32> to vector<16x32xf32>
    %835 = arith.mulf %833, %834 : vector<16x32xf32>
    %836 = vector.broadcast %815 : vector<1x32xf32> to vector<16x32xf32>
    %837 = arith.addf %835, %836 : vector<16x32xf32>
    %c1256 = arith.constant 1256 : index
    %c0_262 = arith.constant 0 : index
    %838 = vector.load %arg1[%c1256, %c0_262] : memref<1296x128xf32, #tpu.memory_space<vmem>>, vector<32x48xf32>
    %c1288 = arith.constant 1288 : index
    %c0_263 = arith.constant 0 : index
    %839 = vector.load %arg1[%c1288, %c0_263] : memref<1296x128xf32, #tpu.memory_space<vmem>>, vector<1x48xf32>
    %cst_264 = arith.constant dense<0.000000e+00> : vector<16x48xf32>
    %840 = tpu.matmul %837, %838, %cst_264 {dimension_numbers = #tpu.dot_dimension_numbers<[1], [0], [0], [1], [0, 0, 1, 1], [], []>} : vector<16x32xf32>, vector<32x48xf32>, vector<16x48xf32> -> vector<16x48xf32>
    %841 = vector.broadcast %839 : vector<1x48xf32> to vector<16x48xf32>
    %842 = arith.addf %840, %841 : vector<16x48xf32>
    %c0_265 = arith.constant 0 : index
    %c0_266 = arith.constant 0 : index
    %843 = vector.load %arg2[%c0_265, %c0_266] : memref<16x48xf32, #tpu.memory_space<vmem>>, vector<16x48xf32>
    tpu.vector_store %arg2[%c0_265, %c0_266], %842 {strides = array<i32>} : memref<16x48xf32, #tpu.memory_space<vmem>>, vector<16x48xf32>,
    return
  }
}

</mosaic_0001>

<llo_original>
// kernel: vit_tiny_autoencoder_forward.1
$region0: #{vit_tiny_autoencoder_forward.1}
  #allocation0 [shape = 'u32[]', space=smem, size = 0x4, offset = 0x4, fixed_abs, tag = 'smem constant byte address 0x4 - core index']
  #allocation1 [shape = 'u32[144,128]{1,0:T(1,128)}', space=vmem, size = 0x12000, scoped, tag = 'internal scratch']
  %s0 = inlined_call_operand.vmem [shape: f32[16,48], index: 0, kind: input, shape index: {}]
  %s1 = inlined_call_operand.hbm [shape: f32[1296,128], index: 1, kind: input, shape index: {}]
  %s2 = inlined_call_operand.vmem [shape: f32[16,48], index: 2, kind: output, shape index: {0}]
  %s3 = inlined_call_operand.vmem [shape: f32[16,32], index: 3, kind: output, shape index: {1}]
  %4 = xla_tuple %s2, %s3
  %s5 = sld [smem:[#allocation0]]
  $region30: #{vit_tiny_autoencoder_forward.1} parent=0
    _
  %s7 = ssub.s32 1, %s5
  %s8 = scalar_select 0, %s7, %s5
  $region1: #{vit_tiny_autoencoder_forward.1} parent=0
    #allocation2 [shape = 'u8[663552]{0}', space=vmem, size = 0xa2000, scoped, tag = 'input window, operand 1, single buffered']
    #allocation3 [shape = 's32[1]{0}', space=sflag, size = 0x4, scoped, tag = 'scoped memory for vit_tiny_autoencoder_forward.1']
    %9 = vsyncpa [#allocation3], 0
    // Predicated region
    $region2: #{vit_tiny_autoencoder_forward.1} parent=1 // pred_check
      _
    $region3: #{vit_tiny_autoencoder_forward.1} parent=1 // pred_check_branch
      %11 = sbr.rel (0) target = $region5
    $region4: #{vit_tiny_autoencoder_forward.1} parent=1 // pred_region
      _
    $region5: #{vit_tiny_autoencoder_forward.1} parent=1 // pred_fallthru
      _
    // Predicated region
    $region6: #{vit_tiny_autoencoder_forward.1} parent=1 // pred_check
      _
    $region7: #{vit_tiny_autoencoder_forward.1} parent=1 // pred_check_branch
      %13 = sbr.rel (0) target = $region9
    $region8: #{vit_tiny_autoencoder_forward.1} parent=1 // pred_region
      %s15 = ssub.s32 20736, 20736
      %16 = vsyncadd [#allocation3], %s15
      %s17 = sshll.u32 [#allocation2], 4
      %s18 = int_to_ptr.vmem [resolvable:$true] %s17
      %23 = dma.hbm_to_vmem [thread:$0]  %s1, 20736, %s18, [#allocation3], 128, 128, 8
    $region9: #{vit_tiny_autoencoder_forward.1} parent=1 // pred_fallthru
      _
    // Predicated region
    $region10: #{vit_tiny_autoencoder_forward.1} parent=1 // pred_check
      _
    $region11: #{vit_tiny_autoencoder_forward.1} parent=1 // pred_check_branch
      %25 = sbr.rel (0) target = $region13
    $region12: #{vit_tiny_autoencoder_forward.1} parent=1 // pred_region
      %26 = dma.done [#allocation3], 20736
    $region13: #{vit_tiny_autoencoder_forward.1} parent=1 // pred_fallthru
      _
    %v27 = vld [vmem:[#allocation2 + $0x48] sm:$0xff]
    %v28 = vld [vmem:[#allocation2 + $0x50] sm:$0xff]
    %v29 = vld [vmem:[%s0] sm:$0xff]
    %v30 = vld [vmem:[%s0 + $0x8] sm:$0xff]
    %v31 = vld [vmem:[#allocation2] sm:$0xff]
    %v32 = vld [vmem:[#allocation2 + $0x8] sm:$0xff]
    %v33 = vld [vmem:[#allocation2 + $0x10] sm:$0xff]
    %v34 = vld [vmem:[#allocation2 + $0x18] sm:$0xff]
    %v35 = vld [vmem:[#allocation2 + $0x20] sm:$0xff]
    %v36 = vld [vmem:[#allocation2 + $0x28] sm:$0xff]
    %v37 = vld [vmem:[#allocation2 + $0x30] sm:$0x1]
    %v38 = vlaneseq
    %v39 = vshrl.u32 %v38, 7
    %v40 = vsub.s32 0, %v39
    %v41 = vrot.slane %v37, %v40
    %vm42 = vcmask 392192
    %v44 = vsel %vm42, %v29, 0
    %v47 = vsel %vm42, %v30, 0
    %49 = vmatprep.subr.mxu0 0.0
    %50 = vmatpush1.msra.mxu0 %v31
    %51 = vmatprep.subr.mxu0 0.0
    %52 = vmatpush1.msra.mxu0 %v32
    %53 = vmatprep.subr.mxu0 0.0
    %54 = vmatpush1.msra.mxu0 %v33
    %55 = vmatprep.subr.mxu0 0.0
    %56 = vmatpush1.msra.mxu0 %v34
    %57 = vmatprep.subr.mxu0 0.0
    %58 = vmatpush1.msra.mxu0 %v35
    %59 = vmatprep.subr.mxu0 0.0
    %60 = vmatpush1.msra.mxu0 %v36
    %61 = vmatprep.subr.mxu0 0.0
    %62 = vmatpush1.msra.mxu0 0.0
    %63 = vmatprep.subr.mxu0 0.0
    %64 = vmatpush1.msra.mxu0 0.0
    %65 = vmatprep.subr.mxu0 0.0
    %66 = vmatpush1.msra.mxu0 0.0
    %67 = vmatprep.subr.mxu0 0.0
    %68 = vmatpush1.msra.mxu0 0.0
    %69 = vmatprep.subr.mxu0 0.0
    %70 = vmatpush1.msra.mxu0 0.0
    %71 = vmatprep.subr.mxu0 0.0
    %72 = vmatpush1.msra.mxu0 0.0
    %73 = vmatprep.subr.mxu0 0.0
    %74 = vmatpush1.msra.mxu0 0.0
    %75 = vmatprep.subr.mxu0 0.0
    %76 = vmatpush1.msra.mxu0 0.0
    %77 = vmatprep.subr.mxu0 0.0
    %78 = vmatpush1.msra.mxu0 0.0
    %79 = vmatprep.subr.mxu0 0.0
    %80 = vmatpush1.msra.mxu0 0.0
    %81 = vmatprep.subr.mxu0 0.0
    %82 = vmatpush1.msra.mxu0 0.0
    %83 = vmatprep.subr.mxu0 0.0
    %84 = vmatpush1.msra.mxu0 0.0
    %85 = vmatprep.subr.mxu0 0.0
    %86 = vmatpush1.msra.mxu0 0.0
    %87 = vmatprep.subr.mxu0 0.0
    %88 = vmatpush1.msra.mxu0 0.0
    %89 = vmatprep.subr.mxu0 0.0
    %90 = vmatpush1.msra.mxu0 0.0
    %91 = vmatprep.subr.mxu0 0.0
    %92 = vmatpush1.msra.mxu0 0.0
    %93 = vmatprep.subr.mxu0 0.0
    %94 = vmatpush1.msra.mxu0 0.0
    %95 = vmatprep.subr.mxu0 0.0
    %96 = vmatpush1.msra.mxu0 0.0
    %97 = vmatprep.subr.mxu0 0.0
    %98 = vmatpush1.msra.mxu0 0.0
    %99 = vmatprep.subr.mxu0 0.0
    %100 = vmatpush1.msra.mxu0 0.0
    %101 = vmatprep.subr.mxu0 0.0
    %102 = vmatpush1.msra.mxu0 0.0
    %103 = vmatprep.subr.mxu0 0.0
    %104 = vmatpush1.msra.mxu0 0.0
    %105 = vmatprep.subr.mxu0 0.0
    %106 = vmatpush1.msra.mxu0 0.0
    %107 = vmatprep.subr.mxu0 0.0
    %108 = vmatpush1.msra.mxu0 0.0
    %109 = vmatprep.subr.mxu0 0.0
    %110 = vmatpush1.msra.mxu0 0.0
    %111 = vmatprep.subr.mxu0 0.0
    %112 = vmatpush1.msra.mxu0 0.0
    %113 = vmatprep.mubr.f32.mxu0 0.0
    %114 = vmatmul.mubr.f32.gmra.mrb[0].mxu0 %v44
    %v115 = vpop.f32.mrb[0].mxu0
    %v116 = vadd.f32 %v41, %v115
    %v117 = vpop.f32.mrb[0].mxu0
    %118 = vmatprep.mubr.f32.mxu0 0.0
    %119 = vmatmul.mubr.f32.gmra.mrb[0].mxu0 %v47
    %v120 = vpop.f32.mrb[0].mxu0
    %v121 = vadd.f32 %v41, %v120
    %v122 = vpop.f32.mrb[0].mxu0
    %123 = vdwg.mxu0
    %v124 = vld [vmem:[#allocation2 + $0x38] sm:$0xff]
    %v125 = vld [vmem:[#allocation2 + $0x40] sm:$0xff]
    %v126 = vadd.f32 %v116, %v124
    %v127 = vadd.f32 %v121, %v125
    %v128 = vld [vmem:[#allocation2 + $0x58] sm:$0xff]
    %v129 = vld [vmem:[#allocation2 + $0x60] sm:$0xff]
    %v130 = vld [vmem:[#allocation2 + $0x68] sm:$0xff]
    %v131 = vld [vmem:[#allocation2 + $0x70] sm:$0xff]
    %v132 = vld [vmem:[#allocation2 + $0x78] sm:$0x1]
    %v133 = vlaneseq
    %v134 = vshrl.u32 %v133, 7
    %v135 = vsub.s32 0, %v134
    %v136 = vrot.slane %v132, %v135
    %vm137 = vcmask 261120
    %v139 = vsel %vm137, %v126, 0
    %v142 = vsel %vm137, %v127, 0
    %144 = vmatprep.subr.mxu0 0.0
    %145 = vmatpush1.msra.mxu0 %v128
    %146 = vmatprep.subr.mxu0 0.0
    %147 = vmatpush1.msra.mxu0 %v129
    %148 = vmatprep.subr.mxu0 0.0
    %149 = vmatpush1.msra.mxu0 %v130
    %150 = vmatprep.subr.mxu0 0.0
    %151 = vmatpush1.msra.mxu0 %v131
    %152 = vmatprep.subr.mxu0 0.0
    %153 = vmatpush1.msra.mxu0 0.0
    %154 = vmatprep.subr.mxu0 0.0
    %155 = vmatpush1.msra.mxu0 0.0
    %156 = vmatprep.subr.mxu0 0.0
    %157 = vmatpush1.msra.mxu0 0.0
    %158 = vmatprep.subr.mxu0 0.0
    %159 = vmatpush1.msra.mxu0 0.0
    %160 = vmatprep.subr.mxu0 0.0
    %161 = vmatpush1.msra.mxu0 0.0
    %162 = vmatprep.subr.mxu0 0.0
    %163 = vmatpush1.msra.mxu0 0.0
    %164 = vmatprep.subr.mxu0 0.0
    %165 = vmatpush1.msra.mxu0 0.0
    %166 = vmatprep.subr.mxu0 0.0
    %167 = vmatpush1.msra.mxu0 0.0
    %168 = vmatprep.subr.mxu0 0.0
    %169 = vmatpush1.msra.mxu0 0.0
    %170 = vmatprep.subr.mxu0 0.0
    %171 = vmatpush1.msra.mxu0 0.0
    %172 = vmatprep.subr.mxu0 0.0
    %173 = vmatpush1.msra.mxu0 0.0
    %174 = vmatprep.subr.mxu0 0.0
    %175 = vmatpush1.msra.mxu0 0.0
    %176 = vmatprep.subr.mxu0 0.0
    %177 = vmatpush1.msra.mxu0 0.0
    %178 = vmatprep.subr.mxu0 0.0
    %179 = vmatpush1.msra.mxu0 0.0
    %180 = vmatprep.subr.mxu0 0.0
    %181 = vmatpush1.msra.mxu0 0.0
    %182 = vmatprep.subr.mxu0 0.0
    %183 = vmatpush1.msra.mxu0 0.0
    %184 = vmatprep.subr.mxu0 0.0
    %185 = vmatpush1.msra.mxu0 0.0
    %186 = vmatprep.subr.mxu0 0.0
    %187 = vmatpush1.msra.mxu0 0.0
    %188 = vmatprep.subr.mxu0 0.0
    %189 = vmatpush1.msra.mxu0 0.0
    %190 = vmatprep.subr.mxu0 0.0
    %191 = vmatpush1.msra.mxu0 0.0
    %192 = vmatprep.subr.mxu0 0.0
    %193 = vmatpush1.msra.mxu0 0.0
    %194 = vmatprep.subr.mxu0 0.0
    %195 = vmatpush1.msra.mxu0 0.0
    %196 = vmatprep.subr.mxu0 0.0
    %197 = vmatpush1.msra.mxu0 0.0
    %198 = vmatprep.subr.mxu0 0.0
    %199 = vmatpush1.msra.mxu0 0.0
    %200 = vmatprep.subr.mxu0 0.0
    %201 = vmatpush1.msra.mxu0 0.0
    %202 = vmatprep.subr.mxu0 0.0
    %203 = vmatpush1.msra.mxu0 0.0
    %204 = vmatprep.subr.mxu0 0.0
    %205 = vmatpush1.msra.mxu0 0.0
    %206 = vmatprep.subr.mxu0 0.0
    %207 = vmatpush1.msra.mxu0 0.0
    %208 = vmatprep.mubr.f32.mxu0 0.0
    %209 = vmatmul.mubr.f32.gmra.mrb[0].mxu0 %v139
    %v210 = vpop.f32.mrb[0].mxu0
    %v211 = vadd.f32 %v136, %v210
    %v212 = vpop.f32.mrb[0].mxu0
    %213 = vmatprep.mubr.f32.mxu0 0.0
    %214 = vmatmul.mubr.f32.gmra.mrb[0].mxu0 %v142
    %v215 = vpop.f32.mrb[0].mxu0
    %v216 = vadd.f32 %v136, %v215
    %v217 = vpop.f32.mrb[0].mxu0
    %218 = vdwg.mxu0
    %v219 = vld [vmem:[#allocation2 + $0x80] sm:$0xff]
    %v220 = vld [vmem:[#allocation2 + $0x88] sm:$0xff]
    %v221 = vld [vmem:[#allocation2 + $0x90] sm:$0xff]
    %v222 = vld [vmem:[#allocation2 + $0x98] sm:$0xff]
    %v223 = vld [vmem:[#allocation2 + $0xa0] sm:$0x1]
    %226 = vrot.lane.b32.xlu0 %v211, 96
    %v227 = vpop.permute.xlu0 %226
    %228 = vrot.lane.b32.xlu0 %v216, 96
    %v229 = vpop.permute.xlu0 %228
    %vm230 = vcmask 64512
    %v231 = vsel %vm230, %v211, 0
    %v233 = vsel %vm230, %v216, 0
    %v235 = vsel %vm230, %v227, 0
    %v237 = vsel %vm230, %v229, 0
    %239 = vmatprep.subr.mxu0 0.0
    %240 = vmatpush1.xpose.msra.mxu0 %v235
    %241 = vmatprep.subr.mxu0 0.0
    %242 = vmatpush1.xpose.msra.mxu0 %v237
    %243 = vmatprep.subr.mxu0 0.0
    %244 = vmatpush1.xpose.msra.mxu0 0.0
    %245 = vmatprep.subr.mxu0 0.0
    %246 = vmatpush1.xpose.msra.mxu0 0.0
    %247 = vmatprep.subr.mxu0 0.0
    %248 = vmatpush1.xpose.msra.mxu0 0.0
    %249 = vmatprep.subr.mxu0 0.0
    %250 = vmatpush1.xpose.msra.mxu0 0.0
    %251 = vmatprep.subr.mxu0 0.0
    %252 = vmatpush1.xpose.msra.mxu0 0.0
    %253 = vmatprep.subr.mxu0 0.0
    %254 = vmatpush1.xpose.msra.mxu0 0.0
    %255 = vmatprep.subr.mxu0 0.0
    %256 = vmatpush1.xpose.msra.mxu0 0.0
    %257 = vmatprep.subr.mxu0 0.0
    %258 = vmatpush1.xpose.msra.mxu0 0.0
    %259 = vmatprep.subr.mxu0 0.0
    %260 = vmatpush1.xpose.msra.mxu0 0.0
    %261 = vmatprep.subr.mxu0 0.0
    %262 = vmatpush1.xpose.msra.mxu0 0.0
    %263 = vmatprep.subr.mxu0 0.0
    %264 = vmatpush1.xpose.msra.mxu0 0.0
    %265 = vmatprep.subr.mxu0 0.0
    %266 = vmatpush1.xpose.msra.mxu0 0.0
    %267 = vmatprep.subr.mxu0 0.0
    %268 = vmatpush1.xpose.msra.mxu0 0.0
    %269 = vmatprep.subr.mxu0 0.0
    %270 = vmatpush1.xpose.msra.mxu0 0.0
    %271 = vmatprep.subr.mxu0 0.0
    %272 = vmatpush1.xpose.msra.mxu0 0.0
    %273 = vmatprep.subr.mxu0 0.0
    %274 = vmatpush1.xpose.msra.mxu0 0.0
    %275 = vmatprep.subr.mxu0 0.0
    %276 = vmatpush1.xpose.msra.mxu0 0.0
    %277 = vmatprep.subr.mxu0 0.0
    %278 = vmatpush1.xpose.msra.mxu0 0.0
    %279 = vmatprep.subr.mxu0 0.0
    %280 = vmatpush1.xpose.msra.mxu0 0.0
    %281 = vmatprep.subr.mxu0 0.0
    %282 = vmatpush1.xpose.msra.mxu0 0.0
    %283 = vmatprep.subr.mxu0 0.0
    %284 = vmatpush1.xpose.msra.mxu0 0.0
    %285 = vmatprep.subr.mxu0 0.0
    %286 = vmatpush1.xpose.msra.mxu0 0.0
    %287 = vmatprep.subr.mxu0 0.0
    %288 = vmatpush1.xpose.msra.mxu0 0.0
    %289 = vmatprep.subr.mxu0 0.0
    %290 = vmatpush1.xpose.msra.mxu0 0.0
    %291 = vmatprep.subr.mxu0 0.0
    %292 = vmatpush1.xpose.msra.mxu0 0.0
    %293 = vmatprep.subr.mxu0 0.0
    %294 = vmatpush1.xpose.msra.mxu0 0.0
    %295 = vmatprep.subr.mxu0 0.0
    %296 = vmatpush1.xpose.msra.mxu0 0.0
    %297 = vmatprep.subr.mxu0 0.0
    %298 = vmatpush1.xpose.msra.mxu0 0.0
    %299 = vmatprep.subr.mxu0 0.0
    %300 = vmatpush1.xpose.msra.mxu0 0.0
    %301 = vmatprep.subr.mxu0 0.0
    %302 = vmatpush1.xpose.msra.mxu0 0.0
    %303 = vmatprep.mubr.f32.mxu0 0.0
    %304 = vmatmul.mubr.f32.gmra.mrb[0].mxu0 %v231
    %v305 = vpop.f32.mrb[0].mxu0
    %v306 = vadd.f32 %v27, %v305
    %v307 = vpop.f32.mrb[0].mxu0
    %308 = vmatprep.mubr.f32.mxu0 0.0
    %309 = vmatmul.mubr.f32.gmra.mrb[0].mxu0 %v233
    %v310 = vpop.f32.mrb[0].mxu0
    %v311 = vadd.f32 %v28, %v310
    %v312 = vpop.f32.mrb[0].mxu0
    %313 = vdwg.mxu0
    %vm314 = vcmask 130048
    %v315 = vsel %vm314, %v306, -inf
    %316 = vmax.xlane.f32.xlu0 %v315
    %v317 = vpop.xlane.xlu0 %316
    %v318 = vsel %vm314, %v311, -inf
    %319 = vmax.xlane.f32.xlu0 %v318
    %v320 = vpop.xlane.xlu0 %319
    %v321 = vsub.f32 %v306, %v317
    %v322 = vsub.f32 %v311, %v320
    %v323 = vmul.f32 %v321, 1.442695
    %v324 = vpow.pop %v323
    %v325 = vmul.f32 %v322, 1.442695
    %v326 = vpow.pop %v325
    %v327 = vsel %vm314, %v324, 0.0
    %328 = vadd.xlane.f32.xlu0 %v327
    %v329 = vpop.xlane.xlu0 %328
    %v330 = vsel %vm314, %v326, 0.0
    %331 = vadd.xlane.f32.xlu0 %v330
    %v332 = vpop.xlane.xlu0 %331
    %v333 = vrcp.pop %v329
    %v334 = vrcp.pop %v332
    %v335 = vmul.f32 %v324, %v333
    %v336 = vmul.f32 %v326, %v334
    %337 = vrot.lane.b32.xlu0 %v211, 64
    %v338 = vpop.permute.xlu0 %337
    %339 = vrot.lane.b32.xlu0 %v216, 64
    %v340 = vpop.permute.xlu0 %339
    %v344 = vsel %vm314, %v335, 0
    %v347 = vsel %vm314, %v336, 0
    %349 = vmatprep.subr.mxu0 0.0
    %350 = vmatpush1.msra.mxu0 %v338
    %351 = vmatprep.subr.mxu0 0.0
    %352 = vmatpush1.msra.mxu0 %v340
    %353 = vmatprep.subr.mxu0 0.0
    %354 = vmatpush1.msra.mxu0 0.0
    %355 = vmatprep.subr.mxu0 0.0
    %356 = vmatpush1.msra.mxu0 0.0
    %357 = vmatprep.subr.mxu0 0.0
    %358 = vmatpush1.msra.mxu0 0.0
    %359 = vmatprep.subr.mxu0 0.0
    %360 = vmatpush1.msra.mxu0 0.0
    %361 = vmatprep.subr.mxu0 0.0
    %362 = vmatpush1.msra.mxu0 0.0
    %363 = vmatprep.subr.mxu0 0.0
    %364 = vmatpush1.msra.mxu0 0.0
    %365 = vmatprep.subr.mxu0 0.0
    %366 = vmatpush1.msra.mxu0 0.0
    %367 = vmatprep.subr.mxu0 0.0
    %368 = vmatpush1.msra.mxu0 0.0
    %369 = vmatprep.subr.mxu0 0.0
    %370 = vmatpush1.msra.mxu0 0.0
    %371 = vmatprep.subr.mxu0 0.0
    %372 = vmatpush1.msra.mxu0 0.0
    %373 = vmatprep.subr.mxu0 0.0
    %374 = vmatpush1.msra.mxu0 0.0
    %375 = vmatprep.subr.mxu0 0.0
    %376 = vmatpush1.msra.mxu0 0.0
    %377 = vmatprep.subr.mxu0 0.0
    %378 = vmatpush1.msra.mxu0 0.0
    %379 = vmatprep.subr.mxu0 0.0
    %380 = vmatpush1.msra.mxu0 0.0
    %381 = vmatprep.subr.mxu0 0.0
    %382 = vmatpush1.msra.mxu0 0.0
    %383 = vmatprep.subr.mxu0 0.0
    %384 = vmatpush1.msra.mxu0 0.0
    %385 = vmatprep.subr.mxu0 0.0
    %386 = vmatpush1.msra.mxu0 0.0
    %387 = vmatprep.subr.mxu0 0.0
    %388 = vmatpush1.msra.mxu0 0.0
    %389 = vmatprep.subr.mxu0 0.0
    %390 = vmatpush1.msra.mxu0 0.0
    %391 = vmatprep.subr.mxu0 0.0
    %392 = vmatpush1.msra.mxu0 0.0
    %393 = vmatprep.subr.mxu0 0.0
    %394 = vmatpush1.msra.mxu0 0.0
    %395 = vmatprep.subr.mxu0 0.0
    %396 = vmatpush1.msra.mxu0 0.0
    %397 = vmatprep.subr.mxu0 0.0
    %398 = vmatpush1.msra.mxu0 0.0
    %399 = vmatprep.subr.mxu0 0.0
    %400 = vmatpush1.msra.mxu0 0.0
    %401 = vmatprep.subr.mxu0 0.0
    %402 = vmatpush1.msra.mxu0 0.0
    %403 = vmatprep.subr.mxu0 0.0
    %404 = vmatpush1.msra.mxu0 0.0
    %405 = vmatprep.subr.mxu0 0.0
    %406 = vmatpush1.msra.mxu0 0.0
    %407 = vmatprep.subr.mxu0 0.0
    %408 = vmatpush1.msra.mxu0 0.0
    %409 = vmatprep.subr.mxu0 0.0
    %410 = vmatpush1.msra.mxu0 0.0
    %411 = vmatprep.subr.mxu0 0.0
    %412 = vmatpush1.msra.mxu0 0.0
    %413 = vmatprep.mubr.f32.mxu0 0.0
    %414 = vmatmul.mubr.f32.gmra.mrb[0].mxu0 %v344
    %v415 = vpop.f32.mrb[0].mxu0
    %v416 = vadd.f32 0.0, %v415
    %v417 = vpop.f32.mrb[0].mxu0
    %418 = vmatprep.mubr.f32.mxu0 0.0
    %419 = vmatmul.mubr.f32.gmra.mrb[0].mxu0 %v347
    %v420 = vpop.f32.mrb[0].mxu0
    %v421 = vadd.f32 0.0, %v420
    %v422 = vpop.f32.mrb[0].mxu0
    %423 = vdwg.mxu0
    %v425 = vsel %vm230, %v416, 0
    %v428 = vsel %vm230, %v421, 0
    %430 = vmatprep.subr.mxu0 0.0
    %431 = vmatpush1.msra.mxu0 %v219
    %432 = vmatprep.subr.mxu0 0.0
    %433 = vmatpush1.msra.mxu0 0.0
    %434 = vmatprep.subr.mxu0 0.0
    %435 = vmatpush1.msra.mxu0 0.0
    %436 = vmatprep.subr.mxu0 0.0
    %437 = vmatpush1.msra.mxu0 0.0
    %438 = vmatprep.subr.mxu0 0.0
    %439 = vmatpush1.msra.mxu0 0.0
    %440 = vmatprep.subr.mxu0 0.0
    %441 = vmatpush1.msra.mxu0 0.0
    %442 = vmatprep.subr.mxu0 0.0
    %443 = vmatpush1.msra.mxu0 0.0
    %444 = vmatprep.subr.mxu0 0.0
    %445 = vmatpush1.msra.mxu0 0.0
    %446 = vmatprep.subr.mxu0 0.0
    %447 = vmatpush1.msra.mxu0 0.0
    %448 = vmatprep.subr.mxu0 0.0
    %449 = vmatpush1.msra.mxu0 0.0
    %450 = vmatprep.subr.mxu0 0.0
    %451 = vmatpush1.msra.mxu0 0.0
    %452 = vmatprep.subr.mxu0 0.0
    %453 = vmatpush1.msra.mxu0 0.0
    %454 = vmatprep.subr.mxu0 0.0
    %455 = vmatpush1.msra.mxu0 0.0
    %456 = vmatprep.subr.mxu0 0.0
    %457 = vmatpush1.msra.mxu0 0.0
    %458 = vmatprep.subr.mxu0 0.0
    %459 = vmatpush1.msra.mxu0 0.0
    %460 = vmatprep.subr.mxu0 0.0
    %461 = vmatpush1.msra.mxu0 0.0
    %462 = vmatprep.subr.mxu0 0.0
    %463 = vmatpush1.msra.mxu0 0.0
    %464 = vmatprep.subr.mxu0 0.0
    %465 = vmatpush1.msra.mxu0 0.0
    %466 = vmatprep.subr.mxu0 0.0
    %467 = vmatpush1.msra.mxu0 0.0
    %468 = vmatprep.subr.mxu0 0.0
    %469 = vmatpush1.msra.mxu0 0.0
    %470 = vmatprep.subr.mxu0 0.0
    %471 = vmatpush1.msra.mxu0 0.0
    %472 = vmatprep.subr.mxu0 0.0
    %473 = vmatpush1.msra.mxu0 0.0
    %474 = vmatprep.subr.mxu0 0.0
    %475 = vmatpush1.msra.mxu0 0.0
    %476 = vmatprep.subr.mxu0 0.0
    %477 = vmatpush1.msra.mxu0 0.0
    %478 = vmatprep.subr.mxu0 0.0
    %479 = vmatpush1.msra.mxu0 0.0
    %480 = vmatprep.subr.mxu0 0.0
    %481 = vmatpush1.msra.mxu0 0.0
    %482 = vmatprep.subr.mxu0 0.0
    %483 = vmatpush1.msra.mxu0 0.0
    %484 = vmatprep.subr.mxu0 0.0
    %485 = vmatpush1.msra.mxu0 0.0
    %486 = vmatprep.subr.mxu0 0.0
    %487 = vmatpush1.msra.mxu0 0.0
    %488 = vmatprep.subr.mxu0 0.0
    %489 = vmatpush1.msra.mxu0 0.0
    %490 = vmatprep.subr.mxu0 0.0
    %491 = vmatpush1.msra.mxu0 0.0
    %492 = vmatprep.subr.mxu0 0.0
    %493 = vmatpush1.msra.mxu0 0.0
    %494 = vmatprep.mubr.f32.mxu0 0.0
    %495 = vmatmul.mubr.f32.gmra.mrb[0].mxu0 %v425
    %v496 = vpop.f32.mrb[0].mxu0
    %v497 = vadd.f32 0.0, %v496
    %v498 = vpop.f32.mrb[0].mxu0
    %499 = vmatprep.mubr.f32.mxu0 0.0
    %500 = vmatmul.mubr.f32.gmra.mrb[0].mxu0 %v428
    %v501 = vpop.f32.mrb[0].mxu0
    %v502 = vadd.f32 0.0, %v501
    %v503 = vpop.f32.mrb[0].mxu0
    %504 = vdwg.mxu0
    %v505 = vlaneseq
    %v506 = vshrl.u32 %v505, 7
    %v507 = vsub.s32 0, %v506
    %v508 = vrot.slane %v223, %v507
    %v509 = vadd.f32 %v508, %v497
    %v510 = vadd.f32 %v508, %v502
    %511 = vrot.lane.b32.xlu0 %v211, 120
    %v512 = vpop.permute.xlu0 %511
    %513 = vrot.lane.b32.xlu0 %v216, 120
    %v514 = vpop.permute.xlu0 %513
    %515 = vrot.lane.b32.xlu0 %v211, 88
    %v516 = vpop.permute.xlu0 %515
    %517 = vrot.lane.b32.xlu0 %v216, 88
    %v518 = vpop.permute.xlu0 %517
    %v519 = vsel %vm230, %v512, 0
    %v521 = vsel %vm230, %v514, 0
    %v523 = vsel %vm230, %v516, 0
    %v525 = vsel %vm230, %v518, 0
    %527 = vmatprep.subr.mxu0 0.0
    %528 = vmatpush1.xpose.msra.mxu0 %v523
    %529 = vmatprep.subr.mxu0 0.0
    %530 = vmatpush1.xpose.msra.mxu0 %v525
    %531 = vmatprep.subr.mxu0 0.0
    %532 = vmatpush1.xpose.msra.mxu0 0.0
    %533 = vmatprep.subr.mxu0 0.0
    %534 = vmatpush1.xpose.msra.mxu0 0.0
    %535 = vmatprep.subr.mxu0 0.0
    %536 = vmatpush1.xpose.msra.mxu0 0.0
    %537 = vmatprep.subr.mxu0 0.0
    %538 = vmatpush1.xpose.msra.mxu0 0.0
    %539 = vmatprep.subr.mxu0 0.0
    %540 = vmatpush1.xpose.msra.mxu0 0.0
    %541 = vmatprep.subr.mxu0 0.0
    %542 = vmatpush1.xpose.msra.mxu0 0.0
    %543 = vmatprep.subr.mxu0 0.0
    %544 = vmatpush1.xpose.msra.mxu0 0.0
    %545 = vmatprep.subr.mxu0 0.0
    %546 = vmatpush1.xpose.msra.mxu0 0.0
    %547 = vmatprep.subr.mxu0 0.0
    %548 = vmatpush1.xpose.msra.mxu0 0.0
    %549 = vmatprep.subr.mxu0 0.0
    %550 = vmatpush1.xpose.msra.mxu0 0.0
    %551 = vmatprep.subr.mxu0 0.0
    %552 = vmatpush1.xpose.msra.mxu0 0.0
    %553 = vmatprep.subr.mxu0 0.0
    %554 = vmatpush1.xpose.msra.mxu0 0.0
    %555 = vmatprep.subr.mxu0 0.0
    %556 = vmatpush1.xpose.msra.mxu0 0.0
    %557 = vmatprep.subr.mxu0 0.0
    %558 = vmatpush1.xpose.msra.mxu0 0.0
    %559 = vmatprep.subr.mxu0 0.0
    %560 = vmatpush1.xpose.msra.mxu0 0.0
    %561 = vmatprep.subr.mxu0 0.0
    %562 = vmatpush1.xpose.msra.mxu0 0.0
    %563 = vmatprep.subr.mxu0 0.0
    %564 = vmatpush1.xpose.msra.mxu0 0.0
    %565 = vmatprep.subr.mxu0 0.0
    %566 = vmatpush1.xpose.msra.mxu0 0.0
    %567 = vmatprep.subr.mxu0 0.0
    %568 = vmatpush1.xpose.msra.mxu0 0.0
    %569 = vmatprep.subr.mxu0 0.0
    %570 = vmatpush1.xpose.msra.mxu0 0.0
    %571 = vmatprep.subr.mxu0 0.0
    %572 = vmatpush1.xpose.msra.mxu0 0.0
    %573 = vmatprep.subr.mxu0 0.0
    %574 = vmatpush1.xpose.msra.mxu0 0.0
    %575 = vmatprep.subr.mxu0 0.0
    %576 = vmatpush1.xpose.msra.mxu0 0.0
    %577 = vmatprep.subr.mxu0 0.0
    %578 = vmatpush1.xpose.msra.mxu0 0.0
    %579 = vmatprep.subr.mxu0 0.0
    %580 = vmatpush1.xpose.msra.mxu0 0.0
    %581 = vmatprep.subr.mxu0 0.0
    %582 = vmatpush1.xpose.msra.mxu0 0.0
    %583 = vmatprep.subr.mxu0 0.0
    %584 = vmatpush1.xpose.msra.mxu0 0.0
    %585 = vmatprep.subr.mxu0 0.0
    %586 = vmatpush1.xpose.msra.mxu0 0.0
    %587 = vmatprep.subr.mxu0 0.0
    %588 = vmatpush1.xpose.msra.mxu0 0.0
    %589 = vmatprep.subr.mxu0 0.0
    %590 = vmatpush1.xpose.msra.mxu0 0.0
    %591 = vmatprep.mubr.f32.mxu0 0.0
    %592 = vmatmul.mubr.f32.gmra.mrb[0].mxu0 %v519
    %v593 = vpop.f32.mrb[0].mxu0
    %v594 = vadd.f32 %v27, %v593
    %v595 = vpop.f32.mrb[0].mxu0
    %596 = vmatprep.mubr.f32.mxu0 0.0
    %597 = vmatmul.mubr.f32.gmra.mrb[0].mxu0 %v521
    %v598 = vpop.f32.mrb[0].mxu0
    %v599 = vadd.f32 %v28, %v598
    %v600 = vpop.f32.mrb[0].mxu0
    %601 = vdwg.mxu0
    %v602 = vsel %vm314, %v594, -inf
    %603 = vmax.xlane.f32.xlu0 %v602
    %v604 = vpop.xlane.xlu0 %603
    %v605 = vsel %vm314, %v599, -inf
    %606 = vmax.xlane.f32.xlu0 %v605
    %v607 = vpop.xlane.xlu0 %606
    %v608 = vsub.f32 %v594, %v604
    %v609 = vsub.f32 %v599, %v607
    %v610 = vmul.f32 %v608, 1.442695
    %v611 = vpow.pop %v610
    %v612 = vmul.f32 %v609, 1.442695
    %v613 = vpow.pop %v612
    %v614 = vsel %vm314, %v611, 0.0
    %615 = vadd.xlane.f32.xlu0 %v614
    %v616 = vpop.xlane.xlu0 %615
    %v617 = vsel %vm314, %v613, 0.0
    %618 = vadd.xlane.f32.xlu0 %v617
    %v619 = vpop.xlane.xlu0 %618
    %v620 = vrcp.pop %v616
    %v621 = vrcp.pop %v619
    %v622 = vmul.f32 %v611, %v620
    %v623 = vmul.f32 %v613, %v621
    %624 = vrot.lane.b32.xlu0 %v211, 56
    %v625 = vpop.permute.xlu0 %624
    %626 = vrot.lane.b32.xlu0 %v216, 56
    %v627 = vpop.permute.xlu0 %626
    %v631 = vsel %vm314, %v622, 0
    %v634 = vsel %vm314, %v623, 0
    %636 = vmatprep.subr.mxu0 0.0
    %637 = vmatpush1.msra.mxu0 %v625
    %638 = vmatprep.subr.mxu0 0.0
    %639 = vmatpush1.msra.mxu0 %v627
    %640 = vmatprep.subr.mxu0 0.0
    %641 = vmatpush1.msra.mxu0 0.0
    %642 = vmatprep.subr.mxu0 0.0
    %643 = vmatpush1.msra.mxu0 0.0
    %644 = vmatprep.subr.mxu0 0.0
    %645 = vmatpush1.msra.mxu0 0.0
    %646 = vmatprep.subr.mxu0 0.0
    %647 = vmatpush1.msra.mxu0 0.0
    %648 = vmatprep.subr.mxu0 0.0
    %649 = vmatpush1.msra.mxu0 0.0
    %650 = vmatprep.subr.mxu0 0.0
    %651 = vmatpush1.msra.mxu0 0.0
    %652 = vmatprep.subr.mxu0 0.0
    %653 = vmatpush1.msra.mxu0 0.0
    %654 = vmatprep.subr.mxu0 0.0
    %655 = vmatpush1.msra.mxu0 0.0
    %656 = vmatprep.subr.mxu0 0.0
    %657 = vmatpush1.msra.mxu0 0.0
    %658 = vmatprep.subr.mxu0 0.0
    %659 = vmatpush1.msra.mxu0 0.0
    %660 = vmatprep.subr.mxu0 0.0
    %661 = vmatpush1.msra.mxu0 0.0
    %662 = vmatprep.subr.mxu0 0.0
    %663 = vmatpush1.msra.mxu0 0.0
    %664 = vmatprep.subr.mxu0 0.0
    %665 = vmatpush1.msra.mxu0 0.0
    %666 = vmatprep.subr.mxu0 0.0
    %667 = vmatpush1.msra.mxu0 0.0
    %668 = vmatprep.subr.mxu0 0.0
    %669 = vmatpush1.msra.mxu0 0.0
    %670 = vmatprep.subr.mxu0 0.0
    %671 = vmatpush1.msra.mxu0 0.0
    %672 = vmatprep.subr.mxu0 0.0
    %673 = vmatpush1.msra.mxu0 0.0
    %674 = vmatprep.subr.mxu0 0.0
    %675 = vmatpush1.msra.mxu0 0.0
    %676 = vmatprep.subr.mxu0 0.0
    %677 = vmatpush1.msra.mxu0 0.0
    %678 = vmatprep.subr.mxu0 0.0
    %679 = vmatpush1.msra.mxu0 0.0
    %680 = vmatprep.subr.mxu0 0.0
    %681 = vmatpush1.msra.mxu0 0.0
    %682 = vmatprep.subr.mxu0 0.0
    %683 = vmatpush1.msra.mxu0 0.0
    %684 = vmatprep.subr.mxu0 0.0
    %685 = vmatpush1.msra.mxu0 0.0
    %686 = vmatprep.subr.mxu0 0.0
    %687 = vmatpush1.msra.mxu0 0.0
    %688 = vmatprep.subr.mxu0 0.0
    %689 = vmatpush1.msra.mxu0 0.0
    %690 = vmatprep.subr.mxu0 0.0
    %691 = vmatpush1.msra.mxu0 0.0
    %692 = vmatprep.subr.mxu0 0.0
    %693 = vmatpush1.msra.mxu0 0.0
    %694 = vmatprep.subr.mxu0 0.0
    %695 = vmatpush1.msra.mxu0 0.0
    %696 = vmatprep.subr.mxu0 0.0
    %697 = vmatpush1.msra.mxu0 0.0
    %698 = vmatprep.subr.mxu0 0.0
    %699 = vmatpush1.msra.mxu0 0.0
    %700 = vmatprep.mubr.f32.mxu0 0.0
    %701 = vmatmul.mubr.f32.gmra.mrb[0].mxu0 %v631
    %v702 = vpop.f32.mrb[0].mxu0
    %v703 = vadd.f32 0.0, %v702
    %v704 = vpop.f32.mrb[0].mxu0
    %705 = vmatprep.mubr.f32.mxu0 0.0
    %706 = vmatmul.mubr.f32.gmra.mrb[0].mxu0 %v634
    %v707 = vpop.f32.mrb[0].mxu0
    %v708 = vadd.f32 0.0, %v707
    %v709 = vpop.f32.mrb[0].mxu0
    %710 = vdwg.mxu0
    %v712 = vsel %vm230, %v703, 0
    %v715 = vsel %vm230, %v708, 0
    %717 = vmatprep.subr.mxu0 0.0
    %718 = vmatpush1.msra.mxu0 %v220
    %719 = vmatprep.subr.mxu0 0.0
    %720 = vmatpush1.msra.mxu0 0.0
    %721 = vmatprep.subr.mxu0 0.0
    %722 = vmatpush1.msra.mxu0 0.0
    %723 = vmatprep.subr.mxu0 0.0
    %724 = vmatpush1.msra.mxu0 0.0
    %725 = vmatprep.subr.mxu0 0.0
    %726 = vmatpush1.msra.mxu0 0.0
    %727 = vmatprep.subr.mxu0 0.0
    %728 = vmatpush1.msra.mxu0 0.0
    %729 = vmatprep.subr.mxu0 0.0
    %730 = vmatpush1.msra.mxu0 0.0
    %731 = vmatprep.subr.mxu0 0.0
    %732 = vmatpush1.msra.mxu0 0.0
    %733 = vmatprep.subr.mxu0 0.0
    %734 = vmatpush1.msra.mxu0 0.0
    %735 = vmatprep.subr.mxu0 0.0
    %736 = vmatpush1.msra.mxu0 0.0
    %737 = vmatprep.subr.mxu0 0.0
    %738 = vmatpush1.msra.mxu0 0.0
    %739 = vmatprep.subr.mxu0 0.0
    %740 = vmatpush1.msra.mxu0 0.0
    %741 = vmatprep.subr.mxu0 0.0
    %742 = vmatpush1.msra.mxu0 0.0
    %743 = vmatprep.subr.mxu0 0.0
    %744 = vmatpush1.msra.mxu0 0.0
    %745 = vmatprep.subr.mxu0 0.0
    %746 = vmatpush1.msra.mxu0 0.0
    %747 = vmatprep.subr.mxu0 0.0
    %748 = vmatpush1.msra.mxu0 0.0
    %749 = vmatprep.subr.mxu0 0.0
    %750 = vmatpush1.msra.mxu0 0.0
    %751 = vmatprep.subr.mxu0 0.0
    %752 = vmatpush1.msra.mxu0 0.0
    %753 = vmatprep.subr.mxu0 0.0
    %754 = vmatpush1.msra.mxu0 0.0
    %755 = vmatprep.subr.mxu0 0.0
    %756 = vmatpush1.msra.mxu0 0.0
    %757 = vmatprep.subr.mxu0 0.0
    %758 = vmatpush1.msra.mxu0 0.0
    %759 = vmatprep.subr.mxu0 0.0
    %760 = vmatpush1.msra.mxu0 0.0
    %761 = vmatprep.subr.mxu0 0.0
    %762 = vmatpush1.msra.mxu0 0.0
    %763 = vmatprep.subr.mxu0 0.0
    %764 = vmatpush1.msra.mxu0 0.0
    %765 = vmatprep.subr.mxu0 0.0
    %766 = vmatpush1.msra.mxu0 0.0
    %767 = vmatprep.subr.mxu0 0.0
    %768 = vmatpush1.msra.mxu0 0.0
    %769 = vmatprep.subr.mxu0 0.0
    %770 = vmatpush1.msra.mxu0 0.0
    %771 = vmatprep.subr.mxu0 0.0
    %772 = vmatpush1.msra.mxu0 0.0
    %773 = vmatprep.subr.mxu0 0.0
    %774 = vmatpush1.msra.mxu0 0.0
    %775 = vmatprep.subr.mxu0 0.0
    %776 = vmatpush1.msra.mxu0 0.0
    %777 = vmatprep.subr.mxu0 0.0
    %778 = vmatpush1.msra.mxu0 0.0
    %779 = vmatprep.subr.mxu0 0.0
    %780 = vmatpush1.msra.mxu0 0.0
    %781 = vmatprep.mubr.f32.mxu0 0.0
    %782 = vmatmul.mubr.f32.gmra.mrb[0].mxu0 %v712
    %v783 = vpop.f32.mrb[0].mxu0
    %v784 = vadd.f32 0.0, %v783
    %v785 = vpop.f32.mrb[0].mxu0
    %786 = vmatprep.mubr.f32.mxu0 0.0
    %787 = vmatmul.mubr.f32.gmra.mrb[0].mxu0 %v715
    %v788 = vpop.f32.mrb[0].mxu0
    %v789 = vadd.f32 0.0, %v788
    %v790 = vpop.f32.mrb[0].mxu0
    %791 = vdwg.mxu0
    %v792 = vadd.f32 %v509, %v784
    %v793 = vadd.f32 %v510, %v789
    %794 = vrot.lane.b32.xlu0 %v211, 112
    %v795 = vpop.permute.xlu0 %794
    %796 = vrot.lane.b32.xlu0 %v216, 112
    %v797 = vpop.permute.xlu0 %796
    %798 = vrot.lane.b32.xlu0 %v211, 80
    %v799 = vpop.permute.xlu0 %798
    %800 = vrot.lane.b32.xlu0 %v216, 80
    %v801 = vpop.permute.xlu0 %800
    %v802 = vsel %vm230, %v795, 0
    %v804 = vsel %vm230, %v797, 0
    %v806 = vsel %vm230, %v799, 0
    %v808 = vsel %vm230, %v801, 0
    %810 = vmatprep.subr.mxu0 0.0
    %811 = vmatpush1.xpose.msra.mxu0 %v806
    %812 = vmatprep.subr.mxu0 0.0
    %813 = vmatpush1.xpose.msra.mxu0 %v808
    %814 = vmatprep.subr.mxu0 0.0
    %815 = vmatpush1.xpose.msra.mxu0 0.0
    %816 = vmatprep.subr.mxu0 0.0
    %817 = vmatpush1.xpose.msra.mxu0 0.0
    %818 = vmatprep.subr.mxu0 0.0
    %819 = vmatpush1.xpose.msra.mxu0 0.0
    %820 = vmatprep.subr.mxu0 0.0
    %821 = vmatpush1.xpose.msra.mxu0 0.0
    %822 = vmatprep.subr.mxu0 0.0
    %823 = vmatpush1.xpose.msra.mxu0 0.0
    %824 = vmatprep.subr.mxu0 0.0
    %825 = vmatpush1.xpose.msra.mxu0 0.0
    %826 = vmatprep.subr.mxu0 0.0
    %827 = vmatpush1.xpose.msra.mxu0 0.0
    %828 = vmatprep.subr.mxu0 0.0
    %829 = vmatpush1.xpose.msra.mxu0 0.0
    %830 = vmatprep.subr.mxu0 0.0
    %831 = vmatpush1.xpose.msra.mxu0 0.0
    %832 = vmatprep.subr.mxu0 0.0
    %833 = vmatpush1.xpose.msra.mxu0 0.0
    %834 = vmatprep.subr.mxu0 0.0
    %835 = vmatpush1.xpose.msra.mxu0 0.0
    %836 = vmatprep.subr.mxu0 0.0
    %837 = vmatpush1.xpose.msra.mxu0 0.0
    %838 = vmatprep.subr.mxu0 0.0
    %839 = vmatpush1.xpose.msra.mxu0 0.0
    %840 = vmatprep.subr.mxu0 0.0
    %841 = vmatpush1.xpose.msra.mxu0 0.0
    %842 = vmatprep.subr.mxu0 0.0
    %843 = vmatpush1.xpose.msra.mxu0 0.0
    %844 = vmatprep.subr.mxu0 0.0
    %845 = vmatpush1.xpose.msra.mxu0 0.0
    %846 = vmatprep.subr.mxu0 0.0
    %847 = vmatpush1.xpose.msra.mxu0 0.0
    %848 = vmatprep.subr.mxu0 0.0
    %849 = vmatpush1.xpose.msra.mxu0 0.0
    %850 = vmatprep.subr.mxu0 0.0
    %851 = vmatpush1.xpose.msra.mxu0 0.0
    %852 = vmatprep.subr.mxu0 0.0
    %853 = vmatpush1.xpose.msra.mxu0 0.0
    %854 = vmatprep.subr.mxu0 0.0
    %855 = vmatpush1.xpose.msra.mxu0 0.0
    %856 = vmatprep.subr.mxu0 0.0
    %857 = vmatpush1.xpose.msra.mxu0 0.0
    %858 = vmatprep.subr.mxu0 0.0
    %859 = vmatpush1.xpose.msra.mxu0 0.0
    %860 = vmatprep.subr.mxu0 0.0
    %861 = vmatpush1.xpose.msra.mxu0 0.0
    %862 = vmatprep.subr.mxu0 0.0
    %863 = vmatpush1.xpose.msra.mxu0 0.0
    %864 = vmatprep.subr.mxu0 0.0
    %865 = vmatpush1.xpose.msra.mxu0 0.0
    %866 = vmatprep.subr.mxu0 0.0
    %867 = vmatpush1.xpose.msra.mxu0 0.0
    %868 = vmatprep.subr.mxu0 0.0
    %869 = vmatpush1.xpose.msra.mxu0 0.0
    %870 = vmatprep.subr.mxu0 0.0
    %871 = vmatpush1.xpose.msra.mxu0 0.0
    %872 = vmatprep.subr.mxu0 0.0
    %873 = vmatpush1.xpose.msra.mxu0 0.0
    %874 = vmatprep.mubr.f32.mxu0 0.0
    %875 = vmatmul.mubr.f32.gmra.mrb[0].mxu0 %v802
    %v876 = vpop.f32.mrb[0].mxu0
    %v877 = vadd.f32 %v27, %v876
    %v878 = vpop.f32.mrb[0].mxu0
    %879 = vmatprep.mubr.f32.mxu0 0.0
    %880 = vmatmul.mubr.f32.gmra.mrb[0].mxu0 %v804
    %v881 = vpop.f32.mrb[0].mxu0
    %v882 = vadd.f32 %v28, %v881
    %v883 = vpop.f32.mrb[0].mxu0
    %884 = vdwg.mxu0
    %v885 = vsel %vm314, %v877, -inf
    %886 = vmax.xlane.f32.xlu0 %v885
    %v887 = vpop.xlane.xlu0 %886
    %v888 = vsel %vm314, %v882, -inf
    %889 = vmax.xlane.f32.xlu0 %v888
    %v890 = vpop.xlane.xlu0 %889
    %v891 = vsub.f32 %v877, %v887
    %v892 = vsub.f32 %v882, %v890
    %v893 = vmul.f32 %v891, 1.442695
    %v894 = vpow.pop %v893
    %v895 = vmul.f32 %v892, 1.442695
    %v896 = vpow.pop %v895
    %v897 = vsel %vm314, %v894, 0.0
    %898 = vadd.xlane.f32.xlu0 %v897
    %v899 = vpop.xlane.xlu0 %898
    %v900 = vsel %vm314, %v896, 0.0
    %901 = vadd.xlane.f32.xlu0 %v900
    %v902 = vpop.xlane.xlu0 %901
    %v903 = vrcp.pop %v899
    %v904 = vrcp.pop %v902
    %v905 = vmul.f32 %v894, %v903
    %v906 = vmul.f32 %v896, %v904
    %907 = vrot.lane.b32.xlu0 %v211, 48
    %v908 = vpop.permute.xlu0 %907
    %909 = vrot.lane.b32.xlu0 %v216, 48
    %v910 = vpop.permute.xlu0 %909
    %v914 = vsel %vm314, %v905, 0
    %v917 = vsel %vm314, %v906, 0
    %919 = vmatprep.subr.mxu0 0.0
    %920 = vmatpush1.msra.mxu0 %v908
    %921 = vmatprep.subr.mxu0 0.0
    %922 = vmatpush1.msra.mxu0 %v910
    %923 = vmatprep.subr.mxu0 0.0
    %924 = vmatpush1.msra.mxu0 0.0
    %925 = vmatprep.subr.mxu0 0.0
    %926 = vmatpush1.msra.mxu0 0.0
    %927 = vmatprep.subr.mxu0 0.0
    %928 = vmatpush1.msra.mxu0 0.0
    %929 = vmatprep.subr.mxu0 0.0
    %930 = vmatpush1.msra.mxu0 0.0
    %931 = vmatprep.subr.mxu0 0.0
    %932 = vmatpush1.msra.mxu0 0.0
    %933 = vmatprep.subr.mxu0 0.0
    %934 = vmatpush1.msra.mxu0 0.0
    %935 = vmatprep.subr.mxu0 0.0
    %936 = vmatpush1.msra.mxu0 0.0
    %937 = vmatprep.subr.mxu0 0.0
    %938 = vmatpush1.msra.mxu0 0.0
    %939 = vmatprep.subr.mxu0 0.0
    %940 = vmatpush1.msra.mxu0 0.0
    %941 = vmatprep.subr.mxu0 0.0
    %942 = vmatpush1.msra.mxu0 0.0
    %943 = vmatprep.subr.mxu0 0.0
    %944 = vmatpush1.msra.mxu0 0.0
    %945 = vmatprep.subr.mxu0 0.0
    %946 = vmatpush1.msra.mxu0 0.0
    %947 = vmatprep.subr.mxu0 0.0
    %948 = vmatpush1.msra.mxu0 0.0
    %949 = vmatprep.subr.mxu0 0.0
    %950 = vmatpush1.msra.mxu0 0.0
    %951 = vmatprep.subr.mxu0 0.0
    %952 = vmatpush1.msra.mxu0 0.0
    %953 = vmatprep.subr.mxu0 0.0
    %954 = vmatpush1.msra.mxu0 0.0
    %955 = vmatprep.subr.mxu0 0.0
    %956 = vmatpush1.msra.mxu0 0.0
    %957 = vmatprep.subr.mxu0 0.0
    %958 = vmatpush1.msra.mxu0 0.0
    %959 = vmatprep.subr.mxu0 0.0
    %960 = vmatpush1.msra.mxu0 0.0
    %961 = vmatprep.subr.mxu0 0.0
    %962 = vmatpush1.msra.mxu0 0.0
    %963 = vmatprep.subr.mxu0 0.0
    %964 = vmatpush1.msra.mxu0 0.0
    %965 = vmatprep.subr.mxu0 0.0
    %966 = vmatpush1.msra.mxu0 0.0
    %967 = vmatprep.subr.mxu0 0.0
    %968 = vmatpush1.msra.mxu0 0.0
    %969 = vmatprep.subr.mxu0 0.0
    %970 = vmatpush1.msra.mxu0 0.0
    %971 = vmatprep.subr.mxu0 0.0
    %972 = vmatpush1.msra.mxu0 0.0
    %973 = vmatprep.subr.mxu0 0.0
    %974 = vmatpush1.msra.mxu0 0.0
    %975 = vmatprep.subr.mxu0 0.0
    %976 = vmatpush1.msra.mxu0 0.0
    %977 = vmatprep.subr.mxu0 0.0
    %978 = vmatpush1.msra.mxu0 0.0
    %979 = vmatprep.subr.mxu0 0.0
    %980 = vmatpush1.msra.mxu0 0.0
    %981 = vmatprep.subr.mxu0 0.0
    %982 = vmatpush1.msra.mxu0 0.0
    %983 = vmatprep.mubr.f32.mxu0 0.0
    %984 = vmatmul.mubr.f32.gmra.mrb[0].mxu0 %v914
    %v985 = vpop.f32.mrb[0].mxu0
    %v986 = vadd.f32 0.0, %v985
    %v987 = vpop.f32.mrb[0].mxu0
    %988 = vmatprep.mubr.f32.mxu0 0.0
    %989 = vmatmul.mubr.f32.gmra.mrb[0].mxu0 %v917
    %v990 = vpop.f32.mrb[0].mxu0
    %v991 = vadd.f32 0.0, %v990
    %v992 = vpop.f32.mrb[0].mxu0
    %993 = vdwg.mxu0
    %v995 = vsel %vm230, %v986, 0
    %v998 = vsel %vm230, %v991, 0
    %1000 = vmatprep.subr.mxu0 0.0
    %1001 = vmatpush1.msra.mxu0 %v221
    %1002 = vmatprep.subr.mxu0 0.0
    %1003 = vmatpush1.msra.mxu0 0.0
    %1004 = vmatprep.subr.mxu0 0.0
    %1005 = vmatpush1.msra.mxu0 0.0
    %1006 = vmatprep.subr.mxu0 0.0
    %1007 = vmatpush1.msra.mxu0 0.0
    %1008 = vmatprep.subr.mxu0 0.0
    %1009 = vmatpush1.msra.mxu0 0.0
    %1010 = vmatprep.subr.mxu0 0.0
    %1011 = vmatpush1.msra.mxu0 0.0
    %1012 = vmatprep.subr.mxu0 0.0
    %1013 = vmatpush1.msra.mxu0 0.0
    %1014 = vmatprep.subr.mxu0 0.0
    %1015 = vmatpush1.msra.mxu0 0.0
    %1016 = vmatprep.subr.mxu0 0.0
    %1017 = vmatpush1.msra.mxu0 0.0
    %1018 = vmatprep.subr.mxu0 0.0
    %1019 = vmatpush1.msra.mxu0 0.0
    %1020 = vmatprep.subr.mxu0 0.0
    %1021 = vmatpush1.msra.mxu0 0.0
    %1022 = vmatprep.subr.mxu0 0.0
    %1023 = vmatpush1.msra.mxu0 0.0
    %1024 = vmatprep.subr.mxu0 0.0
    %1025 = vmatpush1.msra.mxu0 0.0
    %1026 = vmatprep.subr.mxu0 0.0
    %1027 = vmatpush1.msra.mxu0 0.0
    %1028 = vmatprep.subr.mxu0 0.0
    %1029 = vmatpush1.msra.mxu0 0.0
    %1030 = vmatprep.subr.mxu0 0.0
    %1031 = vmatpush1.msra.mxu0 0.0
    %1032 = vmatprep.subr.mxu0 0.0
    %1033 = vmatpush1.msra.mxu0 0.0
    %1034 = vmatprep.subr.mxu0 0.0
    %1035 = vmatpush1.msra.mxu0 0.0
    %1036 = vmatprep.subr.mxu0 0.0
    %1037 = vmatpush1.msra.mxu0 0.0
    %1038 = vmatprep.subr.mxu0 0.0
    %1039 = vmatpush1.msra.mxu0 0.0
    %1040 = vmatprep.subr.mxu0 0.0
    %1041 = vmatpush1.msra.mxu0 0.0
    %1042 = vmatprep.subr.mxu0 0.0
    %1043 = vmatpush1.msra.mxu0 0.0
    %1044 = vmatprep.subr.mxu0 0.0
    %1045 = vmatpush1.msra.mxu0 0.0
    %1046 = vmatprep.subr.mxu0 0.0
    %1047 = vmatpush1.msra.mxu0 0.0
    %1048 = vmatprep.subr.mxu0 0.0
    %1049 = vmatpush1.msra.mxu0 0.0
    %1050 = vmatprep.subr.mxu0 0.0
    %1051 = vmatpush1.msra.mxu0 0.0
    %1052 = vmatprep.subr.mxu0 0.0
    %1053 = vmatpush1.msra.mxu0 0.0
    %1054 = vmatprep.subr.mxu0 0.0
    %1055 = vmatpush1.msra.mxu0 0.0
    %1056 = vmatprep.subr.mxu0 0.0
    %1057 = vmatpush1.msra.mxu0 0.0
    %1058 = vmatprep.subr.mxu0 0.0
    %1059 = vmatpush1.msra.mxu0 0.0
    %1060 = vmatprep.subr.mxu0 0.0
    %1061 = vmatpush1.msra.mxu0 0.0
    %1062 = vmatprep.subr.mxu0 0.0
    %1063 = vmatpush1.msra.mxu0 0.0
    %1064 = vmatprep.mubr.f32.mxu0 0.0
    %1065 = vmatmul.mubr.f32.gmra.mrb[0].mxu0 %v995
    %v1066 = vpop.f32.mrb[0].mxu0
    %v1067 = vadd.f32 0.0, %v1066
    %v1068 = vpop.f32.mrb[0].mxu0
    %1069 = vmatprep.mubr.f32.mxu0 0.0
    %1070 = vmatmul.mubr.f32.gmra.mrb[0].mxu0 %v998
    %v1071 = vpop.f32.mrb[0].mxu0
    %v1072 = vadd.f32 0.0, %v1071
    %v1073 = vpop.f32.mrb[0].mxu0
    %1074 = vdwg.mxu0
    %v1075 = vadd.f32 %v792, %v1067
    %v1076 = vadd.f32 %v793, %v1072
    %1077 = vrot.lane.b32.xlu0 %v211, 104
    %v1078 = vpop.permute.xlu0 %1077
    %1079 = vrot.lane.b32.xlu0 %v216, 104
    %v1080 = vpop.permute.xlu0 %1079
    %1081 = vrot.lane.b32.xlu0 %v211, 72
    %v1082 = vpop.permute.xlu0 %1081
    %1083 = vrot.lane.b32.xlu0 %v216, 72
    %v1084 = vpop.permute.xlu0 %1083
    %v1085 = vsel %vm230, %v1078, 0
    %v1087 = vsel %vm230, %v1080, 0
    %v1089 = vsel %vm230, %v1082, 0
    %v1091 = vsel %vm230, %v1084, 0
    %1093 = vmatprep.subr.mxu0 0.0
    %1094 = vmatpush1.xpose.msra.mxu0 %v1089
    %1095 = vmatprep.subr.mxu0 0.0
    %1096 = vmatpush1.xpose.msra.mxu0 %v1091
    %1097 = vmatprep.subr.mxu0 0.0
    %1098 = vmatpush1.xpose.msra.mxu0 0.0
    %1099 = vmatprep.subr.mxu0 0.0
    %1100 = vmatpush1.xpose.msra.mxu0 0.0
    %1101 = vmatprep.subr.mxu0 0.0
    %1102 = vmatpush1.xpose.msra.mxu0 0.0
    %1103 = vmatprep.subr.mxu0 0.0
    %1104 = vmatpush1.xpose.msra.mxu0 0.0
    %1105 = vmatprep.subr.mxu0 0.0
    %1106 = vmatpush1.xpose.msra.mxu0 0.0
    %1107 = vmatprep.subr.mxu0 0.0
    %1108 = vmatpush1.xpose.msra.mxu0 0.0
    %1109 = vmatprep.subr.mxu0 0.0
    %1110 = vmatpush1.xpose.msra.mxu0 0.0
    %1111 = vmatprep.subr.mxu0 0.0
    %1112 = vmatpush1.xpose.msra.mxu0 0.0
    %1113 = vmatprep.subr.mxu0 0.0
    %1114 = vmatpush1.xpose.msra.mxu0 0.0
    %1115 = vmatprep.subr.mxu0 0.0
    %1116 = vmatpush1.xpose.msra.mxu0 0.0
    %1117 = vmatprep.subr.mxu0 0.0
    %1118 = vmatpush1.xpose.msra.mxu0 0.0
    %1119 = vmatprep.subr.mxu0 0.0
    %1120 = vmatpush1.xpose.msra.mxu0 0.0
    %1121 = vmatprep.subr.mxu0 0.0
    %1122 = vmatpush1.xpose.msra.mxu0 0.0
    %1123 = vmatprep.subr.mxu0 0.0
    %1124 = vmatpush1.xpose.msra.mxu0 0.0
    %1125 = vmatprep.subr.mxu0 0.0
    %1126 = vmatpush1.xpose.msra.mxu0 0.0
    %1127 = vmatprep.subr.mxu0 0.0
    %1128 = vmatpush1.xpose.msra.mxu0 0.0
    %1129 = vmatprep.subr.mxu0 0.0
    %1130 = vmatpush1.xpose.msra.mxu0 0.0
    %1131 = vmatprep.subr.mxu0 0.0
    %1132 = vmatpush1.xpose.msra.mxu0 0.0
    %1133 = vmatprep.subr.mxu0 0.0
    %1134 = vmatpush1.xpose.msra.mxu0 0.0
    %1135 = vmatprep.subr.mxu0 0.0
    %1136 = vmatpush1.xpose.msra.mxu0 0.0
    %1137 = vmatprep.subr.mxu0 0.0
    %1138 = vmatpush1.xpose.msra.mxu0 0.0
    %1139 = vmatprep.subr.mxu0 0.0
    %1140 = vmatpush1.xpose.msra.mxu0 0.0
    %1141 = vmatprep.subr.mxu0 0.0
    %1142 = vmatpush1.xpose.msra.mxu0 0.0
    %1143 = vmatprep.subr.mxu0 0.0
    %1144 = vmatpush1.xpose.msra.mxu0 0.0
    %1145 = vmatprep.subr.mxu0 0.0
    %1146 = vmatpush1.xpose.msra.mxu0 0.0
    %1147 = vmatprep.subr.mxu0 0.0
    %1148 = vmatpush1.xpose.msra.mxu0 0.0
    %1149 = vmatprep.subr.mxu0 0.0
    %1150 = vmatpush1.xpose.msra.mxu0 0.0
    %1151 = vmatprep.subr.mxu0 0.0
    %1152 = vmatpush1.xpose.msra.mxu0 0.0
    %1153 = vmatprep.subr.mxu0 0.0
    %1154 = vmatpush1.xpose.msra.mxu0 0.0
    %1155 = vmatprep.subr.mxu0 0.0
    %1156 = vmatpush1.xpose.msra.mxu0 0.0
    %1157 = vmatprep.mubr.f32.mxu0 0.0
    %1158 = vmatmul.mubr.f32.gmra.mrb[0].mxu0 %v1085
    %v1159 = vpop.f32.mrb[0].mxu0
    %v1160 = vadd.f32 %v27, %v1159
    %v1161 = vpop.f32.mrb[0].mxu0
    %1162 = vmatprep.mubr.f32.mxu0 0.0
    %1163 = vmatmul.mubr.f32.gmra.mrb[0].mxu0 %v1087
    %v1164 = vpop.f32.mrb[0].mxu0
    %v1165 = vadd.f32 %v28, %v1164
    %v1166 = vpop.f32.mrb[0].mxu0
    %1167 = vdwg.mxu0
    %v1168 = vsel %vm314, %v1160, -inf
    %1169 = vmax.xlane.f32.xlu0 %v1168
    %v1170 = vpop.xlane.xlu0 %1169
    %v1171 = vsel %vm314, %v1165, -inf
    %1172 = vmax.xlane.f32.xlu0 %v1171
    %v1173 = vpop.xlane.xlu0 %1172
    %v1174 = vsub.f32 %v1160, %v1170
    %v1175 = vsub.f32 %v1165, %v1173
    %v1176 = vmul.f32 %v1174, 1.442695
    %v1177 = vpow.pop %v1176
    %v1178 = vmul.f32 %v1175, 1.442695
    %v1179 = vpow.pop %v1178
    %v1180 = vsel %vm314, %v1177, 0.0
    %1181 = vadd.xlane.f32.xlu0 %v1180
    %v1182 = vpop.xlane.xlu0 %1181
    %v1183 = vsel %vm314, %v1179, 0.0
    %1184 = vadd.xlane.f32.xlu0 %v1183
    %v1185 = vpop.xlane.xlu0 %1184
    %v1186 = vrcp.pop %v1182
    %v1187 = vrcp.pop %v1185
    %v1188 = vmul.f32 %v1177, %v1186
    %v1189 = vmul.f32 %v1179, %v1187
    %1190 = vrot.lane.b32.xlu0 %v211, 40
    %v1191 = vpop.permute.xlu0 %1190
    %1192 = vrot.lane.b32.xlu0 %v216, 40
    %v1193 = vpop.permute.xlu0 %1192
    %v1197 = vsel %vm314, %v1188, 0
    %v1200 = vsel %vm314, %v1189, 0
    %1202 = vmatprep.subr.mxu0 0.0
    %1203 = vmatpush1.msra.mxu0 %v1191
    %1204 = vmatprep.subr.mxu0 0.0
    %1205 = vmatpush1.msra.mxu0 %v1193
    %1206 = vmatprep.subr.mxu0 0.0
    %1207 = vmatpush1.msra.mxu0 0.0
    %1208 = vmatprep.subr.mxu0 0.0
    %1209 = vmatpush1.msra.mxu0 0.0
    %1210 = vmatprep.subr.mxu0 0.0
    %1211 = vmatpush1.msra.mxu0 0.0
    %1212 = vmatprep.subr.mxu0 0.0
    %1213 = vmatpush1.msra.mxu0 0.0
    %1214 = vmatprep.subr.mxu0 0.0
    %1215 = vmatpush1.msra.mxu0 0.0
    %1216 = vmatprep.subr.mxu0 0.0
    %1217 = vmatpush1.msra.mxu0 0.0
    %1218 = vmatprep.subr.mxu0 0.0
    %1219 = vmatpush1.msra.mxu0 0.0
    %1220 = vmatprep.subr.mxu0 0.0
    %1221 = vmatpush1.msra.mxu0 0.0
    %1222 = vmatprep.subr.mxu0 0.0
    %1223 = vmatpush1.msra.mxu0 0.0
    %1224 = vmatprep.subr.mxu0 0.0
    %1225 = vmatpush1.msra.mxu0 0.0
    %1226 = vmatprep.subr.mxu0 0.0
    %1227 = vmatpush1.msra.mxu0 0.0
    %1228 = vmatprep.subr.mxu0 0.0
    %1229 = vmatpush1.msra.mxu0 0.0
    %1230 = vmatprep.subr.mxu0 0.0
    %1231 = vmatpush1.msra.mxu0 0.0
    %1232 = vmatprep.subr.mxu0 0.0
    %1233 = vmatpush1.msra.mxu0 0.0
    %1234 = vmatprep.subr.mxu0 0.0
    %1235 = vmatpush1.msra.mxu0 0.0
    %1236 = vmatprep.subr.mxu0 0.0
    %1237 = vmatpush1.msra.mxu0 0.0
    %1238 = vmatprep.subr.mxu0 0.0
    %1239 = vmatpush1.msra.mxu0 0.0
    %1240 = vmatprep.subr.mxu0 0.0
    %1241 = vmatpush1.msra.mxu0 0.0
    %1242 = vmatprep.subr.mxu0 0.0
    %1243 = vmatpush1.msra.mxu0 0.0
    %1244 = vmatprep.subr.mxu0 0.0
    %1245 = vmatpush1.msra.mxu0 0.0
    %1246 = vmatprep.subr.mxu0 0.0
    %1247 = vmatpush1.msra.mxu0 0.0
    %1248 = vmatprep.subr.mxu0 0.0
    %1249 = vmatpush1.msra.mxu0 0.0
    %1250 = vmatprep.subr.mxu0 0.0
    %1251 = vmatpush1.msra.mxu0 0.0
    %1252 = vmatprep.subr.mxu0 0.0
    %1253 = vmatpush1.msra.mxu0 0.0
    %1254 = vmatprep.subr.mxu0 0.0
    %1255 = vmatpush1.msra.mxu0 0.0
    %1256 = vmatprep.subr.mxu0 0.0
    %1257 = vmatpush1.msra.mxu0 0.0
    %1258 = vmatprep.subr.mxu0 0.0
    %1259 = vmatpush1.msra.mxu0 0.0
    %1260 = vmatprep.subr.mxu0 0.0
    %1261 = vmatpush1.msra.mxu0 0.0
    %1262 = vmatprep.subr.mxu0 0.0
    %1263 = vmatpush1.msra.mxu0 0.0
    %1264 = vmatprep.subr.mxu0 0.0
    %1265 = vmatpush1.msra.mxu0 0.0
    %1266 = vmatprep.mubr.f32.mxu0 0.0
    %1267 = vmatmul.mubr.f32.gmra.mrb[0].mxu0 %v1197
    %v1268 = vpop.f32.mrb[0].mxu0
    %v1269 = vadd.f32 0.0, %v1268
    %v1270 = vpop.f32.mrb[0].mxu0
    %1271 = vmatprep.mubr.f32.mxu0 0.0
    %1272 = vmatmul.mubr.f32.gmra.mrb[0].mxu0 %v1200
    %v1273 = vpop.f32.mrb[0].mxu0
    %v1274 = vadd.f32 0.0, %v1273
    %v1275 = vpop.f32.mrb[0].mxu0
    %1276 = vdwg.mxu0
    %v1278 = vsel %vm230, %v1269, 0
    %v1281 = vsel %vm230, %v1274, 0
    %1283 = vmatprep.subr.mxu0 0.0
    %1284 = vmatpush1.msra.mxu0 %v222
    %1285 = vmatprep.subr.mxu0 0.0
    %1286 = vmatpush1.msra.mxu0 0.0
    %1287 = vmatprep.subr.mxu0 0.0
    %1288 = vmatpush1.msra.mxu0 0.0
    %1289 = vmatprep.subr.mxu0 0.0
    %1290 = vmatpush1.msra.mxu0 0.0
    %1291 = vmatprep.subr.mxu0 0.0
    %1292 = vmatpush1.msra.mxu0 0.0
    %1293 = vmatprep.subr.mxu0 0.0
    %1294 = vmatpush1.msra.mxu0 0.0
    %1295 = vmatprep.subr.mxu0 0.0
    %1296 = vmatpush1.msra.mxu0 0.0
    %1297 = vmatprep.subr.mxu0 0.0
    %1298 = vmatpush1.msra.mxu0 0.0
    %1299 = vmatprep.subr.mxu0 0.0
    %1300 = vmatpush1.msra.mxu0 0.0
    %1301 = vmatprep.subr.mxu0 0.0
    %1302 = vmatpush1.msra.mxu0 0.0
    %1303 = vmatprep.subr.mxu0 0.0
    %1304 = vmatpush1.msra.mxu0 0.0
    %1305 = vmatprep.subr.mxu0 0.0
    %1306 = vmatpush1.msra.mxu0 0.0
    %1307 = vmatprep.subr.mxu0 0.0
    %1308 = vmatpush1.msra.mxu0 0.0
    %1309 = vmatprep.subr.mxu0 0.0
    %1310 = vmatpush1.msra.mxu0 0.0
    %1311 = vmatprep.subr.mxu0 0.0
    %1312 = vmatpush1.msra.mxu0 0.0
    %1313 = vmatprep.subr.mxu0 0.0
    %1314 = vmatpush1.msra.mxu0 0.0
    %1315 = vmatprep.subr.mxu0 0.0
    %1316 = vmatpush1.msra.mxu0 0.0
    %1317 = vmatprep.subr.mxu0 0.0
    %1318 = vmatpush1.msra.mxu0 0.0
    %1319 = vmatprep.subr.mxu0 0.0
    %1320 = vmatpush1.msra.mxu0 0.0
    %1321 = vmatprep.subr.mxu0 0.0
    %1322 = vmatpush1.msra.mxu0 0.0
    %1323 = vmatprep.subr.mxu0 0.0
    %1324 = vmatpush1.msra.mxu0 0.0
    %1325 = vmatprep.subr.mxu0 0.0
    %1326 = vmatpush1.msra.mxu0 0.0
    %1327 = vmatprep.subr.mxu0 0.0
    %1328 = vmatpush1.msra.mxu0 0.0
    %1329 = vmatprep.subr.mxu0 0.0
    %1330 = vmatpush1.msra.mxu0 0.0
    %1331 = vmatprep.subr.mxu0 0.0
    %1332 = vmatpush1.msra.mxu0 0.0
    %1333 = vmatprep.subr.mxu0 0.0
    %1334 = vmatpush1.msra.mxu0 0.0
    %1335 = vmatprep.subr.mxu0 0.0
    %1336 = vmatpush1.msra.mxu0 0.0
    %1337 = vmatprep.subr.mxu0 0.0
    %1338 = vmatpush1.msra.mxu0 0.0
    %1339 = vmatprep.subr.mxu0 0.0
    %1340 = vmatpush1.msra.mxu0 0.0
    %1341 = vmatprep.subr.mxu0 0.0
    %1342 = vmatpush1.msra.mxu0 0.0
    %1343 = vmatprep.subr.mxu0 0.0
    %1344 = vmatpush1.msra.mxu0 0.0
    %1345 = vmatprep.subr.mxu0 0.0
    %1346 = vmatpush1.msra.mxu0 0.0
    %1347 = vmatprep.mubr.f32.mxu0 0.0
    %1348 = vmatmul.mubr.f32.gmra.mrb[0].mxu0 %v1278
    %v1349 = vpop.f32.mrb[0].mxu0
    %v1350 = vadd.f32 0.0, %v1349
    %v1351 = vpop.f32.mrb[0].mxu0
    %1352 = vmatprep.mubr.f32.mxu0 0.0
    %1353 = vmatmul.mubr.f32.gmra.mrb[0].mxu0 %v1281
    %v1354 = vpop.f32.mrb[0].mxu0
    %v1355 = vadd.f32 0.0, %v1354
    %v1356 = vpop.f32.mrb[0].mxu0
    %1357 = vdwg.mxu0
    %v1358 = vadd.f32 %v1075, %v1350
    %v1359 = vadd.f32 %v1076, %v1355
    %v1360 = vadd.f32 %v126, %v1358
    %v1361 = vadd.f32 %v127, %v1359
    %v1362 = vld [vmem:[#allocation2 + $0xa8] sm:$0x1]
    %v1363 = vld [vmem:[#allocation2 + $0xb0] sm:$0x1]
    %v1364 = vsel %vm137, %v1360, 0.0
    %1365 = vadd.xlane.f32.xlu0 %v1364
    %v1366 = vpop.xlane.xlu0 %1365
    %v1367 = vsel %vm137, %v1361, 0.0
    %1368 = vadd.xlane.f32.xlu0 %v1367
    %v1369 = vpop.xlane.xlu0 %1368
    %v1370 = vrcp.pop 32.0
    %v1371 = vmul.f32 %v1366, %v1370
    %v1372 = vmul.f32 %v1369, %v1370
    %v1373 = vsub.f32 %v1360, %v1371
    %v1374 = vsub.f32 %v1361, %v1372
    %v1375 = vmul.f32 %v1373, %v1373
    %v1376 = vmul.f32 %v1374, %v1374
    %v1377 = vsel %vm137, %v1375, 0.0
    %1378 = vadd.xlane.f32.xlu0 %v1377
    %v1379 = vpop.xlane.xlu0 %1378
    %v1380 = vsel %vm137, %v1376, 0.0
    %1381 = vadd.xlane.f32.xlu0 %v1380
    %v1382 = vpop.xlane.xlu0 %1381
    %v1383 = vmul.f32 %v1379, %v1370
    %v1384 = vmul.f32 %v1382, %v1370
    %v1385 = vadd.f32 %v1383, 1e-05
    %v1386 = vadd.f32 %v1384, 1e-05
    %v1387 = vrsqrt.pop %v1385
    %v1388 = vrsqrt.pop %v1386
    %v1389 = vmul.f32 %v1373, %v1387
    %v1390 = vmul.f32 %v1374, %v1388
    %v1391 = vlaneseq
    %v1392 = vshrl.u32 %v1391, 7
    %v1393 = vsub.s32 0, %v1392
    %v1394 = vrot.slane %v1362, %v1393
    %v1395 = vmul.f32 %v1389, %v1394
    %v1396 = vmul.f32 %v1390, %v1394
    %v1397 = vlaneseq
    %v1398 = vshrl.u32 %v1397, 7
    %v1399 = vsub.s32 0, %v1398
    %v1400 = vrot.slane %v1363, %v1399
    %v1401 = vadd.f32 %v1395, %v1400
    %v1402 = vadd.f32 %v1396, %v1400
    %v1403 = vld [vmem:[#allocation2 + $0xb8] sm:$0xff]
    %v1404 = vld [vmem:[#allocation2 + $0xc0] sm:$0xff]
    %v1405 = vld [vmem:[#allocation2 + $0xc8] sm:$0xff]
    %v1406 = vld [vmem:[#allocation2 + $0xd0] sm:$0xff]
    %v1407 = vld [vmem:[#allocation2 + $0xd8] sm:$0x1]
    %v1408 = vlaneseq
    %v1409 = vshrl.u32 %v1408, 7
    %v1410 = vsub.s32 0, %v1409
    %v1411 = vrot.slane %v1407, %v1410
    %v1413 = vsel %vm137, %v1401, 0
    %v1416 = vsel %vm137, %v1402, 0
    %1418 = vmatprep.subr.mxu0 0.0
    %1419 = vmatpush1.msra.mxu0 %v1403
    %1420 = vmatprep.subr.mxu0 0.0
    %1421 = vmatpush1.msra.mxu0 %v1404
    %1422 = vmatprep.subr.mxu0 0.0
    %1423 = vmatpush1.msra.mxu0 %v1405
    %1424 = vmatprep.subr.mxu0 0.0
    %1425 = vmatpush1.msra.mxu0 %v1406
    %1426 = vmatprep.subr.mxu0 0.0
    %1427 = vmatpush1.msra.mxu0 0.0
    %1428 = vmatprep.subr.mxu0 0.0
    %1429 = vmatpush1.msra.mxu0 0.0
    %1430 = vmatprep.subr.mxu0 0.0
    %1431 = vmatpush1.msra.mxu0 0.0
    %1432 = vmatprep.subr.mxu0 0.0
    %1433 = vmatpush1.msra.mxu0 0.0
    %1434 = vmatprep.subr.mxu0 0.0
    %1435 = vmatpush1.msra.mxu0 0.0
    %1436 = vmatprep.subr.mxu0 0.0
    %1437 = vmatpush1.msra.mxu0 0.0
    %1438 = vmatprep.subr.mxu0 0.0
    %1439 = vmatpush1.msra.mxu0 0.0
    %1440 = vmatprep.subr.mxu0 0.0
    %1441 = vmatpush1.msra.mxu0 0.0
    %1442 = vmatprep.subr.mxu0 0.0
    %1443 = vmatpush1.msra.mxu0 0.0
    %1444 = vmatprep.subr.mxu0 0.0
    %1445 = vmatpush1.msra.mxu0 0.0
    %1446 = vmatprep.subr.mxu0 0.0
    %1447 = vmatpush1.msra.mxu0 0.0
    %1448 = vmatprep.subr.mxu0 0.0
    %1449 = vmatpush1.msra.mxu0 0.0
    %1450 = vmatprep.subr.mxu0 0.0
    %1451 = vmatpush1.msra.mxu0 0.0
    %1452 = vmatprep.subr.mxu0 0.0
    %1453 = vmatpush1.msra.mxu0 0.0
    %1454 = vmatprep.subr.mxu0 0.0
    %1455 = vmatpush1.msra.mxu0 0.0
    %1456 = vmatprep.subr.mxu0 0.0
    %1457 = vmatpush1.msra.mxu0 0.0
    %1458 = vmatprep.subr.mxu0 0.0
    %1459 = vmatpush1.msra.mxu0 0.0
    %1460 = vmatprep.subr.mxu0 0.0
    %1461 = vmatpush1.msra.mxu0 0.0
    %1462 = vmatprep.subr.mxu0 0.0
    %1463 = vmatpush1.msra.mxu0 0.0
    %1464 = vmatprep.subr.mxu0 0.0
    %1465 = vmatpush1.msra.mxu0 0.0
    %1466 = vmatprep.subr.mxu0 0.0
    %1467 = vmatpush1.msra.mxu0 0.0
    %1468 = vmatprep.subr.mxu0 0.0
    %1469 = vmatpush1.msra.mxu0 0.0
    %1470 = vmatprep.subr.mxu0 0.0
    %1471 = vmatpush1.msra.mxu0 0.0
    %1472 = vmatprep.subr.mxu0 0.0
    %1473 = vmatpush1.msra.mxu0 0.0
    %1474 = vmatprep.subr.mxu0 0.0
    %1475 = vmatpush1.msra.mxu0 0.0
    %1476 = vmatprep.subr.mxu0 0.0
    %1477 = vmatpush1.msra.mxu0 0.0
    %1478 = vmatprep.subr.mxu0 0.0
    %1479 = vmatpush1.msra.mxu0 0.0
    %1480 = vmatprep.subr.mxu0 0.0
    %1481 = vmatpush1.msra.mxu0 0.0
    %1482 = vmatprep.mubr.f32.mxu0 0.0
    %1483 = vmatmul.mubr.f32.gmra.mrb[0].mxu0 %v1413
    %v1484 = vpop.f32.mrb[0].mxu0
    %v1485 = vadd.f32 %v1411, %v1484
    %v1486 = vpop.f32.mrb[0].mxu0
    %1487 = vmatprep.mubr.f32.mxu0 0.0
    %1488 = vmatmul.mubr.f32.gmra.mrb[0].mxu0 %v1416
    %v1489 = vpop.f32.mrb[0].mxu0
    %v1490 = vadd.f32 %v1411, %v1489
    %v1491 = vpop.f32.mrb[0].mxu0
    %1492 = vdwg.mxu0
    %v1493 = vmax.f32 %v1485, 0.0
    %v1494 = vmax.f32 %v1490, 0.0
    %v1495 = vld [vmem:[#allocation2 + $0xe0] sm:$0xff]
    %v1496 = vld [vmem:[#allocation2 + $0xe8] sm:$0xff]
    %v1497 = vld [vmem:[#allocation2 + $0xf0] sm:$0xff]
    %v1498 = vld [vmem:[#allocation2 + $0xf8] sm:$0xff]
    %v1499 = vld [vmem:[#allocation2 + $0x100] sm:$0xff]
    %v1500 = vld [vmem:[#allocation2 + $0x108] sm:$0xff]
    %v1501 = vld [vmem:[#allocation2 + $0x110] sm:$0xff]
    %v1502 = vld [vmem:[#allocation2 + $0x118] sm:$0xff]
    %v1503 = vld [vmem:[#allocation2 + $0x120] sm:$0x1]
    %v1504 = vlaneseq
    %v1505 = vshrl.u32 %v1504, 7
    %v1506 = vsub.s32 0, %v1505
    %v1507 = vrot.slane %v1503, %v1506
    %vm1508 = vcmask 523264
    %v1510 = vsel %vm1508, %v1493, 0
    %v1513 = vsel %vm1508, %v1494, 0
    %1515 = vmatprep.subr.mxu0 0.0
    %1516 = vmatpush1.msra.mxu0 %v1495
    %1517 = vmatprep.subr.mxu0 0.0
    %1518 = vmatpush1.msra.mxu0 %v1496
    %1519 = vmatprep.subr.mxu0 0.0
    %1520 = vmatpush1.msra.mxu0 %v1497
    %1521 = vmatprep.subr.mxu0 0.0
    %1522 = vmatpush1.msra.mxu0 %v1498
    %1523 = vmatprep.subr.mxu0 0.0
    %1524 = vmatpush1.msra.mxu0 %v1499
    %1525 = vmatprep.subr.mxu0 0.0
    %1526 = vmatpush1.msra.mxu0 %v1500
    %1527 = vmatprep.subr.mxu0 0.0
    %1528 = vmatpush1.msra.mxu0 %v1501
    %1529 = vmatprep.subr.mxu0 0.0
    %1530 = vmatpush1.msra.mxu0 %v1502
    %1531 = vmatprep.subr.mxu0 0.0
    %1532 = vmatpush1.msra.mxu0 0.0
    %1533 = vmatprep.subr.mxu0 0.0
    %1534 = vmatpush1.msra.mxu0 0.0
    %1535 = vmatprep.subr.mxu0 0.0
    %1536 = vmatpush1.msra.mxu0 0.0
    %1537 = vmatprep.subr.mxu0 0.0
    %1538 = vmatpush1.msra.mxu0 0.0
    %1539 = vmatprep.subr.mxu0 0.0
    %1540 = vmatpush1.msra.mxu0 0.0
    %1541 = vmatprep.subr.mxu0 0.0
    %1542 = vmatpush1.msra.mxu0 0.0
    %1543 = vmatprep.subr.mxu0 0.0
    %1544 = vmatpush1.msra.mxu0 0.0
    %1545 = vmatprep.subr.mxu0 0.0
    %1546 = vmatpush1.msra.mxu0 0.0
    %1547 = vmatprep.subr.mxu0 0.0
    %1548 = vmatpush1.msra.mxu0 0.0
    %1549 = vmatprep.subr.mxu0 0.0
    %1550 = vmatpush1.msra.mxu0 0.0
    %1551 = vmatprep.subr.mxu0 0.0
    %1552 = vmatpush1.msra.mxu0 0.0
    %1553 = vmatprep.subr.mxu0 0.0
    %1554 = vmatpush1.msra.mxu0 0.0
    %1555 = vmatprep.subr.mxu0 0.0
    %1556 = vmatpush1.msra.mxu0 0.0
    %1557 = vmatprep.subr.mxu0 0.0
    %1558 = vmatpush1.msra.mxu0 0.0
    %1559 = vmatprep.subr.mxu0 0.0
    %1560 = vmatpush1.msra.mxu0 0.0
    %1561 = vmatprep.subr.mxu0 0.0
    %1562 = vmatpush1.msra.mxu0 0.0
    %1563 = vmatprep.subr.mxu0 0.0
    %1564 = vmatpush1.msra.mxu0 0.0
    %1565 = vmatprep.subr.mxu0 0.0
    %1566 = vmatpush1.msra.mxu0 0.0
    %1567 = vmatprep.subr.mxu0 0.0
    %1568 = vmatpush1.msra.mxu0 0.0
    %1569 = vmatprep.subr.mxu0 0.0
    %1570 = vmatpush1.msra.mxu0 0.0
    %1571 = vmatprep.subr.mxu0 0.0
    %1572 = vmatpush1.msra.mxu0 0.0
    %1573 = vmatprep.subr.mxu0 0.0
    %1574 = vmatpush1.msra.mxu0 0.0
    %1575 = vmatprep.subr.mxu0 0.0
    %1576 = vmatpush1.msra.mxu0 0.0
    %1577 = vmatprep.subr.mxu0 0.0
    %1578 = vmatpush1.msra.mxu0 0.0
    %1579 = vmatprep.mubr.f32.mxu0 0.0
    %1580 = vmatmul.mubr.f32.gmra.mrb[0].mxu0 %v1510
    %v1581 = vpop.f32.mrb[0].mxu0
    %v1582 = vadd.f32 %v1507, %v1581
    %v1583 = vpop.f32.mrb[0].mxu0
    %1584 = vmatprep.mubr.f32.mxu0 0.0
    %1585 = vmatmul.mubr.f32.gmra.mrb[0].mxu0 %v1513
    %v1586 = vpop.f32.mrb[0].mxu0
    %v1587 = vadd.f32 %v1507, %v1586
    %v1588 = vpop.f32.mrb[0].mxu0
    %1589 = vdwg.mxu0
    %v1590 = vadd.f32 %v1401, %v1582
    %v1591 = vadd.f32 %v1402, %v1587
    %v1592 = vld [vmem:[#allocation2 + $0x128] sm:$0x1]
    %v1593 = vld [vmem:[#allocation2 + $0x130] sm:$0x1]
    %v1594 = vsel %vm137, %v1590, 0.0
    %1595 = vadd.xlane.f32.xlu0 %v1594
    %v1596 = vpop.xlane.xlu0 %1595
    %v1597 = vsel %vm137, %v1591, 0.0
    %1598 = vadd.xlane.f32.xlu0 %v1597
    %v1599 = vpop.xlane.xlu0 %1598
    %v1600 = vmul.f32 %v1596, %v1370
    %v1601 = vmul.f32 %v1599, %v1370
    %v1602 = vsub.f32 %v1590, %v1600
    %v1603 = vsub.f32 %v1591, %v1601
    %v1604 = vmul.f32 %v1602, %v1602
    %v1605 = vmul.f32 %v1603, %v1603
    %v1606 = vsel %vm137, %v1604, 0.0
    %1607 = vadd.xlane.f32.xlu0 %v1606
    %v1608 = vpop.xlane.xlu0 %1607
    %v1609 = vsel %vm137, %v1605, 0.0
    %1610 = vadd.xlane.f32.xlu0 %v1609
    %v1611 = vpop.xlane.xlu0 %1610
    %v1612 = vmul.f32 %v1608, %v1370
    %v1613 = vmul.f32 %v1611, %v1370
    %v1614 = vadd.f32 %v1612, 1e-05
    %v1615 = vadd.f32 %v1613, 1e-05
    %v1616 = vrsqrt.pop %v1614
    %v1617 = vrsqrt.pop %v1615
    %v1618 = vmul.f32 %v1602, %v1616
    %v1619 = vmul.f32 %v1603, %v1617
    %v1620 = vlaneseq
    %v1621 = vshrl.u32 %v1620, 7
    %v1622 = vsub.s32 0, %v1621
    %v1623 = vrot.slane %v1592, %v1622
    %v1624 = vmul.f32 %v1618, %v1623
    %v1625 = vmul.f32 %v1619, %v1623
    %v1626 = vlaneseq
    %v1627 = vshrl.u32 %v1626, 7
    %v1628 = vsub.s32 0, %v1627
    %v1629 = vrot.slane %v1593, %v1628
    %v1630 = vadd.f32 %v1624, %v1629
    %v1631 = vadd.f32 %v1625, %v1629
    %v1632 = vld [vmem:[#allocation2 + $0x138] sm:$0xff]
    %v1633 = vld [vmem:[#allocation2 + $0x140] sm:$0xff]
    %v1634 = vld [vmem:[#allocation2 + $0x148] sm:$0xff]
    %v1635 = vld [vmem:[#allocation2 + $0x150] sm:$0xff]
    %v1636 = vld [vmem:[#allocation2 + $0x158] sm:$0x1]
    %v1637 = vlaneseq
    %v1638 = vshrl.u32 %v1637, 7
    %v1639 = vsub.s32 0, %v1638
    %v1640 = vrot.slane %v1636, %v1639
    %v1642 = vsel %vm137, %v1630, 0
    %v1645 = vsel %vm137, %v1631, 0
    %1647 = vmatprep.subr.mxu0 0.0
    %1648 = vmatpush1.msra.mxu0 %v1632
    %1649 = vmatprep.subr.mxu0 0.0
    %1650 = vmatpush1.msra.mxu0 %v1633
    %1651 = vmatprep.subr.mxu0 0.0
    %1652 = vmatpush1.msra.mxu0 %v1634
    %1653 = vmatprep.subr.mxu0 0.0
    %1654 = vmatpush1.msra.mxu0 %v1635
    %1655 = vmatprep.subr.mxu0 0.0
    %1656 = vmatpush1.msra.mxu0 0.0
    %1657 = vmatprep.subr.mxu0 0.0
    %1658 = vmatpush1.msra.mxu0 0.0
    %1659 = vmatprep.subr.mxu0 0.0
    %1660 = vmatpush1.msra.mxu0 0.0
    %1661 = vmatprep.subr.mxu0 0.0
    %1662 = vmatpush1.msra.mxu0 0.0
    %1663 = vmatprep.subr.mxu0 0.0
    %1664 = vmatpush1.msra.mxu0 0.0
    %1665 = vmatprep.subr.mxu0 0.0
    %1666 = vmatpush1.msra.mxu0 0.0
    %1667 = vmatprep.subr.mxu0 0.0
    %1668 = vmatpush1.msra.mxu0 0.0
    %1669 = vmatprep.subr.mxu0 0.0
    %1670 = vmatpush1.msra.mxu0 0.0
    %1671 = vmatprep.subr.mxu0 0.0
    %1672 = vmatpush1.msra.mxu0 0.0
    %1673 = vmatprep.subr.mxu0 0.0
    %1674 = vmatpush1.msra.mxu0 0.0
    %1675 = vmatprep.subr.mxu0 0.0
    %1676 = vmatpush1.msra.mxu0 0.0
    %1677 = vmatprep.subr.mxu0 0.0
    %1678 = vmatpush1.msra.mxu0 0.0
    %1679 = vmatprep.subr.mxu0 0.0
    %1680 = vmatpush1.msra.mxu0 0.0
    %1681 = vmatprep.subr.mxu0 0.0
    %1682 = vmatpush1.msra.mxu0 0.0
    %1683 = vmatprep.subr.mxu0 0.0
    %1684 = vmatpush1.msra.mxu0 0.0
    %1685 = vmatprep.subr.mxu0 0.0
    %1686 = vmatpush1.msra.mxu0 0.0
    %1687 = vmatprep.subr.mxu0 0.0
    %1688 = vmatpush1.msra.mxu0 0.0
    %1689 = vmatprep.subr.mxu0 0.0
    %1690 = vmatpush1.msra.mxu0 0.0
    %1691 = vmatprep.subr.mxu0 0.0
    %1692 = vmatpush1.msra.mxu0 0.0
    %1693 = vmatprep.subr.mxu0 0.0
    %1694 = vmatpush1.msra.mxu0 0.0
    %1695 = vmatprep.subr.mxu0 0.0
    %1696 = vmatpush1.msra.mxu0 0.0
    %1697 = vmatprep.subr.mxu0 0.0
    %1698 = vmatpush1.msra.mxu0 0.0
    %1699 = vmatprep.subr.mxu0 0.0
    %1700 = vmatpush1.msra.mxu0 0.0
    %1701 = vmatprep.subr.mxu0 0.0
    %1702 = vmatpush1.msra.mxu0 0.0
    %1703 = vmatprep.subr.mxu0 0.0
    %1704 = vmatpush1.msra.mxu0 0.0
    %1705 = vmatprep.subr.mxu0 0.0
    %1706 = vmatpush1.msra.mxu0 0.0
    %1707 = vmatprep.subr.mxu0 0.0
    %1708 = vmatpush1.msra.mxu0 0.0
    %1709 = vmatprep.subr.mxu0 0.0
    %1710 = vmatpush1.msra.mxu0 0.0
    %1711 = vmatprep.mubr.f32.mxu0 0.0
    %1712 = vmatmul.mubr.f32.gmra.mrb[0].mxu0 %v1642
    %v1713 = vpop.f32.mrb[0].mxu0
    %v1714 = vadd.f32 %v1640, %v1713
    %v1715 = vpop.f32.mrb[0].mxu0
    %1716 = vmatprep.mubr.f32.mxu0 0.0
    %1717 = vmatmul.mubr.f32.gmra.mrb[0].mxu0 %v1645
    %v1718 = vpop.f32.mrb[0].mxu0
    %v1719 = vadd.f32 %v1640, %v1718
    %v1720 = vpop.f32.mrb[0].mxu0
    %1721 = vdwg.mxu0
    %v1722 = vld [vmem:[#allocation2 + $0x160] sm:$0xff]
    %v1723 = vld [vmem:[#allocation2 + $0x168] sm:$0xff]
    %v1724 = vld [vmem:[#allocation2 + $0x170] sm:$0xff]
    %v1725 = vld [vmem:[#allocation2 + $0x178] sm:$0xff]
    %v1726 = vld [vmem:[#allocation2 + $0x180] sm:$0x1]
    %1729 = vrot.lane.b32.xlu0 %v1714, 96
    %v1730 = vpop.permute.xlu0 %1729
    %1731 = vrot.lane.b32.xlu0 %v1719, 96
    %v1732 = vpop.permute.xlu0 %1731
    %v1733 = vsel %vm230, %v1714, 0
    %v1735 = vsel %vm230, %v1719, 0
    %v1737 = vsel %vm230, %v1730, 0
    %v1739 = vsel %vm230, %v1732, 0
    %1741 = vmatprep.subr.mxu0 0.0
    %1742 = vmatpush1.xpose.msra.mxu0 %v1737
    %1743 = vmatprep.subr.mxu0 0.0
    %1744 = vmatpush1.xpose.msra.mxu0 %v1739
    %1745 = vmatprep.subr.mxu0 0.0
    %1746 = vmatpush1.xpose.msra.mxu0 0.0
    %1747 = vmatprep.subr.mxu0 0.0
    %1748 = vmatpush1.xpose.msra.mxu0 0.0
    %1749 = vmatprep.subr.mxu0 0.0
    %1750 = vmatpush1.xpose.msra.mxu0 0.0
    %1751 = vmatprep.subr.mxu0 0.0
    %1752 = vmatpush1.xpose.msra.mxu0 0.0
    %1753 = vmatprep.subr.mxu0 0.0
    %1754 = vmatpush1.xpose.msra.mxu0 0.0
    %1755 = vmatprep.subr.mxu0 0.0
    %1756 = vmatpush1.xpose.msra.mxu0 0.0
    %1757 = vmatprep.subr.mxu0 0.0
    %1758 = vmatpush1.xpose.msra.mxu0 0.0
    %1759 = vmatprep.subr.mxu0 0.0
    %1760 = vmatpush1.xpose.msra.mxu0 0.0
    %1761 = vmatprep.subr.mxu0 0.0
    %1762 = vmatpush1.xpose.msra.mxu0 0.0
    %1763 = vmatprep.subr.mxu0 0.0
    %1764 = vmatpush1.xpose.msra.mxu0 0.0
    %1765 = vmatprep.subr.mxu0 0.0
    %1766 = vmatpush1.xpose.msra.mxu0 0.0
    %1767 = vmatprep.subr.mxu0 0.0
    %1768 = vmatpush1.xpose.msra.mxu0 0.0
    %1769 = vmatprep.subr.mxu0 0.0
    %1770 = vmatpush1.xpose.msra.mxu0 0.0
    %1771 = vmatprep.subr.mxu0 0.0
    %1772 = vmatpush1.xpose.msra.mxu0 0.0
    %1773 = vmatprep.subr.mxu0 0.0
    %1774 = vmatpush1.xpose.msra.mxu0 0.0
    %1775 = vmatprep.subr.mxu0 0.0
    %1776 = vmatpush1.xpose.msra.mxu0 0.0
    %1777 = vmatprep.subr.mxu0 0.0
    %1778 = vmatpush1.xpose.msra.mxu0 0.0
    %1779 = vmatprep.subr.mxu0 0.0
    %1780 = vmatpush1.xpose.msra.mxu0 0.0
    %1781 = vmatprep.subr.mxu0 0.0
    %1782 = vmatpush1.xpose.msra.mxu0 0.0
    %1783 = vmatprep.subr.mxu0 0.0
    %1784 = vmatpush1.xpose.msra.mxu0 0.0
    %1785 = vmatprep.subr.mxu0 0.0
    %1786 = vmatpush1.xpose.msra.mxu0 0.0
    %1787 = vmatprep.subr.mxu0 0.0
    %1788 = vmatpush1.xpose.msra.mxu0 0.0
    %1789 = vmatprep.subr.mxu0 0.0
    %1790 = vmatpush1.xpose.msra.mxu0 0.0
    %1791 = vmatprep.subr.mxu0 0.0
    %1792 = vmatpush1.xpose.msra.mxu0 0.0
    %1793 = vmatprep.subr.mxu0 0.0
    %1794 = vmatpush1.xpose.msra.mxu0 0.0
    %1795 = vmatprep.subr.mxu0 0.0
    %1796 = vmatpush1.xpose.msra.mxu0 0.0
    %1797 = vmatprep.subr.mxu0 0.0
    %1798 = vmatpush1.xpose.msra.mxu0 0.0
    %1799 = vmatprep.subr.mxu0 0.0
    %1800 = vmatpush1.xpose.msra.mxu0 0.0
    %1801 = vmatprep.subr.mxu0 0.0
    %1802 = vmatpush1.xpose.msra.mxu0 0.0
    %1803 = vmatprep.subr.mxu0 0.0
    %1804 = vmatpush1.xpose.msra.mxu0 0.0
    %1805 = vmatprep.mubr.f32.mxu0 0.0
    %1806 = vmatmul.mubr.f32.gmra.mrb[0].mxu0 %v1733
    %v1807 = vpop.f32.mrb[0].mxu0
    %v1808 = vadd.f32 %v27, %v1807
    %v1809 = vpop.f32.mrb[0].mxu0
    %1810 = vmatprep.mubr.f32.mxu0 0.0
    %1811 = vmatmul.mubr.f32.gmra.mrb[0].mxu0 %v1735
    %v1812 = vpop.f32.mrb[0].mxu0
    %v1813 = vadd.f32 %v28, %v1812
    %v1814 = vpop.f32.mrb[0].mxu0
    %1815 = vdwg.mxu0
    %v1816 = vsel %vm314, %v1808, -inf
    %1817 = vmax.xlane.f32.xlu0 %v1816
    %v1818 = vpop.xlane.xlu0 %1817
    %v1819 = vsel %vm314, %v1813, -inf
    %1820 = vmax.xlane.f32.xlu0 %v1819
    %v1821 = vpop.xlane.xlu0 %1820
    %v1822 = vsub.f32 %v1808, %v1818
    %v1823 = vsub.f32 %v1813, %v1821
    %v1824 = vmul.f32 %v1822, 1.442695
    %v1825 = vpow.pop %v1824
    %v1826 = vmul.f32 %v1823, 1.442695
    %v1827 = vpow.pop %v1826
    %v1828 = vsel %vm314, %v1825, 0.0
    %1829 = vadd.xlane.f32.xlu0 %v1828
    %v1830 = vpop.xlane.xlu0 %1829
    %v1831 = vsel %vm314, %v1827, 0.0
    %1832 = vadd.xlane.f32.xlu0 %v1831
    %v1833 = vpop.xlane.xlu0 %1832
    %v1834 = vrcp.pop %v1830
    %v1835 = vrcp.pop %v1833
    %v1836 = vmul.f32 %v1825, %v1834
    %v1837 = vmul.f32 %v1827, %v1835
    %1838 = vrot.lane.b32.xlu0 %v1714, 64
    %v1839 = vpop.permute.xlu0 %1838
    %1840 = vrot.lane.b32.xlu0 %v1719, 64
    %v1841 = vpop.permute.xlu0 %1840
    %v1845 = vsel %vm314, %v1836, 0
    %v1848 = vsel %vm314, %v1837, 0
    %1850 = vmatprep.subr.mxu0 0.0
    %1851 = vmatpush1.msra.mxu0 %v1839
    %1852 = vmatprep.subr.mxu0 0.0
    %1853 = vmatpush1.msra.mxu0 %v1841
    %1854 = vmatprep.subr.mxu0 0.0
    %1855 = vmatpush1.msra.mxu0 0.0
    %1856 = vmatprep.subr.mxu0 0.0
    %1857 = vmatpush1.msra.mxu0 0.0
    %1858 = vmatprep.subr.mxu0 0.0
    %1859 = vmatpush1.msra.mxu0 0.0
    %1860 = vmatprep.subr.mxu0 0.0
    %1861 = vmatpush1.msra.mxu0 0.0
    %1862 = vmatprep.subr.mxu0 0.0
    %1863 = vmatpush1.msra.mxu0 0.0
    %1864 = vmatprep.subr.mxu0 0.0
    %1865 = vmatpush1.msra.mxu0 0.0
    %1866 = vmatprep.subr.mxu0 0.0
    %1867 = vmatpush1.msra.mxu0 0.0
    %1868 = vmatprep.subr.mxu0 0.0
    %1869 = vmatpush1.msra.mxu0 0.0
    %1870 = vmatprep.subr.mxu0 0.0
    %1871 = vmatpush1.msra.mxu0 0.0
    %1872 = vmatprep.subr.mxu0 0.0
    %1873 = vmatpush1.msra.mxu0 0.0
    %1874 = vmatprep.subr.mxu0 0.0
    %1875 = vmatpush1.msra.mxu0 0.0
    %1876 = vmatprep.subr.mxu0 0.0
    %1877 = vmatpush1.msra.mxu0 0.0
    %1878 = vmatprep.subr.mxu0 0.0
    %1879 = vmatpush1.msra.mxu0 0.0
    %1880 = vmatprep.subr.mxu0 0.0
    %1881 = vmatpush1.msra.mxu0 0.0
    %1882 = vmatprep.subr.mxu0 0.0
    %1883 = vmatpush1.msra.mxu0 0.0
    %1884 = vmatprep.subr.mxu0 0.0
    %1885 = vmatpush1.msra.mxu0 0.0
    %1886 = vmatprep.subr.mxu0 0.0
    %1887 = vmatpush1.msra.mxu0 0.0
    %1888 = vmatprep.subr.mxu0 0.0
    %1889 = vmatpush1.msra.mxu0 0.0
    %1890 = vmatprep.subr.mxu0 0.0
    %1891 = vmatpush1.msra.mxu0 0.0
    %1892 = vmatprep.subr.mxu0 0.0
    %1893 = vmatpush1.msra.mxu0 0.0
    %1894 = vmatprep.subr.mxu0 0.0
    %1895 = vmatpush1.msra.mxu0 0.0
    %1896 = vmatprep.subr.mxu0 0.0
    %1897 = vmatpush1.msra.mxu0 0.0
    %1898 = vmatprep.subr.mxu0 0.0
    %1899 = vmatpush1.msra.mxu0 0.0
    %1900 = vmatprep.subr.mxu0 0.0
    %1901 = vmatpush1.msra.mxu0 0.0
    %1902 = vmatprep.subr.mxu0 0.0
    %1903 = vmatpush1.msra.mxu0 0.0
    %1904 = vmatprep.subr.mxu0 0.0
    %1905 = vmatpush1.msra.mxu0 0.0
    %1906 = vmatprep.subr.mxu0 0.0
    %1907 = vmatpush1.msra.mxu0 0.0
    %1908 = vmatprep.subr.mxu0 0.0
    %1909 = vmatpush1.msra.mxu0 0.0
    %1910 = vmatprep.subr.mxu0 0.0
    %1911 = vmatpush1.msra.mxu0 0.0
    %1912 = vmatprep.subr.mxu0 0.0
    %1913 = vmatpush1.msra.mxu0 0.0
    %1914 = vmatprep.mubr.f32.mxu0 0.0
    %1915 = vmatmul.mubr.f32.gmra.mrb[0].mxu0 %v1845
    %v1916 = vpop.f32.mrb[0].mxu0
    %v1917 = vadd.f32 0.0, %v1916
    %v1918 = vpop.f32.mrb[0].mxu0
    %1919 = vmatprep.mubr.f32.mxu0 0.0
    %1920 = vmatmul.mubr.f32.gmra.mrb[0].mxu0 %v1848
    %v1921 = vpop.f32.mrb[0].mxu0
    %v1922 = vadd.f32 0.0, %v1921
    %v1923 = vpop.f32.mrb[0].mxu0
    %1924 = vdwg.mxu0
    %v1926 = vsel %vm230, %v1917, 0
    %v1929 = vsel %vm230, %v1922, 0
    %1931 = vmatprep.subr.mxu0 0.0
    %1932 = vmatpush1.msra.mxu0 %v1722
    %1933 = vmatprep.subr.mxu0 0.0
    %1934 = vmatpush1.msra.mxu0 0.0
    %1935 = vmatprep.subr.mxu0 0.0
    %1936 = vmatpush1.msra.mxu0 0.0
    %1937 = vmatprep.subr.mxu0 0.0
    %1938 = vmatpush1.msra.mxu0 0.0
    %1939 = vmatprep.subr.mxu0 0.0
    %1940 = vmatpush1.msra.mxu0 0.0
    %1941 = vmatprep.subr.mxu0 0.0
    %1942 = vmatpush1.msra.mxu0 0.0
    %1943 = vmatprep.subr.mxu0 0.0
    %1944 = vmatpush1.msra.mxu0 0.0
    %1945 = vmatprep.subr.mxu0 0.0
    %1946 = vmatpush1.msra.mxu0 0.0
    %1947 = vmatprep.subr.mxu0 0.0
    %1948 = vmatpush1.msra.mxu0 0.0
    %1949 = vmatprep.subr.mxu0 0.0
    %1950 = vmatpush1.msra.mxu0 0.0
    %1951 = vmatprep.subr.mxu0 0.0
    %1952 = vmatpush1.msra.mxu0 0.0
    %1953 = vmatprep.subr.mxu0 0.0
    %1954 = vmatpush1.msra.mxu0 0.0
    %1955 = vmatprep.subr.mxu0 0.0
    %1956 = vmatpush1.msra.mxu0 0.0
    %1957 = vmatprep.subr.mxu0 0.0
    %1958 = vmatpush1.msra.mxu0 0.0
    %1959 = vmatprep.subr.mxu0 0.0
    %1960 = vmatpush1.msra.mxu0 0.0
    %1961 = vmatprep.subr.mxu0 0.0
    %1962 = vmatpush1.msra.mxu0 0.0
    %1963 = vmatprep.subr.mxu0 0.0
    %1964 = vmatpush1.msra.mxu0 0.0
    %1965 = vmatprep.subr.mxu0 0.0
    %1966 = vmatpush1.msra.mxu0 0.0
    %1967 = vmatprep.subr.mxu0 0.0
    %1968 = vmatpush1.msra.mxu0 0.0
    %1969 = vmatprep.subr.mxu0 0.0
    %1970 = vmatpush1.msra.mxu0 0.0
    %1971 = vmatprep.subr.mxu0 0.0
    %1972 = vmatpush1.msra.mxu0 0.0
    %1973 = vmatprep.subr.mxu0 0.0
    %1974 = vmatpush1.msra.mxu0 0.0
    %1975 = vmatprep.subr.mxu0 0.0
    %1976 = vmatpush1.msra.mxu0 0.0
    %1977 = vmatprep.subr.mxu0 0.0
    %1978 = vmatpush1.msra.mxu0 0.0
    %1979 = vmatprep.subr.mxu0 0.0
    %1980 = vmatpush1.msra.mxu0 0.0
    %1981 = vmatprep.subr.mxu0 0.0
    %1982 = vmatpush1.msra.mxu0 0.0
    %1983 = vmatprep.subr.mxu0 0.0
    %1984 = vmatpush1.msra.mxu0 0.0
    %1985 = vmatprep.subr.mxu0 0.0
    %1986 = vmatpush1.msra.mxu0 0.0
    %1987 = vmatprep.subr.mxu0 0.0
    %1988 = vmatpush1.msra.mxu0 0.0
    %1989 = vmatprep.subr.mxu0 0.0
    %1990 = vmatpush1.msra.mxu0 0.0
    %1991 = vmatprep.subr.mxu0 0.0
    %1992 = vmatpush1.msra.mxu0 0.0
    %1993 = vmatprep.subr.mxu0 0.0
    %1994 = vmatpush1.msra.mxu0 0.0
    %1995 = vmatprep.mubr.f32.mxu0 0.0
    %1996 = vmatmul.mubr.f32.gmra.mrb[0].mxu0 %v1926
    %v1997 = vpop.f32.mrb[0].mxu0
    %v1998 = vadd.f32 0.0, %v1997
    %v1999 = vpop.f32.mrb[0].mxu0
    %2000 = vmatprep.mubr.f32.mxu0 0.0
    %2001 = vmatmul.mubr.f32.gmra.mrb[0].mxu0 %v1929
    %v2002 = vpop.f32.mrb[0].mxu0
    %v2003 = vadd.f32 0.0, %v2002
    %v2004 = vpop.f32.mrb[0].mxu0
    %2005 = vdwg.mxu0
    %v2006 = vlaneseq
    %v2007 = vshrl.u32 %v2006, 7
    %v2008 = vsub.s32 0, %v2007
    %v2009 = vrot.slane %v1726, %v2008
    %v2010 = vadd.f32 %v2009, %v1998
    %v2011 = vadd.f32 %v2009, %v2003
    %2012 = vrot.lane.b32.xlu0 %v1714, 120
    %v2013 = vpop.permute.xlu0 %2012
    %2014 = vrot.lane.b32.xlu0 %v1719, 120
    %v2015 = vpop.permute.xlu0 %2014
    %2016 = vrot.lane.b32.xlu0 %v1714, 88
    %v2017 = vpop.permute.xlu0 %2016
    %2018 = vrot.lane.b32.xlu0 %v1719, 88
    %v2019 = vpop.permute.xlu0 %2018
    %v2020 = vsel %vm230, %v2013, 0
    %v2022 = vsel %vm230, %v2015, 0
    %v2024 = vsel %vm230, %v2017, 0
    %v2026 = vsel %vm230, %v2019, 0
    %2028 = vmatprep.subr.mxu0 0.0
    %2029 = vmatpush1.xpose.msra.mxu0 %v2024
    %2030 = vmatprep.subr.mxu0 0.0
    %2031 = vmatpush1.xpose.msra.mxu0 %v2026
    %2032 = vmatprep.subr.mxu0 0.0
    %2033 = vmatpush1.xpose.msra.mxu0 0.0
    %2034 = vmatprep.subr.mxu0 0.0
    %2035 = vmatpush1.xpose.msra.mxu0 0.0
    %2036 = vmatprep.subr.mxu0 0.0
    %2037 = vmatpush1.xpose.msra.mxu0 0.0
    %2038 = vmatprep.subr.mxu0 0.0
    %2039 = vmatpush1.xpose.msra.mxu0 0.0
    %2040 = vmatprep.subr.mxu0 0.0
    %2041 = vmatpush1.xpose.msra.mxu0 0.0
    %2042 = vmatprep.subr.mxu0 0.0
    %2043 = vmatpush1.xpose.msra.mxu0 0.0
    %2044 = vmatprep.subr.mxu0 0.0
    %2045 = vmatpush1.xpose.msra.mxu0 0.0
    %2046 = vmatprep.subr.mxu0 0.0
    %2047 = vmatpush1.xpose.msra.mxu0 0.0
    %2048 = vmatprep.subr.mxu0 0.0
    %2049 = vmatpush1.xpose.msra.mxu0 0.0
    %2050 = vmatprep.subr.mxu0 0.0
    %2051 = vmatpush1.xpose.msra.mxu0 0.0
    %2052 = vmatprep.subr.mxu0 0.0
    %2053 = vmatpush1.xpose.msra.mxu0 0.0
    %2054 = vmatprep.subr.mxu0 0.0
    %2055 = vmatpush1.xpose.msra.mxu0 0.0
    %2056 = vmatprep.subr.mxu0 0.0
    %2057 = vmatpush1.xpose.msra.mxu0 0.0
    %2058 = vmatprep.subr.mxu0 0.0
    %2059 = vmatpush1.xpose.msra.mxu0 0.0
    %2060 = vmatprep.subr.mxu0 0.0
    %2061 = vmatpush1.xpose.msra.mxu0 0.0
    %2062 = vmatprep.subr.mxu0 0.0
    %2063 = vmatpush1.xpose.msra.mxu0 0.0
    %2064 = vmatprep.subr.mxu0 0.0
    %2065 = vmatpush1.xpose.msra.mxu0 0.0
    %2066 = vmatprep.subr.mxu0 0.0
    %2067 = vmatpush1.xpose.msra.mxu0 0.0
    %2068 = vmatprep.subr.mxu0 0.0
    %2069 = vmatpush1.xpose.msra.mxu0 0.0
    %2070 = vmatprep.subr.mxu0 0.0
    %2071 = vmatpush1.xpose.msra.mxu0 0.0
    %2072 = vmatprep.subr.mxu0 0.0
    %2073 = vmatpush1.xpose.msra.mxu0 0.0
    %2074 = vmatprep.subr.mxu0 0.0
    %2075 = vmatpush1.xpose.msra.mxu0 0.0
    %2076 = vmatprep.subr.mxu0 0.0
    %2077 = vmatpush1.xpose.msra.mxu0 0.0
    %2078 = vmatprep.subr.mxu0 0.0
    %2079 = vmatpush1.xpose.msra.mxu0 0.0
    %2080 = vmatprep.subr.mxu0 0.0
    %2081 = vmatpush1.xpose.msra.mxu0 0.0
    %2082 = vmatprep.subr.mxu0 0.0
    %2083 = vmatpush1.xpose.msra.mxu0 0.0
    %2084 = vmatprep.subr.mxu0 0.0
    %2085 = vmatpush1.xpose.msra.mxu0 0.0
    %2086 = vmatprep.subr.mxu0 0.0
    %2087 = vmatpush1.xpose.msra.mxu0 0.0
    %2088 = vmatprep.subr.mxu0 0.0
    %2089 = vmatpush1.xpose.msra.mxu0 0.0
    %2090 = vmatprep.subr.mxu0 0.0
    %2091 = vmatpush1.xpose.msra.mxu0 0.0
    %2092 = vmatprep.mubr.f32.mxu0 0.0
    %2093 = vmatmul.mubr.f32.gmra.mrb[0].mxu0 %v2020
    %v2094 = vpop.f32.mrb[0].mxu0
    %v2095 = vadd.f32 %v27, %v2094
    %v2096 = vpop.f32.mrb[0].mxu0
    %2097 = vmatprep.mubr.f32.mxu0 0.0
    %2098 = vmatmul.mubr.f32.gmra.mrb[0].mxu0 %v2022
    %v2099 = vpop.f32.mrb[0].mxu0
    %v2100 = vadd.f32 %v28, %v2099
    %v2101 = vpop.f32.mrb[0].mxu0
    %2102 = vdwg.mxu0
    %v2103 = vsel %vm314, %v2095, -inf
    %2104 = vmax.xlane.f32.xlu0 %v2103
    %v2105 = vpop.xlane.xlu0 %2104
    %v2106 = vsel %vm314, %v2100, -inf
    %2107 = vmax.xlane.f32.xlu0 %v2106
    %v2108 = vpop.xlane.xlu0 %2107
    %v2109 = vsub.f32 %v2095, %v2105
    %v2110 = vsub.f32 %v2100, %v2108
    %v2111 = vmul.f32 %v2109, 1.442695
    %v2112 = vpow.pop %v2111
    %v2113 = vmul.f32 %v2110, 1.442695
    %v2114 = vpow.pop %v2113
    %v2115 = vsel %vm314, %v2112, 0.0
    %2116 = vadd.xlane.f32.xlu0 %v2115
    %v2117 = vpop.xlane.xlu0 %2116
    %v2118 = vsel %vm314, %v2114, 0.0
    %2119 = vadd.xlane.f32.xlu0 %v2118
    %v2120 = vpop.xlane.xlu0 %2119
    %v2121 = vrcp.pop %v2117
    %v2122 = vrcp.pop %v2120
    %v2123 = vmul.f32 %v2112, %v2121
    %v2124 = vmul.f32 %v2114, %v2122
    %2125 = vrot.lane.b32.xlu0 %v1714, 56
    %v2126 = vpop.permute.xlu0 %2125
    %2127 = vrot.lane.b32.xlu0 %v1719, 56
    %v2128 = vpop.permute.xlu0 %2127
    %v2132 = vsel %vm314, %v2123, 0
    %v2135 = vsel %vm314, %v2124, 0
    %2137 = vmatprep.subr.mxu0 0.0
    %2138 = vmatpush1.msra.mxu0 %v2126
    %2139 = vmatprep.subr.mxu0 0.0
    %2140 = vmatpush1.msra.mxu0 %v2128
    %2141 = vmatprep.subr.mxu0 0.0
    %2142 = vmatpush1.msra.mxu0 0.0
    %2143 = vmatprep.subr.mxu0 0.0
    %2144 = vmatpush1.msra.mxu0 0.0
    %2145 = vmatprep.subr.mxu0 0.0
    %2146 = vmatpush1.msra.mxu0 0.0
    %2147 = vmatprep.subr.mxu0 0.0
    %2148 = vmatpush1.msra.mxu0 0.0
    %2149 = vmatprep.subr.mxu0 0.0
    %2150 = vmatpush1.msra.mxu0 0.0
    %2151 = vmatprep.subr.mxu0 0.0
    %2152 = vmatpush1.msra.mxu0 0.0
    %2153 = vmatprep.subr.mxu0 0.0
    %2154 = vmatpush1.msra.mxu0 0.0
    %2155 = vmatprep.subr.mxu0 0.0
    %2156 = vmatpush1.msra.mxu0 0.0
    %2157 = vmatprep.subr.mxu0 0.0
    %2158 = vmatpush1.msra.mxu0 0.0
    %2159 = vmatprep.subr.mxu0 0.0
    %2160 = vmatpush1.msra.mxu0 0.0
    %2161 = vmatprep.subr.mxu0 0.0
    %2162 = vmatpush1.msra.mxu0 0.0
    %2163 = vmatprep.subr.mxu0 0.0
    %2164 = vmatpush1.msra.mxu0 0.0
    %2165 = vmatprep.subr.mxu0 0.0
    %2166 = vmatpush1.msra.mxu0 0.0
    %2167 = vmatprep.subr.mxu0 0.0
    %2168 = vmatpush1.msra.mxu0 0.0
    %2169 = vmatprep.subr.mxu0 0.0
    %2170 = vmatpush1.msra.mxu0 0.0
    %2171 = vmatprep.subr.mxu0 0.0
    %2172 = vmatpush1.msra.mxu0 0.0
    %2173 = vmatprep.subr.mxu0 0.0
    %2174 = vmatpush1.msra.mxu0 0.0
    %2175 = vmatprep.subr.mxu0 0.0
    %2176 = vmatpush1.msra.mxu0 0.0
    %2177 = vmatprep.subr.mxu0 0.0
    %2178 = vmatpush1.msra.mxu0 0.0
    %2179 = vmatprep.subr.mxu0 0.0
    %2180 = vmatpush1.msra.mxu0 0.0
    %2181 = vmatprep.subr.mxu0 0.0
    %2182 = vmatpush1.msra.mxu0 0.0
    %2183 = vmatprep.subr.mxu0 0.0
    %2184 = vmatpush1.msra.mxu0 0.0
    %2185 = vmatprep.subr.mxu0 0.0
    %2186 = vmatpush1.msra.mxu0 0.0
    %2187 = vmatprep.subr.mxu0 0.0
    %2188 = vmatpush1.msra.mxu0 0.0
    %2189 = vmatprep.subr.mxu0 0.0
    %2190 = vmatpush1.msra.mxu0 0.0
    %2191 = vmatprep.subr.mxu0 0.0
    %2192 = vmatpush1.msra.mxu0 0.0
    %2193 = vmatprep.subr.mxu0 0.0
    %2194 = vmatpush1.msra.mxu0 0.0
    %2195 = vmatprep.subr.mxu0 0.0
    %2196 = vmatpush1.msra.mxu0 0.0
    %2197 = vmatprep.subr.mxu0 0.0
    %2198 = vmatpush1.msra.mxu0 0.0
    %2199 = vmatprep.subr.mxu0 0.0
    %2200 = vmatpush1.msra.mxu0 0.0
    %2201 = vmatprep.mubr.f32.mxu0 0.0
    %2202 = vmatmul.mubr.f32.gmra.mrb[0].mxu0 %v2132
    %v2203 = vpop.f32.mrb[0].mxu0
    %v2204 = vadd.f32 0.0, %v2203
    %v2205 = vpop.f32.mrb[0].mxu0
    %2206 = vmatprep.mubr.f32.mxu0 0.0
    %2207 = vmatmul.mubr.f32.gmra.mrb[0].mxu0 %v2135
    %v2208 = vpop.f32.mrb[0].mxu0
    %v2209 = vadd.f32 0.0, %v2208
    %v2210 = vpop.f32.mrb[0].mxu0
    %2211 = vdwg.mxu0
    %v2213 = vsel %vm230, %v2204, 0
    %v2216 = vsel %vm230, %v2209, 0
    %2218 = vmatprep.subr.mxu0 0.0
    %2219 = vmatpush1.msra.mxu0 %v1723
    %2220 = vmatprep.subr.mxu0 0.0
    %2221 = vmatpush1.msra.mxu0 0.0
    %2222 = vmatprep.subr.mxu0 0.0
    %2223 = vmatpush1.msra.mxu0 0.0
    %2224 = vmatprep.subr.mxu0 0.0
    %2225 = vmatpush1.msra.mxu0 0.0
    %2226 = vmatprep.subr.mxu0 0.0
    %2227 = vmatpush1.msra.mxu0 0.0
    %2228 = vmatprep.subr.mxu0 0.0
    %2229 = vmatpush1.msra.mxu0 0.0
    %2230 = vmatprep.subr.mxu0 0.0
    %2231 = vmatpush1.msra.mxu0 0.0
    %2232 = vmatprep.subr.mxu0 0.0
    %2233 = vmatpush1.msra.mxu0 0.0
    %2234 = vmatprep.subr.mxu0 0.0
    %2235 = vmatpush1.msra.mxu0 0.0
    %2236 = vmatprep.subr.mxu0 0.0
    %2237 = vmatpush1.msra.mxu0 0.0
    %2238 = vmatprep.subr.mxu0 0.0
    %2239 = vmatpush1.msra.mxu0 0.0
    %2240 = vmatprep.subr.mxu0 0.0
    %2241 = vmatpush1.msra.mxu0 0.0
    %2242 = vmatprep.subr.mxu0 0.0
    %2243 = vmatpush1.msra.mxu0 0.0
    %2244 = vmatprep.subr.mxu0 0.0
    %2245 = vmatpush1.msra.mxu0 0.0
    %2246 = vmatprep.subr.mxu0 0.0
    %2247 = vmatpush1.msra.mxu0 0.0
    %2248 = vmatprep.subr.mxu0 0.0
    %2249 = vmatpush1.msra.mxu0 0.0
    %2250 = vmatprep.subr.mxu0 0.0
    %2251 = vmatpush1.msra.mxu0 0.0
    %2252 = vmatprep.subr.mxu0 0.0
    %2253 = vmatpush1.msra.mxu0 0.0
    %2254 = vmatprep.subr.mxu0 0.0
    %2255 = vmatpush1.msra.mxu0 0.0
    %2256 = vmatprep.subr.mxu0 0.0
    %2257 = vmatpush1.msra.mxu0 0.0
    %2258 = vmatprep.subr.mxu0 0.0
    %2259 = vmatpush1.msra.mxu0 0.0
    %2260 = vmatprep.subr.mxu0 0.0
    %2261 = vmatpush1.msra.mxu0 0.0
    %2262 = vmatprep.subr.mxu0 0.0
    %2263 = vmatpush1.msra.mxu0 0.0
    %2264 = vmatprep.subr.mxu0 0.0
    %2265 = vmatpush1.msra.mxu0 0.0
    %2266 = vmatprep.subr.mxu0 0.0
    %2267 = vmatpush1.msra.mxu0 0.0
    %2268 = vmatprep.subr.mxu0 0.0
    %2269 = vmatpush1.msra.mxu0 0.0
    %2270 = vmatprep.subr.mxu0 0.0
    %2271 = vmatpush1.msra.mxu0 0.0
    %2272 = vmatprep.subr.mxu0 0.0
    %2273 = vmatpush1.msra.mxu0 0.0
    %2274 = vmatprep.subr.mxu0 0.0
    %2275 = vmatpush1.msra.mxu0 0.0
    %2276 = vmatprep.subr.mxu0 0.0
    %2277 = vmatpush1.msra.mxu0 0.0
    %2278 = vmatprep.subr.mxu0 0.0
    %2279 = vmatpush1.msra.mxu0 0.0
    %2280 = vmatprep.subr.mxu0 0.0
    %2281 = vmatpush1.msra.mxu0 0.0
    %2282 = vmatprep.mubr.f32.mxu0 0.0
    %2283 = vmatmul.mubr.f32.gmra.mrb[0].mxu0 %v2213
    %v2284 = vpop.f32.mrb[0].mxu0
    %v2285 = vadd.f32 0.0, %v2284
    %v2286 = vpop.f32.mrb[0].mxu0
    %2287 = vmatprep.mubr.f32.mxu0 0.0
    %2288 = vmatmul.mubr.f32.gmra.mrb[0].mxu0 %v2216
    %v2289 = vpop.f32.mrb[0].mxu0
    %v2290 = vadd.f32 0.0, %v2289
    %v2291 = vpop.f32.mrb[0].mxu0
    %2292 = vdwg.mxu0
    %v2293 = vadd.f32 %v2010, %v2285
    %v2294 = vadd.f32 %v2011, %v2290
    %2295 = vrot.lane.b32.xlu0 %v1714, 112
    %v2296 = vpop.permute.xlu0 %2295
    %2297 = vrot.lane.b32.xlu0 %v1719, 112
    %v2298 = vpop.permute.xlu0 %2297
    %2299 = vrot.lane.b32.xlu0 %v1714, 80
    %v2300 = vpop.permute.xlu0 %2299
    %2301 = vrot.lane.b32.xlu0 %v1719, 80
    %v2302 = vpop.permute.xlu0 %2301
    %v2303 = vsel %vm230, %v2296, 0
    %v2305 = vsel %vm230, %v2298, 0
    %v2307 = vsel %vm230, %v2300, 0
    %v2309 = vsel %vm230, %v2302, 0
    %2311 = vmatprep.subr.mxu0 0.0
    %2312 = vmatpush1.xpose.msra.mxu0 %v2307
    %2313 = vmatprep.subr.mxu0 0.0
    %2314 = vmatpush1.xpose.msra.mxu0 %v2309
    %2315 = vmatprep.subr.mxu0 0.0
    %2316 = vmatpush1.xpose.msra.mxu0 0.0
    %2317 = vmatprep.subr.mxu0 0.0
    %2318 = vmatpush1.xpose.msra.mxu0 0.0
    %2319 = vmatprep.subr.mxu0 0.0
    %2320 = vmatpush1.xpose.msra.mxu0 0.0
    %2321 = vmatprep.subr.mxu0 0.0
    %2322 = vmatpush1.xpose.msra.mxu0 0.0
    %2323 = vmatprep.subr.mxu0 0.0
    %2324 = vmatpush1.xpose.msra.mxu0 0.0
    %2325 = vmatprep.subr.mxu0 0.0
    %2326 = vmatpush1.xpose.msra.mxu0 0.0
    %2327 = vmatprep.subr.mxu0 0.0
    %2328 = vmatpush1.xpose.msra.mxu0 0.0
    %2329 = vmatprep.subr.mxu0 0.0
    %2330 = vmatpush1.xpose.msra.mxu0 0.0
    %2331 = vmatprep.subr.mxu0 0.0
    %2332 = vmatpush1.xpose.msra.mxu0 0.0
    %2333 = vmatprep.subr.mxu0 0.0
    %2334 = vmatpush1.xpose.msra.mxu0 0.0
    %2335 = vmatprep.subr.mxu0 0.0
    %2336 = vmatpush1.xpose.msra.mxu0 0.0
    %2337 = vmatprep.subr.mxu0 0.0
    %2338 = vmatpush1.xpose.msra.mxu0 0.0
    %2339 = vmatprep.subr.mxu0 0.0
    %2340 = vmatpush1.xpose.msra.mxu0 0.0
    %2341 = vmatprep.subr.mxu0 0.0
    %2342 = vmatpush1.xpose.msra.mxu0 0.0
    %2343 = vmatprep.subr.mxu0 0.0
    %2344 = vmatpush1.xpose.msra.mxu0 0.0
    %2345 = vmatprep.subr.mxu0 0.0
    %2346 = vmatpush1.xpose.msra.mxu0 0.0
    %2347 = vmatprep.subr.mxu0 0.0
    %2348 = vmatpush1.xpose.msra.mxu0 0.0
    %2349 = vmatprep.subr.mxu0 0.0
    %2350 = vmatpush1.xpose.msra.mxu0 0.0
    %2351 = vmatprep.subr.mxu0 0.0
    %2352 = vmatpush1.xpose.msra.mxu0 0.0
    %2353 = vmatprep.subr.mxu0 0.0
    %2354 = vmatpush1.xpose.msra.mxu0 0.0
    %2355 = vmatprep.subr.mxu0 0.0
    %2356 = vmatpush1.xpose.msra.mxu0 0.0
    %2357 = vmatprep.subr.mxu0 0.0
    %2358 = vmatpush1.xpose.msra.mxu0 0.0
    %2359 = vmatprep.subr.mxu0 0.0
    %2360 = vmatpush1.xpose.msra.mxu0 0.0
    %2361 = vmatprep.subr.mxu0 0.0
    %2362 = vmatpush1.xpose.msra.mxu0 0.0
    %2363 = vmatprep.subr.mxu0 0.0
    %2364 = vmatpush1.xpose.msra.mxu0 0.0
    %2365 = vmatprep.subr.mxu0 0.0
    %2366 = vmatpush1.xpose.msra.mxu0 0.0
    %2367 = vmatprep.subr.mxu0 0.0
    %2368 = vmatpush1.xpose.msra.mxu0 0.0
    %2369 = vmatprep.subr.mxu0 0.0
    %2370 = vmatpush1.xpose.msra.mxu0 0.0
    %2371 = vmatprep.subr.mxu0 0.0
    %2372 = vmatpush1.xpose.msra.mxu0 0.0
    %2373 = vmatprep.subr.mxu0 0.0
    %2374 = vmatpush1.xpose.msra.mxu0 0.0
    %2375 = vmatprep.mubr.f32.mxu0 0.0
    %2376 = vmatmul.mubr.f32.gmra.mrb[0].mxu0 %v2303
    %v2377 = vpop.f32.mrb[0].mxu0
    %v2378 = vadd.f32 %v27, %v2377
    %v2379 = vpop.f32.mrb[0].mxu0
    %2380 = vmatprep.mubr.f32.mxu0 0.0
    %2381 = vmatmul.mubr.f32.gmra.mrb[0].mxu0 %v2305
    %v2382 = vpop.f32.mrb[0].mxu0
    %v2383 = vadd.f32 %v28, %v2382
    %v2384 = vpop.f32.mrb[0].mxu0
    %2385 = vdwg.mxu0
    %v2386 = vsel %vm314, %v2378, -inf
    %2387 = vmax.xlane.f32.xlu0 %v2386
    %v2388 = vpop.xlane.xlu0 %2387
    %v2389 = vsel %vm314, %v2383, -inf
    %2390 = vmax.xlane.f32.xlu0 %v2389
    %v2391 = vpop.xlane.xlu0 %2390
    %v2392 = vsub.f32 %v2378, %v2388
    %v2393 = vsub.f32 %v2383, %v2391
    %v2394 = vmul.f32 %v2392, 1.442695
    %v2395 = vpow.pop %v2394
    %v2396 = vmul.f32 %v2393, 1.442695
    %v2397 = vpow.pop %v2396
    %v2398 = vsel %vm314, %v2395, 0.0
    %2399 = vadd.xlane.f32.xlu0 %v2398
    %v2400 = vpop.xlane.xlu0 %2399
    %v2401 = vsel %vm314, %v2397, 0.0
    %2402 = vadd.xlane.f32.xlu0 %v2401
    %v2403 = vpop.xlane.xlu0 %2402
    %v2404 = vrcp.pop %v2400
    %v2405 = vrcp.pop %v2403
    %v2406 = vmul.f32 %v2395, %v2404
    %v2407 = vmul.f32 %v2397, %v2405
    %2408 = vrot.lane.b32.xlu0 %v1714, 48
    %v2409 = vpop.permute.xlu0 %2408
    %2410 = vrot.lane.b32.xlu0 %v1719, 48
    %v2411 = vpop.permute.xlu0 %2410
    %v2415 = vsel %vm314, %v2406, 0
    %v2418 = vsel %vm314, %v2407, 0
    %2420 = vmatprep.subr.mxu0 0.0
    %2421 = vmatpush1.msra.mxu0 %v2409
    %2422 = vmatprep.subr.mxu0 0.0
    %2423 = vmatpush1.msra.mxu0 %v2411
    %2424 = vmatprep.subr.mxu0 0.0
    %2425 = vmatpush1.msra.mxu0 0.0
    %2426 = vmatprep.subr.mxu0 0.0
    %2427 = vmatpush1.msra.mxu0 0.0
    %2428 = vmatprep.subr.mxu0 0.0
    %2429 = vmatpush1.msra.mxu0 0.0
    %2430 = vmatprep.subr.mxu0 0.0
    %2431 = vmatpush1.msra.mxu0 0.0
    %2432 = vmatprep.subr.mxu0 0.0
    %2433 = vmatpush1.msra.mxu0 0.0
    %2434 = vmatprep.subr.mxu0 0.0
    %2435 = vmatpush1.msra.mxu0 0.0
    %2436 = vmatprep.subr.mxu0 0.0
    %2437 = vmatpush1.msra.mxu0 0.0
    %2438 = vmatprep.subr.mxu0 0.0
    %2439 = vmatpush1.msra.mxu0 0.0
    %2440 = vmatprep.subr.mxu0 0.0
    %2441 = vmatpush1.msra.mxu0 0.0
    %2442 = vmatprep.subr.mxu0 0.0
    %2443 = vmatpush1.msra.mxu0 0.0
    %2444 = vmatprep.subr.mxu0 0.0
    %2445 = vmatpush1.msra.mxu0 0.0
    %2446 = vmatprep.subr.mxu0 0.0
    %2447 = vmatpush1.msra.mxu0 0.0
    %2448 = vmatprep.subr.mxu0 0.0
    %2449 = vmatpush1.msra.mxu0 0.0
    %2450 = vmatprep.subr.mxu0 0.0
    %2451 = vmatpush1.msra.mxu0 0.0
    %2452 = vmatprep.subr.mxu0 0.0
    %2453 = vmatpush1.msra.mxu0 0.0
    %2454 = vmatprep.subr.mxu0 0.0
    %2455 = vmatpush1.msra.mxu0 0.0
    %2456 = vmatprep.subr.mxu0 0.0
    %2457 = vmatpush1.msra.mxu0 0.0
    %2458 = vmatprep.subr.mxu0 0.0
    %2459 = vmatpush1.msra.mxu0 0.0
    %2460 = vmatprep.subr.mxu0 0.0
    %2461 = vmatpush1.msra.mxu0 0.0
    %2462 = vmatprep.subr.mxu0 0.0
    %2463 = vmatpush1.msra.mxu0 0.0
    %2464 = vmatprep.subr.mxu0 0.0
    %2465 = vmatpush1.msra.mxu0 0.0
    %2466 = vmatprep.subr.mxu0 0.0
    %2467 = vmatpush1.msra.mxu0 0.0
    %2468 = vmatprep.subr.mxu0 0.0
    %2469 = vmatpush1.msra.mxu0 0.0
    %2470 = vmatprep.subr.mxu0 0.0
    %2471 = vmatpush1.msra.mxu0 0.0
    %2472 = vmatprep.subr.mxu0 0.0
    %2473 = vmatpush1.msra.mxu0 0.0
    %2474 = vmatprep.subr.mxu0 0.0
    %2475 = vmatpush1.msra.mxu0 0.0
    %2476 = vmatprep.subr.mxu0 0.0
    %2477 = vmatpush1.msra.mxu0 0.0
    %2478 = vmatprep.subr.mxu0 0.0
    %2479 = vmatpush1.msra.mxu0 0.0
    %2480 = vmatprep.subr.mxu0 0.0
    %2481 = vmatpush1.msra.mxu0 0.0
    %2482 = vmatprep.subr.mxu0 0.0
    %2483 = vmatpush1.msra.mxu0 0.0
    %2484 = vmatprep.mubr.f32.mxu0 0.0
    %2485 = vmatmul.mubr.f32.gmra.mrb[0].mxu0 %v2415
    %v2486 = vpop.f32.mrb[0].mxu0
    %v2487 = vadd.f32 0.0, %v2486
    %v2488 = vpop.f32.mrb[0].mxu0
    %2489 = vmatprep.mubr.f32.mxu0 0.0
    %2490 = vmatmul.mubr.f32.gmra.mrb[0].mxu0 %v2418
    %v2491 = vpop.f32.mrb[0].mxu0
    %v2492 = vadd.f32 0.0, %v2491
    %v2493 = vpop.f32.mrb[0].mxu0
    %2494 = vdwg.mxu0
    %v2496 = vsel %vm230, %v2487, 0
    %v2499 = vsel %vm230, %v2492, 0
    %2501 = vmatprep.subr.mxu0 0.0
    %2502 = vmatpush1.msra.mxu0 %v1724
    %2503 = vmatprep.subr.mxu0 0.0
    %2504 = vmatpush1.msra.mxu0 0.0
    %2505 = vmatprep.subr.mxu0 0.0
    %2506 = vmatpush1.msra.mxu0 0.0
    %2507 = vmatprep.subr.mxu0 0.0
    %2508 = vmatpush1.msra.mxu0 0.0
    %2509 = vmatprep.subr.mxu0 0.0
    %2510 = vmatpush1.msra.mxu0 0.0
    %2511 = vmatprep.subr.mxu0 0.0
    %2512 = vmatpush1.msra.mxu0 0.0
    %2513 = vmatprep.subr.mxu0 0.0
    %2514 = vmatpush1.msra.mxu0 0.0
    %2515 = vmatprep.subr.mxu0 0.0
    %2516 = vmatpush1.msra.mxu0 0.0
    %2517 = vmatprep.subr.mxu0 0.0
    %2518 = vmatpush1.msra.mxu0 0.0
    %2519 = vmatprep.subr.mxu0 0.0
    %2520 = vmatpush1.msra.mxu0 0.0
    %2521 = vmatprep.subr.mxu0 0.0
    %2522 = vmatpush1.msra.mxu0 0.0
    %2523 = vmatprep.subr.mxu0 0.0
    %2524 = vmatpush1.msra.mxu0 0.0
    %2525 = vmatprep.subr.mxu0 0.0
    %2526 = vmatpush1.msra.mxu0 0.0
    %2527 = vmatprep.subr.mxu0 0.0
    %2528 = vmatpush1.msra.mxu0 0.0
    %2529 = vmatprep.subr.mxu0 0.0
    %2530 = vmatpush1.msra.mxu0 0.0
    %2531 = vmatprep.subr.mxu0 0.0
    %2532 = vmatpush1.msra.mxu0 0.0
    %2533 = vmatprep.subr.mxu0 0.0
    %2534 = vmatpush1.msra.mxu0 0.0
    %2535 = vmatprep.subr.mxu0 0.0
    %2536 = vmatpush1.msra.mxu0 0.0
    %2537 = vmatprep.subr.mxu0 0.0
    %2538 = vmatpush1.msra.mxu0 0.0
    %2539 = vmatprep.subr.mxu0 0.0
    %2540 = vmatpush1.msra.mxu0 0.0
    %2541 = vmatprep.subr.mxu0 0.0
    %2542 = vmatpush1.msra.mxu0 0.0
    %2543 = vmatprep.subr.mxu0 0.0
    %2544 = vmatpush1.msra.mxu0 0.0
    %2545 = vmatprep.subr.mxu0 0.0
    %2546 = vmatpush1.msra.mxu0 0.0
    %2547 = vmatprep.subr.mxu0 0.0
    %2548 = vmatpush1.msra.mxu0 0.0
    %2549 = vmatprep.subr.mxu0 0.0
    %2550 = vmatpush1.msra.mxu0 0.0
    %2551 = vmatprep.subr.mxu0 0.0
    %2552 = vmatpush1.msra.mxu0 0.0
    %2553 = vmatprep.subr.mxu0 0.0
    %2554 = vmatpush1.msra.mxu0 0.0
    %2555 = vmatprep.subr.mxu0 0.0
    %2556 = vmatpush1.msra.mxu0 0.0
    %2557 = vmatprep.subr.mxu0 0.0
    %2558 = vmatpush1.msra.mxu0 0.0
    %2559 = vmatprep.subr.mxu0 0.0
    %2560 = vmatpush1.msra.mxu0 0.0
    %2561 = vmatprep.subr.mxu0 0.0
    %2562 = vmatpush1.msra.mxu0 0.0
    %2563 = vmatprep.subr.mxu0 0.0
    %2564 = vmatpush1.msra.mxu0 0.0
    %2565 = vmatprep.mubr.f32.mxu0 0.0
    %2566 = vmatmul.mubr.f32.gmra.mrb[0].mxu0 %v2496
    %v2567 = vpop.f32.mrb[0].mxu0
    %v2568 = vadd.f32 0.0, %v2567
    %v2569 = vpop.f32.mrb[0].mxu0
    %2570 = vmatprep.mubr.f32.mxu0 0.0
    %2571 = vmatmul.mubr.f32.gmra.mrb[0].mxu0 %v2499
    %v2572 = vpop.f32.mrb[0].mxu0
    %v2573 = vadd.f32 0.0, %v2572
    %v2574 = vpop.f32.mrb[0].mxu0
    %2575 = vdwg.mxu0
    %v2576 = vadd.f32 %v2293, %v2568
    %v2577 = vadd.f32 %v2294, %v2573
    %2578 = vrot.lane.b32.xlu0 %v1714, 104
    %v2579 = vpop.permute.xlu0 %2578
    %2580 = vrot.lane.b32.xlu0 %v1719, 104
    %v2581 = vpop.permute.xlu0 %2580
    %2582 = vrot.lane.b32.xlu0 %v1714, 72
    %v2583 = vpop.permute.xlu0 %2582
    %2584 = vrot.lane.b32.xlu0 %v1719, 72
    %v2585 = vpop.permute.xlu0 %2584
    %v2586 = vsel %vm230, %v2579, 0
    %v2588 = vsel %vm230, %v2581, 0
    %v2590 = vsel %vm230, %v2583, 0
    %v2592 = vsel %vm230, %v2585, 0
    %2594 = vmatprep.subr.mxu0 0.0
    %2595 = vmatpush1.xpose.msra.mxu0 %v2590
    %2596 = vmatprep.subr.mxu0 0.0
    %2597 = vmatpush1.xpose.msra.mxu0 %v2592
    %2598 = vmatprep.subr.mxu0 0.0
    %2599 = vmatpush1.xpose.msra.mxu0 0.0
    %2600 = vmatprep.subr.mxu0 0.0
    %2601 = vmatpush1.xpose.msra.mxu0 0.0
    %2602 = vmatprep.subr.mxu0 0.0
    %2603 = vmatpush1.xpose.msra.mxu0 0.0
    %2604 = vmatprep.subr.mxu0 0.0
    %2605 = vmatpush1.xpose.msra.mxu0 0.0
    %2606 = vmatprep.subr.mxu0 0.0
    %2607 = vmatpush1.xpose.msra.mxu0 0.0
    %2608 = vmatprep.subr.mxu0 0.0
    %2609 = vmatpush1.xpose.msra.mxu0 0.0
    %2610 = vmatprep.subr.mxu0 0.0
    %2611 = vmatpush1.xpose.msra.mxu0 0.0
    %2612 = vmatprep.subr.mxu0 0.0
    %2613 = vmatpush1.xpose.msra.mxu0 0.0
    %2614 = vmatprep.subr.mxu0 0.0
    %2615 = vmatpush1.xpose.msra.mxu0 0.0
    %2616 = vmatprep.subr.mxu0 0.0
    %2617 = vmatpush1.xpose.msra.mxu0 0.0
    %2618 = vmatprep.subr.mxu0 0.0
    %2619 = vmatpush1.xpose.msra.mxu0 0.0
    %2620 = vmatprep.subr.mxu0 0.0
    %2621 = vmatpush1.xpose.msra.mxu0 0.0
    %2622 = vmatprep.subr.mxu0 0.0
    %2623 = vmatpush1.xpose.msra.mxu0 0.0
    %2624 = vmatprep.subr.mxu0 0.0
    %2625 = vmatpush1.xpose.msra.mxu0 0.0
    %2626 = vmatprep.subr.mxu0 0.0
    %2627 = vmatpush1.xpose.msra.mxu0 0.0
    %2628 = vmatprep.subr.mxu0 0.0
    %2629 = vmatpush1.xpose.msra.mxu0 0.0
    %2630 = vmatprep.subr.mxu0 0.0
    %2631 = vmatpush1.xpose.msra.mxu0 0.0
    %2632 = vmatprep.subr.mxu0 0.0
    %2633 = vmatpush1.xpose.msra.mxu0 0.0
    %2634 = vmatprep.subr.mxu0 0.0
    %2635 = vmatpush1.xpose.msra.mxu0 0.0
    %2636 = vmatprep.subr.mxu0 0.0
    %2637 = vmatpush1.xpose.msra.mxu0 0.0
    %2638 = vmatprep.subr.mxu0 0.0
    %2639 = vmatpush1.xpose.msra.mxu0 0.0
    %2640 = vmatprep.subr.mxu0 0.0
    %2641 = vmatpush1.xpose.msra.mxu0 0.0
    %2642 = vmatprep.subr.mxu0 0.0
    %2643 = vmatpush1.xpose.msra.mxu0 0.0
    %2644 = vmatprep.subr.mxu0 0.0
    %2645 = vmatpush1.xpose.msra.mxu0 0.0
    %2646 = vmatprep.subr.mxu0 0.0
    %2647 = vmatpush1.xpose.msra.mxu0 0.0
    %2648 = vmatprep.subr.mxu0 0.0
    %2649 = vmatpush1.xpose.msra.mxu0 0.0
    %2650 = vmatprep.subr.mxu0 0.0
    %2651 = vmatpush1.xpose.msra.mxu0 0.0
    %2652 = vmatprep.subr.mxu0 0.0
    %2653 = vmatpush1.xpose.msra.mxu0 0.0
    %2654 = vmatprep.subr.mxu0 0.0
    %2655 = vmatpush1.xpose.msra.mxu0 0.0
    %2656 = vmatprep.subr.mxu0 0.0
    %2657 = vmatpush1.xpose.msra.mxu0 0.0
    %2658 = vmatprep.mubr.f32.mxu0 0.0
    %2659 = vmatmul.mubr.f32.gmra.mrb[0].mxu0 %v2586
    %v2660 = vpop.f32.mrb[0].mxu0
    %v2661 = vadd.f32 %v27, %v2660
    %v2662 = vpop.f32.mrb[0].mxu0
    %2663 = vmatprep.mubr.f32.mxu0 0.0
    %2664 = vmatmul.mubr.f32.gmra.mrb[0].mxu0 %v2588
    %v2665 = vpop.f32.mrb[0].mxu0
    %v2666 = vadd.f32 %v28, %v2665
    %v2667 = vpop.f32.mrb[0].mxu0
    %2668 = vdwg.mxu0
    %v2669 = vsel %vm314, %v2661, -inf
    %2670 = vmax.xlane.f32.xlu0 %v2669
    %v2671 = vpop.xlane.xlu0 %2670
    %v2672 = vsel %vm314, %v2666, -inf
    %2673 = vmax.xlane.f32.xlu0 %v2672
    %v2674 = vpop.xlane.xlu0 %2673
    %v2675 = vsub.f32 %v2661, %v2671
    %v2676 = vsub.f32 %v2666, %v2674
    %v2677 = vmul.f32 %v2675, 1.442695
    %v2678 = vpow.pop %v2677
    %v2679 = vmul.f32 %v2676, 1.442695
    %v2680 = vpow.pop %v2679
    %v2681 = vsel %vm314, %v2678, 0.0
    %2682 = vadd.xlane.f32.xlu0 %v2681
    %v2683 = vpop.xlane.xlu0 %2682
    %v2684 = vsel %vm314, %v2680, 0.0
    %2685 = vadd.xlane.f32.xlu0 %v2684
    %v2686 = vpop.xlane.xlu0 %2685
    %v2687 = vrcp.pop %v2683
    %v2688 = vrcp.pop %v2686
    %v2689 = vmul.f32 %v2678, %v2687
    %v2690 = vmul.f32 %v2680, %v2688
    %2691 = vrot.lane.b32.xlu0 %v1714, 40
    %v2692 = vpop.permute.xlu0 %2691
    %2693 = vrot.lane.b32.xlu0 %v1719, 40
    %v2694 = vpop.permute.xlu0 %2693
    %v2698 = vsel %vm314, %v2689, 0
    %v2701 = vsel %vm314, %v2690, 0
    %2703 = vmatprep.subr.mxu0 0.0
    %2704 = vmatpush1.msra.mxu0 %v2692
    %2705 = vmatprep.subr.mxu0 0.0
    %2706 = vmatpush1.msra.mxu0 %v2694
    %2707 = vmatprep.subr.mxu0 0.0
    %2708 = vmatpush1.msra.mxu0 0.0
    %2709 = vmatprep.subr.mxu0 0.0
    %2710 = vmatpush1.msra.mxu0 0.0
    %2711 = vmatprep.subr.mxu0 0.0
    %2712 = vmatpush1.msra.mxu0 0.0
    %2713 = vmatprep.subr.mxu0 0.0
    %2714 = vmatpush1.msra.mxu0 0.0
    %2715 = vmatprep.subr.mxu0 0.0
    %2716 = vmatpush1.msra.mxu0 0.0
    %2717 = vmatprep.subr.mxu0 0.0
    %2718 = vmatpush1.msra.mxu0 0.0
    %2719 = vmatprep.subr.mxu0 0.0
    %2720 = vmatpush1.msra.mxu0 0.0
    %2721 = vmatprep.subr.mxu0 0.0
    %2722 = vmatpush1.msra.mxu0 0.0
    %2723 = vmatprep.subr.mxu0 0.0
    %2724 = vmatpush1.msra.mxu0 0.0
    %2725 = vmatprep.subr.mxu0 0.0
    %2726 = vmatpush1.msra.mxu0 0.0
    %2727 = vmatprep.subr.mxu0 0.0
    %2728 = vmatpush1.msra.mxu0 0.0
    %2729 = vmatprep.subr.mxu0 0.0
    %2730 = vmatpush1.msra.mxu0 0.0
    %2731 = vmatprep.subr.mxu0 0.0
    %2732 = vmatpush1.msra.mxu0 0.0
    %2733 = vmatprep.subr.mxu0 0.0
    %2734 = vmatpush1.msra.mxu0 0.0
    %2735 = vmatprep.subr.mxu0 0.0
    %2736 = vmatpush1.msra.mxu0 0.0
    %2737 = vmatprep.subr.mxu0 0.0
    %2738 = vmatpush1.msra.mxu0 0.0
    %2739 = vmatprep.subr.mxu0 0.0
    %2740 = vmatpush1.msra.mxu0 0.0
    %2741 = vmatprep.subr.mxu0 0.0
    %2742 = vmatpush1.msra.mxu0 0.0
    %2743 = vmatprep.subr.mxu0 0.0
    %2744 = vmatpush1.msra.mxu0 0.0
    %2745 = vmatprep.subr.mxu0 0.0
    %2746 = vmatpush1.msra.mxu0 0.0
    %2747 = vmatprep.subr.mxu0 0.0
    %2748 = vmatpush1.msra.mxu0 0.0
    %2749 = vmatprep.subr.mxu0 0.0
    %2750 = vmatpush1.msra.mxu0 0.0
    %2751 = vmatprep.subr.mxu0 0.0
    %2752 = vmatpush1.msra.mxu0 0.0
    %2753 = vmatprep.subr.mxu0 0.0
    %2754 = vmatpush1.msra.mxu0 0.0
    %2755 = vmatprep.subr.mxu0 0.0
    %2756 = vmatpush1.msra.mxu0 0.0
    %2757 = vmatprep.subr.mxu0 0.0
    %2758 = vmatpush1.msra.mxu0 0.0
    %2759 = vmatprep.subr.mxu0 0.0
    %2760 = vmatpush1.msra.mxu0 0.0
    %2761 = vmatprep.subr.mxu0 0.0
    %2762 = vmatpush1.msra.mxu0 0.0
    %2763 = vmatprep.subr.mxu0 0.0
    %2764 = vmatpush1.msra.mxu0 0.0
    %2765 = vmatprep.subr.mxu0 0.0
    %2766 = vmatpush1.msra.mxu0 0.0
    %2767 = vmatprep.mubr.f32.mxu0 0.0
    %2768 = vmatmul.mubr.f32.gmra.mrb[0].mxu0 %v2698
    %v2769 = vpop.f32.mrb[0].mxu0
    %v2770 = vadd.f32 0.0, %v2769
    %v2771 = vpop.f32.mrb[0].mxu0
    %2772 = vmatprep.mubr.f32.mxu0 0.0
    %2773 = vmatmul.mubr.f32.gmra.mrb[0].mxu0 %v2701
    %v2774 = vpop.f32.mrb[0].mxu0
    %v2775 = vadd.f32 0.0, %v2774
    %v2776 = vpop.f32.mrb[0].mxu0
    %2777 = vdwg.mxu0
    %v2779 = vsel %vm230, %v2770, 0
    %v2782 = vsel %vm230, %v2775, 0
    %2784 = vmatprep.subr.mxu0 0.0
    %2785 = vmatpush1.msra.mxu0 %v1725
    %2786 = vmatprep.subr.mxu0 0.0
    %2787 = vmatpush1.msra.mxu0 0.0
    %2788 = vmatprep.subr.mxu0 0.0
    %2789 = vmatpush1.msra.mxu0 0.0
    %2790 = vmatprep.subr.mxu0 0.0
    %2791 = vmatpush1.msra.mxu0 0.0
    %2792 = vmatprep.subr.mxu0 0.0
    %2793 = vmatpush1.msra.mxu0 0.0
    %2794 = vmatprep.subr.mxu0 0.0
    %2795 = vmatpush1.msra.mxu0 0.0
    %2796 = vmatprep.subr.mxu0 0.0
    %2797 = vmatpush1.msra.mxu0 0.0
    %2798 = vmatprep.subr.mxu0 0.0
    %2799 = vmatpush1.msra.mxu0 0.0
    %2800 = vmatprep.subr.mxu0 0.0
    %2801 = vmatpush1.msra.mxu0 0.0
    %2802 = vmatprep.subr.mxu0 0.0
    %2803 = vmatpush1.msra.mxu0 0.0
    %2804 = vmatprep.subr.mxu0 0.0
    %2805 = vmatpush1.msra.mxu0 0.0
    %2806 = vmatprep.subr.mxu0 0.0
    %2807 = vmatpush1.msra.mxu0 0.0
    %2808 = vmatprep.subr.mxu0 0.0
    %2809 = vmatpush1.msra.mxu0 0.0
    %2810 = vmatprep.subr.mxu0 0.0
    %2811 = vmatpush1.msra.mxu0 0.0
    %2812 = vmatprep.subr.mxu0 0.0
    %2813 = vmatpush1.msra.mxu0 0.0
    %2814 = vmatprep.subr.mxu0 0.0
    %2815 = vmatpush1.msra.mxu0 0.0
    %2816 = vmatprep.subr.mxu0 0.0
    %2817 = vmatpush1.msra.mxu0 0.0
    %2818 = vmatprep.subr.mxu0 0.0
    %2819 = vmatpush1.msra.mxu0 0.0
    %2820 = vmatprep.subr.mxu0 0.0
    %2821 = vmatpush1.msra.mxu0 0.0
    %2822 = vmatprep.subr.mxu0 0.0
    %2823 = vmatpush1.msra.mxu0 0.0
    %2824 = vmatprep.subr.mxu0 0.0
    %2825 = vmatpush1.msra.mxu0 0.0
    %2826 = vmatprep.subr.mxu0 0.0
    %2827 = vmatpush1.msra.mxu0 0.0
    %2828 = vmatprep.subr.mxu0 0.0
    %2829 = vmatpush1.msra.mxu0 0.0
    %2830 = vmatprep.subr.mxu0 0.0
    %2831 = vmatpush1.msra.mxu0 0.0
    %2832 = vmatprep.subr.mxu0 0.0
    %2833 = vmatpush1.msra.mxu0 0.0
    %2834 = vmatprep.subr.mxu0 0.0
    %2835 = vmatpush1.msra.mxu0 0.0
    %2836 = vmatprep.subr.mxu0 0.0
    %2837 = vmatpush1.msra.mxu0 0.0
    %2838 = vmatprep.subr.mxu0 0.0
    %2839 = vmatpush1.msra.mxu0 0.0
    %2840 = vmatprep.subr.mxu0 0.0
    %2841 = vmatpush1.msra.mxu0 0.0
    %2842 = vmatprep.subr.mxu0 0.0
    %2843 = vmatpush1.msra.mxu0 0.0
    %2844 = vmatprep.subr.mxu0 0.0
    %2845 = vmatpush1.msra.mxu0 0.0
    %2846 = vmatprep.subr.mxu0 0.0
    %2847 = vmatpush1.msra.mxu0 0.0
    %2848 = vmatprep.mubr.f32.mxu0 0.0
    %2849 = vmatmul.mubr.f32.gmra.mrb[0].mxu0 %v2779
    %v2850 = vpop.f32.mrb[0].mxu0
    %v2851 = vadd.f32 0.0, %v2850
    %v2852 = vpop.f32.mrb[0].mxu0
    %2853 = vmatprep.mubr.f32.mxu0 0.0
    %2854 = vmatmul.mubr.f32.gmra.mrb[0].mxu0 %v2782
    %v2855 = vpop.f32.mrb[0].mxu0
    %v2856 = vadd.f32 0.0, %v2855
    %v2857 = vpop.f32.mrb[0].mxu0
    %2858 = vdwg.mxu0
    %v2859 = vadd.f32 %v2576, %v2851
    %v2860 = vadd.f32 %v2577, %v2856
    %v2861 = vadd.f32 %v1630, %v2859
    %v2862 = vadd.f32 %v1631, %v2860
    %v2863 = vld [vmem:[#allocation2 + $0x188] sm:$0x1]
    %v2864 = vld [vmem:[#allocation2 + $0x190] sm:$0x1]
    %v2865 = vsel %vm137, %v2861, 0.0
    %2866 = vadd.xlane.f32.xlu0 %v2865
    %v2867 = vpop.xlane.xlu0 %2866
    %v2868 = vsel %vm137, %v2862, 0.0
    %2869 = vadd.xlane.f32.xlu0 %v2868
    %v2870 = vpop.xlane.xlu0 %2869
    %v2871 = vmul.f32 %v2867, %v1370
    %v2872 = vmul.f32 %v2870, %v1370
    %v2873 = vsub.f32 %v2861, %v2871
    %v2874 = vsub.f32 %v2862, %v2872
    %v2875 = vmul.f32 %v2873, %v2873
    %v2876 = vmul.f32 %v2874, %v2874
    %v2877 = vsel %vm137, %v2875, 0.0
    %2878 = vadd.xlane.f32.xlu0 %v2877
    %v2879 = vpop.xlane.xlu0 %2878
    %v2880 = vsel %vm137, %v2876, 0.0
    %2881 = vadd.xlane.f32.xlu0 %v2880
    %v2882 = vpop.xlane.xlu0 %2881
    %v2883 = vmul.f32 %v2879, %v1370
    %v2884 = vmul.f32 %v2882, %v1370
    %v2885 = vadd.f32 %v2883, 1e-05
    %v2886 = vadd.f32 %v2884, 1e-05
    %v2887 = vrsqrt.pop %v2885
    %v2888 = vrsqrt.pop %v2886
    %v2889 = vmul.f32 %v2873, %v2887
    %v2890 = vmul.f32 %v2874, %v2888
    %v2891 = vlaneseq
    %v2892 = vshrl.u32 %v2891, 7
    %v2893 = vsub.s32 0, %v2892
    %v2894 = vrot.slane %v2863, %v2893
    %v2895 = vmul.f32 %v2889, %v2894
    %v2896 = vmul.f32 %v2890, %v2894
    %v2897 = vlaneseq
    %v2898 = vshrl.u32 %v2897, 7
    %v2899 = vsub.s32 0, %v2898
    %v2900 = vrot.slane %v2864, %v2899
    %v2901 = vadd.f32 %v2895, %v2900
    %v2902 = vadd.f32 %v2896, %v2900
    %v2903 = vld [vmem:[#allocation2 + $0x198] sm:$0xff]
    %v2904 = vld [vmem:[#allocation2 + $0x1a0] sm:$0xff]
    %v2905 = vld [vmem:[#allocation2 + $0x1a8] sm:$0xff]
    %v2906 = vld [vmem:[#allocation2 + $0x1b0] sm:$0xff]
    %v2907 = vld [vmem:[#allocation2 + $0x1b8] sm:$0x1]
    %v2908 = vlaneseq
    %v2909 = vshrl.u32 %v2908, 7
    %v2910 = vsub.s32 0, %v2909
    %v2911 = vrot.slane %v2907, %v2910
    %v2913 = vsel %vm137, %v2901, 0
    %v2916 = vsel %vm137, %v2902, 0
    %2918 = vmatprep.subr.mxu0 0.0
    %2919 = vmatpush1.msra.mxu0 %v2903
    %2920 = vmatprep.subr.mxu0 0.0
    %2921 = vmatpush1.msra.mxu0 %v2904
    %2922 = vmatprep.subr.mxu0 0.0
    %2923 = vmatpush1.msra.mxu0 %v2905
    %2924 = vmatprep.subr.mxu0 0.0
    %2925 = vmatpush1.msra.mxu0 %v2906
    %2926 = vmatprep.subr.mxu0 0.0
    %2927 = vmatpush1.msra.mxu0 0.0
    %2928 = vmatprep.subr.mxu0 0.0
    %2929 = vmatpush1.msra.mxu0 0.0
    %2930 = vmatprep.subr.mxu0 0.0
    %2931 = vmatpush1.msra.mxu0 0.0
    %2932 = vmatprep.subr.mxu0 0.0
    %2933 = vmatpush1.msra.mxu0 0.0
    %2934 = vmatprep.subr.mxu0 0.0
    %2935 = vmatpush1.msra.mxu0 0.0
    %2936 = vmatprep.subr.mxu0 0.0
    %2937 = vmatpush1.msra.mxu0 0.0
    %2938 = vmatprep.subr.mxu0 0.0
    %2939 = vmatpush1.msra.mxu0 0.0
    %2940 = vmatprep.subr.mxu0 0.0
    %2941 = vmatpush1.msra.mxu0 0.0
    %2942 = vmatprep.subr.mxu0 0.0
    %2943 = vmatpush1.msra.mxu0 0.0
    %2944 = vmatprep.subr.mxu0 0.0
    %2945 = vmatpush1.msra.mxu0 0.0
    %2946 = vmatprep.subr.mxu0 0.0
    %2947 = vmatpush1.msra.mxu0 0.0
    %2948 = vmatprep.subr.mxu0 0.0
    %2949 = vmatpush1.msra.mxu0 0.0
    %2950 = vmatprep.subr.mxu0 0.0
    %2951 = vmatpush1.msra.mxu0 0.0
    %2952 = vmatprep.subr.mxu0 0.0
    %2953 = vmatpush1.msra.mxu0 0.0
    %2954 = vmatprep.subr.mxu0 0.0
    %2955 = vmatpush1.msra.mxu0 0.0
    %2956 = vmatprep.subr.mxu0 0.0
    %2957 = vmatpush1.msra.mxu0 0.0
    %2958 = vmatprep.subr.mxu0 0.0
    %2959 = vmatpush1.msra.mxu0 0.0
    %2960 = vmatprep.subr.mxu0 0.0
    %2961 = vmatpush1.msra.mxu0 0.0
    %2962 = vmatprep.subr.mxu0 0.0
    %2963 = vmatpush1.msra.mxu0 0.0
    %2964 = vmatprep.subr.mxu0 0.0
    %2965 = vmatpush1.msra.mxu0 0.0
    %2966 = vmatprep.subr.mxu0 0.0
    %2967 = vmatpush1.msra.mxu0 0.0
    %2968 = vmatprep.subr.mxu0 0.0
    %2969 = vmatpush1.msra.mxu0 0.0
    %2970 = vmatprep.subr.mxu0 0.0
    %2971 = vmatpush1.msra.mxu0 0.0
    %2972 = vmatprep.subr.mxu0 0.0
    %2973 = vmatpush1.msra.mxu0 0.0
    %2974 = vmatprep.subr.mxu0 0.0
    %2975 = vmatpush1.msra.mxu0 0.0
    %2976 = vmatprep.subr.mxu0 0.0
    %2977 = vmatpush1.msra.mxu0 0.0
    %2978 = vmatprep.subr.mxu0 0.0
    %2979 = vmatpush1.msra.mxu0 0.0
    %2980 = vmatprep.subr.mxu0 0.0
    %2981 = vmatpush1.msra.mxu0 0.0
    %2982 = vmatprep.mubr.f32.mxu0 0.0
    %2983 = vmatmul.mubr.f32.gmra.mrb[0].mxu0 %v2913
    %v2984 = vpop.f32.mrb[0].mxu0
    %v2985 = vadd.f32 %v2911, %v2984
    %v2986 = vpop.f32.mrb[0].mxu0
    %2987 = vmatprep.mubr.f32.mxu0 0.0
    %2988 = vmatmul.mubr.f32.gmra.mrb[0].mxu0 %v2916
    %v2989 = vpop.f32.mrb[0].mxu0
    %v2990 = vadd.f32 %v2911, %v2989
    %v2991 = vpop.f32.mrb[0].mxu0
    %2992 = vdwg.mxu0
    %v2993 = vmax.f32 %v2985, 0.0
    %v2994 = vmax.f32 %v2990, 0.0
    %v2995 = vld [vmem:[#allocation2 + $0x1c0] sm:$0xff]
    %v2996 = vld [vmem:[#allocation2 + $0x1c8] sm:$0xff]
    %v2997 = vld [vmem:[#allocation2 + $0x1d0] sm:$0xff]
    %v2998 = vld [vmem:[#allocation2 + $0x1d8] sm:$0xff]
    %v2999 = vld [vmem:[#allocation2 + $0x1e0] sm:$0xff]
    %v3000 = vld [vmem:[#allocation2 + $0x1e8] sm:$0xff]
    %v3001 = vld [vmem:[#allocation2 + $0x1f0] sm:$0xff]
    %v3002 = vld [vmem:[#allocation2 + $0x1f8] sm:$0xff]
    %v3003 = vld [vmem:[#allocation2 + $0x200] sm:$0x1]
    %v3004 = vlaneseq
    %v3005 = vshrl.u32 %v3004, 7
    %v3006 = vsub.s32 0, %v3005
    %v3007 = vrot.slane %v3003, %v3006
    %v3009 = vsel %vm1508, %v2993, 0
    %v3012 = vsel %vm1508, %v2994, 0
    %3014 = vmatprep.subr.mxu0 0.0
    %3015 = vmatpush1.msra.mxu0 %v2995
    %3016 = vmatprep.subr.mxu0 0.0
    %3017 = vmatpush1.msra.mxu0 %v2996
    %3018 = vmatprep.subr.mxu0 0.0
    %3019 = vmatpush1.msra.mxu0 %v2997
    %3020 = vmatprep.subr.mxu0 0.0
    %3021 = vmatpush1.msra.mxu0 %v2998
    %3022 = vmatprep.subr.mxu0 0.0
    %3023 = vmatpush1.msra.mxu0 %v2999
    %3024 = vmatprep.subr.mxu0 0.0
    %3025 = vmatpush1.msra.mxu0 %v3000
    %3026 = vmatprep.subr.mxu0 0.0
    %3027 = vmatpush1.msra.mxu0 %v3001
    %3028 = vmatprep.subr.mxu0 0.0
    %3029 = vmatpush1.msra.mxu0 %v3002
    %3030 = vmatprep.subr.mxu0 0.0
    %3031 = vmatpush1.msra.mxu0 0.0
    %3032 = vmatprep.subr.mxu0 0.0
    %3033 = vmatpush1.msra.mxu0 0.0
    %3034 = vmatprep.subr.mxu0 0.0
    %3035 = vmatpush1.msra.mxu0 0.0
    %3036 = vmatprep.subr.mxu0 0.0
    %3037 = vmatpush1.msra.mxu0 0.0
    %3038 = vmatprep.subr.mxu0 0.0
    %3039 = vmatpush1.msra.mxu0 0.0
    %3040 = vmatprep.subr.mxu0 0.0
    %3041 = vmatpush1.msra.mxu0 0.0
    %3042 = vmatprep.subr.mxu0 0.0
    %3043 = vmatpush1.msra.mxu0 0.0
    %3044 = vmatprep.subr.mxu0 0.0
    %3045 = vmatpush1.msra.mxu0 0.0
    %3046 = vmatprep.subr.mxu0 0.0
    %3047 = vmatpush1.msra.mxu0 0.0
    %3048 = vmatprep.subr.mxu0 0.0
    %3049 = vmatpush1.msra.mxu0 0.0
    %3050 = vmatprep.subr.mxu0 0.0
    %3051 = vmatpush1.msra.mxu0 0.0
    %3052 = vmatprep.subr.mxu0 0.0
    %3053 = vmatpush1.msra.mxu0 0.0
    %3054 = vmatprep.subr.mxu0 0.0
    %3055 = vmatpush1.msra.mxu0 0.0
    %3056 = vmatprep.subr.mxu0 0.0
    %3057 = vmatpush1.msra.mxu0 0.0
    %3058 = vmatprep.subr.mxu0 0.0
    %3059 = vmatpush1.msra.mxu0 0.0
    %3060 = vmatprep.subr.mxu0 0.0
    %3061 = vmatpush1.msra.mxu0 0.0
    %3062 = vmatprep.subr.mxu0 0.0
    %3063 = vmatpush1.msra.mxu0 0.0
    %3064 = vmatprep.subr.mxu0 0.0
    %3065 = vmatpush1.msra.mxu0 0.0
    %3066 = vmatprep.subr.mxu0 0.0
    %3067 = vmatpush1.msra.mxu0 0.0
    %3068 = vmatprep.subr.mxu0 0.0
    %3069 = vmatpush1.msra.mxu0 0.0
    %3070 = vmatprep.subr.mxu0 0.0
    %3071 = vmatpush1.msra.mxu0 0.0
    %3072 = vmatprep.subr.mxu0 0.0
    %3073 = vmatpush1.msra.mxu0 0.0
    %3074 = vmatprep.subr.mxu0 0.0
    %3075 = vmatpush1.msra.mxu0 0.0
    %3076 = vmatprep.subr.mxu0 0.0
    %3077 = vmatpush1.msra.mxu0 0.0
    %3078 = vmatprep.mubr.f32.mxu0 0.0
    %3079 = vmatmul.mubr.f32.gmra.mrb[0].mxu0 %v3009
    %v3080 = vpop.f32.mrb[0].mxu0
    %v3081 = vadd.f32 %v3007, %v3080
    %v3082 = vpop.f32.mrb[0].mxu0
    %3083 = vmatprep.mubr.f32.mxu0 0.0
    %3084 = vmatmul.mubr.f32.gmra.mrb[0].mxu0 %v3012
    %v3085 = vpop.f32.mrb[0].mxu0
    %v3086 = vadd.f32 %v3007, %v3085
    %v3087 = vpop.f32.mrb[0].mxu0
    %3088 = vdwg.mxu0
    %v3089 = vadd.f32 %v2901, %v3081
    %v3090 = vadd.f32 %v2902, %v3086
    %v3091 = vld [vmem:[#allocation2 + $0x208] sm:$0x1]
    %v3092 = vld [vmem:[#allocation2 + $0x210] sm:$0x1]
    %v3093 = vsel %vm137, %v3089, 0.0
    %3094 = vadd.xlane.f32.xlu0 %v3093
    %v3095 = vpop.xlane.xlu0 %3094
    %v3096 = vsel %vm137, %v3090, 0.0
    %3097 = vadd.xlane.f32.xlu0 %v3096
    %v3098 = vpop.xlane.xlu0 %3097
    %v3099 = vmul.f32 %v3095, %v1370
    %v3100 = vmul.f32 %v3098, %v1370
    %v3101 = vsub.f32 %v3089, %v3099
    %v3102 = vsub.f32 %v3090, %v3100
    %v3103 = vmul.f32 %v3101, %v3101
    %v3104 = vmul.f32 %v3102, %v3102
    %v3105 = vsel %vm137, %v3103, 0.0
    %3106 = vadd.xlane.f32.xlu0 %v3105
    %v3107 = vpop.xlane.xlu0 %3106
    %v3108 = vsel %vm137, %v3104, 0.0
    %3109 = vadd.xlane.f32.xlu0 %v3108
    %v3110 = vpop.xlane.xlu0 %3109
    %v3111 = vmul.f32 %v3107, %v1370
    %v3112 = vmul.f32 %v3110, %v1370
    %v3113 = vadd.f32 %v3111, 1e-05
    %v3114 = vadd.f32 %v3112, 1e-05
    %v3115 = vrsqrt.pop %v3113
    %v3116 = vrsqrt.pop %v3114
    %v3117 = vmul.f32 %v3101, %v3115
    %v3118 = vmul.f32 %v3102, %v3116
    %v3119 = vlaneseq
    %v3120 = vshrl.u32 %v3119, 7
    %v3121 = vsub.s32 0, %v3120
    %v3122 = vrot.slane %v3091, %v3121
    %v3123 = vmul.f32 %v3117, %v3122
    %v3124 = vmul.f32 %v3118, %v3122
    %v3125 = vlaneseq
    %v3126 = vshrl.u32 %v3125, 7
    %v3127 = vsub.s32 0, %v3126
    %v3128 = vrot.slane %v3092, %v3127
    %v3129 = vadd.f32 %v3123, %v3128
    %v3130 = vadd.f32 %v3124, %v3128
    %3131 = vst.msk [vmem:[%s3] sm:$0xff] %vm137, %v3129
    %3132 = vst.msk [vmem:[%s3 + $0x8] sm:$0xff] %vm137, %v3130
    %v3133 = vld [vmem:[#allocation2 + $0x218] sm:$0xff]
    %v3134 = vld [vmem:[#allocation2 + $0x220] sm:$0xff]
    %v3135 = vld [vmem:[#allocation2 + $0x228] sm:$0xff]
    %v3136 = vld [vmem:[#allocation2 + $0x230] sm:$0xff]
    %v3137 = vld [vmem:[#allocation2 + $0x238] sm:$0x1]
    %v3138 = vlaneseq
    %v3139 = vshrl.u32 %v3138, 7
    %v3140 = vsub.s32 0, %v3139
    %v3141 = vrot.slane %v3137, %v3140
    %v3143 = vsel %vm137, %v3129, 0
    %v3146 = vsel %vm137, %v3130, 0
    %3148 = vmatprep.subr.mxu0 0.0
    %3149 = vmatpush1.msra.mxu0 %v3133
    %3150 = vmatprep.subr.mxu0 0.0
    %3151 = vmatpush1.msra.mxu0 %v3134
    %3152 = vmatprep.subr.mxu0 0.0
    %3153 = vmatpush1.msra.mxu0 %v3135
    %3154 = vmatprep.subr.mxu0 0.0
    %3155 = vmatpush1.msra.mxu0 %v3136
    %3156 = vmatprep.subr.mxu0 0.0
    %3157 = vmatpush1.msra.mxu0 0.0
    %3158 = vmatprep.subr.mxu0 0.0
    %3159 = vmatpush1.msra.mxu0 0.0
    %3160 = vmatprep.subr.mxu0 0.0
    %3161 = vmatpush1.msra.mxu0 0.0
    %3162 = vmatprep.subr.mxu0 0.0
    %3163 = vmatpush1.msra.mxu0 0.0
    %3164 = vmatprep.subr.mxu0 0.0
    %3165 = vmatpush1.msra.mxu0 0.0
    %3166 = vmatprep.subr.mxu0 0.0
    %3167 = vmatpush1.msra.mxu0 0.0
    %3168 = vmatprep.subr.mxu0 0.0
    %3169 = vmatpush1.msra.mxu0 0.0
    %3170 = vmatprep.subr.mxu0 0.0
    %3171 = vmatpush1.msra.mxu0 0.0
    %3172 = vmatprep.subr.mxu0 0.0
    %3173 = vmatpush1.msra.mxu0 0.0
    %3174 = vmatprep.subr.mxu0 0.0
    %3175 = vmatpush1.msra.mxu0 0.0
    %3176 = vmatprep.subr.mxu0 0.0
    %3177 = vmatpush1.msra.mxu0 0.0
    %3178 = vmatprep.subr.mxu0 0.0
    %3179 = vmatpush1.msra.mxu0 0.0
    %3180 = vmatprep.subr.mxu0 0.0
    %3181 = vmatpush1.msra.mxu0 0.0
    %3182 = vmatprep.subr.mxu0 0.0
    %3183 = vmatpush1.msra.mxu0 0.0
    %3184 = vmatprep.subr.mxu0 0.0
    %3185 = vmatpush1.msra.mxu0 0.0
    %3186 = vmatprep.subr.mxu0 0.0
    %3187 = vmatpush1.msra.mxu0 0.0
    %3188 = vmatprep.subr.mxu0 0.0
    %3189 = vmatpush1.msra.mxu0 0.0
    %3190 = vmatprep.subr.mxu0 0.0
    %3191 = vmatpush1.msra.mxu0 0.0
    %3192 = vmatprep.subr.mxu0 0.0
    %3193 = vmatpush1.msra.mxu0 0.0
    %3194 = vmatprep.subr.mxu0 0.0
    %3195 = vmatpush1.msra.mxu0 0.0
    %3196 = vmatprep.subr.mxu0 0.0
    %3197 = vmatpush1.msra.mxu0 0.0
    %3198 = vmatprep.subr.mxu0 0.0
    %3199 = vmatpush1.msra.mxu0 0.0
    %3200 = vmatprep.subr.mxu0 0.0
    %3201 = vmatpush1.msra.mxu0 0.0
    %3202 = vmatprep.subr.mxu0 0.0
    %3203 = vmatpush1.msra.mxu0 0.0
    %3204 = vmatprep.subr.mxu0 0.0
    %3205 = vmatpush1.msra.mxu0 0.0
    %3206 = vmatprep.subr.mxu0 0.0
    %3207 = vmatpush1.msra.mxu0 0.0
    %3208 = vmatprep.subr.mxu0 0.0
    %3209 = vmatpush1.msra.mxu0 0.0
    %3210 = vmatprep.subr.mxu0 0.0
    %3211 = vmatpush1.msra.mxu0 0.0
    %3212 = vmatprep.mubr.f32.mxu0 0.0
    %3213 = vmatmul.mubr.f32.gmra.mrb[0].mxu0 %v3143
    %v3214 = vpop.f32.mrb[0].mxu0
    %v3215 = vadd.f32 %v3141, %v3214
    %v3216 = vpop.f32.mrb[0].mxu0
    %3217 = vmatprep.mubr.f32.mxu0 0.0
    %3218 = vmatmul.mubr.f32.gmra.mrb[0].mxu0 %v3146
    %v3219 = vpop.f32.mrb[0].mxu0
    %v3220 = vadd.f32 %v3141, %v3219
    %v3221 = vpop.f32.mrb[0].mxu0
    %3222 = vdwg.mxu0
    %v3223 = vld [vmem:[#allocation2 + $0x240] sm:$0xff]
    %v3224 = vld [vmem:[#allocation2 + $0x248] sm:$0xff]
    %v3225 = vld [vmem:[#allocation2 + $0x250] sm:$0xff]
    %v3226 = vld [vmem:[#allocation2 + $0x258] sm:$0xff]
    %v3227 = vld [vmem:[#allocation2 + $0x260] sm:$0x1]
    %3230 = vrot.lane.b32.xlu0 %v3215, 96
    %v3231 = vpop.permute.xlu0 %3230
    %3232 = vrot.lane.b32.xlu0 %v3220, 96
    %v3233 = vpop.permute.xlu0 %3232
    %v3234 = vsel %vm230, %v3215, 0
    %v3236 = vsel %vm230, %v3220, 0
    %v3238 = vsel %vm230, %v3231, 0
    %v3240 = vsel %vm230, %v3233, 0
    %3242 = vmatprep.subr.mxu0 0.0
    %3243 = vmatpush1.xpose.msra.mxu0 %v3238
    %3244 = vmatprep.subr.mxu0 0.0
    %3245 = vmatpush1.xpose.msra.mxu0 %v3240
    %3246 = vmatprep.subr.mxu0 0.0
    %3247 = vmatpush1.xpose.msra.mxu0 0.0
    %3248 = vmatprep.subr.mxu0 0.0
    %3249 = vmatpush1.xpose.msra.mxu0 0.0
    %3250 = vmatprep.subr.mxu0 0.0
    %3251 = vmatpush1.xpose.msra.mxu0 0.0
    %3252 = vmatprep.subr.mxu0 0.0
    %3253 = vmatpush1.xpose.msra.mxu0 0.0
    %3254 = vmatprep.subr.mxu0 0.0
    %3255 = vmatpush1.xpose.msra.mxu0 0.0
    %3256 = vmatprep.subr.mxu0 0.0
    %3257 = vmatpush1.xpose.msra.mxu0 0.0
    %3258 = vmatprep.subr.mxu0 0.0
    %3259 = vmatpush1.xpose.msra.mxu0 0.0
    %3260 = vmatprep.subr.mxu0 0.0
    %3261 = vmatpush1.xpose.msra.mxu0 0.0
    %3262 = vmatprep.subr.mxu0 0.0
    %3263 = vmatpush1.xpose.msra.mxu0 0.0
    %3264 = vmatprep.subr.mxu0 0.0
    %3265 = vmatpush1.xpose.msra.mxu0 0.0
    %3266 = vmatprep.subr.mxu0 0.0
    %3267 = vmatpush1.xpose.msra.mxu0 0.0
    %3268 = vmatprep.subr.mxu0 0.0
    %3269 = vmatpush1.xpose.msra.mxu0 0.0
    %3270 = vmatprep.subr.mxu0 0.0
    %3271 = vmatpush1.xpose.msra.mxu0 0.0
    %3272 = vmatprep.subr.mxu0 0.0
    %3273 = vmatpush1.xpose.msra.mxu0 0.0
    %3274 = vmatprep.subr.mxu0 0.0
    %3275 = vmatpush1.xpose.msra.mxu0 0.0
    %3276 = vmatprep.subr.mxu0 0.0
    %3277 = vmatpush1.xpose.msra.mxu0 0.0
    %3278 = vmatprep.subr.mxu0 0.0
    %3279 = vmatpush1.xpose.msra.mxu0 0.0
    %3280 = vmatprep.subr.mxu0 0.0
    %3281 = vmatpush1.xpose.msra.mxu0 0.0
    %3282 = vmatprep.subr.mxu0 0.0
    %3283 = vmatpush1.xpose.msra.mxu0 0.0
    %3284 = vmatprep.subr.mxu0 0.0
    %3285 = vmatpush1.xpose.msra.mxu0 0.0
    %3286 = vmatprep.subr.mxu0 0.0
    %3287 = vmatpush1.xpose.msra.mxu0 0.0
    %3288 = vmatprep.subr.mxu0 0.0
    %3289 = vmatpush1.xpose.msra.mxu0 0.0
    %3290 = vmatprep.subr.mxu0 0.0
    %3291 = vmatpush1.xpose.msra.mxu0 0.0
    %3292 = vmatprep.subr.mxu0 0.0
    %3293 = vmatpush1.xpose.msra.mxu0 0.0
    %3294 = vmatprep.subr.mxu0 0.0
    %3295 = vmatpush1.xpose.msra.mxu0 0.0
    %3296 = vmatprep.subr.mxu0 0.0
    %3297 = vmatpush1.xpose.msra.mxu0 0.0
    %3298 = vmatprep.subr.mxu0 0.0
    %3299 = vmatpush1.xpose.msra.mxu0 0.0
    %3300 = vmatprep.subr.mxu0 0.0
    %3301 = vmatpush1.xpose.msra.mxu0 0.0
    %3302 = vmatprep.subr.mxu0 0.0
    %3303 = vmatpush1.xpose.msra.mxu0 0.0
    %3304 = vmatprep.subr.mxu0 0.0
    %3305 = vmatpush1.xpose.msra.mxu0 0.0
    %3306 = vmatprep.mubr.f32.mxu0 0.0
    %3307 = vmatmul.mubr.f32.gmra.mrb[0].mxu0 %v3234
    %v3308 = vpop.f32.mrb[0].mxu0
    %v3309 = vadd.f32 %v27, %v3308
    %v3310 = vpop.f32.mrb[0].mxu0
    %3311 = vmatprep.mubr.f32.mxu0 0.0
    %3312 = vmatmul.mubr.f32.gmra.mrb[0].mxu0 %v3236
    %v3313 = vpop.f32.mrb[0].mxu0
    %v3314 = vadd.f32 %v28, %v3313
    %v3315 = vpop.f32.mrb[0].mxu0
    %3316 = vdwg.mxu0
    %v3317 = vsel %vm314, %v3309, -inf
    %3318 = vmax.xlane.f32.xlu0 %v3317
    %v3319 = vpop.xlane.xlu0 %3318
    %v3320 = vsel %vm314, %v3314, -inf
    %3321 = vmax.xlane.f32.xlu0 %v3320
    %v3322 = vpop.xlane.xlu0 %3321
    %v3323 = vsub.f32 %v3309, %v3319
    %v3324 = vsub.f32 %v3314, %v3322
    %v3325 = vmul.f32 %v3323, 1.442695
    %v3326 = vpow.pop %v3325
    %v3327 = vmul.f32 %v3324, 1.442695
    %v3328 = vpow.pop %v3327
    %v3329 = vsel %vm314, %v3326, 0.0
    %3330 = vadd.xlane.f32.xlu0 %v3329
    %v3331 = vpop.xlane.xlu0 %3330
    %v3332 = vsel %vm314, %v3328, 0.0
    %3333 = vadd.xlane.f32.xlu0 %v3332
    %v3334 = vpop.xlane.xlu0 %3333
    %v3335 = vrcp.pop %v3331
    %v3336 = vrcp.pop %v3334
    %v3337 = vmul.f32 %v3326, %v3335
    %v3338 = vmul.f32 %v3328, %v3336
    %3339 = vrot.lane.b32.xlu0 %v3215, 64
    %v3340 = vpop.permute.xlu0 %3339
    %3341 = vrot.lane.b32.xlu0 %v3220, 64
    %v3342 = vpop.permute.xlu0 %3341
    %v3346 = vsel %vm314, %v3337, 0
    %v3349 = vsel %vm314, %v3338, 0
    %3351 = vmatprep.subr.mxu0 0.0
    %3352 = vmatpush1.msra.mxu0 %v3340
    %3353 = vmatprep.subr.mxu0 0.0
    %3354 = vmatpush1.msra.mxu0 %v3342
    %3355 = vmatprep.subr.mxu0 0.0
    %3356 = vmatpush1.msra.mxu0 0.0
    %3357 = vmatprep.subr.mxu0 0.0
    %3358 = vmatpush1.msra.mxu0 0.0
    %3359 = vmatprep.subr.mxu0 0.0
    %3360 = vmatpush1.msra.mxu0 0.0
    %3361 = vmatprep.subr.mxu0 0.0
    %3362 = vmatpush1.msra.mxu0 0.0
    %3363 = vmatprep.subr.mxu0 0.0
    %3364 = vmatpush1.msra.mxu0 0.0
    %3365 = vmatprep.subr.mxu0 0.0
    %3366 = vmatpush1.msra.mxu0 0.0
    %3367 = vmatprep.subr.mxu0 0.0
    %3368 = vmatpush1.msra.mxu0 0.0
    %3369 = vmatprep.subr.mxu0 0.0
    %3370 = vmatpush1.msra.mxu0 0.0
    %3371 = vmatprep.subr.mxu0 0.0
    %3372 = vmatpush1.msra.mxu0 0.0
    %3373 = vmatprep.subr.mxu0 0.0
    %3374 = vmatpush1.msra.mxu0 0.0
    %3375 = vmatprep.subr.mxu0 0.0
    %3376 = vmatpush1.msra.mxu0 0.0
    %3377 = vmatprep.subr.mxu0 0.0
    %3378 = vmatpush1.msra.mxu0 0.0
    %3379 = vmatprep.subr.mxu0 0.0
    %3380 = vmatpush1.msra.mxu0 0.0
    %3381 = vmatprep.subr.mxu0 0.0
    %3382 = vmatpush1.msra.mxu0 0.0
    %3383 = vmatprep.subr.mxu0 0.0
    %3384 = vmatpush1.msra.mxu0 0.0
    %3385 = vmatprep.subr.mxu0 0.0
    %3386 = vmatpush1.msra.mxu0 0.0
    %3387 = vmatprep.subr.mxu0 0.0
    %3388 = vmatpush1.msra.mxu0 0.0
    %3389 = vmatprep.subr.mxu0 0.0
    %3390 = vmatpush1.msra.mxu0 0.0
    %3391 = vmatprep.subr.mxu0 0.0
    %3392 = vmatpush1.msra.mxu0 0.0
    %3393 = vmatprep.subr.mxu0 0.0
    %3394 = vmatpush1.msra.mxu0 0.0
    %3395 = vmatprep.subr.mxu0 0.0
    %3396 = vmatpush1.msra.mxu0 0.0
    %3397 = vmatprep.subr.mxu0 0.0
    %3398 = vmatpush1.msra.mxu0 0.0
    %3399 = vmatprep.subr.mxu0 0.0
    %3400 = vmatpush1.msra.mxu0 0.0
    %3401 = vmatprep.subr.mxu0 0.0
    %3402 = vmatpush1.msra.mxu0 0.0
    %3403 = vmatprep.subr.mxu0 0.0
    %3404 = vmatpush1.msra.mxu0 0.0
    %3405 = vmatprep.subr.mxu0 0.0
    %3406 = vmatpush1.msra.mxu0 0.0
    %3407 = vmatprep.subr.mxu0 0.0
    %3408 = vmatpush1.msra.mxu0 0.0
    %3409 = vmatprep.subr.mxu0 0.0
    %3410 = vmatpush1.msra.mxu0 0.0
    %3411 = vmatprep.subr.mxu0 0.0
    %3412 = vmatpush1.msra.mxu0 0.0
    %3413 = vmatprep.subr.mxu0 0.0
    %3414 = vmatpush1.msra.mxu0 0.0
    %3415 = vmatprep.mubr.f32.mxu0 0.0
    %3416 = vmatmul.mubr.f32.gmra.mrb[0].mxu0 %v3346
    %v3417 = vpop.f32.mrb[0].mxu0
    %v3418 = vadd.f32 0.0, %v3417
    %v3419 = vpop.f32.mrb[0].mxu0
    %3420 = vmatprep.mubr.f32.mxu0 0.0
    %3421 = vmatmul.mubr.f32.gmra.mrb[0].mxu0 %v3349
    %v3422 = vpop.f32.mrb[0].mxu0
    %v3423 = vadd.f32 0.0, %v3422
    %v3424 = vpop.f32.mrb[0].mxu0
    %3425 = vdwg.mxu0
    %v3427 = vsel %vm230, %v3418, 0
    %v3430 = vsel %vm230, %v3423, 0
    %3432 = vmatprep.subr.mxu0 0.0
    %3433 = vmatpush1.msra.mxu0 %v3223
    %3434 = vmatprep.subr.mxu0 0.0
    %3435 = vmatpush1.msra.mxu0 0.0
    %3436 = vmatprep.subr.mxu0 0.0
    %3437 = vmatpush1.msra.mxu0 0.0
    %3438 = vmatprep.subr.mxu0 0.0
    %3439 = vmatpush1.msra.mxu0 0.0
    %3440 = vmatprep.subr.mxu0 0.0
    %3441 = vmatpush1.msra.mxu0 0.0
    %3442 = vmatprep.subr.mxu0 0.0
    %3443 = vmatpush1.msra.mxu0 0.0
    %3444 = vmatprep.subr.mxu0 0.0
    %3445 = vmatpush1.msra.mxu0 0.0
    %3446 = vmatprep.subr.mxu0 0.0
    %3447 = vmatpush1.msra.mxu0 0.0
    %3448 = vmatprep.subr.mxu0 0.0
    %3449 = vmatpush1.msra.mxu0 0.0
    %3450 = vmatprep.subr.mxu0 0.0
    %3451 = vmatpush1.msra.mxu0 0.0
    %3452 = vmatprep.subr.mxu0 0.0
    %3453 = vmatpush1.msra.mxu0 0.0
    %3454 = vmatprep.subr.mxu0 0.0
    %3455 = vmatpush1.msra.mxu0 0.0
    %3456 = vmatprep.subr.mxu0 0.0
    %3457 = vmatpush1.msra.mxu0 0.0
    %3458 = vmatprep.subr.mxu0 0.0
    %3459 = vmatpush1.msra.mxu0 0.0
    %3460 = vmatprep.subr.mxu0 0.0
    %3461 = vmatpush1.msra.mxu0 0.0
    %3462 = vmatprep.subr.mxu0 0.0
    %3463 = vmatpush1.msra.mxu0 0.0
    %3464 = vmatprep.subr.mxu0 0.0
    %3465 = vmatpush1.msra.mxu0 0.0
    %3466 = vmatprep.subr.mxu0 0.0
    %3467 = vmatpush1.msra.mxu0 0.0
    %3468 = vmatprep.subr.mxu0 0.0
    %3469 = vmatpush1.msra.mxu0 0.0
    %3470 = vmatprep.subr.mxu0 0.0
    %3471 = vmatpush1.msra.mxu0 0.0
    %3472 = vmatprep.subr.mxu0 0.0
    %3473 = vmatpush1.msra.mxu0 0.0
    %3474 = vmatprep.subr.mxu0 0.0
    %3475 = vmatpush1.msra.mxu0 0.0
    %3476 = vmatprep.subr.mxu0 0.0
    %3477 = vmatpush1.msra.mxu0 0.0
    %3478 = vmatprep.subr.mxu0 0.0
    %3479 = vmatpush1.msra.mxu0 0.0
    %3480 = vmatprep.subr.mxu0 0.0
    %3481 = vmatpush1.msra.mxu0 0.0
    %3482 = vmatprep.subr.mxu0 0.0
    %3483 = vmatpush1.msra.mxu0 0.0
    %3484 = vmatprep.subr.mxu0 0.0
    %3485 = vmatpush1.msra.mxu0 0.0
    %3486 = vmatprep.subr.mxu0 0.0
    %3487 = vmatpush1.msra.mxu0 0.0
    %3488 = vmatprep.subr.mxu0 0.0
    %3489 = vmatpush1.msra.mxu0 0.0
    %3490 = vmatprep.subr.mxu0 0.0
    %3491 = vmatpush1.msra.mxu0 0.0
    %3492 = vmatprep.subr.mxu0 0.0
    %3493 = vmatpush1.msra.mxu0 0.0
    %3494 = vmatprep.subr.mxu0 0.0
    %3495 = vmatpush1.msra.mxu0 0.0
    %3496 = vmatprep.mubr.f32.mxu0 0.0
    %3497 = vmatmul.mubr.f32.gmra.mrb[0].mxu0 %v3427
    %v3498 = vpop.f32.mrb[0].mxu0
    %v3499 = vadd.f32 0.0, %v3498
    %v3500 = vpop.f32.mrb[0].mxu0
    %3501 = vmatprep.mubr.f32.mxu0 0.0
    %3502 = vmatmul.mubr.f32.gmra.mrb[0].mxu0 %v3430
    %v3503 = vpop.f32.mrb[0].mxu0
    %v3504 = vadd.f32 0.0, %v3503
    %v3505 = vpop.f32.mrb[0].mxu0
    %3506 = vdwg.mxu0
    %v3507 = vlaneseq
    %v3508 = vshrl.u32 %v3507, 7
    %v3509 = vsub.s32 0, %v3508
    %v3510 = vrot.slane %v3227, %v3509
    %v3511 = vadd.f32 %v3510, %v3499
    %v3512 = vadd.f32 %v3510, %v3504
    %3513 = vrot.lane.b32.xlu0 %v3215, 120
    %v3514 = vpop.permute.xlu0 %3513
    %3515 = vrot.lane.b32.xlu0 %v3220, 120
    %v3516 = vpop.permute.xlu0 %3515
    %3517 = vrot.lane.b32.xlu0 %v3215, 88
    %v3518 = vpop.permute.xlu0 %3517
    %3519 = vrot.lane.b32.xlu0 %v3220, 88
    %v3520 = vpop.permute.xlu0 %3519
    %v3521 = vsel %vm230, %v3514, 0
    %v3523 = vsel %vm230, %v3516, 0
    %v3525 = vsel %vm230, %v3518, 0
    %v3527 = vsel %vm230, %v3520, 0
    %3529 = vmatprep.subr.mxu0 0.0
    %3530 = vmatpush1.xpose.msra.mxu0 %v3525
    %3531 = vmatprep.subr.mxu0 0.0
    %3532 = vmatpush1.xpose.msra.mxu0 %v3527
    %3533 = vmatprep.subr.mxu0 0.0
    %3534 = vmatpush1.xpose.msra.mxu0 0.0
    %3535 = vmatprep.subr.mxu0 0.0
    %3536 = vmatpush1.xpose.msra.mxu0 0.0
    %3537 = vmatprep.subr.mxu0 0.0
    %3538 = vmatpush1.xpose.msra.mxu0 0.0
    %3539 = vmatprep.subr.mxu0 0.0
    %3540 = vmatpush1.xpose.msra.mxu0 0.0
    %3541 = vmatprep.subr.mxu0 0.0
    %3542 = vmatpush1.xpose.msra.mxu0 0.0
    %3543 = vmatprep.subr.mxu0 0.0
    %3544 = vmatpush1.xpose.msra.mxu0 0.0
    %3545 = vmatprep.subr.mxu0 0.0
    %3546 = vmatpush1.xpose.msra.mxu0 0.0
    %3547 = vmatprep.subr.mxu0 0.0
    %3548 = vmatpush1.xpose.msra.mxu0 0.0
    %3549 = vmatprep.subr.mxu0 0.0
    %3550 = vmatpush1.xpose.msra.mxu0 0.0
    %3551 = vmatprep.subr.mxu0 0.0
    %3552 = vmatpush1.xpose.msra.mxu0 0.0
    %3553 = vmatprep.subr.mxu0 0.0
    %3554 = vmatpush1.xpose.msra.mxu0 0.0
    %3555 = vmatprep.subr.mxu0 0.0
    %3556 = vmatpush1.xpose.msra.mxu0 0.0
    %3557 = vmatprep.subr.mxu0 0.0
    %3558 = vmatpush1.xpose.msra.mxu0 0.0
    %3559 = vmatprep.subr.mxu0 0.0
    %3560 = vmatpush1.xpose.msra.mxu0 0.0
    %3561 = vmatprep.subr.mxu0 0.0
    %3562 = vmatpush1.xpose.msra.mxu0 0.0
    %3563 = vmatprep.subr.mxu0 0.0
    %3564 = vmatpush1.xpose.msra.mxu0 0.0
    %3565 = vmatprep.subr.mxu0 0.0
    %3566 = vmatpush1.xpose.msra.mxu0 0.0
    %3567 = vmatprep.subr.mxu0 0.0
    %3568 = vmatpush1.xpose.msra.mxu0 0.0
    %3569 = vmatprep.subr.mxu0 0.0
    %3570 = vmatpush1.xpose.msra.mxu0 0.0
    %3571 = vmatprep.subr.mxu0 0.0
    %3572 = vmatpush1.xpose.msra.mxu0 0.0
    %3573 = vmatprep.subr.mxu0 0.0
    %3574 = vmatpush1.xpose.msra.mxu0 0.0
    %3575 = vmatprep.subr.mxu0 0.0
    %3576 = vmatpush1.xpose.msra.mxu0 0.0
    %3577 = vmatprep.subr.mxu0 0.0
    %3578 = vmatpush1.xpose.msra.mxu0 0.0
    %3579 = vmatprep.subr.mxu0 0.0
    %3580 = vmatpush1.xpose.msra.mxu0 0.0
    %3581 = vmatprep.subr.mxu0 0.0
    %3582 = vmatpush1.xpose.msra.mxu0 0.0
    %3583 = vmatprep.subr.mxu0 0.0
    %3584 = vmatpush1.xpose.msra.mxu0 0.0
    %3585 = vmatprep.subr.mxu0 0.0
    %3586 = vmatpush1.xpose.msra.mxu0 0.0
    %3587 = vmatprep.subr.mxu0 0.0
    %3588 = vmatpush1.xpose.msra.mxu0 0.0
    %3589 = vmatprep.subr.mxu0 0.0
    %3590 = vmatpush1.xpose.msra.mxu0 0.0
    %3591 = vmatprep.subr.mxu0 0.0
    %3592 = vmatpush1.xpose.msra.mxu0 0.0
    %3593 = vmatprep.mubr.f32.mxu0 0.0
    %3594 = vmatmul.mubr.f32.gmra.mrb[0].mxu0 %v3521
    %v3595 = vpop.f32.mrb[0].mxu0
    %v3596 = vadd.f32 %v27, %v3595
    %v3597 = vpop.f32.mrb[0].mxu0
    %3598 = vmatprep.mubr.f32.mxu0 0.0
    %3599 = vmatmul.mubr.f32.gmra.mrb[0].mxu0 %v3523
    %v3600 = vpop.f32.mrb[0].mxu0
    %v3601 = vadd.f32 %v28, %v3600
    %v3602 = vpop.f32.mrb[0].mxu0
    %3603 = vdwg.mxu0
    %v3604 = vsel %vm314, %v3596, -inf
    %3605 = vmax.xlane.f32.xlu0 %v3604
    %v3606 = vpop.xlane.xlu0 %3605
    %v3607 = vsel %vm314, %v3601, -inf
    %3608 = vmax.xlane.f32.xlu0 %v3607
    %v3609 = vpop.xlane.xlu0 %3608
    %v3610 = vsub.f32 %v3596, %v3606
    %v3611 = vsub.f32 %v3601, %v3609
    %v3612 = vmul.f32 %v3610, 1.442695
    %v3613 = vpow.pop %v3612
    %v3614 = vmul.f32 %v3611, 1.442695
    %v3615 = vpow.pop %v3614
    %v3616 = vsel %vm314, %v3613, 0.0
    %3617 = vadd.xlane.f32.xlu0 %v3616
    %v3618 = vpop.xlane.xlu0 %3617
    %v3619 = vsel %vm314, %v3615, 0.0
    %3620 = vadd.xlane.f32.xlu0 %v3619
    %v3621 = vpop.xlane.xlu0 %3620
    %v3622 = vrcp.pop %v3618
    %v3623 = vrcp.pop %v3621
    %v3624 = vmul.f32 %v3613, %v3622
    %v3625 = vmul.f32 %v3615, %v3623
    %3626 = vrot.lane.b32.xlu0 %v3215, 56
    %v3627 = vpop.permute.xlu0 %3626
    %3628 = vrot.lane.b32.xlu0 %v3220, 56
    %v3629 = vpop.permute.xlu0 %3628
    %v3633 = vsel %vm314, %v3624, 0
    %v3636 = vsel %vm314, %v3625, 0
    %3638 = vmatprep.subr.mxu0 0.0
    %3639 = vmatpush1.msra.mxu0 %v3627
    %3640 = vmatprep.subr.mxu0 0.0
    %3641 = vmatpush1.msra.mxu0 %v3629
    %3642 = vmatprep.subr.mxu0 0.0
    %3643 = vmatpush1.msra.mxu0 0.0
    %3644 = vmatprep.subr.mxu0 0.0
    %3645 = vmatpush1.msra.mxu0 0.0
    %3646 = vmatprep.subr.mxu0 0.0
    %3647 = vmatpush1.msra.mxu0 0.0
    %3648 = vmatprep.subr.mxu0 0.0
    %3649 = vmatpush1.msra.mxu0 0.0
    %3650 = vmatprep.subr.mxu0 0.0
    %3651 = vmatpush1.msra.mxu0 0.0
    %3652 = vmatprep.subr.mxu0 0.0
    %3653 = vmatpush1.msra.mxu0 0.0
    %3654 = vmatprep.subr.mxu0 0.0
    %3655 = vmatpush1.msra.mxu0 0.0
    %3656 = vmatprep.subr.mxu0 0.0
    %3657 = vmatpush1.msra.mxu0 0.0
    %3658 = vmatprep.subr.mxu0 0.0
    %3659 = vmatpush1.msra.mxu0 0.0
    %3660 = vmatprep.subr.mxu0 0.0
    %3661 = vmatpush1.msra.mxu0 0.0
    %3662 = vmatprep.subr.mxu0 0.0
    %3663 = vmatpush1.msra.mxu0 0.0
    %3664 = vmatprep.subr.mxu0 0.0
    %3665 = vmatpush1.msra.mxu0 0.0
    %3666 = vmatprep.subr.mxu0 0.0
    %3667 = vmatpush1.msra.mxu0 0.0
    %3668 = vmatprep.subr.mxu0 0.0
    %3669 = vmatpush1.msra.mxu0 0.0
    %3670 = vmatprep.subr.mxu0 0.0
    %3671 = vmatpush1.msra.mxu0 0.0
    %3672 = vmatprep.subr.mxu0 0.0
    %3673 = vmatpush1.msra.mxu0 0.0
    %3674 = vmatprep.subr.mxu0 0.0
    %3675 = vmatpush1.msra.mxu0 0.0
    %3676 = vmatprep.subr.mxu0 0.0
    %3677 = vmatpush1.msra.mxu0 0.0
    %3678 = vmatprep.subr.mxu0 0.0
    %3679 = vmatpush1.msra.mxu0 0.0
    %3680 = vmatprep.subr.mxu0 0.0
    %3681 = vmatpush1.msra.mxu0 0.0
    %3682 = vmatprep.subr.mxu0 0.0
    %3683 = vmatpush1.msra.mxu0 0.0
    %3684 = vmatprep.subr.mxu0 0.0
    %3685 = vmatpush1.msra.mxu0 0.0
    %3686 = vmatprep.subr.mxu0 0.0
    %3687 = vmatpush1.msra.mxu0 0.0
    %3688 = vmatprep.subr.mxu0 0.0
    %3689 = vmatpush1.msra.mxu0 0.0
    %3690 = vmatprep.subr.mxu0 0.0
    %3691 = vmatpush1.msra.mxu0 0.0
    %3692 = vmatprep.subr.mxu0 0.0
    %3693 = vmatpush1.msra.mxu0 0.0
    %3694 = vmatprep.subr.mxu0 0.0
    %3695 = vmatpush1.msra.mxu0 0.0
    %3696 = vmatprep.subr.mxu0 0.0
    %3697 = vmatpush1.msra.mxu0 0.0
    %3698 = vmatprep.subr.mxu0 0.0
    %3699 = vmatpush1.msra.mxu0 0.0
    %3700 = vmatprep.subr.mxu0 0.0
    %3701 = vmatpush1.msra.mxu0 0.0
    %3702 = vmatprep.mubr.f32.mxu0 0.0
    %3703 = vmatmul.mubr.f32.gmra.mrb[0].mxu0 %v3633
    %v3704 = vpop.f32.mrb[0].mxu0
    %v3705 = vadd.f32 0.0, %v3704
    %v3706 = vpop.f32.mrb[0].mxu0
    %3707 = vmatprep.mubr.f32.mxu0 0.0
    %3708 = vmatmul.mubr.f32.gmra.mrb[0].mxu0 %v3636
    %v3709 = vpop.f32.mrb[0].mxu0
    %v3710 = vadd.f32 0.0, %v3709
    %v3711 = vpop.f32.mrb[0].mxu0
    %3712 = vdwg.mxu0
    %v3714 = vsel %vm230, %v3705, 0
    %v3717 = vsel %vm230, %v3710, 0
    %3719 = vmatprep.subr.mxu0 0.0
    %3720 = vmatpush1.msra.mxu0 %v3224
    %3721 = vmatprep.subr.mxu0 0.0
    %3722 = vmatpush1.msra.mxu0 0.0
    %3723 = vmatprep.subr.mxu0 0.0
    %3724 = vmatpush1.msra.mxu0 0.0
    %3725 = vmatprep.subr.mxu0 0.0
    %3726 = vmatpush1.msra.mxu0 0.0
    %3727 = vmatprep.subr.mxu0 0.0
    %3728 = vmatpush1.msra.mxu0 0.0
    %3729 = vmatprep.subr.mxu0 0.0
    %3730 = vmatpush1.msra.mxu0 0.0
    %3731 = vmatprep.subr.mxu0 0.0
    %3732 = vmatpush1.msra.mxu0 0.0
    %3733 = vmatprep.subr.mxu0 0.0
    %3734 = vmatpush1.msra.mxu0 0.0
    %3735 = vmatprep.subr.mxu0 0.0
    %3736 = vmatpush1.msra.mxu0 0.0
    %3737 = vmatprep.subr.mxu0 0.0
    %3738 = vmatpush1.msra.mxu0 0.0
    %3739 = vmatprep.subr.mxu0 0.0
    %3740 = vmatpush1.msra.mxu0 0.0
    %3741 = vmatprep.subr.mxu0 0.0
    %3742 = vmatpush1.msra.mxu0 0.0
    %3743 = vmatprep.subr.mxu0 0.0
    %3744 = vmatpush1.msra.mxu0 0.0
    %3745 = vmatprep.subr.mxu0 0.0
    %3746 = vmatpush1.msra.mxu0 0.0
    %3747 = vmatprep.subr.mxu0 0.0
    %3748 = vmatpush1.msra.mxu0 0.0
    %3749 = vmatprep.subr.mxu0 0.0
    %3750 = vmatpush1.msra.mxu0 0.0
    %3751 = vmatprep.subr.mxu0 0.0
    %3752 = vmatpush1.msra.mxu0 0.0
    %3753 = vmatprep.subr.mxu0 0.0
    %3754 = vmatpush1.msra.mxu0 0.0
    %3755 = vmatprep.subr.mxu0 0.0
    %3756 = vmatpush1.msra.mxu0 0.0
    %3757 = vmatprep.subr.mxu0 0.0
    %3758 = vmatpush1.msra.mxu0 0.0
    %3759 = vmatprep.subr.mxu0 0.0
    %3760 = vmatpush1.msra.mxu0 0.0
    %3761 = vmatprep.subr.mxu0 0.0
    %3762 = vmatpush1.msra.mxu0 0.0
    %3763 = vmatprep.subr.mxu0 0.0
    %3764 = vmatpush1.msra.mxu0 0.0
    %3765 = vmatprep.subr.mxu0 0.0
    %3766 = vmatpush1.msra.mxu0 0.0
    %3767 = vmatprep.subr.mxu0 0.0
    %3768 = vmatpush1.msra.mxu0 0.0
    %3769 = vmatprep.subr.mxu0 0.0
    %3770 = vmatpush1.msra.mxu0 0.0
    %3771 = vmatprep.subr.mxu0 0.0
    %3772 = vmatpush1.msra.mxu0 0.0
    %3773 = vmatprep.subr.mxu0 0.0
    %3774 = vmatpush1.msra.mxu0 0.0
    %3775 = vmatprep.subr.mxu0 0.0
    %3776 = vmatpush1.msra.mxu0 0.0
    %3777 = vmatprep.subr.mxu0 0.0
    %3778 = vmatpush1.msra.mxu0 0.0
    %3779 = vmatprep.subr.mxu0 0.0
    %3780 = vmatpush1.msra.mxu0 0.0
    %3781 = vmatprep.subr.mxu0 0.0
    %3782 = vmatpush1.msra.mxu0 0.0
    %3783 = vmatprep.mubr.f32.mxu0 0.0
    %3784 = vmatmul.mubr.f32.gmra.mrb[0].mxu0 %v3714
    %v3785 = vpop.f32.mrb[0].mxu0
    %v3786 = vadd.f32 0.0, %v3785
    %v3787 = vpop.f32.mrb[0].mxu0
    %3788 = vmatprep.mubr.f32.mxu0 0.0
    %3789 = vmatmul.mubr.f32.gmra.mrb[0].mxu0 %v3717
    %v3790 = vpop.f32.mrb[0].mxu0
    %v3791 = vadd.f32 0.0, %v3790
    %v3792 = vpop.f32.mrb[0].mxu0
    %3793 = vdwg.mxu0
    %v3794 = vadd.f32 %v3511, %v3786
    %v3795 = vadd.f32 %v3512, %v3791
    %3796 = vrot.lane.b32.xlu0 %v3215, 112
    %v3797 = vpop.permute.xlu0 %3796
    %3798 = vrot.lane.b32.xlu0 %v3220, 112
    %v3799 = vpop.permute.xlu0 %3798
    %3800 = vrot.lane.b32.xlu0 %v3215, 80
    %v3801 = vpop.permute.xlu0 %3800
    %3802 = vrot.lane.b32.xlu0 %v3220, 80
    %v3803 = vpop.permute.xlu0 %3802
    %v3804 = vsel %vm230, %v3797, 0
    %v3806 = vsel %vm230, %v3799, 0
    %v3808 = vsel %vm230, %v3801, 0
    %v3810 = vsel %vm230, %v3803, 0
    %3812 = vmatprep.subr.mxu0 0.0
    %3813 = vmatpush1.xpose.msra.mxu0 %v3808
    %3814 = vmatprep.subr.mxu0 0.0
    %3815 = vmatpush1.xpose.msra.mxu0 %v3810
    %3816 = vmatprep.subr.mxu0 0.0
    %3817 = vmatpush1.xpose.msra.mxu0 0.0
    %3818 = vmatprep.subr.mxu0 0.0
    %3819 = vmatpush1.xpose.msra.mxu0 0.0
    %3820 = vmatprep.subr.mxu0 0.0
    %3821 = vmatpush1.xpose.msra.mxu0 0.0
    %3822 = vmatprep.subr.mxu0 0.0
    %3823 = vmatpush1.xpose.msra.mxu0 0.0
    %3824 = vmatprep.subr.mxu0 0.0
    %3825 = vmatpush1.xpose.msra.mxu0 0.0
    %3826 = vmatprep.subr.mxu0 0.0
    %3827 = vmatpush1.xpose.msra.mxu0 0.0
    %3828 = vmatprep.subr.mxu0 0.0
    %3829 = vmatpush1.xpose.msra.mxu0 0.0
    %3830 = vmatprep.subr.mxu0 0.0
    %3831 = vmatpush1.xpose.msra.mxu0 0.0
    %3832 = vmatprep.subr.mxu0 0.0
    %3833 = vmatpush1.xpose.msra.mxu0 0.0
    %3834 = vmatprep.subr.mxu0 0.0
    %3835 = vmatpush1.xpose.msra.mxu0 0.0
    %3836 = vmatprep.subr.mxu0 0.0
    %3837 = vmatpush1.xpose.msra.mxu0 0.0
    %3838 = vmatprep.subr.mxu0 0.0
    %3839 = vmatpush1.xpose.msra.mxu0 0.0
    %3840 = vmatprep.subr.mxu0 0.0
    %3841 = vmatpush1.xpose.msra.mxu0 0.0
    %3842 = vmatprep.subr.mxu0 0.0
    %3843 = vmatpush1.xpose.msra.mxu0 0.0
    %3844 = vmatprep.subr.mxu0 0.0
    %3845 = vmatpush1.xpose.msra.mxu0 0.0
    %3846 = vmatprep.subr.mxu0 0.0
    %3847 = vmatpush1.xpose.msra.mxu0 0.0
    %3848 = vmatprep.subr.mxu0 0.0
    %3849 = vmatpush1.xpose.msra.mxu0 0.0
    %3850 = vmatprep.subr.mxu0 0.0
    %3851 = vmatpush1.xpose.msra.mxu0 0.0
    %3852 = vmatprep.subr.mxu0 0.0
    %3853 = vmatpush1.xpose.msra.mxu0 0.0
    %3854 = vmatprep.subr.mxu0 0.0
    %3855 = vmatpush1.xpose.msra.mxu0 0.0
    %3856 = vmatprep.subr.mxu0 0.0
    %3857 = vmatpush1.xpose.msra.mxu0 0.0
    %3858 = vmatprep.subr.mxu0 0.0
    %3859 = vmatpush1.xpose.msra.mxu0 0.0
    %3860 = vmatprep.subr.mxu0 0.0
    %3861 = vmatpush1.xpose.msra.mxu0 0.0
    %3862 = vmatprep.subr.mxu0 0.0
    %3863 = vmatpush1.xpose.msra.mxu0 0.0
    %3864 = vmatprep.subr.mxu0 0.0
    %3865 = vmatpush1.xpose.msra.mxu0 0.0
    %3866 = vmatprep.subr.mxu0 0.0
    %3867 = vmatpush1.xpose.msra.mxu0 0.0
    %3868 = vmatprep.subr.mxu0 0.0
    %3869 = vmatpush1.xpose.msra.mxu0 0.0
    %3870 = vmatprep.subr.mxu0 0.0
    %3871 = vmatpush1.xpose.msra.mxu0 0.0
    %3872 = vmatprep.subr.mxu0 0.0
    %3873 = vmatpush1.xpose.msra.mxu0 0.0
    %3874 = vmatprep.subr.mxu0 0.0
    %3875 = vmatpush1.xpose.msra.mxu0 0.0
    %3876 = vmatprep.mubr.f32.mxu0 0.0
    %3877 = vmatmul.mubr.f32.gmra.mrb[0].mxu0 %v3804
    %v3878 = vpop.f32.mrb[0].mxu0
    %v3879 = vadd.f32 %v27, %v3878
    %v3880 = vpop.f32.mrb[0].mxu0
    %3881 = vmatprep.mubr.f32.mxu0 0.0
    %3882 = vmatmul.mubr.f32.gmra.mrb[0].mxu0 %v3806
    %v3883 = vpop.f32.mrb[0].mxu0
    %v3884 = vadd.f32 %v28, %v3883
    %v3885 = vpop.f32.mrb[0].mxu0
    %3886 = vdwg.mxu0
    %v3887 = vsel %vm314, %v3879, -inf
    %3888 = vmax.xlane.f32.xlu0 %v3887
    %v3889 = vpop.xlane.xlu0 %3888
    %v3890 = vsel %vm314, %v3884, -inf
    %3891 = vmax.xlane.f32.xlu0 %v3890
    %v3892 = vpop.xlane.xlu0 %3891
    %v3893 = vsub.f32 %v3879, %v3889
    %v3894 = vsub.f32 %v3884, %v3892
    %v3895 = vmul.f32 %v3893, 1.442695
    %v3896 = vpow.pop %v3895
    %v3897 = vmul.f32 %v3894, 1.442695
    %v3898 = vpow.pop %v3897
    %v3899 = vsel %vm314, %v3896, 0.0
    %3900 = vadd.xlane.f32.xlu0 %v3899
    %v3901 = vpop.xlane.xlu0 %3900
    %v3902 = vsel %vm314, %v3898, 0.0
    %3903 = vadd.xlane.f32.xlu0 %v3902
    %v3904 = vpop.xlane.xlu0 %3903
    %v3905 = vrcp.pop %v3901
    %v3906 = vrcp.pop %v3904
    %v3907 = vmul.f32 %v3896, %v3905
    %v3908 = vmul.f32 %v3898, %v3906
    %3909 = vrot.lane.b32.xlu0 %v3215, 48
    %v3910 = vpop.permute.xlu0 %3909
    %3911 = vrot.lane.b32.xlu0 %v3220, 48
    %v3912 = vpop.permute.xlu0 %3911
    %v3916 = vsel %vm314, %v3907, 0
    %v3919 = vsel %vm314, %v3908, 0
    %3921 = vmatprep.subr.mxu0 0.0
    %3922 = vmatpush1.msra.mxu0 %v3910
    %3923 = vmatprep.subr.mxu0 0.0
    %3924 = vmatpush1.msra.mxu0 %v3912
    %3925 = vmatprep.subr.mxu0 0.0
    %3926 = vmatpush1.msra.mxu0 0.0
    %3927 = vmatprep.subr.mxu0 0.0
    %3928 = vmatpush1.msra.mxu0 0.0
    %3929 = vmatprep.subr.mxu0 0.0
    %3930 = vmatpush1.msra.mxu0 0.0
    %3931 = vmatprep.subr.mxu0 0.0
    %3932 = vmatpush1.msra.mxu0 0.0
    %3933 = vmatprep.subr.mxu0 0.0
    %3934 = vmatpush1.msra.mxu0 0.0
    %3935 = vmatprep.subr.mxu0 0.0
    %3936 = vmatpush1.msra.mxu0 0.0
    %3937 = vmatprep.subr.mxu0 0.0
    %3938 = vmatpush1.msra.mxu0 0.0
    %3939 = vmatprep.subr.mxu0 0.0
    %3940 = vmatpush1.msra.mxu0 0.0
    %3941 = vmatprep.subr.mxu0 0.0
    %3942 = vmatpush1.msra.mxu0 0.0
    %3943 = vmatprep.subr.mxu0 0.0
    %3944 = vmatpush1.msra.mxu0 0.0
    %3945 = vmatprep.subr.mxu0 0.0
    %3946 = vmatpush1.msra.mxu0 0.0
    %3947 = vmatprep.subr.mxu0 0.0
    %3948 = vmatpush1.msra.mxu0 0.0
    %3949 = vmatprep.subr.mxu0 0.0
    %3950 = vmatpush1.msra.mxu0 0.0
    %3951 = vmatprep.subr.mxu0 0.0
    %3952 = vmatpush1.msra.mxu0 0.0
    %3953 = vmatprep.subr.mxu0 0.0
    %3954 = vmatpush1.msra.mxu0 0.0
    %3955 = vmatprep.subr.mxu0 0.0
    %3956 = vmatpush1.msra.mxu0 0.0
    %3957 = vmatprep.subr.mxu0 0.0
    %3958 = vmatpush1.msra.mxu0 0.0
    %3959 = vmatprep.subr.mxu0 0.0
    %3960 = vmatpush1.msra.mxu0 0.0
    %3961 = vmatprep.subr.mxu0 0.0
    %3962 = vmatpush1.msra.mxu0 0.0
    %3963 = vmatprep.subr.mxu0 0.0
    %3964 = vmatpush1.msra.mxu0 0.0
    %3965 = vmatprep.subr.mxu0 0.0
    %3966 = vmatpush1.msra.mxu0 0.0
    %3967 = vmatprep.subr.mxu0 0.0
    %3968 = vmatpush1.msra.mxu0 0.0
    %3969 = vmatprep.subr.mxu0 0.0
    %3970 = vmatpush1.msra.mxu0 0.0
    %3971 = vmatprep.subr.mxu0 0.0
    %3972 = vmatpush1.msra.mxu0 0.0
    %3973 = vmatprep.subr.mxu0 0.0
    %3974 = vmatpush1.msra.mxu0 0.0
    %3975 = vmatprep.subr.mxu0 0.0
    %3976 = vmatpush1.msra.mxu0 0.0
    %3977 = vmatprep.subr.mxu0 0.0
    %3978 = vmatpush1.msra.mxu0 0.0
    %3979 = vmatprep.subr.mxu0 0.0
    %3980 = vmatpush1.msra.mxu0 0.0
    %3981 = vmatprep.subr.mxu0 0.0
    %3982 = vmatpush1.msra.mxu0 0.0
    %3983 = vmatprep.subr.mxu0 0.0
    %3984 = vmatpush1.msra.mxu0 0.0
    %3985 = vmatprep.mubr.f32.mxu0 0.0
    %3986 = vmatmul.mubr.f32.gmra.mrb[0].mxu0 %v3916
    %v3987 = vpop.f32.mrb[0].mxu0
    %v3988 = vadd.f32 0.0, %v3987
    %v3989 = vpop.f32.mrb[0].mxu0
    %3990 = vmatprep.mubr.f32.mxu0 0.0
    %3991 = vmatmul.mubr.f32.gmra.mrb[0].mxu0 %v3919
    %v3992 = vpop.f32.mrb[0].mxu0
    %v3993 = vadd.f32 0.0, %v3992
    %v3994 = vpop.f32.mrb[0].mxu0
    %3995 = vdwg.mxu0
    %v3997 = vsel %vm230, %v3988, 0
    %v4000 = vsel %vm230, %v3993, 0
    %4002 = vmatprep.subr.mxu0 0.0
    %4003 = vmatpush1.msra.mxu0 %v3225
    %4004 = vmatprep.subr.mxu0 0.0
    %4005 = vmatpush1.msra.mxu0 0.0
    %4006 = vmatprep.subr.mxu0 0.0
    %4007 = vmatpush1.msra.mxu0 0.0
    %4008 = vmatprep.subr.mxu0 0.0
    %4009 = vmatpush1.msra.mxu0 0.0
    %4010 = vmatprep.subr.mxu0 0.0
    %4011 = vmatpush1.msra.mxu0 0.0
    %4012 = vmatprep.subr.mxu0 0.0
    %4013 = vmatpush1.msra.mxu0 0.0
    %4014 = vmatprep.subr.mxu0 0.0
    %4015 = vmatpush1.msra.mxu0 0.0
    %4016 = vmatprep.subr.mxu0 0.0
    %4017 = vmatpush1.msra.mxu0 0.0
    %4018 = vmatprep.subr.mxu0 0.0
    %4019 = vmatpush1.msra.mxu0 0.0
    %4020 = vmatprep.subr.mxu0 0.0
    %4021 = vmatpush1.msra.mxu0 0.0
    %4022 = vmatprep.subr.mxu0 0.0
    %4023 = vmatpush1.msra.mxu0 0.0
    %4024 = vmatprep.subr.mxu0 0.0
    %4025 = vmatpush1.msra.mxu0 0.0
    %4026 = vmatprep.subr.mxu0 0.0
    %4027 = vmatpush1.msra.mxu0 0.0
    %4028 = vmatprep.subr.mxu0 0.0
    %4029 = vmatpush1.msra.mxu0 0.0
    %4030 = vmatprep.subr.mxu0 0.0
    %4031 = vmatpush1.msra.mxu0 0.0
    %4032 = vmatprep.subr.mxu0 0.0
    %4033 = vmatpush1.msra.mxu0 0.0
    %4034 = vmatprep.subr.mxu0 0.0
    %4035 = vmatpush1.msra.mxu0 0.0
    %4036 = vmatprep.subr.mxu0 0.0
    %4037 = vmatpush1.msra.mxu0 0.0
    %4038 = vmatprep.subr.mxu0 0.0
    %4039 = vmatpush1.msra.mxu0 0.0
    %4040 = vmatprep.subr.mxu0 0.0
    %4041 = vmatpush1.msra.mxu0 0.0
    %4042 = vmatprep.subr.mxu0 0.0
    %4043 = vmatpush1.msra.mxu0 0.0
    %4044 = vmatprep.subr.mxu0 0.0
    %4045 = vmatpush1.msra.mxu0 0.0
    %4046 = vmatprep.subr.mxu0 0.0
    %4047 = vmatpush1.msra.mxu0 0.0
    %4048 = vmatprep.subr.mxu0 0.0
    %4049 = vmatpush1.msra.mxu0 0.0
    %4050 = vmatprep.subr.mxu0 0.0
    %4051 = vmatpush1.msra.mxu0 0.0
    %4052 = vmatprep.subr.mxu0 0.0
    %4053 = vmatpush1.msra.mxu0 0.0
    %4054 = vmatprep.subr.mxu0 0.0
    %4055 = vmatpush1.msra.mxu0 0.0
    %4056 = vmatprep.subr.mxu0 0.0
    %4057 = vmatpush1.msra.mxu0 0.0
    %4058 = vmatprep.subr.mxu0 0.0
    %4059 = vmatpush1.msra.mxu0 0.0
    %4060 = vmatprep.subr.mxu0 0.0
    %4061 = vmatpush1.msra.mxu0 0.0
    %4062 = vmatprep.subr.mxu0 0.0
    %4063 = vmatpush1.msra.mxu0 0.0
    %4064 = vmatprep.subr.mxu0 0.0
    %4065 = vmatpush1.msra.mxu0 0.0
    %4066 = vmatprep.mubr.f32.mxu0 0.0
    %4067 = vmatmul.mubr.f32.gmra.mrb[0].mxu0 %v3997
    %v4068 = vpop.f32.mrb[0].mxu0
    %v4069 = vadd.f32 0.0, %v4068
    %v4070 = vpop.f32.mrb[0].mxu0
    %4071 = vmatprep.mubr.f32.mxu0 0.0
    %4072 = vmatmul.mubr.f32.gmra.mrb[0].mxu0 %v4000
    %v4073 = vpop.f32.mrb[0].mxu0
    %v4074 = vadd.f32 0.0, %v4073
    %v4075 = vpop.f32.mrb[0].mxu0
    %4076 = vdwg.mxu0
    %v4077 = vadd.f32 %v3794, %v4069
    %v4078 = vadd.f32 %v3795, %v4074
    %4079 = vrot.lane.b32.xlu0 %v3215, 104
    %v4080 = vpop.permute.xlu0 %4079
    %4081 = vrot.lane.b32.xlu0 %v3220, 104
    %v4082 = vpop.permute.xlu0 %4081
    %4083 = vrot.lane.b32.xlu0 %v3215, 72
    %v4084 = vpop.permute.xlu0 %4083
    %4085 = vrot.lane.b32.xlu0 %v3220, 72
    %v4086 = vpop.permute.xlu0 %4085
    %v4087 = vsel %vm230, %v4080, 0
    %v4089 = vsel %vm230, %v4082, 0
    %v4091 = vsel %vm230, %v4084, 0
    %v4093 = vsel %vm230, %v4086, 0
    %4095 = vmatprep.subr.mxu0 0.0
    %4096 = vmatpush1.xpose.msra.mxu0 %v4091
    %4097 = vmatprep.subr.mxu0 0.0
    %4098 = vmatpush1.xpose.msra.mxu0 %v4093
    %4099 = vmatprep.subr.mxu0 0.0
    %4100 = vmatpush1.xpose.msra.mxu0 0.0
    %4101 = vmatprep.subr.mxu0 0.0
    %4102 = vmatpush1.xpose.msra.mxu0 0.0
    %4103 = vmatprep.subr.mxu0 0.0
    %4104 = vmatpush1.xpose.msra.mxu0 0.0
    %4105 = vmatprep.subr.mxu0 0.0
    %4106 = vmatpush1.xpose.msra.mxu0 0.0
    %4107 = vmatprep.subr.mxu0 0.0
    %4108 = vmatpush1.xpose.msra.mxu0 0.0
    %4109 = vmatprep.subr.mxu0 0.0
    %4110 = vmatpush1.xpose.msra.mxu0 0.0
    %4111 = vmatprep.subr.mxu0 0.0
    %4112 = vmatpush1.xpose.msra.mxu0 0.0
    %4113 = vmatprep.subr.mxu0 0.0
    %4114 = vmatpush1.xpose.msra.mxu0 0.0
    %4115 = vmatprep.subr.mxu0 0.0
    %4116 = vmatpush1.xpose.msra.mxu0 0.0
    %4117 = vmatprep.subr.mxu0 0.0
    %4118 = vmatpush1.xpose.msra.mxu0 0.0
    %4119 = vmatprep.subr.mxu0 0.0
    %4120 = vmatpush1.xpose.msra.mxu0 0.0
    %4121 = vmatprep.subr.mxu0 0.0
    %4122 = vmatpush1.xpose.msra.mxu0 0.0
    %4123 = vmatprep.subr.mxu0 0.0
    %4124 = vmatpush1.xpose.msra.mxu0 0.0
    %4125 = vmatprep.subr.mxu0 0.0
    %4126 = vmatpush1.xpose.msra.mxu0 0.0
    %4127 = vmatprep.subr.mxu0 0.0
    %4128 = vmatpush1.xpose.msra.mxu0 0.0
    %4129 = vmatprep.subr.mxu0 0.0
    %4130 = vmatpush1.xpose.msra.mxu0 0.0
    %4131 = vmatprep.subr.mxu0 0.0
    %4132 = vmatpush1.xpose.msra.mxu0 0.0
    %4133 = vmatprep.subr.mxu0 0.0
    %4134 = vmatpush1.xpose.msra.mxu0 0.0
    %4135 = vmatprep.subr.mxu0 0.0
    %4136 = vmatpush1.xpose.msra.mxu0 0.0
    %4137 = vmatprep.subr.mxu0 0.0
    %4138 = vmatpush1.xpose.msra.mxu0 0.0
    %4139 = vmatprep.subr.mxu0 0.0
    %4140 = vmatpush1.xpose.msra.mxu0 0.0
    %4141 = vmatprep.subr.mxu0 0.0
    %4142 = vmatpush1.xpose.msra.mxu0 0.0
    %4143 = vmatprep.subr.mxu0 0.0
    %4144 = vmatpush1.xpose.msra.mxu0 0.0
    %4145 = vmatprep.subr.mxu0 0.0
    %4146 = vmatpush1.xpose.msra.mxu0 0.0
    %4147 = vmatprep.subr.mxu0 0.0
    %4148 = vmatpush1.xpose.msra.mxu0 0.0
    %4149 = vmatprep.subr.mxu0 0.0
    %4150 = vmatpush1.xpose.msra.mxu0 0.0
    %4151 = vmatprep.subr.mxu0 0.0
    %4152 = vmatpush1.xpose.msra.mxu0 0.0
    %4153 = vmatprep.subr.mxu0 0.0
    %4154 = vmatpush1.xpose.msra.mxu0 0.0
    %4155 = vmatprep.subr.mxu0 0.0
    %4156 = vmatpush1.xpose.msra.mxu0 0.0
    %4157 = vmatprep.subr.mxu0 0.0
    %4158 = vmatpush1.xpose.msra.mxu0 0.0
    %4159 = vmatprep.mubr.f32.mxu0 0.0
    %4160 = vmatmul.mubr.f32.gmra.mrb[0].mxu0 %v4087
    %v4161 = vpop.f32.mrb[0].mxu0
    %v4162 = vadd.f32 %v27, %v4161
    %v4163 = vpop.f32.mrb[0].mxu0
    %4164 = vmatprep.mubr.f32.mxu0 0.0
    %4165 = vmatmul.mubr.f32.gmra.mrb[0].mxu0 %v4089
    %v4166 = vpop.f32.mrb[0].mxu0
    %v4167 = vadd.f32 %v28, %v4166
    %v4168 = vpop.f32.mrb[0].mxu0
    %4169 = vdwg.mxu0
    %v4170 = vsel %vm314, %v4162, -inf
    %4171 = vmax.xlane.f32.xlu0 %v4170
    %v4172 = vpop.xlane.xlu0 %4171
    %v4173 = vsel %vm314, %v4167, -inf
    %4174 = vmax.xlane.f32.xlu0 %v4173
    %v4175 = vpop.xlane.xlu0 %4174
    %v4176 = vsub.f32 %v4162, %v4172
    %v4177 = vsub.f32 %v4167, %v4175
    %v4178 = vmul.f32 %v4176, 1.442695
    %v4179 = vpow.pop %v4178
    %v4180 = vmul.f32 %v4177, 1.442695
    %v4181 = vpow.pop %v4180
    %v4182 = vsel %vm314, %v4179, 0.0
    %4183 = vadd.xlane.f32.xlu0 %v4182
    %v4184 = vpop.xlane.xlu0 %4183
    %v4185 = vsel %vm314, %v4181, 0.0
    %4186 = vadd.xlane.f32.xlu0 %v4185
    %v4187 = vpop.xlane.xlu0 %4186
    %v4188 = vrcp.pop %v4184
    %v4189 = vrcp.pop %v4187
    %v4190 = vmul.f32 %v4179, %v4188
    %v4191 = vmul.f32 %v4181, %v4189
    %4192 = vrot.lane.b32.xlu0 %v3215, 40
    %v4193 = vpop.permute.xlu0 %4192
    %4194 = vrot.lane.b32.xlu0 %v3220, 40
    %v4195 = vpop.permute.xlu0 %4194
    %v4199 = vsel %vm314, %v4190, 0
    %v4202 = vsel %vm314, %v4191, 0
    %4204 = vmatprep.subr.mxu0 0.0
    %4205 = vmatpush1.msra.mxu0 %v4193
    %4206 = vmatprep.subr.mxu0 0.0
    %4207 = vmatpush1.msra.mxu0 %v4195
    %4208 = vmatprep.subr.mxu0 0.0
    %4209 = vmatpush1.msra.mxu0 0.0
    %4210 = vmatprep.subr.mxu0 0.0
    %4211 = vmatpush1.msra.mxu0 0.0
    %4212 = vmatprep.subr.mxu0 0.0
    %4213 = vmatpush1.msra.mxu0 0.0
    %4214 = vmatprep.subr.mxu0 0.0
    %4215 = vmatpush1.msra.mxu0 0.0
    %4216 = vmatprep.subr.mxu0 0.0
    %4217 = vmatpush1.msra.mxu0 0.0
    %4218 = vmatprep.subr.mxu0 0.0
    %4219 = vmatpush1.msra.mxu0 0.0
    %4220 = vmatprep.subr.mxu0 0.0
    %4221 = vmatpush1.msra.mxu0 0.0
    %4222 = vmatprep.subr.mxu0 0.0
    %4223 = vmatpush1.msra.mxu0 0.0
    %4224 = vmatprep.subr.mxu0 0.0
    %4225 = vmatpush1.msra.mxu0 0.0
    %4226 = vmatprep.subr.mxu0 0.0
    %4227 = vmatpush1.msra.mxu0 0.0
    %4228 = vmatprep.subr.mxu0 0.0
    %4229 = vmatpush1.msra.mxu0 0.0
    %4230 = vmatprep.subr.mxu0 0.0
    %4231 = vmatpush1.msra.mxu0 0.0
    %4232 = vmatprep.subr.mxu0 0.0
    %4233 = vmatpush1.msra.mxu0 0.0
    %4234 = vmatprep.subr.mxu0 0.0
    %4235 = vmatpush1.msra.mxu0 0.0
    %4236 = vmatprep.subr.mxu0 0.0
    %4237 = vmatpush1.msra.mxu0 0.0
    %4238 = vmatprep.subr.mxu0 0.0
    %4239 = vmatpush1.msra.mxu0 0.0
    %4240 = vmatprep.subr.mxu0 0.0
    %4241 = vmatpush1.msra.mxu0 0.0
    %4242 = vmatprep.subr.mxu0 0.0
    %4243 = vmatpush1.msra.mxu0 0.0
    %4244 = vmatprep.subr.mxu0 0.0
    %4245 = vmatpush1.msra.mxu0 0.0
    %4246 = vmatprep.subr.mxu0 0.0
    %4247 = vmatpush1.msra.mxu0 0.0
    %4248 = vmatprep.subr.mxu0 0.0
    %4249 = vmatpush1.msra.mxu0 0.0
    %4250 = vmatprep.subr.mxu0 0.0
    %4251 = vmatpush1.msra.mxu0 0.0
    %4252 = vmatprep.subr.mxu0 0.0
    %4253 = vmatpush1.msra.mxu0 0.0
    %4254 = vmatprep.subr.mxu0 0.0
    %4255 = vmatpush1.msra.mxu0 0.0
    %4256 = vmatprep.subr.mxu0 0.0
    %4257 = vmatpush1.msra.mxu0 0.0
    %4258 = vmatprep.subr.mxu0 0.0
    %4259 = vmatpush1.msra.mxu0 0.0
    %4260 = vmatprep.subr.mxu0 0.0
    %4261 = vmatpush1.msra.mxu0 0.0
    %4262 = vmatprep.subr.mxu0 0.0
    %4263 = vmatpush1.msra.mxu0 0.0
    %4264 = vmatprep.subr.mxu0 0.0
    %4265 = vmatpush1.msra.mxu0 0.0
    %4266 = vmatprep.subr.mxu0 0.0
    %4267 = vmatpush1.msra.mxu0 0.0
    %4268 = vmatprep.mubr.f32.mxu0 0.0
    %4269 = vmatmul.mubr.f32.gmra.mrb[0].mxu0 %v4199
    %v4270 = vpop.f32.mrb[0].mxu0
    %v4271 = vadd.f32 0.0, %v4270
    %v4272 = vpop.f32.mrb[0].mxu0
    %4273 = vmatprep.mubr.f32.mxu0 0.0
    %4274 = vmatmul.mubr.f32.gmra.mrb[0].mxu0 %v4202
    %v4275 = vpop.f32.mrb[0].mxu0
    %v4276 = vadd.f32 0.0, %v4275
    %v4277 = vpop.f32.mrb[0].mxu0
    %4278 = vdwg.mxu0
    %v4280 = vsel %vm230, %v4271, 0
    %v4283 = vsel %vm230, %v4276, 0
    %4285 = vmatprep.subr.mxu0 0.0
    %4286 = vmatpush1.msra.mxu0 %v3226
    %4287 = vmatprep.subr.mxu0 0.0
    %4288 = vmatpush1.msra.mxu0 0.0
    %4289 = vmatprep.subr.mxu0 0.0
    %4290 = vmatpush1.msra.mxu0 0.0
    %4291 = vmatprep.subr.mxu0 0.0
    %4292 = vmatpush1.msra.mxu0 0.0
    %4293 = vmatprep.subr.mxu0 0.0
    %4294 = vmatpush1.msra.mxu0 0.0
    %4295 = vmatprep.subr.mxu0 0.0
    %4296 = vmatpush1.msra.mxu0 0.0
    %4297 = vmatprep.subr.mxu0 0.0
    %4298 = vmatpush1.msra.mxu0 0.0
    %4299 = vmatprep.subr.mxu0 0.0
    %4300 = vmatpush1.msra.mxu0 0.0
    %4301 = vmatprep.subr.mxu0 0.0
    %4302 = vmatpush1.msra.mxu0 0.0
    %4303 = vmatprep.subr.mxu0 0.0
    %4304 = vmatpush1.msra.mxu0 0.0
    %4305 = vmatprep.subr.mxu0 0.0
    %4306 = vmatpush1.msra.mxu0 0.0
    %4307 = vmatprep.subr.mxu0 0.0
    %4308 = vmatpush1.msra.mxu0 0.0
    %4309 = vmatprep.subr.mxu0 0.0
    %4310 = vmatpush1.msra.mxu0 0.0
    %4311 = vmatprep.subr.mxu0 0.0
    %4312 = vmatpush1.msra.mxu0 0.0
    %4313 = vmatprep.subr.mxu0 0.0
    %4314 = vmatpush1.msra.mxu0 0.0
    %4315 = vmatprep.subr.mxu0 0.0
    %4316 = vmatpush1.msra.mxu0 0.0
    %4317 = vmatprep.subr.mxu0 0.0
    %4318 = vmatpush1.msra.mxu0 0.0
    %4319 = vmatprep.subr.mxu0 0.0
    %4320 = vmatpush1.msra.mxu0 0.0
    %4321 = vmatprep.subr.mxu0 0.0
    %4322 = vmatpush1.msra.mxu0 0.0
    %4323 = vmatprep.subr.mxu0 0.0
    %4324 = vmatpush1.msra.mxu0 0.0
    %4325 = vmatprep.subr.mxu0 0.0
    %4326 = vmatpush1.msra.mxu0 0.0
    %4327 = vmatprep.subr.mxu0 0.0
    %4328 = vmatpush1.msra.mxu0 0.0
    %4329 = vmatprep.subr.mxu0 0.0
    %4330 = vmatpush1.msra.mxu0 0.0
    %4331 = vmatprep.subr.mxu0 0.0
    %4332 = vmatpush1.msra.mxu0 0.0
    %4333 = vmatprep.subr.mxu0 0.0
    %4334 = vmatpush1.msra.mxu0 0.0
    %4335 = vmatprep.subr.mxu0 0.0
    %4336 = vmatpush1.msra.mxu0 0.0
    %4337 = vmatprep.subr.mxu0 0.0
    %4338 = vmatpush1.msra.mxu0 0.0
    %4339 = vmatprep.subr.mxu0 0.0
    %4340 = vmatpush1.msra.mxu0 0.0
    %4341 = vmatprep.subr.mxu0 0.0
    %4342 = vmatpush1.msra.mxu0 0.0
    %4343 = vmatprep.subr.mxu0 0.0
    %4344 = vmatpush1.msra.mxu0 0.0
    %4345 = vmatprep.subr.mxu0 0.0
    %4346 = vmatpush1.msra.mxu0 0.0
    %4347 = vmatprep.subr.mxu0 0.0
    %4348 = vmatpush1.msra.mxu0 0.0
    %4349 = vmatprep.mubr.f32.mxu0 0.0
    %4350 = vmatmul.mubr.f32.gmra.mrb[0].mxu0 %v4280
    %v4351 = vpop.f32.mrb[0].mxu0
    %v4352 = vadd.f32 0.0, %v4351
    %v4353 = vpop.f32.mrb[0].mxu0
    %4354 = vmatprep.mubr.f32.mxu0 0.0
    %4355 = vmatmul.mubr.f32.gmra.mrb[0].mxu0 %v4283
    %v4356 = vpop.f32.mrb[0].mxu0
    %v4357 = vadd.f32 0.0, %v4356
    %v4358 = vpop.f32.mrb[0].mxu0
    %4359 = vdwg.mxu0
    %v4360 = vadd.f32 %v4077, %v4352
    %v4361 = vadd.f32 %v4078, %v4357
    %v4362 = vadd.f32 %v3129, %v4360
    %v4363 = vadd.f32 %v3130, %v4361
    %v4364 = vld [vmem:[#allocation2 + $0x2e0] sm:$0x1]
    %v4365 = vld [vmem:[#allocation2 + $0x2e8] sm:$0x1]
    %v4366 = vsel %vm137, %v4362, 0.0
    %4367 = vadd.xlane.f32.xlu0 %v4366
    %v4368 = vpop.xlane.xlu0 %4367
    %v4369 = vsel %vm137, %v4363, 0.0
    %4370 = vadd.xlane.f32.xlu0 %v4369
    %v4371 = vpop.xlane.xlu0 %4370
    %v4372 = vmul.f32 %v4368, %v1370
    %v4373 = vmul.f32 %v4371, %v1370
    %v4374 = vsub.f32 %v4362, %v4372
    %v4375 = vsub.f32 %v4363, %v4373
    %v4376 = vmul.f32 %v4374, %v4374
    %v4377 = vmul.f32 %v4375, %v4375
    %v4378 = vsel %vm137, %v4376, 0.0
    %4379 = vadd.xlane.f32.xlu0 %v4378
    %v4380 = vpop.xlane.xlu0 %4379
    %v4381 = vsel %vm137, %v4377, 0.0
    %4382 = vadd.xlane.f32.xlu0 %v4381
    %v4383 = vpop.xlane.xlu0 %4382
    %v4384 = vmul.f32 %v4380, %v1370
    %v4385 = vmul.f32 %v4383, %v1370
    %v4386 = vadd.f32 %v4384, 1e-05
    %v4387 = vadd.f32 %v4385, 1e-05
    %v4388 = vrsqrt.pop %v4386
    %v4389 = vrsqrt.pop %v4387
    %v4390 = vmul.f32 %v4374, %v4388
    %v4391 = vmul.f32 %v4375, %v4389
    %v4392 = vlaneseq
    %v4393 = vshrl.u32 %v4392, 7
    %v4394 = vsub.s32 0, %v4393
    %v4395 = vrot.slane %v4364, %v4394
    %v4396 = vmul.f32 %v4390, %v4395
    %v4397 = vmul.f32 %v4391, %v4395
    %v4398 = vlaneseq
    %v4399 = vshrl.u32 %v4398, 7
    %v4400 = vsub.s32 0, %v4399
    %v4401 = vrot.slane %v4365, %v4400
    %v4402 = vadd.f32 %v4396, %v4401
    %v4403 = vadd.f32 %v4397, %v4401
    %v4404 = vld [vmem:[#allocation2 + $0x268] sm:$0xff]
    %v4405 = vld [vmem:[#allocation2 + $0x270] sm:$0xff]
    %v4406 = vld [vmem:[#allocation2 + $0x278] sm:$0xff]
    %v4407 = vld [vmem:[#allocation2 + $0x280] sm:$0xff]
    %v4408 = vld [vmem:[#allocation2 + $0x288] sm:$0x1]
    %v4409 = vlaneseq
    %v4410 = vshrl.u32 %v4409, 7
    %v4411 = vsub.s32 0, %v4410
    %v4412 = vrot.slane %v4408, %v4411
    %v4414 = vsel %vm137, %v4402, 0
    %v4417 = vsel %vm137, %v4403, 0
    %4419 = vmatprep.subr.mxu0 0.0
    %4420 = vmatpush1.msra.mxu0 %v4404
    %4421 = vmatprep.subr.mxu0 0.0
    %4422 = vmatpush1.msra.mxu0 %v4405
    %4423 = vmatprep.subr.mxu0 0.0
    %4424 = vmatpush1.msra.mxu0 %v4406
    %4425 = vmatprep.subr.mxu0 0.0
    %4426 = vmatpush1.msra.mxu0 %v4407
    %4427 = vmatprep.subr.mxu0 0.0
    %4428 = vmatpush1.msra.mxu0 0.0
    %4429 = vmatprep.subr.mxu0 0.0
    %4430 = vmatpush1.msra.mxu0 0.0
    %4431 = vmatprep.subr.mxu0 0.0
    %4432 = vmatpush1.msra.mxu0 0.0
    %4433 = vmatprep.subr.mxu0 0.0
    %4434 = vmatpush1.msra.mxu0 0.0
    %4435 = vmatprep.subr.mxu0 0.0
    %4436 = vmatpush1.msra.mxu0 0.0
    %4437 = vmatprep.subr.mxu0 0.0
    %4438 = vmatpush1.msra.mxu0 0.0
    %4439 = vmatprep.subr.mxu0 0.0
    %4440 = vmatpush1.msra.mxu0 0.0
    %4441 = vmatprep.subr.mxu0 0.0
    %4442 = vmatpush1.msra.mxu0 0.0
    %4443 = vmatprep.subr.mxu0 0.0
    %4444 = vmatpush1.msra.mxu0 0.0
    %4445 = vmatprep.subr.mxu0 0.0
    %4446 = vmatpush1.msra.mxu0 0.0
    %4447 = vmatprep.subr.mxu0 0.0
    %4448 = vmatpush1.msra.mxu0 0.0
    %4449 = vmatprep.subr.mxu0 0.0
    %4450 = vmatpush1.msra.mxu0 0.0
    %4451 = vmatprep.subr.mxu0 0.0
    %4452 = vmatpush1.msra.mxu0 0.0
    %4453 = vmatprep.subr.mxu0 0.0
    %4454 = vmatpush1.msra.mxu0 0.0
    %4455 = vmatprep.subr.mxu0 0.0
    %4456 = vmatpush1.msra.mxu0 0.0
    %4457 = vmatprep.subr.mxu0 0.0
    %4458 = vmatpush1.msra.mxu0 0.0
    %4459 = vmatprep.subr.mxu0 0.0
    %4460 = vmatpush1.msra.mxu0 0.0
    %4461 = vmatprep.subr.mxu0 0.0
    %4462 = vmatpush1.msra.mxu0 0.0
    %4463 = vmatprep.subr.mxu0 0.0
    %4464 = vmatpush1.msra.mxu0 0.0
    %4465 = vmatprep.subr.mxu0 0.0
    %4466 = vmatpush1.msra.mxu0 0.0
    %4467 = vmatprep.subr.mxu0 0.0
    %4468 = vmatpush1.msra.mxu0 0.0
    %4469 = vmatprep.subr.mxu0 0.0
    %4470 = vmatpush1.msra.mxu0 0.0
    %4471 = vmatprep.subr.mxu0 0.0
    %4472 = vmatpush1.msra.mxu0 0.0
    %4473 = vmatprep.subr.mxu0 0.0
    %4474 = vmatpush1.msra.mxu0 0.0
    %4475 = vmatprep.subr.mxu0 0.0
    %4476 = vmatpush1.msra.mxu0 0.0
    %4477 = vmatprep.subr.mxu0 0.0
    %4478 = vmatpush1.msra.mxu0 0.0
    %4479 = vmatprep.subr.mxu0 0.0
    %4480 = vmatpush1.msra.mxu0 0.0
    %4481 = vmatprep.subr.mxu0 0.0
    %4482 = vmatpush1.msra.mxu0 0.0
    %4483 = vmatprep.mubr.f32.mxu0 0.0
    %4484 = vmatmul.mubr.f32.gmra.mrb[0].mxu0 %v4414
    %v4485 = vpop.f32.mrb[0].mxu0
    %v4486 = vadd.f32 %v4412, %v4485
    %v4487 = vpop.f32.mrb[0].mxu0
    %4488 = vmatprep.mubr.f32.mxu0 0.0
    %4489 = vmatmul.mubr.f32.gmra.mrb[0].mxu0 %v4417
    %v4490 = vpop.f32.mrb[0].mxu0
    %v4491 = vadd.f32 %v4412, %v4490
    %v4492 = vpop.f32.mrb[0].mxu0
    %4493 = vdwg.mxu0
    %v4494 = vld [vmem:[#allocation2 + $0x290] sm:$0xff]
    %v4495 = vld [vmem:[#allocation2 + $0x298] sm:$0xff]
    %v4496 = vld [vmem:[#allocation2 + $0x2a0] sm:$0xff]
    %v4497 = vld [vmem:[#allocation2 + $0x2a8] sm:$0xff]
    %v4498 = vld [vmem:[#allocation2 + $0x2b0] sm:$0x1]
    %v4499 = vlaneseq
    %v4500 = vshrl.u32 %v4499, 7
    %v4501 = vsub.s32 0, %v4500
    %v4502 = vrot.slane %v4498, %v4501
    %4503 = vmatprep.subr.mxu0 0.0
    %4504 = vmatpush1.msra.mxu0 %v4494
    %4505 = vmatprep.subr.mxu0 0.0
    %4506 = vmatpush1.msra.mxu0 %v4495
    %4507 = vmatprep.subr.mxu0 0.0
    %4508 = vmatpush1.msra.mxu0 %v4496
    %4509 = vmatprep.subr.mxu0 0.0
    %4510 = vmatpush1.msra.mxu0 %v4497
    %4511 = vmatprep.subr.mxu0 0.0
    %4512 = vmatpush1.msra.mxu0 0.0
    %4513 = vmatprep.subr.mxu0 0.0
    %4514 = vmatpush1.msra.mxu0 0.0
    %4515 = vmatprep.subr.mxu0 0.0
    %4516 = vmatpush1.msra.mxu0 0.0
    %4517 = vmatprep.subr.mxu0 0.0
    %4518 = vmatpush1.msra.mxu0 0.0
    %4519 = vmatprep.subr.mxu0 0.0
    %4520 = vmatpush1.msra.mxu0 0.0
    %4521 = vmatprep.subr.mxu0 0.0
    %4522 = vmatpush1.msra.mxu0 0.0
    %4523 = vmatprep.subr.mxu0 0.0
    %4524 = vmatpush1.msra.mxu0 0.0
    %4525 = vmatprep.subr.mxu0 0.0
    %4526 = vmatpush1.msra.mxu0 0.0
    %4527 = vmatprep.subr.mxu0 0.0
    %4528 = vmatpush1.msra.mxu0 0.0
    %4529 = vmatprep.subr.mxu0 0.0
    %4530 = vmatpush1.msra.mxu0 0.0
    %4531 = vmatprep.subr.mxu0 0.0
    %4532 = vmatpush1.msra.mxu0 0.0
    %4533 = vmatprep.subr.mxu0 0.0
    %4534 = vmatpush1.msra.mxu0 0.0
    %4535 = vmatprep.subr.mxu0 0.0
    %4536 = vmatpush1.msra.mxu0 0.0
    %4537 = vmatprep.subr.mxu0 0.0
    %4538 = vmatpush1.msra.mxu0 0.0
    %4539 = vmatprep.subr.mxu0 0.0
    %4540 = vmatpush1.msra.mxu0 0.0
    %4541 = vmatprep.subr.mxu0 0.0
    %4542 = vmatpush1.msra.mxu0 0.0
    %4543 = vmatprep.subr.mxu0 0.0
    %4544 = vmatpush1.msra.mxu0 0.0
    %4545 = vmatprep.subr.mxu0 0.0
    %4546 = vmatpush1.msra.mxu0 0.0
    %4547 = vmatprep.subr.mxu0 0.0
    %4548 = vmatpush1.msra.mxu0 0.0
    %4549 = vmatprep.subr.mxu0 0.0
    %4550 = vmatpush1.msra.mxu0 0.0
    %4551 = vmatprep.subr.mxu0 0.0
    %4552 = vmatpush1.msra.mxu0 0.0
    %4553 = vmatprep.subr.mxu0 0.0
    %4554 = vmatpush1.msra.mxu0 0.0
    %4555 = vmatprep.subr.mxu0 0.0
    %4556 = vmatpush1.msra.mxu0 0.0
    %4557 = vmatprep.subr.mxu0 0.0
    %4558 = vmatpush1.msra.mxu0 0.0
    %4559 = vmatprep.subr.mxu0 0.0
    %4560 = vmatpush1.msra.mxu0 0.0
    %4561 = vmatprep.subr.mxu0 0.0
    %4562 = vmatpush1.msra.mxu0 0.0
    %4563 = vmatprep.subr.mxu0 0.0
    %4564 = vmatpush1.msra.mxu0 0.0
    %4565 = vmatprep.subr.mxu0 0.0
    %4566 = vmatpush1.msra.mxu0 0.0
    %4567 = vmatprep.mubr.f32.mxu0 0.0
    %4568 = vmatmul.mubr.f32.gmra.mrb[0].mxu0 %v3143
    %v4569 = vpop.f32.mrb[0].mxu0
    %v4570 = vadd.f32 %v4502, %v4569
    %v4571 = vpop.f32.mrb[0].mxu0
    %4572 = vmatprep.mubr.f32.mxu0 0.0
    %4573 = vmatmul.mubr.f32.gmra.mrb[0].mxu0 %v3146
    %v4574 = vpop.f32.mrb[0].mxu0
    %v4575 = vadd.f32 %v4502, %v4574
    %v4576 = vpop.f32.mrb[0].mxu0
    %4577 = vdwg.mxu0
    %v4578 = vld [vmem:[#allocation2 + $0x2b8] sm:$0xff]
    %v4579 = vld [vmem:[#allocation2 + $0x2c0] sm:$0xff]
    %v4580 = vld [vmem:[#allocation2 + $0x2c8] sm:$0xff]
    %v4581 = vld [vmem:[#allocation2 + $0x2d0] sm:$0xff]
    %v4582 = vld [vmem:[#allocation2 + $0x2d8] sm:$0x1]
    %v4584 = vsel %vm230, %v4486, 0
    %v4587 = vsel %vm230, %v4491, 0
    %v4590 = vsel %vm230, %v4570, 0
    %v4593 = vsel %vm230, %v4575, 0
    %4595 = vmatprep.subr.mxu0 0.0
    %4596 = vmatpush1.xpose.msra.mxu0 %v4590
    %4597 = vmatprep.subr.mxu0 0.0
    %4598 = vmatpush1.xpose.msra.mxu0 %v4593
    %4599 = vmatprep.subr.mxu0 0.0
    %4600 = vmatpush1.xpose.msra.mxu0 0.0
    %4601 = vmatprep.subr.mxu0 0.0
    %4602 = vmatpush1.xpose.msra.mxu0 0.0
    %4603 = vmatprep.subr.mxu0 0.0
    %4604 = vmatpush1.xpose.msra.mxu0 0.0
    %4605 = vmatprep.subr.mxu0 0.0
    %4606 = vmatpush1.xpose.msra.mxu0 0.0
    %4607 = vmatprep.subr.mxu0 0.0
    %4608 = vmatpush1.xpose.msra.mxu0 0.0
    %4609 = vmatprep.subr.mxu0 0.0
    %4610 = vmatpush1.xpose.msra.mxu0 0.0
    %4611 = vmatprep.subr.mxu0 0.0
    %4612 = vmatpush1.xpose.msra.mxu0 0.0
    %4613 = vmatprep.subr.mxu0 0.0
    %4614 = vmatpush1.xpose.msra.mxu0 0.0
    %4615 = vmatprep.subr.mxu0 0.0
    %4616 = vmatpush1.xpose.msra.mxu0 0.0
    %4617 = vmatprep.subr.mxu0 0.0
    %4618 = vmatpush1.xpose.msra.mxu0 0.0
    %4619 = vmatprep.subr.mxu0 0.0
    %4620 = vmatpush1.xpose.msra.mxu0 0.0
    %4621 = vmatprep.subr.mxu0 0.0
    %4622 = vmatpush1.xpose.msra.mxu0 0.0
    %4623 = vmatprep.subr.mxu0 0.0
    %4624 = vmatpush1.xpose.msra.mxu0 0.0
    %4625 = vmatprep.subr.mxu0 0.0
    %4626 = vmatpush1.xpose.msra.mxu0 0.0
    %4627 = vmatprep.subr.mxu0 0.0
    %4628 = vmatpush1.xpose.msra.mxu0 0.0
    %4629 = vmatprep.subr.mxu0 0.0
    %4630 = vmatpush1.xpose.msra.mxu0 0.0
    %4631 = vmatprep.subr.mxu0 0.0
    %4632 = vmatpush1.xpose.msra.mxu0 0.0
    %4633 = vmatprep.subr.mxu0 0.0
    %4634 = vmatpush1.xpose.msra.mxu0 0.0
    %4635 = vmatprep.subr.mxu0 0.0
    %4636 = vmatpush1.xpose.msra.mxu0 0.0
    %4637 = vmatprep.subr.mxu0 0.0
    %4638 = vmatpush1.xpose.msra.mxu0 0.0
    %4639 = vmatprep.subr.mxu0 0.0
    %4640 = vmatpush1.xpose.msra.mxu0 0.0
    %4641 = vmatprep.subr.mxu0 0.0
    %4642 = vmatpush1.xpose.msra.mxu0 0.0
    %4643 = vmatprep.subr.mxu0 0.0
    %4644 = vmatpush1.xpose.msra.mxu0 0.0
    %4645 = vmatprep.subr.mxu0 0.0
    %4646 = vmatpush1.xpose.msra.mxu0 0.0
    %4647 = vmatprep.subr.mxu0 0.0
    %4648 = vmatpush1.xpose.msra.mxu0 0.0
    %4649 = vmatprep.subr.mxu0 0.0
    %4650 = vmatpush1.xpose.msra.mxu0 0.0
    %4651 = vmatprep.subr.mxu0 0.0
    %4652 = vmatpush1.xpose.msra.mxu0 0.0
    %4653 = vmatprep.subr.mxu0 0.0
    %4654 = vmatpush1.xpose.msra.mxu0 0.0
    %4655 = vmatprep.subr.mxu0 0.0
    %4656 = vmatpush1.xpose.msra.mxu0 0.0
    %4657 = vmatprep.subr.mxu0 0.0
    %4658 = vmatpush1.xpose.msra.mxu0 0.0
    %4659 = vmatprep.mubr.f32.mxu0 0.0
    %4660 = vmatmul.mubr.f32.gmra.mrb[0].mxu0 %v4584
    %v4661 = vpop.f32.mrb[0].mxu0
    %v4662 = vadd.f32 %v27, %v4661
    %v4663 = vpop.f32.mrb[0].mxu0
    %4664 = vmatprep.mubr.f32.mxu0 0.0
    %4665 = vmatmul.mubr.f32.gmra.mrb[0].mxu0 %v4587
    %v4666 = vpop.f32.mrb[0].mxu0
    %v4667 = vadd.f32 %v28, %v4666
    %v4668 = vpop.f32.mrb[0].mxu0
    %4669 = vdwg.mxu0
    %v4670 = vsel %vm314, %v4662, -inf
    %4671 = vmax.xlane.f32.xlu0 %v4670
    %v4672 = vpop.xlane.xlu0 %4671
    %v4673 = vsel %vm314, %v4667, -inf
    %4674 = vmax.xlane.f32.xlu0 %v4673
    %v4675 = vpop.xlane.xlu0 %4674
    %v4676 = vsub.f32 %v4662, %v4672
    %v4677 = vsub.f32 %v4667, %v4675
    %v4678 = vmul.f32 %v4676, 1.442695
    %v4679 = vpow.pop %v4678
    %v4680 = vmul.f32 %v4677, 1.442695
    %v4681 = vpow.pop %v4680
    %v4682 = vsel %vm314, %v4679, 0.0
    %4683 = vadd.xlane.f32.xlu0 %v4682
    %v4684 = vpop.xlane.xlu0 %4683
    %v4685 = vsel %vm314, %v4681, 0.0
    %4686 = vadd.xlane.f32.xlu0 %v4685
    %v4687 = vpop.xlane.xlu0 %4686
    %v4688 = vrcp.pop %v4684
    %v4689 = vrcp.pop %v4687
    %v4690 = vmul.f32 %v4679, %v4688
    %v4691 = vmul.f32 %v4681, %v4689
    %4692 = vrot.lane.b32.xlu0 %v4570, 96
    %v4693 = vpop.permute.xlu0 %4692
    %4694 = vrot.lane.b32.xlu0 %v4575, 96
    %v4695 = vpop.permute.xlu0 %4694
    %v4699 = vsel %vm314, %v4690, 0
    %v4702 = vsel %vm314, %v4691, 0
    %4704 = vmatprep.subr.mxu0 0.0
    %4705 = vmatpush1.msra.mxu0 %v4693
    %4706 = vmatprep.subr.mxu0 0.0
    %4707 = vmatpush1.msra.mxu0 %v4695
    %4708 = vmatprep.subr.mxu0 0.0
    %4709 = vmatpush1.msra.mxu0 0.0
    %4710 = vmatprep.subr.mxu0 0.0
    %4711 = vmatpush1.msra.mxu0 0.0
    %4712 = vmatprep.subr.mxu0 0.0
    %4713 = vmatpush1.msra.mxu0 0.0
    %4714 = vmatprep.subr.mxu0 0.0
    %4715 = vmatpush1.msra.mxu0 0.0
    %4716 = vmatprep.subr.mxu0 0.0
    %4717 = vmatpush1.msra.mxu0 0.0
    %4718 = vmatprep.subr.mxu0 0.0
    %4719 = vmatpush1.msra.mxu0 0.0
    %4720 = vmatprep.subr.mxu0 0.0
    %4721 = vmatpush1.msra.mxu0 0.0
    %4722 = vmatprep.subr.mxu0 0.0
    %4723 = vmatpush1.msra.mxu0 0.0
    %4724 = vmatprep.subr.mxu0 0.0
    %4725 = vmatpush1.msra.mxu0 0.0
    %4726 = vmatprep.subr.mxu0 0.0
    %4727 = vmatpush1.msra.mxu0 0.0
    %4728 = vmatprep.subr.mxu0 0.0
    %4729 = vmatpush1.msra.mxu0 0.0
    %4730 = vmatprep.subr.mxu0 0.0
    %4731 = vmatpush1.msra.mxu0 0.0
    %4732 = vmatprep.subr.mxu0 0.0
    %4733 = vmatpush1.msra.mxu0 0.0
    %4734 = vmatprep.subr.mxu0 0.0
    %4735 = vmatpush1.msra.mxu0 0.0
    %4736 = vmatprep.subr.mxu0 0.0
    %4737 = vmatpush1.msra.mxu0 0.0
    %4738 = vmatprep.subr.mxu0 0.0
    %4739 = vmatpush1.msra.mxu0 0.0
    %4740 = vmatprep.subr.mxu0 0.0
    %4741 = vmatpush1.msra.mxu0 0.0
    %4742 = vmatprep.subr.mxu0 0.0
    %4743 = vmatpush1.msra.mxu0 0.0
    %4744 = vmatprep.subr.mxu0 0.0
    %4745 = vmatpush1.msra.mxu0 0.0
    %4746 = vmatprep.subr.mxu0 0.0
    %4747 = vmatpush1.msra.mxu0 0.0
    %4748 = vmatprep.subr.mxu0 0.0
    %4749 = vmatpush1.msra.mxu0 0.0
    %4750 = vmatprep.subr.mxu0 0.0
    %4751 = vmatpush1.msra.mxu0 0.0
    %4752 = vmatprep.subr.mxu0 0.0
    %4753 = vmatpush1.msra.mxu0 0.0
    %4754 = vmatprep.subr.mxu0 0.0
    %4755 = vmatpush1.msra.mxu0 0.0
    %4756 = vmatprep.subr.mxu0 0.0
    %4757 = vmatpush1.msra.mxu0 0.0
    %4758 = vmatprep.subr.mxu0 0.0
    %4759 = vmatpush1.msra.mxu0 0.0
    %4760 = vmatprep.subr.mxu0 0.0
    %4761 = vmatpush1.msra.mxu0 0.0
    %4762 = vmatprep.subr.mxu0 0.0
    %4763 = vmatpush1.msra.mxu0 0.0
    %4764 = vmatprep.subr.mxu0 0.0
    %4765 = vmatpush1.msra.mxu0 0.0
    %4766 = vmatprep.subr.mxu0 0.0
    %4767 = vmatpush1.msra.mxu0 0.0
    %4768 = vmatprep.mubr.f32.mxu0 0.0
    %4769 = vmatmul.mubr.f32.gmra.mrb[0].mxu0 %v4699
    %v4770 = vpop.f32.mrb[0].mxu0
    %v4771 = vadd.f32 0.0, %v4770
    %v4772 = vpop.f32.mrb[0].mxu0
    %4773 = vmatprep.mubr.f32.mxu0 0.0
    %4774 = vmatmul.mubr.f32.gmra.mrb[0].mxu0 %v4702
    %v4775 = vpop.f32.mrb[0].mxu0
    %v4776 = vadd.f32 0.0, %v4775
    %v4777 = vpop.f32.mrb[0].mxu0
    %4778 = vdwg.mxu0
    %v4780 = vsel %vm230, %v4771, 0
    %v4783 = vsel %vm230, %v4776, 0
    %4785 = vmatprep.subr.mxu0 0.0
    %4786 = vmatpush1.msra.mxu0 %v4578
    %4787 = vmatprep.subr.mxu0 0.0
    %4788 = vmatpush1.msra.mxu0 0.0
    %4789 = vmatprep.subr.mxu0 0.0
    %4790 = vmatpush1.msra.mxu0 0.0
    %4791 = vmatprep.subr.mxu0 0.0
    %4792 = vmatpush1.msra.mxu0 0.0
    %4793 = vmatprep.subr.mxu0 0.0
    %4794 = vmatpush1.msra.mxu0 0.0
    %4795 = vmatprep.subr.mxu0 0.0
    %4796 = vmatpush1.msra.mxu0 0.0
    %4797 = vmatprep.subr.mxu0 0.0
    %4798 = vmatpush1.msra.mxu0 0.0
    %4799 = vmatprep.subr.mxu0 0.0
    %4800 = vmatpush1.msra.mxu0 0.0
    %4801 = vmatprep.subr.mxu0 0.0
    %4802 = vmatpush1.msra.mxu0 0.0
    %4803 = vmatprep.subr.mxu0 0.0
    %4804 = vmatpush1.msra.mxu0 0.0
    %4805 = vmatprep.subr.mxu0 0.0
    %4806 = vmatpush1.msra.mxu0 0.0
    %4807 = vmatprep.subr.mxu0 0.0
    %4808 = vmatpush1.msra.mxu0 0.0
    %4809 = vmatprep.subr.mxu0 0.0
    %4810 = vmatpush1.msra.mxu0 0.0
    %4811 = vmatprep.subr.mxu0 0.0
    %4812 = vmatpush1.msra.mxu0 0.0
    %4813 = vmatprep.subr.mxu0 0.0
    %4814 = vmatpush1.msra.mxu0 0.0
    %4815 = vmatprep.subr.mxu0 0.0
    %4816 = vmatpush1.msra.mxu0 0.0
    %4817 = vmatprep.subr.mxu0 0.0
    %4818 = vmatpush1.msra.mxu0 0.0
    %4819 = vmatprep.subr.mxu0 0.0
    %4820 = vmatpush1.msra.mxu0 0.0
    %4821 = vmatprep.subr.mxu0 0.0
    %4822 = vmatpush1.msra.mxu0 0.0
    %4823 = vmatprep.subr.mxu0 0.0
    %4824 = vmatpush1.msra.mxu0 0.0
    %4825 = vmatprep.subr.mxu0 0.0
    %4826 = vmatpush1.msra.mxu0 0.0
    %4827 = vmatprep.subr.mxu0 0.0
    %4828 = vmatpush1.msra.mxu0 0.0
    %4829 = vmatprep.subr.mxu0 0.0
    %4830 = vmatpush1.msra.mxu0 0.0
    %4831 = vmatprep.subr.mxu0 0.0
    %4832 = vmatpush1.msra.mxu0 0.0
    %4833 = vmatprep.subr.mxu0 0.0
    %4834 = vmatpush1.msra.mxu0 0.0
    %4835 = vmatprep.subr.mxu0 0.0
    %4836 = vmatpush1.msra.mxu0 0.0
    %4837 = vmatprep.subr.mxu0 0.0
    %4838 = vmatpush1.msra.mxu0 0.0
    %4839 = vmatprep.subr.mxu0 0.0
    %4840 = vmatpush1.msra.mxu0 0.0
    %4841 = vmatprep.subr.mxu0 0.0
    %4842 = vmatpush1.msra.mxu0 0.0
    %4843 = vmatprep.subr.mxu0 0.0
    %4844 = vmatpush1.msra.mxu0 0.0
    %4845 = vmatprep.subr.mxu0 0.0
    %4846 = vmatpush1.msra.mxu0 0.0
    %4847 = vmatprep.subr.mxu0 0.0
    %4848 = vmatpush1.msra.mxu0 0.0
    %4849 = vmatprep.mubr.f32.mxu0 0.0
    %4850 = vmatmul.mubr.f32.gmra.mrb[0].mxu0 %v4780
    %v4851 = vpop.f32.mrb[0].mxu0
    %v4852 = vadd.f32 0.0, %v4851
    %v4853 = vpop.f32.mrb[0].mxu0
    %4854 = vmatprep.mubr.f32.mxu0 0.0
    %4855 = vmatmul.mubr.f32.gmra.mrb[0].mxu0 %v4783
    %v4856 = vpop.f32.mrb[0].mxu0
    %v4857 = vadd.f32 0.0, %v4856
    %v4858 = vpop.f32.mrb[0].mxu0
    %4859 = vdwg.mxu0
    %v4860 = vlaneseq
    %v4861 = vshrl.u32 %v4860, 7
    %v4862 = vsub.s32 0, %v4861
    %v4863 = vrot.slane %v4582, %v4862
    %v4864 = vadd.f32 %v4863, %v4852
    %v4865 = vadd.f32 %v4863, %v4857
    %4866 = vrot.lane.b32.xlu0 %v4486, 120
    %v4867 = vpop.permute.xlu0 %4866
    %4868 = vrot.lane.b32.xlu0 %v4491, 120
    %v4869 = vpop.permute.xlu0 %4868
    %4870 = vrot.lane.b32.xlu0 %v4570, 120
    %v4871 = vpop.permute.xlu0 %4870
    %4872 = vrot.lane.b32.xlu0 %v4575, 120
    %v4873 = vpop.permute.xlu0 %4872
    %v4874 = vsel %vm230, %v4867, 0
    %v4876 = vsel %vm230, %v4869, 0
    %v4878 = vsel %vm230, %v4871, 0
    %v4880 = vsel %vm230, %v4873, 0
    %4882 = vmatprep.subr.mxu0 0.0
    %4883 = vmatpush1.xpose.msra.mxu0 %v4878
    %4884 = vmatprep.subr.mxu0 0.0
    %4885 = vmatpush1.xpose.msra.mxu0 %v4880
    %4886 = vmatprep.subr.mxu0 0.0
    %4887 = vmatpush1.xpose.msra.mxu0 0.0
    %4888 = vmatprep.subr.mxu0 0.0
    %4889 = vmatpush1.xpose.msra.mxu0 0.0
    %4890 = vmatprep.subr.mxu0 0.0
    %4891 = vmatpush1.xpose.msra.mxu0 0.0
    %4892 = vmatprep.subr.mxu0 0.0
    %4893 = vmatpush1.xpose.msra.mxu0 0.0
    %4894 = vmatprep.subr.mxu0 0.0
    %4895 = vmatpush1.xpose.msra.mxu0 0.0
    %4896 = vmatprep.subr.mxu0 0.0
    %4897 = vmatpush1.xpose.msra.mxu0 0.0
    %4898 = vmatprep.subr.mxu0 0.0
    %4899 = vmatpush1.xpose.msra.mxu0 0.0
    %4900 = vmatprep.subr.mxu0 0.0
    %4901 = vmatpush1.xpose.msra.mxu0 0.0
    %4902 = vmatprep.subr.mxu0 0.0
    %4903 = vmatpush1.xpose.msra.mxu0 0.0
    %4904 = vmatprep.subr.mxu0 0.0
    %4905 = vmatpush1.xpose.msra.mxu0 0.0
    %4906 = vmatprep.subr.mxu0 0.0
    %4907 = vmatpush1.xpose.msra.mxu0 0.0
    %4908 = vmatprep.subr.mxu0 0.0
    %4909 = vmatpush1.xpose.msra.mxu0 0.0
    %4910 = vmatprep.subr.mxu0 0.0
    %4911 = vmatpush1.xpose.msra.mxu0 0.0
    %4912 = vmatprep.subr.mxu0 0.0
    %4913 = vmatpush1.xpose.msra.mxu0 0.0
    %4914 = vmatprep.subr.mxu0 0.0
    %4915 = vmatpush1.xpose.msra.mxu0 0.0
    %4916 = vmatprep.subr.mxu0 0.0
    %4917 = vmatpush1.xpose.msra.mxu0 0.0
    %4918 = vmatprep.subr.mxu0 0.0
    %4919 = vmatpush1.xpose.msra.mxu0 0.0
    %4920 = vmatprep.subr.mxu0 0.0
    %4921 = vmatpush1.xpose.msra.mxu0 0.0
    %4922 = vmatprep.subr.mxu0 0.0
    %4923 = vmatpush1.xpose.msra.mxu0 0.0
    %4924 = vmatprep.subr.mxu0 0.0
    %4925 = vmatpush1.xpose.msra.mxu0 0.0
    %4926 = vmatprep.subr.mxu0 0.0
    %4927 = vmatpush1.xpose.msra.mxu0 0.0
    %4928 = vmatprep.subr.mxu0 0.0
    %4929 = vmatpush1.xpose.msra.mxu0 0.0
    %4930 = vmatprep.subr.mxu0 0.0
    %4931 = vmatpush1.xpose.msra.mxu0 0.0
    %4932 = vmatprep.subr.mxu0 0.0
    %4933 = vmatpush1.xpose.msra.mxu0 0.0
    %4934 = vmatprep.subr.mxu0 0.0
    %4935 = vmatpush1.xpose.msra.mxu0 0.0
    %4936 = vmatprep.subr.mxu0 0.0
    %4937 = vmatpush1.xpose.msra.mxu0 0.0
    %4938 = vmatprep.subr.mxu0 0.0
    %4939 = vmatpush1.xpose.msra.mxu0 0.0
    %4940 = vmatprep.subr.mxu0 0.0
    %4941 = vmatpush1.xpose.msra.mxu0 0.0
    %4942 = vmatprep.subr.mxu0 0.0
    %4943 = vmatpush1.xpose.msra.mxu0 0.0
    %4944 = vmatprep.subr.mxu0 0.0
    %4945 = vmatpush1.xpose.msra.mxu0 0.0
    %4946 = vmatprep.mubr.f32.mxu0 0.0
    %4947 = vmatmul.mubr.f32.gmra.mrb[0].mxu0 %v4874
    %v4948 = vpop.f32.mrb[0].mxu0
    %v4949 = vadd.f32 %v27, %v4948
    %v4950 = vpop.f32.mrb[0].mxu0
    %4951 = vmatprep.mubr.f32.mxu0 0.0
    %4952 = vmatmul.mubr.f32.gmra.mrb[0].mxu0 %v4876
    %v4953 = vpop.f32.mrb[0].mxu0
    %v4954 = vadd.f32 %v28, %v4953
    %v4955 = vpop.f32.mrb[0].mxu0
    %4956 = vdwg.mxu0
    %v4957 = vsel %vm314, %v4949, -inf
    %4958 = vmax.xlane.f32.xlu0 %v4957
    %v4959 = vpop.xlane.xlu0 %4958
    %v4960 = vsel %vm314, %v4954, -inf
    %4961 = vmax.xlane.f32.xlu0 %v4960
    %v4962 = vpop.xlane.xlu0 %4961
    %v4963 = vsub.f32 %v4949, %v4959
    %v4964 = vsub.f32 %v4954, %v4962
    %v4965 = vmul.f32 %v4963, 1.442695
    %v4966 = vpow.pop %v4965
    %v4967 = vmul.f32 %v4964, 1.442695
    %v4968 = vpow.pop %v4967
    %v4969 = vsel %vm314, %v4966, 0.0
    %4970 = vadd.xlane.f32.xlu0 %v4969
    %v4971 = vpop.xlane.xlu0 %4970
    %v4972 = vsel %vm314, %v4968, 0.0
    %4973 = vadd.xlane.f32.xlu0 %v4972
    %v4974 = vpop.xlane.xlu0 %4973
    %v4975 = vrcp.pop %v4971
    %v4976 = vrcp.pop %v4974
    %v4977 = vmul.f32 %v4966, %v4975
    %v4978 = vmul.f32 %v4968, %v4976
    %4979 = vrot.lane.b32.xlu0 %v4570, 88
    %v4980 = vpop.permute.xlu0 %4979
    %4981 = vrot.lane.b32.xlu0 %v4575, 88
    %v4982 = vpop.permute.xlu0 %4981
    %v4986 = vsel %vm314, %v4977, 0
    %v4989 = vsel %vm314, %v4978, 0
    %4991 = vmatprep.subr.mxu0 0.0
    %4992 = vmatpush1.msra.mxu0 %v4980
    %4993 = vmatprep.subr.mxu0 0.0
    %4994 = vmatpush1.msra.mxu0 %v4982
    %4995 = vmatprep.subr.mxu0 0.0
    %4996 = vmatpush1.msra.mxu0 0.0
    %4997 = vmatprep.subr.mxu0 0.0
    %4998 = vmatpush1.msra.mxu0 0.0
    %4999 = vmatprep.subr.mxu0 0.0
    %5000 = vmatpush1.msra.mxu0 0.0
    %5001 = vmatprep.subr.mxu0 0.0
    %5002 = vmatpush1.msra.mxu0 0.0
    %5003 = vmatprep.subr.mxu0 0.0
    %5004 = vmatpush1.msra.mxu0 0.0
    %5005 = vmatprep.subr.mxu0 0.0
    %5006 = vmatpush1.msra.mxu0 0.0
    %5007 = vmatprep.subr.mxu0 0.0
    %5008 = vmatpush1.msra.mxu0 0.0
    %5009 = vmatprep.subr.mxu0 0.0
    %5010 = vmatpush1.msra.mxu0 0.0
    %5011 = vmatprep.subr.mxu0 0.0
    %5012 = vmatpush1.msra.mxu0 0.0
    %5013 = vmatprep.subr.mxu0 0.0
    %5014 = vmatpush1.msra.mxu0 0.0
    %5015 = vmatprep.subr.mxu0 0.0
    %5016 = vmatpush1.msra.mxu0 0.0
    %5017 = vmatprep.subr.mxu0 0.0
    %5018 = vmatpush1.msra.mxu0 0.0
    %5019 = vmatprep.subr.mxu0 0.0
    %5020 = vmatpush1.msra.mxu0 0.0
    %5021 = vmatprep.subr.mxu0 0.0
    %5022 = vmatpush1.msra.mxu0 0.0
    %5023 = vmatprep.subr.mxu0 0.0
    %5024 = vmatpush1.msra.mxu0 0.0
    %5025 = vmatprep.subr.mxu0 0.0
    %5026 = vmatpush1.msra.mxu0 0.0
    %5027 = vmatprep.subr.mxu0 0.0
    %5028 = vmatpush1.msra.mxu0 0.0
    %5029 = vmatprep.subr.mxu0 0.0
    %5030 = vmatpush1.msra.mxu0 0.0
    %5031 = vmatprep.subr.mxu0 0.0
    %5032 = vmatpush1.msra.mxu0 0.0
    %5033 = vmatprep.subr.mxu0 0.0
    %5034 = vmatpush1.msra.mxu0 0.0
    %5035 = vmatprep.subr.mxu0 0.0
    %5036 = vmatpush1.msra.mxu0 0.0
    %5037 = vmatprep.subr.mxu0 0.0
    %5038 = vmatpush1.msra.mxu0 0.0
    %5039 = vmatprep.subr.mxu0 0.0
    %5040 = vmatpush1.msra.mxu0 0.0
    %5041 = vmatprep.subr.mxu0 0.0
    %5042 = vmatpush1.msra.mxu0 0.0
    %5043 = vmatprep.subr.mxu0 0.0
    %5044 = vmatpush1.msra.mxu0 0.0
    %5045 = vmatprep.subr.mxu0 0.0
    %5046 = vmatpush1.msra.mxu0 0.0
    %5047 = vmatprep.subr.mxu0 0.0
    %5048 = vmatpush1.msra.mxu0 0.0
    %5049 = vmatprep.subr.mxu0 0.0
    %5050 = vmatpush1.msra.mxu0 0.0
    %5051 = vmatprep.subr.mxu0 0.0
    %5052 = vmatpush1.msra.mxu0 0.0
    %5053 = vmatprep.subr.mxu0 0.0
    %5054 = vmatpush1.msra.mxu0 0.0
    %5055 = vmatprep.mubr.f32.mxu0 0.0
    %5056 = vmatmul.mubr.f32.gmra.mrb[0].mxu0 %v4986
    %v5057 = vpop.f32.mrb[0].mxu0
    %v5058 = vadd.f32 0.0, %v5057
    %v5059 = vpop.f32.mrb[0].mxu0
    %5060 = vmatprep.mubr.f32.mxu0 0.0
    %5061 = vmatmul.mubr.f32.gmra.mrb[0].mxu0 %v4989
    %v5062 = vpop.f32.mrb[0].mxu0
    %v5063 = vadd.f32 0.0, %v5062
    %v5064 = vpop.f32.mrb[0].mxu0
    %5065 = vdwg.mxu0
    %v5067 = vsel %vm230, %v5058, 0
    %v5070 = vsel %vm230, %v5063, 0
    %5072 = vmatprep.subr.mxu0 0.0
    %5073 = vmatpush1.msra.mxu0 %v4579
    %5074 = vmatprep.subr.mxu0 0.0
    %5075 = vmatpush1.msra.mxu0 0.0
    %5076 = vmatprep.subr.mxu0 0.0
    %5077 = vmatpush1.msra.mxu0 0.0
    %5078 = vmatprep.subr.mxu0 0.0
    %5079 = vmatpush1.msra.mxu0 0.0
    %5080 = vmatprep.subr.mxu0 0.0
    %5081 = vmatpush1.msra.mxu0 0.0
    %5082 = vmatprep.subr.mxu0 0.0
    %5083 = vmatpush1.msra.mxu0 0.0
    %5084 = vmatprep.subr.mxu0 0.0
    %5085 = vmatpush1.msra.mxu0 0.0
    %5086 = vmatprep.subr.mxu0 0.0
    %5087 = vmatpush1.msra.mxu0 0.0
    %5088 = vmatprep.subr.mxu0 0.0
    %5089 = vmatpush1.msra.mxu0 0.0
    %5090 = vmatprep.subr.mxu0 0.0
    %5091 = vmatpush1.msra.mxu0 0.0
    %5092 = vmatprep.subr.mxu0 0.0
    %5093 = vmatpush1.msra.mxu0 0.0
    %5094 = vmatprep.subr.mxu0 0.0
    %5095 = vmatpush1.msra.mxu0 0.0
    %5096 = vmatprep.subr.mxu0 0.0
    %5097 = vmatpush1.msra.mxu0 0.0
    %5098 = vmatprep.subr.mxu0 0.0
    %5099 = vmatpush1.msra.mxu0 0.0
    %5100 = vmatprep.subr.mxu0 0.0
    %5101 = vmatpush1.msra.mxu0 0.0
    %5102 = vmatprep.subr.mxu0 0.0
    %5103 = vmatpush1.msra.mxu0 0.0
    %5104 = vmatprep.subr.mxu0 0.0
    %5105 = vmatpush1.msra.mxu0 0.0
    %5106 = vmatprep.subr.mxu0 0.0
    %5107 = vmatpush1.msra.mxu0 0.0
    %5108 = vmatprep.subr.mxu0 0.0
    %5109 = vmatpush1.msra.mxu0 0.0
    %5110 = vmatprep.subr.mxu0 0.0
    %5111 = vmatpush1.msra.mxu0 0.0
    %5112 = vmatprep.subr.mxu0 0.0
    %5113 = vmatpush1.msra.mxu0 0.0
    %5114 = vmatprep.subr.mxu0 0.0
    %5115 = vmatpush1.msra.mxu0 0.0
    %5116 = vmatprep.subr.mxu0 0.0
    %5117 = vmatpush1.msra.mxu0 0.0
    %5118 = vmatprep.subr.mxu0 0.0
    %5119 = vmatpush1.msra.mxu0 0.0
    %5120 = vmatprep.subr.mxu0 0.0
    %5121 = vmatpush1.msra.mxu0 0.0
    %5122 = vmatprep.subr.mxu0 0.0
    %5123 = vmatpush1.msra.mxu0 0.0
    %5124 = vmatprep.subr.mxu0 0.0
    %5125 = vmatpush1.msra.mxu0 0.0
    %5126 = vmatprep.subr.mxu0 0.0
    %5127 = vmatpush1.msra.mxu0 0.0
    %5128 = vmatprep.subr.mxu0 0.0
    %5129 = vmatpush1.msra.mxu0 0.0
    %5130 = vmatprep.subr.mxu0 0.0
    %5131 = vmatpush1.msra.mxu0 0.0
    %5132 = vmatprep.subr.mxu0 0.0
    %5133 = vmatpush1.msra.mxu0 0.0
    %5134 = vmatprep.subr.mxu0 0.0
    %5135 = vmatpush1.msra.mxu0 0.0
    %5136 = vmatprep.mubr.f32.mxu0 0.0
    %5137 = vmatmul.mubr.f32.gmra.mrb[0].mxu0 %v5067
    %v5138 = vpop.f32.mrb[0].mxu0
    %v5139 = vadd.f32 0.0, %v5138
    %v5140 = vpop.f32.mrb[0].mxu0
    %5141 = vmatprep.mubr.f32.mxu0 0.0
    %5142 = vmatmul.mubr.f32.gmra.mrb[0].mxu0 %v5070
    %v5143 = vpop.f32.mrb[0].mxu0
    %v5144 = vadd.f32 0.0, %v5143
    %v5145 = vpop.f32.mrb[0].mxu0
    %5146 = vdwg.mxu0
    %v5147 = vadd.f32 %v4864, %v5139
    %v5148 = vadd.f32 %v4865, %v5144
    %5149 = vrot.lane.b32.xlu0 %v4486, 112
    %v5150 = vpop.permute.xlu0 %5149
    %5151 = vrot.lane.b32.xlu0 %v4491, 112
    %v5152 = vpop.permute.xlu0 %5151
    %5153 = vrot.lane.b32.xlu0 %v4570, 112
    %v5154 = vpop.permute.xlu0 %5153
    %5155 = vrot.lane.b32.xlu0 %v4575, 112
    %v5156 = vpop.permute.xlu0 %5155
    %v5157 = vsel %vm230, %v5150, 0
    %v5159 = vsel %vm230, %v5152, 0
    %v5161 = vsel %vm230, %v5154, 0
    %v5163 = vsel %vm230, %v5156, 0
    %5165 = vmatprep.subr.mxu0 0.0
    %5166 = vmatpush1.xpose.msra.mxu0 %v5161
    %5167 = vmatprep.subr.mxu0 0.0
    %5168 = vmatpush1.xpose.msra.mxu0 %v5163
    %5169 = vmatprep.subr.mxu0 0.0
    %5170 = vmatpush1.xpose.msra.mxu0 0.0
    %5171 = vmatprep.subr.mxu0 0.0
    %5172 = vmatpush1.xpose.msra.mxu0 0.0
    %5173 = vmatprep.subr.mxu0 0.0
    %5174 = vmatpush1.xpose.msra.mxu0 0.0
    %5175 = vmatprep.subr.mxu0 0.0
    %5176 = vmatpush1.xpose.msra.mxu0 0.0
    %5177 = vmatprep.subr.mxu0 0.0
    %5178 = vmatpush1.xpose.msra.mxu0 0.0
    %5179 = vmatprep.subr.mxu0 0.0
    %5180 = vmatpush1.xpose.msra.mxu0 0.0
    %5181 = vmatprep.subr.mxu0 0.0
    %5182 = vmatpush1.xpose.msra.mxu0 0.0
    %5183 = vmatprep.subr.mxu0 0.0
    %5184 = vmatpush1.xpose.msra.mxu0 0.0
    %5185 = vmatprep.subr.mxu0 0.0
    %5186 = vmatpush1.xpose.msra.mxu0 0.0
    %5187 = vmatprep.subr.mxu0 0.0
    %5188 = vmatpush1.xpose.msra.mxu0 0.0
    %5189 = vmatprep.subr.mxu0 0.0
    %5190 = vmatpush1.xpose.msra.mxu0 0.0
    %5191 = vmatprep.subr.mxu0 0.0
    %5192 = vmatpush1.xpose.msra.mxu0 0.0
    %5193 = vmatprep.subr.mxu0 0.0
    %5194 = vmatpush1.xpose.msra.mxu0 0.0
    %5195 = vmatprep.subr.mxu0 0.0
    %5196 = vmatpush1.xpose.msra.mxu0 0.0
    %5197 = vmatprep.subr.mxu0 0.0
    %5198 = vmatpush1.xpose.msra.mxu0 0.0
    %5199 = vmatprep.subr.mxu0 0.0
    %5200 = vmatpush1.xpose.msra.mxu0 0.0
    %5201 = vmatprep.subr.mxu0 0.0
    %5202 = vmatpush1.xpose.msra.mxu0 0.0
    %5203 = vmatprep.subr.mxu0 0.0
    %5204 = vmatpush1.xpose.msra.mxu0 0.0
    %5205 = vmatprep.subr.mxu0 0.0
    %5206 = vmatpush1.xpose.msra.mxu0 0.0
    %5207 = vmatprep.subr.mxu0 0.0
    %5208 = vmatpush1.xpose.msra.mxu0 0.0
    %5209 = vmatprep.subr.mxu0 0.0
    %5210 = vmatpush1.xpose.msra.mxu0 0.0
    %5211 = vmatprep.subr.mxu0 0.0
    %5212 = vmatpush1.xpose.msra.mxu0 0.0
    %5213 = vmatprep.subr.mxu0 0.0
    %5214 = vmatpush1.xpose.msra.mxu0 0.0
    %5215 = vmatprep.subr.mxu0 0.0
    %5216 = vmatpush1.xpose.msra.mxu0 0.0
    %5217 = vmatprep.subr.mxu0 0.0
    %5218 = vmatpush1.xpose.msra.mxu0 0.0
    %5219 = vmatprep.subr.mxu0 0.0
    %5220 = vmatpush1.xpose.msra.mxu0 0.0
    %5221 = vmatprep.subr.mxu0 0.0
    %5222 = vmatpush1.xpose.msra.mxu0 0.0
    %5223 = vmatprep.subr.mxu0 0.0
    %5224 = vmatpush1.xpose.msra.mxu0 0.0
    %5225 = vmatprep.subr.mxu0 0.0
    %5226 = vmatpush1.xpose.msra.mxu0 0.0
    %5227 = vmatprep.subr.mxu0 0.0
    %5228 = vmatpush1.xpose.msra.mxu0 0.0
    %5229 = vmatprep.mubr.f32.mxu0 0.0
    %5230 = vmatmul.mubr.f32.gmra.mrb[0].mxu0 %v5157
    %v5231 = vpop.f32.mrb[0].mxu0
    %v5232 = vadd.f32 %v27, %v5231
    %v5233 = vpop.f32.mrb[0].mxu0
    %5234 = vmatprep.mubr.f32.mxu0 0.0
    %5235 = vmatmul.mubr.f32.gmra.mrb[0].mxu0 %v5159
    %v5236 = vpop.f32.mrb[0].mxu0
    %v5237 = vadd.f32 %v28, %v5236
    %v5238 = vpop.f32.mrb[0].mxu0
    %5239 = vdwg.mxu0
    %v5240 = vsel %vm314, %v5232, -inf
    %5241 = vmax.xlane.f32.xlu0 %v5240
    %v5242 = vpop.xlane.xlu0 %5241
    %v5243 = vsel %vm314, %v5237, -inf
    %5244 = vmax.xlane.f32.xlu0 %v5243
    %v5245 = vpop.xlane.xlu0 %5244
    %v5246 = vsub.f32 %v5232, %v5242
    %v5247 = vsub.f32 %v5237, %v5245
    %v5248 = vmul.f32 %v5246, 1.442695
    %v5249 = vpow.pop %v5248
    %v5250 = vmul.f32 %v5247, 1.442695
    %v5251 = vpow.pop %v5250
    %v5252 = vsel %vm314, %v5249, 0.0
    %5253 = vadd.xlane.f32.xlu0 %v5252
    %v5254 = vpop.xlane.xlu0 %5253
    %v5255 = vsel %vm314, %v5251, 0.0
    %5256 = vadd.xlane.f32.xlu0 %v5255
    %v5257 = vpop.xlane.xlu0 %5256
    %v5258 = vrcp.pop %v5254
    %v5259 = vrcp.pop %v5257
    %v5260 = vmul.f32 %v5249, %v5258
    %v5261 = vmul.f32 %v5251, %v5259
    %5262 = vrot.lane.b32.xlu0 %v4570, 80
    %v5263 = vpop.permute.xlu0 %5262
    %5264 = vrot.lane.b32.xlu0 %v4575, 80
    %v5265 = vpop.permute.xlu0 %5264
    %v5269 = vsel %vm314, %v5260, 0
    %v5272 = vsel %vm314, %v5261, 0
    %5274 = vmatprep.subr.mxu0 0.0
    %5275 = vmatpush1.msra.mxu0 %v5263
    %5276 = vmatprep.subr.mxu0 0.0
    %5277 = vmatpush1.msra.mxu0 %v5265
    %5278 = vmatprep.subr.mxu0 0.0
    %5279 = vmatpush1.msra.mxu0 0.0
    %5280 = vmatprep.subr.mxu0 0.0
    %5281 = vmatpush1.msra.mxu0 0.0
    %5282 = vmatprep.subr.mxu0 0.0
    %5283 = vmatpush1.msra.mxu0 0.0
    %5284 = vmatprep.subr.mxu0 0.0
    %5285 = vmatpush1.msra.mxu0 0.0
    %5286 = vmatprep.subr.mxu0 0.0
    %5287 = vmatpush1.msra.mxu0 0.0
    %5288 = vmatprep.subr.mxu0 0.0
    %5289 = vmatpush1.msra.mxu0 0.0
    %5290 = vmatprep.subr.mxu0 0.0
    %5291 = vmatpush1.msra.mxu0 0.0
    %5292 = vmatprep.subr.mxu0 0.0
    %5293 = vmatpush1.msra.mxu0 0.0
    %5294 = vmatprep.subr.mxu0 0.0
    %5295 = vmatpush1.msra.mxu0 0.0
    %5296 = vmatprep.subr.mxu0 0.0
    %5297 = vmatpush1.msra.mxu0 0.0
    %5298 = vmatprep.subr.mxu0 0.0
    %5299 = vmatpush1.msra.mxu0 0.0
    %5300 = vmatprep.subr.mxu0 0.0
    %5301 = vmatpush1.msra.mxu0 0.0
    %5302 = vmatprep.subr.mxu0 0.0
    %5303 = vmatpush1.msra.mxu0 0.0
    %5304 = vmatprep.subr.mxu0 0.0
    %5305 = vmatpush1.msra.mxu0 0.0
    %5306 = vmatprep.subr.mxu0 0.0
    %5307 = vmatpush1.msra.mxu0 0.0
    %5308 = vmatprep.subr.mxu0 0.0
    %5309 = vmatpush1.msra.mxu0 0.0
    %5310 = vmatprep.subr.mxu0 0.0
    %5311 = vmatpush1.msra.mxu0 0.0
    %5312 = vmatprep.subr.mxu0 0.0
    %5313 = vmatpush1.msra.mxu0 0.0
    %5314 = vmatprep.subr.mxu0 0.0
    %5315 = vmatpush1.msra.mxu0 0.0
    %5316 = vmatprep.subr.mxu0 0.0
    %5317 = vmatpush1.msra.mxu0 0.0
    %5318 = vmatprep.subr.mxu0 0.0
    %5319 = vmatpush1.msra.mxu0 0.0
    %5320 = vmatprep.subr.mxu0 0.0
    %5321 = vmatpush1.msra.mxu0 0.0
    %5322 = vmatprep.subr.mxu0 0.0
    %5323 = vmatpush1.msra.mxu0 0.0
    %5324 = vmatprep.subr.mxu0 0.0
    %5325 = vmatpush1.msra.mxu0 0.0
    %5326 = vmatprep.subr.mxu0 0.0
    %5327 = vmatpush1.msra.mxu0 0.0
    %5328 = vmatprep.subr.mxu0 0.0
    %5329 = vmatpush1.msra.mxu0 0.0
    %5330 = vmatprep.subr.mxu0 0.0
    %5331 = vmatpush1.msra.mxu0 0.0
    %5332 = vmatprep.subr.mxu0 0.0
    %5333 = vmatpush1.msra.mxu0 0.0
    %5334 = vmatprep.subr.mxu0 0.0
    %5335 = vmatpush1.msra.mxu0 0.0
    %5336 = vmatprep.subr.mxu0 0.0
    %5337 = vmatpush1.msra.mxu0 0.0
    %5338 = vmatprep.mubr.f32.mxu0 0.0
    %5339 = vmatmul.mubr.f32.gmra.mrb[0].mxu0 %v5269
    %v5340 = vpop.f32.mrb[0].mxu0
    %v5341 = vadd.f32 0.0, %v5340
    %v5342 = vpop.f32.mrb[0].mxu0
    %5343 = vmatprep.mubr.f32.mxu0 0.0
    %5344 = vmatmul.mubr.f32.gmra.mrb[0].mxu0 %v5272
    %v5345 = vpop.f32.mrb[0].mxu0
    %v5346 = vadd.f32 0.0, %v5345
    %v5347 = vpop.f32.mrb[0].mxu0
    %5348 = vdwg.mxu0
    %v5350 = vsel %vm230, %v5341, 0
    %v5353 = vsel %vm230, %v5346, 0
    %5355 = vmatprep.subr.mxu0 0.0
    %5356 = vmatpush1.msra.mxu0 %v4580
    %5357 = vmatprep.subr.mxu0 0.0
    %5358 = vmatpush1.msra.mxu0 0.0
    %5359 = vmatprep.subr.mxu0 0.0
    %5360 = vmatpush1.msra.mxu0 0.0
    %5361 = vmatprep.subr.mxu0 0.0
    %5362 = vmatpush1.msra.mxu0 0.0
    %5363 = vmatprep.subr.mxu0 0.0
    %5364 = vmatpush1.msra.mxu0 0.0
    %5365 = vmatprep.subr.mxu0 0.0
    %5366 = vmatpush1.msra.mxu0 0.0
    %5367 = vmatprep.subr.mxu0 0.0
    %5368 = vmatpush1.msra.mxu0 0.0
    %5369 = vmatprep.subr.mxu0 0.0
    %5370 = vmatpush1.msra.mxu0 0.0
    %5371 = vmatprep.subr.mxu0 0.0
    %5372 = vmatpush1.msra.mxu0 0.0
    %5373 = vmatprep.subr.mxu0 0.0
    %5374 = vmatpush1.msra.mxu0 0.0
    %5375 = vmatprep.subr.mxu0 0.0
    %5376 = vmatpush1.msra.mxu0 0.0
    %5377 = vmatprep.subr.mxu0 0.0
    %5378 = vmatpush1.msra.mxu0 0.0
    %5379 = vmatprep.subr.mxu0 0.0
    %5380 = vmatpush1.msra.mxu0 0.0
    %5381 = vmatprep.subr.mxu0 0.0
    %5382 = vmatpush1.msra.mxu0 0.0
    %5383 = vmatprep.subr.mxu0 0.0
    %5384 = vmatpush1.msra.mxu0 0.0
    %5385 = vmatprep.subr.mxu0 0.0
    %5386 = vmatpush1.msra.mxu0 0.0
    %5387 = vmatprep.subr.mxu0 0.0
    %5388 = vmatpush1.msra.mxu0 0.0
    %5389 = vmatprep.subr.mxu0 0.0
    %5390 = vmatpush1.msra.mxu0 0.0
    %5391 = vmatprep.subr.mxu0 0.0
    %5392 = vmatpush1.msra.mxu0 0.0
    %5393 = vmatprep.subr.mxu0 0.0
    %5394 = vmatpush1.msra.mxu0 0.0
    %5395 = vmatprep.subr.mxu0 0.0
    %5396 = vmatpush1.msra.mxu0 0.0
    %5397 = vmatprep.subr.mxu0 0.0
    %5398 = vmatpush1.msra.mxu0 0.0
    %5399 = vmatprep.subr.mxu0 0.0
    %5400 = vmatpush1.msra.mxu0 0.0
    %5401 = vmatprep.subr.mxu0 0.0
    %5402 = vmatpush1.msra.mxu0 0.0
    %5403 = vmatprep.subr.mxu0 0.0
    %5404 = vmatpush1.msra.mxu0 0.0
    %5405 = vmatprep.subr.mxu0 0.0
    %5406 = vmatpush1.msra.mxu0 0.0
    %5407 = vmatprep.subr.mxu0 0.0
    %5408 = vmatpush1.msra.mxu0 0.0
    %5409 = vmatprep.subr.mxu0 0.0
    %5410 = vmatpush1.msra.mxu0 0.0
    %5411 = vmatprep.subr.mxu0 0.0
    %5412 = vmatpush1.msra.mxu0 0.0
    %5413 = vmatprep.subr.mxu0 0.0
    %5414 = vmatpush1.msra.mxu0 0.0
    %5415 = vmatprep.subr.mxu0 0.0
    %5416 = vmatpush1.msra.mxu0 0.0
    %5417 = vmatprep.subr.mxu0 0.0
    %5418 = vmatpush1.msra.mxu0 0.0
    %5419 = vmatprep.mubr.f32.mxu0 0.0
    %5420 = vmatmul.mubr.f32.gmra.mrb[0].mxu0 %v5350
    %v5421 = vpop.f32.mrb[0].mxu0
    %v5422 = vadd.f32 0.0, %v5421
    %v5423 = vpop.f32.mrb[0].mxu0
    %5424 = vmatprep.mubr.f32.mxu0 0.0
    %5425 = vmatmul.mubr.f32.gmra.mrb[0].mxu0 %v5353
    %v5426 = vpop.f32.mrb[0].mxu0
    %v5427 = vadd.f32 0.0, %v5426
    %v5428 = vpop.f32.mrb[0].mxu0
    %5429 = vdwg.mxu0
    %v5430 = vadd.f32 %v5147, %v5422
    %v5431 = vadd.f32 %v5148, %v5427
    %5432 = vrot.lane.b32.xlu0 %v4486, 104
    %v5433 = vpop.permute.xlu0 %5432
    %5434 = vrot.lane.b32.xlu0 %v4491, 104
    %v5435 = vpop.permute.xlu0 %5434
    %5436 = vrot.lane.b32.xlu0 %v4570, 104
    %v5437 = vpop.permute.xlu0 %5436
    %5438 = vrot.lane.b32.xlu0 %v4575, 104
    %v5439 = vpop.permute.xlu0 %5438
    %v5440 = vsel %vm230, %v5433, 0
    %v5442 = vsel %vm230, %v5435, 0
    %v5444 = vsel %vm230, %v5437, 0
    %v5446 = vsel %vm230, %v5439, 0
    %5448 = vmatprep.subr.mxu0 0.0
    %5449 = vmatpush1.xpose.msra.mxu0 %v5444
    %5450 = vmatprep.subr.mxu0 0.0
    %5451 = vmatpush1.xpose.msra.mxu0 %v5446
    %5452 = vmatprep.subr.mxu0 0.0
    %5453 = vmatpush1.xpose.msra.mxu0 0.0
    %5454 = vmatprep.subr.mxu0 0.0
    %5455 = vmatpush1.xpose.msra.mxu0 0.0
    %5456 = vmatprep.subr.mxu0 0.0
    %5457 = vmatpush1.xpose.msra.mxu0 0.0
    %5458 = vmatprep.subr.mxu0 0.0
    %5459 = vmatpush1.xpose.msra.mxu0 0.0
    %5460 = vmatprep.subr.mxu0 0.0
    %5461 = vmatpush1.xpose.msra.mxu0 0.0
    %5462 = vmatprep.subr.mxu0 0.0
    %5463 = vmatpush1.xpose.msra.mxu0 0.0
    %5464 = vmatprep.subr.mxu0 0.0
    %5465 = vmatpush1.xpose.msra.mxu0 0.0
    %5466 = vmatprep.subr.mxu0 0.0
    %5467 = vmatpush1.xpose.msra.mxu0 0.0
    %5468 = vmatprep.subr.mxu0 0.0
    %5469 = vmatpush1.xpose.msra.mxu0 0.0
    %5470 = vmatprep.subr.mxu0 0.0
    %5471 = vmatpush1.xpose.msra.mxu0 0.0
    %5472 = vmatprep.subr.mxu0 0.0
    %5473 = vmatpush1.xpose.msra.mxu0 0.0
    %5474 = vmatprep.subr.mxu0 0.0
    %5475 = vmatpush1.xpose.msra.mxu0 0.0
    %5476 = vmatprep.subr.mxu0 0.0
    %5477 = vmatpush1.xpose.msra.mxu0 0.0
    %5478 = vmatprep.subr.mxu0 0.0
    %5479 = vmatpush1.xpose.msra.mxu0 0.0
    %5480 = vmatprep.subr.mxu0 0.0
    %5481 = vmatpush1.xpose.msra.mxu0 0.0
    %5482 = vmatprep.subr.mxu0 0.0
    %5483 = vmatpush1.xpose.msra.mxu0 0.0
    %5484 = vmatprep.subr.mxu0 0.0
    %5485 = vmatpush1.xpose.msra.mxu0 0.0
    %5486 = vmatprep.subr.mxu0 0.0
    %5487 = vmatpush1.xpose.msra.mxu0 0.0
    %5488 = vmatprep.subr.mxu0 0.0
    %5489 = vmatpush1.xpose.msra.mxu0 0.0
    %5490 = vmatprep.subr.mxu0 0.0
    %5491 = vmatpush1.xpose.msra.mxu0 0.0
    %5492 = vmatprep.subr.mxu0 0.0
    %5493 = vmatpush1.xpose.msra.mxu0 0.0
    %5494 = vmatprep.subr.mxu0 0.0
    %5495 = vmatpush1.xpose.msra.mxu0 0.0
    %5496 = vmatprep.subr.mxu0 0.0
    %5497 = vmatpush1.xpose.msra.mxu0 0.0
    %5498 = vmatprep.subr.mxu0 0.0
    %5499 = vmatpush1.xpose.msra.mxu0 0.0
    %5500 = vmatprep.subr.mxu0 0.0
    %5501 = vmatpush1.xpose.msra.mxu0 0.0
    %5502 = vmatprep.subr.mxu0 0.0
    %5503 = vmatpush1.xpose.msra.mxu0 0.0
    %5504 = vmatprep.subr.mxu0 0.0
    %5505 = vmatpush1.xpose.msra.mxu0 0.0
    %5506 = vmatprep.subr.mxu0 0.0
    %5507 = vmatpush1.xpose.msra.mxu0 0.0
    %5508 = vmatprep.subr.mxu0 0.0
    %5509 = vmatpush1.xpose.msra.mxu0 0.0
    %5510 = vmatprep.subr.mxu0 0.0
    %5511 = vmatpush1.xpose.msra.mxu0 0.0
    %5512 = vmatprep.mubr.f32.mxu0 0.0
    %5513 = vmatmul.mubr.f32.gmra.mrb[0].mxu0 %v5440
    %v5514 = vpop.f32.mrb[0].mxu0
    %v5515 = vadd.f32 %v27, %v5514
    %v5516 = vpop.f32.mrb[0].mxu0
    %5517 = vmatprep.mubr.f32.mxu0 0.0
    %5518 = vmatmul.mubr.f32.gmra.mrb[0].mxu0 %v5442
    %v5519 = vpop.f32.mrb[0].mxu0
    %v5520 = vadd.f32 %v28, %v5519
    %v5521 = vpop.f32.mrb[0].mxu0
    %5522 = vdwg.mxu0
    %v5523 = vsel %vm314, %v5515, -inf
    %5524 = vmax.xlane.f32.xlu0 %v5523
    %v5525 = vpop.xlane.xlu0 %5524
    %v5526 = vsel %vm314, %v5520, -inf
    %5527 = vmax.xlane.f32.xlu0 %v5526
    %v5528 = vpop.xlane.xlu0 %5527
    %v5529 = vsub.f32 %v5515, %v5525
    %v5530 = vsub.f32 %v5520, %v5528
    %v5531 = vmul.f32 %v5529, 1.442695
    %v5532 = vpow.pop %v5531
    %v5533 = vmul.f32 %v5530, 1.442695
    %v5534 = vpow.pop %v5533
    %v5535 = vsel %vm314, %v5532, 0.0
    %5536 = vadd.xlane.f32.xlu0 %v5535
    %v5537 = vpop.xlane.xlu0 %5536
    %v5538 = vsel %vm314, %v5534, 0.0
    %5539 = vadd.xlane.f32.xlu0 %v5538
    %v5540 = vpop.xlane.xlu0 %5539
    %v5541 = vrcp.pop %v5537
    %v5542 = vrcp.pop %v5540
    %v5543 = vmul.f32 %v5532, %v5541
    %v5544 = vmul.f32 %v5534, %v5542
    %5545 = vrot.lane.b32.xlu0 %v4570, 72
    %v5546 = vpop.permute.xlu0 %5545
    %5547 = vrot.lane.b32.xlu0 %v4575, 72
    %v5548 = vpop.permute.xlu0 %5547
    %v5552 = vsel %vm314, %v5543, 0
    %v5555 = vsel %vm314, %v5544, 0
    %5557 = vmatprep.subr.mxu0 0.0
    %5558 = vmatpush1.msra.mxu0 %v5546
    %5559 = vmatprep.subr.mxu0 0.0
    %5560 = vmatpush1.msra.mxu0 %v5548
    %5561 = vmatprep.subr.mxu0 0.0
    %5562 = vmatpush1.msra.mxu0 0.0
    %5563 = vmatprep.subr.mxu0 0.0
    %5564 = vmatpush1.msra.mxu0 0.0
    %5565 = vmatprep.subr.mxu0 0.0
    %5566 = vmatpush1.msra.mxu0 0.0
    %5567 = vmatprep.subr.mxu0 0.0
    %5568 = vmatpush1.msra.mxu0 0.0
    %5569 = vmatprep.subr.mxu0 0.0
    %5570 = vmatpush1.msra.mxu0 0.0
    %5571 = vmatprep.subr.mxu0 0.0
    %5572 = vmatpush1.msra.mxu0 0.0
    %5573 = vmatprep.subr.mxu0 0.0
    %5574 = vmatpush1.msra.mxu0 0.0
    %5575 = vmatprep.subr.mxu0 0.0
    %5576 = vmatpush1.msra.mxu0 0.0
    %5577 = vmatprep.subr.mxu0 0.0
    %5578 = vmatpush1.msra.mxu0 0.0
    %5579 = vmatprep.subr.mxu0 0.0
    %5580 = vmatpush1.msra.mxu0 0.0
    %5581 = vmatprep.subr.mxu0 0.0
    %5582 = vmatpush1.msra.mxu0 0.0
    %5583 = vmatprep.subr.mxu0 0.0
    %5584 = vmatpush1.msra.mxu0 0.0
    %5585 = vmatprep.subr.mxu0 0.0
    %5586 = vmatpush1.msra.mxu0 0.0
    %5587 = vmatprep.subr.mxu0 0.0
    %5588 = vmatpush1.msra.mxu0 0.0
    %5589 = vmatprep.subr.mxu0 0.0
    %5590 = vmatpush1.msra.mxu0 0.0
    %5591 = vmatprep.subr.mxu0 0.0
    %5592 = vmatpush1.msra.mxu0 0.0
    %5593 = vmatprep.subr.mxu0 0.0
    %5594 = vmatpush1.msra.mxu0 0.0
    %5595 = vmatprep.subr.mxu0 0.0
    %5596 = vmatpush1.msra.mxu0 0.0
    %5597 = vmatprep.subr.mxu0 0.0
    %5598 = vmatpush1.msra.mxu0 0.0
    %5599 = vmatprep.subr.mxu0 0.0
    %5600 = vmatpush1.msra.mxu0 0.0
    %5601 = vmatprep.subr.mxu0 0.0
    %5602 = vmatpush1.msra.mxu0 0.0
    %5603 = vmatprep.subr.mxu0 0.0
    %5604 = vmatpush1.msra.mxu0 0.0
    %5605 = vmatprep.subr.mxu0 0.0
    %5606 = vmatpush1.msra.mxu0 0.0
    %5607 = vmatprep.subr.mxu0 0.0
    %5608 = vmatpush1.msra.mxu0 0.0
    %5609 = vmatprep.subr.mxu0 0.0
    %5610 = vmatpush1.msra.mxu0 0.0
    %5611 = vmatprep.subr.mxu0 0.0
    %5612 = vmatpush1.msra.mxu0 0.0
    %5613 = vmatprep.subr.mxu0 0.0
    %5614 = vmatpush1.msra.mxu0 0.0
    %5615 = vmatprep.subr.mxu0 0.0
    %5616 = vmatpush1.msra.mxu0 0.0
    %5617 = vmatprep.subr.mxu0 0.0
    %5618 = vmatpush1.msra.mxu0 0.0
    %5619 = vmatprep.subr.mxu0 0.0
    %5620 = vmatpush1.msra.mxu0 0.0
    %5621 = vmatprep.mubr.f32.mxu0 0.0
    %5622 = vmatmul.mubr.f32.gmra.mrb[0].mxu0 %v5552
    %v5623 = vpop.f32.mrb[0].mxu0
    %v5624 = vadd.f32 0.0, %v5623
    %v5625 = vpop.f32.mrb[0].mxu0
    %5626 = vmatprep.mubr.f32.mxu0 0.0
    %5627 = vmatmul.mubr.f32.gmra.mrb[0].mxu0 %v5555
    %v5628 = vpop.f32.mrb[0].mxu0
    %v5629 = vadd.f32 0.0, %v5628
    %v5630 = vpop.f32.mrb[0].mxu0
    %5631 = vdwg.mxu0
    %v5633 = vsel %vm230, %v5624, 0
    %v5636 = vsel %vm230, %v5629, 0
    %5638 = vmatprep.subr.mxu0 0.0
    %5639 = vmatpush1.msra.mxu0 %v4581
    %5640 = vmatprep.subr.mxu0 0.0
    %5641 = vmatpush1.msra.mxu0 0.0
    %5642 = vmatprep.subr.mxu0 0.0
    %5643 = vmatpush1.msra.mxu0 0.0
    %5644 = vmatprep.subr.mxu0 0.0
    %5645 = vmatpush1.msra.mxu0 0.0
    %5646 = vmatprep.subr.mxu0 0.0
    %5647 = vmatpush1.msra.mxu0 0.0
    %5648 = vmatprep.subr.mxu0 0.0
    %5649 = vmatpush1.msra.mxu0 0.0
    %5650 = vmatprep.subr.mxu0 0.0
    %5651 = vmatpush1.msra.mxu0 0.0
    %5652 = vmatprep.subr.mxu0 0.0
    %5653 = vmatpush1.msra.mxu0 0.0
    %5654 = vmatprep.subr.mxu0 0.0
    %5655 = vmatpush1.msra.mxu0 0.0
    %5656 = vmatprep.subr.mxu0 0.0
    %5657 = vmatpush1.msra.mxu0 0.0
    %5658 = vmatprep.subr.mxu0 0.0
    %5659 = vmatpush1.msra.mxu0 0.0
    %5660 = vmatprep.subr.mxu0 0.0
    %5661 = vmatpush1.msra.mxu0 0.0
    %5662 = vmatprep.subr.mxu0 0.0
    %5663 = vmatpush1.msra.mxu0 0.0
    %5664 = vmatprep.subr.mxu0 0.0
    %5665 = vmatpush1.msra.mxu0 0.0
    %5666 = vmatprep.subr.mxu0 0.0
    %5667 = vmatpush1.msra.mxu0 0.0
    %5668 = vmatprep.subr.mxu0 0.0
    %5669 = vmatpush1.msra.mxu0 0.0
    %5670 = vmatprep.subr.mxu0 0.0
    %5671 = vmatpush1.msra.mxu0 0.0
    %5672 = vmatprep.subr.mxu0 0.0
    %5673 = vmatpush1.msra.mxu0 0.0
    %5674 = vmatprep.subr.mxu0 0.0
    %5675 = vmatpush1.msra.mxu0 0.0
    %5676 = vmatprep.subr.mxu0 0.0
    %5677 = vmatpush1.msra.mxu0 0.0
    %5678 = vmatprep.subr.mxu0 0.0
    %5679 = vmatpush1.msra.mxu0 0.0
    %5680 = vmatprep.subr.mxu0 0.0
    %5681 = vmatpush1.msra.mxu0 0.0
    %5682 = vmatprep.subr.mxu0 0.0
    %5683 = vmatpush1.msra.mxu0 0.0
    %5684 = vmatprep.subr.mxu0 0.0
    %5685 = vmatpush1.msra.mxu0 0.0
    %5686 = vmatprep.subr.mxu0 0.0
    %5687 = vmatpush1.msra.mxu0 0.0
    %5688 = vmatprep.subr.mxu0 0.0
    %5689 = vmatpush1.msra.mxu0 0.0
    %5690 = vmatprep.subr.mxu0 0.0
    %5691 = vmatpush1.msra.mxu0 0.0
    %5692 = vmatprep.subr.mxu0 0.0
    %5693 = vmatpush1.msra.mxu0 0.0
    %5694 = vmatprep.subr.mxu0 0.0
    %5695 = vmatpush1.msra.mxu0 0.0
    %5696 = vmatprep.subr.mxu0 0.0
    %5697 = vmatpush1.msra.mxu0 0.0
    %5698 = vmatprep.subr.mxu0 0.0
    %5699 = vmatpush1.msra.mxu0 0.0
    %5700 = vmatprep.subr.mxu0 0.0
    %5701 = vmatpush1.msra.mxu0 0.0
    %5702 = vmatprep.mubr.f32.mxu0 0.0
    %5703 = vmatmul.mubr.f32.gmra.mrb[0].mxu0 %v5633
    %v5704 = vpop.f32.mrb[0].mxu0
    %v5705 = vadd.f32 0.0, %v5704
    %v5706 = vpop.f32.mrb[0].mxu0
    %5707 = vmatprep.mubr.f32.mxu0 0.0
    %5708 = vmatmul.mubr.f32.gmra.mrb[0].mxu0 %v5636
    %v5709 = vpop.f32.mrb[0].mxu0
    %v5710 = vadd.f32 0.0, %v5709
    %v5711 = vpop.f32.mrb[0].mxu0
    %5712 = vdwg.mxu0
    %v5713 = vadd.f32 %v5430, %v5705
    %v5714 = vadd.f32 %v5431, %v5710
    %v5715 = vadd.f32 %v4402, %v5713
    %v5716 = vadd.f32 %v4403, %v5714
    %v5717 = vld [vmem:[#allocation2 + $0x2f0] sm:$0x1]
    %v5718 = vld [vmem:[#allocation2 + $0x2f8] sm:$0x1]
    %v5719 = vsel %vm137, %v5715, 0.0
    %5720 = vadd.xlane.f32.xlu0 %v5719
    %v5721 = vpop.xlane.xlu0 %5720
    %v5722 = vsel %vm137, %v5716, 0.0
    %5723 = vadd.xlane.f32.xlu0 %v5722
    %v5724 = vpop.xlane.xlu0 %5723
    %v5725 = vmul.f32 %v5721, %v1370
    %v5726 = vmul.f32 %v5724, %v1370
    %v5727 = vsub.f32 %v5715, %v5725
    %v5728 = vsub.f32 %v5716, %v5726
    %v5729 = vmul.f32 %v5727, %v5727
    %v5730 = vmul.f32 %v5728, %v5728
    %v5731 = vsel %vm137, %v5729, 0.0
    %5732 = vadd.xlane.f32.xlu0 %v5731
    %v5733 = vpop.xlane.xlu0 %5732
    %v5734 = vsel %vm137, %v5730, 0.0
    %5735 = vadd.xlane.f32.xlu0 %v5734
    %v5736 = vpop.xlane.xlu0 %5735
    %v5737 = vmul.f32 %v5733, %v1370
    %v5738 = vmul.f32 %v5736, %v1370
    %v5739 = vadd.f32 %v5737, 1e-05
    %v5740 = vadd.f32 %v5738, 1e-05
    %v5741 = vrsqrt.pop %v5739
    %v5742 = vrsqrt.pop %v5740
    %v5743 = vmul.f32 %v5727, %v5741
    %v5744 = vmul.f32 %v5728, %v5742
    %v5745 = vlaneseq
    %v5746 = vshrl.u32 %v5745, 7
    %v5747 = vsub.s32 0, %v5746
    %v5748 = vrot.slane %v5717, %v5747
    %v5749 = vmul.f32 %v5743, %v5748
    %v5750 = vmul.f32 %v5744, %v5748
    %v5751 = vlaneseq
    %v5752 = vshrl.u32 %v5751, 7
    %v5753 = vsub.s32 0, %v5752
    %v5754 = vrot.slane %v5718, %v5753
    %v5755 = vadd.f32 %v5749, %v5754
    %v5756 = vadd.f32 %v5750, %v5754
    %v5757 = vld [vmem:[#allocation2 + $0x300] sm:$0xff]
    %v5758 = vld [vmem:[#allocation2 + $0x308] sm:$0xff]
    %v5759 = vld [vmem:[#allocation2 + $0x310] sm:$0xff]
    %v5760 = vld [vmem:[#allocation2 + $0x318] sm:$0xff]
    %v5761 = vld [vmem:[#allocation2 + $0x320] sm:$0x1]
    %v5762 = vlaneseq
    %v5763 = vshrl.u32 %v5762, 7
    %v5764 = vsub.s32 0, %v5763
    %v5765 = vrot.slane %v5761, %v5764
    %v5767 = vsel %vm137, %v5755, 0
    %v5770 = vsel %vm137, %v5756, 0
    %5772 = vmatprep.subr.mxu0 0.0
    %5773 = vmatpush1.msra.mxu0 %v5757
    %5774 = vmatprep.subr.mxu0 0.0
    %5775 = vmatpush1.msra.mxu0 %v5758
    %5776 = vmatprep.subr.mxu0 0.0
    %5777 = vmatpush1.msra.mxu0 %v5759
    %5778 = vmatprep.subr.mxu0 0.0
    %5779 = vmatpush1.msra.mxu0 %v5760
    %5780 = vmatprep.subr.mxu0 0.0
    %5781 = vmatpush1.msra.mxu0 0.0
    %5782 = vmatprep.subr.mxu0 0.0
    %5783 = vmatpush1.msra.mxu0 0.0
    %5784 = vmatprep.subr.mxu0 0.0
    %5785 = vmatpush1.msra.mxu0 0.0
    %5786 = vmatprep.subr.mxu0 0.0
    %5787 = vmatpush1.msra.mxu0 0.0
    %5788 = vmatprep.subr.mxu0 0.0
    %5789 = vmatpush1.msra.mxu0 0.0
    %5790 = vmatprep.subr.mxu0 0.0
    %5791 = vmatpush1.msra.mxu0 0.0
    %5792 = vmatprep.subr.mxu0 0.0
    %5793 = vmatpush1.msra.mxu0 0.0
    %5794 = vmatprep.subr.mxu0 0.0
    %5795 = vmatpush1.msra.mxu0 0.0
    %5796 = vmatprep.subr.mxu0 0.0
    %5797 = vmatpush1.msra.mxu0 0.0
    %5798 = vmatprep.subr.mxu0 0.0
    %5799 = vmatpush1.msra.mxu0 0.0
    %5800 = vmatprep.subr.mxu0 0.0
    %5801 = vmatpush1.msra.mxu0 0.0
    %5802 = vmatprep.subr.mxu0 0.0
    %5803 = vmatpush1.msra.mxu0 0.0
    %5804 = vmatprep.subr.mxu0 0.0
    %5805 = vmatpush1.msra.mxu0 0.0
    %5806 = vmatprep.subr.mxu0 0.0
    %5807 = vmatpush1.msra.mxu0 0.0
    %5808 = vmatprep.subr.mxu0 0.0
    %5809 = vmatpush1.msra.mxu0 0.0
    %5810 = vmatprep.subr.mxu0 0.0
    %5811 = vmatpush1.msra.mxu0 0.0
    %5812 = vmatprep.subr.mxu0 0.0
    %5813 = vmatpush1.msra.mxu0 0.0
    %5814 = vmatprep.subr.mxu0 0.0
    %5815 = vmatpush1.msra.mxu0 0.0
    %5816 = vmatprep.subr.mxu0 0.0
    %5817 = vmatpush1.msra.mxu0 0.0
    %5818 = vmatprep.subr.mxu0 0.0
    %5819 = vmatpush1.msra.mxu0 0.0
    %5820 = vmatprep.subr.mxu0 0.0
    %5821 = vmatpush1.msra.mxu0 0.0
    %5822 = vmatprep.subr.mxu0 0.0
    %5823 = vmatpush1.msra.mxu0 0.0
    %5824 = vmatprep.subr.mxu0 0.0
    %5825 = vmatpush1.msra.mxu0 0.0
    %5826 = vmatprep.subr.mxu0 0.0
    %5827 = vmatpush1.msra.mxu0 0.0
    %5828 = vmatprep.subr.mxu0 0.0
    %5829 = vmatpush1.msra.mxu0 0.0
    %5830 = vmatprep.subr.mxu0 0.0
    %5831 = vmatpush1.msra.mxu0 0.0
    %5832 = vmatprep.subr.mxu0 0.0
    %5833 = vmatpush1.msra.mxu0 0.0
    %5834 = vmatprep.subr.mxu0 0.0
    %5835 = vmatpush1.msra.mxu0 0.0
    %5836 = vmatprep.mubr.f32.mxu0 0.0
    %5837 = vmatmul.mubr.f32.gmra.mrb[0].mxu0 %v5767
    %v5838 = vpop.f32.mrb[0].mxu0
    %v5839 = vadd.f32 %v5765, %v5838
    %v5840 = vpop.f32.mrb[0].mxu0
    %5841 = vmatprep.mubr.f32.mxu0 0.0
    %5842 = vmatmul.mubr.f32.gmra.mrb[0].mxu0 %v5770
    %v5843 = vpop.f32.mrb[0].mxu0
    %v5844 = vadd.f32 %v5765, %v5843
    %v5845 = vpop.f32.mrb[0].mxu0
    %5846 = vdwg.mxu0
    %v5847 = vmax.f32 %v5839, 0.0
    %v5848 = vmax.f32 %v5844, 0.0
    %v5849 = vld [vmem:[#allocation2 + $0x328] sm:$0xff]
    %v5850 = vld [vmem:[#allocation2 + $0x330] sm:$0xff]
    %v5851 = vld [vmem:[#allocation2 + $0x338] sm:$0xff]
    %v5852 = vld [vmem:[#allocation2 + $0x340] sm:$0xff]
    %v5853 = vld [vmem:[#allocation2 + $0x348] sm:$0xff]
    %v5854 = vld [vmem:[#allocation2 + $0x350] sm:$0xff]
    %v5855 = vld [vmem:[#allocation2 + $0x358] sm:$0xff]
    %v5856 = vld [vmem:[#allocation2 + $0x360] sm:$0xff]
    %v5857 = vld [vmem:[#allocation2 + $0x368] sm:$0x1]
    %v5858 = vlaneseq
    %v5859 = vshrl.u32 %v5858, 7
    %v5860 = vsub.s32 0, %v5859
    %v5861 = vrot.slane %v5857, %v5860
    %v5863 = vsel %vm1508, %v5847, 0
    %v5866 = vsel %vm1508, %v5848, 0
    %5868 = vmatprep.subr.mxu0 0.0
    %5869 = vmatpush1.msra.mxu0 %v5849
    %5870 = vmatprep.subr.mxu0 0.0
    %5871 = vmatpush1.msra.mxu0 %v5850
    %5872 = vmatprep.subr.mxu0 0.0
    %5873 = vmatpush1.msra.mxu0 %v5851
    %5874 = vmatprep.subr.mxu0 0.0
    %5875 = vmatpush1.msra.mxu0 %v5852
    %5876 = vmatprep.subr.mxu0 0.0
    %5877 = vmatpush1.msra.mxu0 %v5853
    %5878 = vmatprep.subr.mxu0 0.0
    %5879 = vmatpush1.msra.mxu0 %v5854
    %5880 = vmatprep.subr.mxu0 0.0
    %5881 = vmatpush1.msra.mxu0 %v5855
    %5882 = vmatprep.subr.mxu0 0.0
    %5883 = vmatpush1.msra.mxu0 %v5856
    %5884 = vmatprep.subr.mxu0 0.0
    %5885 = vmatpush1.msra.mxu0 0.0
    %5886 = vmatprep.subr.mxu0 0.0
    %5887 = vmatpush1.msra.mxu0 0.0
    %5888 = vmatprep.subr.mxu0 0.0
    %5889 = vmatpush1.msra.mxu0 0.0
    %5890 = vmatprep.subr.mxu0 0.0
    %5891 = vmatpush1.msra.mxu0 0.0
    %5892 = vmatprep.subr.mxu0 0.0
    %5893 = vmatpush1.msra.mxu0 0.0
    %5894 = vmatprep.subr.mxu0 0.0
    %5895 = vmatpush1.msra.mxu0 0.0
    %5896 = vmatprep.subr.mxu0 0.0
    %5897 = vmatpush1.msra.mxu0 0.0
    %5898 = vmatprep.subr.mxu0 0.0
    %5899 = vmatpush1.msra.mxu0 0.0
    %5900 = vmatprep.subr.mxu0 0.0
    %5901 = vmatpush1.msra.mxu0 0.0
    %5902 = vmatprep.subr.mxu0 0.0
    %5903 = vmatpush1.msra.mxu0 0.0
    %5904 = vmatprep.subr.mxu0 0.0
    %5905 = vmatpush1.msra.mxu0 0.0
    %5906 = vmatprep.subr.mxu0 0.0
    %5907 = vmatpush1.msra.mxu0 0.0
    %5908 = vmatprep.subr.mxu0 0.0
    %5909 = vmatpush1.msra.mxu0 0.0
    %5910 = vmatprep.subr.mxu0 0.0
    %5911 = vmatpush1.msra.mxu0 0.0
    %5912 = vmatprep.subr.mxu0 0.0
    %5913 = vmatpush1.msra.mxu0 0.0
    %5914 = vmatprep.subr.mxu0 0.0
    %5915 = vmatpush1.msra.mxu0 0.0
    %5916 = vmatprep.subr.mxu0 0.0
    %5917 = vmatpush1.msra.mxu0 0.0
    %5918 = vmatprep.subr.mxu0 0.0
    %5919 = vmatpush1.msra.mxu0 0.0
    %5920 = vmatprep.subr.mxu0 0.0
    %5921 = vmatpush1.msra.mxu0 0.0
    %5922 = vmatprep.subr.mxu0 0.0
    %5923 = vmatpush1.msra.mxu0 0.0
    %5924 = vmatprep.subr.mxu0 0.0
    %5925 = vmatpush1.msra.mxu0 0.0
    %5926 = vmatprep.subr.mxu0 0.0
    %5927 = vmatpush1.msra.mxu0 0.0
    %5928 = vmatprep.subr.mxu0 0.0
    %5929 = vmatpush1.msra.mxu0 0.0
    %5930 = vmatprep.subr.mxu0 0.0
    %5931 = vmatpush1.msra.mxu0 0.0
    %5932 = vmatprep.mubr.f32.mxu0 0.0
    %5933 = vmatmul.mubr.f32.gmra.mrb[0].mxu0 %v5863
    %v5934 = vpop.f32.mrb[0].mxu0
    %v5935 = vadd.f32 %v5861, %v5934
    %v5936 = vpop.f32.mrb[0].mxu0
    %5937 = vmatprep.mubr.f32.mxu0 0.0
    %5938 = vmatmul.mubr.f32.gmra.mrb[0].mxu0 %v5866
    %v5939 = vpop.f32.mrb[0].mxu0
    %v5940 = vadd.f32 %v5861, %v5939
    %v5941 = vpop.f32.mrb[0].mxu0
    %5942 = vdwg.mxu0
    %v5943 = vadd.f32 %v5755, %v5935
    %v5944 = vadd.f32 %v5756, %v5940
    %v5945 = vld [vmem:[#allocation2 + $0x370] sm:$0x1]
    %v5946 = vld [vmem:[#allocation2 + $0x378] sm:$0x1]
    %v5947 = vsel %vm137, %v5943, 0.0
    %5948 = vadd.xlane.f32.xlu0 %v5947
    %v5949 = vpop.xlane.xlu0 %5948
    %v5950 = vsel %vm137, %v5944, 0.0
    %5951 = vadd.xlane.f32.xlu0 %v5950
    %v5952 = vpop.xlane.xlu0 %5951
    %v5953 = vmul.f32 %v5949, %v1370
    %v5954 = vmul.f32 %v5952, %v1370
    %v5955 = vsub.f32 %v5943, %v5953
    %v5956 = vsub.f32 %v5944, %v5954
    %v5957 = vmul.f32 %v5955, %v5955
    %v5958 = vmul.f32 %v5956, %v5956
    %v5959 = vsel %vm137, %v5957, 0.0
    %5960 = vadd.xlane.f32.xlu0 %v5959
    %v5961 = vpop.xlane.xlu0 %5960
    %v5962 = vsel %vm137, %v5958, 0.0
    %5963 = vadd.xlane.f32.xlu0 %v5962
    %v5964 = vpop.xlane.xlu0 %5963
    %v5965 = vmul.f32 %v5961, %v1370
    %v5966 = vmul.f32 %v5964, %v1370
    %v5967 = vadd.f32 %v5965, 1e-05
    %v5968 = vadd.f32 %v5966, 1e-05
    %v5969 = vrsqrt.pop %v5967
    %v5970 = vrsqrt.pop %v5968
    %v5971 = vmul.f32 %v5955, %v5969
    %v5972 = vmul.f32 %v5956, %v5970
    %v5973 = vlaneseq
    %v5974 = vshrl.u32 %v5973, 7
    %v5975 = vsub.s32 0, %v5974
    %v5976 = vrot.slane %v5945, %v5975
    %v5977 = vmul.f32 %v5971, %v5976
    %v5978 = vmul.f32 %v5972, %v5976
    %v5979 = vlaneseq
    %v5980 = vshrl.u32 %v5979, 7
    %v5981 = vsub.s32 0, %v5980
    %v5982 = vrot.slane %v5946, %v5981
    %v5983 = vadd.f32 %v5977, %v5982
    %v5984 = vadd.f32 %v5978, %v5982
    %v5985 = vld [vmem:[#allocation2 + $0x380] sm:$0xff]
    %v5986 = vld [vmem:[#allocation2 + $0x388] sm:$0xff]
    %v5987 = vld [vmem:[#allocation2 + $0x390] sm:$0xff]
    %v5988 = vld [vmem:[#allocation2 + $0x398] sm:$0xff]
    %v5989 = vld [vmem:[#allocation2 + $0x3a0] sm:$0x1]
    %v5990 = vlaneseq
    %v5991 = vshrl.u32 %v5990, 7
    %v5992 = vsub.s32 0, %v5991
    %v5993 = vrot.slane %v5989, %v5992
    %v5995 = vsel %vm137, %v5983, 0
    %v5998 = vsel %vm137, %v5984, 0
    %6000 = vmatprep.subr.mxu0 0.0
    %6001 = vmatpush1.msra.mxu0 %v5985
    %6002 = vmatprep.subr.mxu0 0.0
    %6003 = vmatpush1.msra.mxu0 %v5986
    %6004 = vmatprep.subr.mxu0 0.0
    %6005 = vmatpush1.msra.mxu0 %v5987
    %6006 = vmatprep.subr.mxu0 0.0
    %6007 = vmatpush1.msra.mxu0 %v5988
    %6008 = vmatprep.subr.mxu0 0.0
    %6009 = vmatpush1.msra.mxu0 0.0
    %6010 = vmatprep.subr.mxu0 0.0
    %6011 = vmatpush1.msra.mxu0 0.0
    %6012 = vmatprep.subr.mxu0 0.0
    %6013 = vmatpush1.msra.mxu0 0.0
    %6014 = vmatprep.subr.mxu0 0.0
    %6015 = vmatpush1.msra.mxu0 0.0
    %6016 = vmatprep.subr.mxu0 0.0
    %6017 = vmatpush1.msra.mxu0 0.0
    %6018 = vmatprep.subr.mxu0 0.0
    %6019 = vmatpush1.msra.mxu0 0.0
    %6020 = vmatprep.subr.mxu0 0.0
    %6021 = vmatpush1.msra.mxu0 0.0
    %6022 = vmatprep.subr.mxu0 0.0
    %6023 = vmatpush1.msra.mxu0 0.0
    %6024 = vmatprep.subr.mxu0 0.0
    %6025 = vmatpush1.msra.mxu0 0.0
    %6026 = vmatprep.subr.mxu0 0.0
    %6027 = vmatpush1.msra.mxu0 0.0
    %6028 = vmatprep.subr.mxu0 0.0
    %6029 = vmatpush1.msra.mxu0 0.0
    %6030 = vmatprep.subr.mxu0 0.0
    %6031 = vmatpush1.msra.mxu0 0.0
    %6032 = vmatprep.subr.mxu0 0.0
    %6033 = vmatpush1.msra.mxu0 0.0
    %6034 = vmatprep.subr.mxu0 0.0
    %6035 = vmatpush1.msra.mxu0 0.0
    %6036 = vmatprep.subr.mxu0 0.0
    %6037 = vmatpush1.msra.mxu0 0.0
    %6038 = vmatprep.subr.mxu0 0.0
    %6039 = vmatpush1.msra.mxu0 0.0
    %6040 = vmatprep.subr.mxu0 0.0
    %6041 = vmatpush1.msra.mxu0 0.0
    %6042 = vmatprep.subr.mxu0 0.0
    %6043 = vmatpush1.msra.mxu0 0.0
    %6044 = vmatprep.subr.mxu0 0.0
    %6045 = vmatpush1.msra.mxu0 0.0
    %6046 = vmatprep.subr.mxu0 0.0
    %6047 = vmatpush1.msra.mxu0 0.0
    %6048 = vmatprep.subr.mxu0 0.0
    %6049 = vmatpush1.msra.mxu0 0.0
    %6050 = vmatprep.subr.mxu0 0.0
    %6051 = vmatpush1.msra.mxu0 0.0
    %6052 = vmatprep.subr.mxu0 0.0
    %6053 = vmatpush1.msra.mxu0 0.0
    %6054 = vmatprep.subr.mxu0 0.0
    %6055 = vmatpush1.msra.mxu0 0.0
    %6056 = vmatprep.subr.mxu0 0.0
    %6057 = vmatpush1.msra.mxu0 0.0
    %6058 = vmatprep.subr.mxu0 0.0
    %6059 = vmatpush1.msra.mxu0 0.0
    %6060 = vmatprep.subr.mxu0 0.0
    %6061 = vmatpush1.msra.mxu0 0.0
    %6062 = vmatprep.subr.mxu0 0.0
    %6063 = vmatpush1.msra.mxu0 0.0
    %6064 = vmatprep.mubr.f32.mxu0 0.0
    %6065 = vmatmul.mubr.f32.gmra.mrb[0].mxu0 %v5995
    %v6066 = vpop.f32.mrb[0].mxu0
    %v6067 = vadd.f32 %v5993, %v6066
    %v6068 = vpop.f32.mrb[0].mxu0
    %6069 = vmatprep.mubr.f32.mxu0 0.0
    %6070 = vmatmul.mubr.f32.gmra.mrb[0].mxu0 %v5998
    %v6071 = vpop.f32.mrb[0].mxu0
    %v6072 = vadd.f32 %v5993, %v6071
    %v6073 = vpop.f32.mrb[0].mxu0
    %6074 = vdwg.mxu0
    %v6075 = vld [vmem:[#allocation2 + $0x3a8] sm:$0xff]
    %v6076 = vld [vmem:[#allocation2 + $0x3b0] sm:$0xff]
    %v6077 = vld [vmem:[#allocation2 + $0x3b8] sm:$0xff]
    %v6078 = vld [vmem:[#allocation2 + $0x3c0] sm:$0xff]
    %v6079 = vld [vmem:[#allocation2 + $0x3c8] sm:$0x1]
    %6082 = vrot.lane.b32.xlu0 %v6067, 96
    %v6083 = vpop.permute.xlu0 %6082
    %6084 = vrot.lane.b32.xlu0 %v6072, 96
    %v6085 = vpop.permute.xlu0 %6084
    %v6086 = vsel %vm230, %v6067, 0
    %v6088 = vsel %vm230, %v6072, 0
    %v6090 = vsel %vm230, %v6083, 0
    %v6092 = vsel %vm230, %v6085, 0
    %6094 = vmatprep.subr.mxu0 0.0
    %6095 = vmatpush1.xpose.msra.mxu0 %v6090
    %6096 = vmatprep.subr.mxu0 0.0
    %6097 = vmatpush1.xpose.msra.mxu0 %v6092
    %6098 = vmatprep.subr.mxu0 0.0
    %6099 = vmatpush1.xpose.msra.mxu0 0.0
    %6100 = vmatprep.subr.mxu0 0.0
    %6101 = vmatpush1.xpose.msra.mxu0 0.0
    %6102 = vmatprep.subr.mxu0 0.0
    %6103 = vmatpush1.xpose.msra.mxu0 0.0
    %6104 = vmatprep.subr.mxu0 0.0
    %6105 = vmatpush1.xpose.msra.mxu0 0.0
    %6106 = vmatprep.subr.mxu0 0.0
    %6107 = vmatpush1.xpose.msra.mxu0 0.0
    %6108 = vmatprep.subr.mxu0 0.0
    %6109 = vmatpush1.xpose.msra.mxu0 0.0
    %6110 = vmatprep.subr.mxu0 0.0
    %6111 = vmatpush1.xpose.msra.mxu0 0.0
    %6112 = vmatprep.subr.mxu0 0.0
    %6113 = vmatpush1.xpose.msra.mxu0 0.0
    %6114 = vmatprep.subr.mxu0 0.0
    %6115 = vmatpush1.xpose.msra.mxu0 0.0
    %6116 = vmatprep.subr.mxu0 0.0
    %6117 = vmatpush1.xpose.msra.mxu0 0.0
    %6118 = vmatprep.subr.mxu0 0.0
    %6119 = vmatpush1.xpose.msra.mxu0 0.0
    %6120 = vmatprep.subr.mxu0 0.0
    %6121 = vmatpush1.xpose.msra.mxu0 0.0
    %6122 = vmatprep.subr.mxu0 0.0
    %6123 = vmatpush1.xpose.msra.mxu0 0.0
    %6124 = vmatprep.subr.mxu0 0.0
    %6125 = vmatpush1.xpose.msra.mxu0 0.0
    %6126 = vmatprep.subr.mxu0 0.0
    %6127 = vmatpush1.xpose.msra.mxu0 0.0
    %6128 = vmatprep.subr.mxu0 0.0
    %6129 = vmatpush1.xpose.msra.mxu0 0.0
    %6130 = vmatprep.subr.mxu0 0.0
    %6131 = vmatpush1.xpose.msra.mxu0 0.0
    %6132 = vmatprep.subr.mxu0 0.0
    %6133 = vmatpush1.xpose.msra.mxu0 0.0
    %6134 = vmatprep.subr.mxu0 0.0
    %6135 = vmatpush1.xpose.msra.mxu0 0.0
    %6136 = vmatprep.subr.mxu0 0.0
    %6137 = vmatpush1.xpose.msra.mxu0 0.0
    %6138 = vmatprep.subr.mxu0 0.0
    %6139 = vmatpush1.xpose.msra.mxu0 0.0
    %6140 = vmatprep.subr.mxu0 0.0
    %6141 = vmatpush1.xpose.msra.mxu0 0.0
    %6142 = vmatprep.subr.mxu0 0.0
    %6143 = vmatpush1.xpose.msra.mxu0 0.0
    %6144 = vmatprep.subr.mxu0 0.0
    %6145 = vmatpush1.xpose.msra.mxu0 0.0
    %6146 = vmatprep.subr.mxu0 0.0
    %6147 = vmatpush1.xpose.msra.mxu0 0.0
    %6148 = vmatprep.subr.mxu0 0.0
    %6149 = vmatpush1.xpose.msra.mxu0 0.0
    %6150 = vmatprep.subr.mxu0 0.0
    %6151 = vmatpush1.xpose.msra.mxu0 0.0
    %6152 = vmatprep.subr.mxu0 0.0
    %6153 = vmatpush1.xpose.msra.mxu0 0.0
    %6154 = vmatprep.subr.mxu0 0.0
    %6155 = vmatpush1.xpose.msra.mxu0 0.0
    %6156 = vmatprep.subr.mxu0 0.0
    %6157 = vmatpush1.xpose.msra.mxu0 0.0
    %6158 = vmatprep.mubr.f32.mxu0 0.0
    %6159 = vmatmul.mubr.f32.gmra.mrb[0].mxu0 %v6086
    %v6160 = vpop.f32.mrb[0].mxu0
    %v6161 = vadd.f32 %v27, %v6160
    %v6162 = vpop.f32.mrb[0].mxu0
    %6163 = vmatprep.mubr.f32.mxu0 0.0
    %6164 = vmatmul.mubr.f32.gmra.mrb[0].mxu0 %v6088
    %v6165 = vpop.f32.mrb[0].mxu0
    %v6166 = vadd.f32 %v28, %v6165
    %v6167 = vpop.f32.mrb[0].mxu0
    %6168 = vdwg.mxu0
    %v6169 = vsel %vm314, %v6161, -inf
    %6170 = vmax.xlane.f32.xlu0 %v6169
    %v6171 = vpop.xlane.xlu0 %6170
    %v6172 = vsel %vm314, %v6166, -inf
    %6173 = vmax.xlane.f32.xlu0 %v6172
    %v6174 = vpop.xlane.xlu0 %6173
    %v6175 = vsub.f32 %v6161, %v6171
    %v6176 = vsub.f32 %v6166, %v6174
    %v6177 = vmul.f32 %v6175, 1.442695
    %v6178 = vpow.pop %v6177
    %v6179 = vmul.f32 %v6176, 1.442695
    %v6180 = vpow.pop %v6179
    %v6181 = vsel %vm314, %v6178, 0.0
    %6182 = vadd.xlane.f32.xlu0 %v6181
    %v6183 = vpop.xlane.xlu0 %6182
    %v6184 = vsel %vm314, %v6180, 0.0
    %6185 = vadd.xlane.f32.xlu0 %v6184
    %v6186 = vpop.xlane.xlu0 %6185
    %v6187 = vrcp.pop %v6183
    %v6188 = vrcp.pop %v6186
    %v6189 = vmul.f32 %v6178, %v6187
    %v6190 = vmul.f32 %v6180, %v6188
    %6191 = vrot.lane.b32.xlu0 %v6067, 64
    %v6192 = vpop.permute.xlu0 %6191
    %6193 = vrot.lane.b32.xlu0 %v6072, 64
    %v6194 = vpop.permute.xlu0 %6193
    %v6198 = vsel %vm314, %v6189, 0
    %v6201 = vsel %vm314, %v6190, 0
    %6203 = vmatprep.subr.mxu0 0.0
    %6204 = vmatpush1.msra.mxu0 %v6192
    %6205 = vmatprep.subr.mxu0 0.0
    %6206 = vmatpush1.msra.mxu0 %v6194
    %6207 = vmatprep.subr.mxu0 0.0
    %6208 = vmatpush1.msra.mxu0 0.0
    %6209 = vmatprep.subr.mxu0 0.0
    %6210 = vmatpush1.msra.mxu0 0.0
    %6211 = vmatprep.subr.mxu0 0.0
    %6212 = vmatpush1.msra.mxu0 0.0
    %6213 = vmatprep.subr.mxu0 0.0
    %6214 = vmatpush1.msra.mxu0 0.0
    %6215 = vmatprep.subr.mxu0 0.0
    %6216 = vmatpush1.msra.mxu0 0.0
    %6217 = vmatprep.subr.mxu0 0.0
    %6218 = vmatpush1.msra.mxu0 0.0
    %6219 = vmatprep.subr.mxu0 0.0
    %6220 = vmatpush1.msra.mxu0 0.0
    %6221 = vmatprep.subr.mxu0 0.0
    %6222 = vmatpush1.msra.mxu0 0.0
    %6223 = vmatprep.subr.mxu0 0.0
    %6224 = vmatpush1.msra.mxu0 0.0
    %6225 = vmatprep.subr.mxu0 0.0
    %6226 = vmatpush1.msra.mxu0 0.0
    %6227 = vmatprep.subr.mxu0 0.0
    %6228 = vmatpush1.msra.mxu0 0.0
    %6229 = vmatprep.subr.mxu0 0.0
    %6230 = vmatpush1.msra.mxu0 0.0
    %6231 = vmatprep.subr.mxu0 0.0
    %6232 = vmatpush1.msra.mxu0 0.0
    %6233 = vmatprep.subr.mxu0 0.0
    %6234 = vmatpush1.msra.mxu0 0.0
    %6235 = vmatprep.subr.mxu0 0.0
    %6236 = vmatpush1.msra.mxu0 0.0
    %6237 = vmatprep.subr.mxu0 0.0
    %6238 = vmatpush1.msra.mxu0 0.0
    %6239 = vmatprep.subr.mxu0 0.0
    %6240 = vmatpush1.msra.mxu0 0.0
    %6241 = vmatprep.subr.mxu0 0.0
    %6242 = vmatpush1.msra.mxu0 0.0
    %6243 = vmatprep.subr.mxu0 0.0
    %6244 = vmatpush1.msra.mxu0 0.0
    %6245 = vmatprep.subr.mxu0 0.0
    %6246 = vmatpush1.msra.mxu0 0.0
    %6247 = vmatprep.subr.mxu0 0.0
    %6248 = vmatpush1.msra.mxu0 0.0
    %6249 = vmatprep.subr.mxu0 0.0
    %6250 = vmatpush1.msra.mxu0 0.0
    %6251 = vmatprep.subr.mxu0 0.0
    %6252 = vmatpush1.msra.mxu0 0.0
    %6253 = vmatprep.subr.mxu0 0.0
    %6254 = vmatpush1.msra.mxu0 0.0
    %6255 = vmatprep.subr.mxu0 0.0
    %6256 = vmatpush1.msra.mxu0 0.0
    %6257 = vmatprep.subr.mxu0 0.0
    %6258 = vmatpush1.msra.mxu0 0.0
    %6259 = vmatprep.subr.mxu0 0.0
    %6260 = vmatpush1.msra.mxu0 0.0
    %6261 = vmatprep.subr.mxu0 0.0
    %6262 = vmatpush1.msra.mxu0 0.0
    %6263 = vmatprep.subr.mxu0 0.0
    %6264 = vmatpush1.msra.mxu0 0.0
    %6265 = vmatprep.subr.mxu0 0.0
    %6266 = vmatpush1.msra.mxu0 0.0
    %6267 = vmatprep.mubr.f32.mxu0 0.0
    %6268 = vmatmul.mubr.f32.gmra.mrb[0].mxu0 %v6198
    %v6269 = vpop.f32.mrb[0].mxu0
    %v6270 = vadd.f32 0.0, %v6269
    %v6271 = vpop.f32.mrb[0].mxu0
    %6272 = vmatprep.mubr.f32.mxu0 0.0
    %6273 = vmatmul.mubr.f32.gmra.mrb[0].mxu0 %v6201
    %v6274 = vpop.f32.mrb[0].mxu0
    %v6275 = vadd.f32 0.0, %v6274
    %v6276 = vpop.f32.mrb[0].mxu0
    %6277 = vdwg.mxu0
    %v6279 = vsel %vm230, %v6270, 0
    %v6282 = vsel %vm230, %v6275, 0
    %6284 = vmatprep.subr.mxu0 0.0
    %6285 = vmatpush1.msra.mxu0 %v6075
    %6286 = vmatprep.subr.mxu0 0.0
    %6287 = vmatpush1.msra.mxu0 0.0
    %6288 = vmatprep.subr.mxu0 0.0
    %6289 = vmatpush1.msra.mxu0 0.0
    %6290 = vmatprep.subr.mxu0 0.0
    %6291 = vmatpush1.msra.mxu0 0.0
    %6292 = vmatprep.subr.mxu0 0.0
    %6293 = vmatpush1.msra.mxu0 0.0
    %6294 = vmatprep.subr.mxu0 0.0
    %6295 = vmatpush1.msra.mxu0 0.0
    %6296 = vmatprep.subr.mxu0 0.0
    %6297 = vmatpush1.msra.mxu0 0.0
    %6298 = vmatprep.subr.mxu0 0.0
    %6299 = vmatpush1.msra.mxu0 0.0
    %6300 = vmatprep.subr.mxu0 0.0
    %6301 = vmatpush1.msra.mxu0 0.0
    %6302 = vmatprep.subr.mxu0 0.0
    %6303 = vmatpush1.msra.mxu0 0.0
    %6304 = vmatprep.subr.mxu0 0.0
    %6305 = vmatpush1.msra.mxu0 0.0
    %6306 = vmatprep.subr.mxu0 0.0
    %6307 = vmatpush1.msra.mxu0 0.0
    %6308 = vmatprep.subr.mxu0 0.0
    %6309 = vmatpush1.msra.mxu0 0.0
    %6310 = vmatprep.subr.mxu0 0.0
    %6311 = vmatpush1.msra.mxu0 0.0
    %6312 = vmatprep.subr.mxu0 0.0
    %6313 = vmatpush1.msra.mxu0 0.0
    %6314 = vmatprep.subr.mxu0 0.0
    %6315 = vmatpush1.msra.mxu0 0.0
    %6316 = vmatprep.subr.mxu0 0.0
    %6317 = vmatpush1.msra.mxu0 0.0
    %6318 = vmatprep.subr.mxu0 0.0
    %6319 = vmatpush1.msra.mxu0 0.0
    %6320 = vmatprep.subr.mxu0 0.0
    %6321 = vmatpush1.msra.mxu0 0.0
    %6322 = vmatprep.subr.mxu0 0.0
    %6323 = vmatpush1.msra.mxu0 0.0
    %6324 = vmatprep.subr.mxu0 0.0
    %6325 = vmatpush1.msra.mxu0 0.0
    %6326 = vmatprep.subr.mxu0 0.0
    %6327 = vmatpush1.msra.mxu0 0.0
    %6328 = vmatprep.subr.mxu0 0.0
    %6329 = vmatpush1.msra.mxu0 0.0
    %6330 = vmatprep.subr.mxu0 0.0
    %6331 = vmatpush1.msra.mxu0 0.0
    %6332 = vmatprep.subr.mxu0 0.0
    %6333 = vmatpush1.msra.mxu0 0.0
    %6334 = vmatprep.subr.mxu0 0.0
    %6335 = vmatpush1.msra.mxu0 0.0
    %6336 = vmatprep.subr.mxu0 0.0
    %6337 = vmatpush1.msra.mxu0 0.0
    %6338 = vmatprep.subr.mxu0 0.0
    %6339 = vmatpush1.msra.mxu0 0.0
    %6340 = vmatprep.subr.mxu0 0.0
    %6341 = vmatpush1.msra.mxu0 0.0
    %6342 = vmatprep.subr.mxu0 0.0
    %6343 = vmatpush1.msra.mxu0 0.0
    %6344 = vmatprep.subr.mxu0 0.0
    %6345 = vmatpush1.msra.mxu0 0.0
    %6346 = vmatprep.subr.mxu0 0.0
    %6347 = vmatpush1.msra.mxu0 0.0
    %6348 = vmatprep.mubr.f32.mxu0 0.0
    %6349 = vmatmul.mubr.f32.gmra.mrb[0].mxu0 %v6279
    %v6350 = vpop.f32.mrb[0].mxu0
    %v6351 = vadd.f32 0.0, %v6350
    %v6352 = vpop.f32.mrb[0].mxu0
    %6353 = vmatprep.mubr.f32.mxu0 0.0
    %6354 = vmatmul.mubr.f32.gmra.mrb[0].mxu0 %v6282
    %v6355 = vpop.f32.mrb[0].mxu0
    %v6356 = vadd.f32 0.0, %v6355
    %v6357 = vpop.f32.mrb[0].mxu0
    %6358 = vdwg.mxu0
    %v6359 = vlaneseq
    %v6360 = vshrl.u32 %v6359, 7
    %v6361 = vsub.s32 0, %v6360
    %v6362 = vrot.slane %v6079, %v6361
    %v6363 = vadd.f32 %v6362, %v6351
    %v6364 = vadd.f32 %v6362, %v6356
    %6365 = vrot.lane.b32.xlu0 %v6067, 120
    %v6366 = vpop.permute.xlu0 %6365
    %6367 = vrot.lane.b32.xlu0 %v6072, 120
    %v6368 = vpop.permute.xlu0 %6367
    %6369 = vrot.lane.b32.xlu0 %v6067, 88
    %v6370 = vpop.permute.xlu0 %6369
    %6371 = vrot.lane.b32.xlu0 %v6072, 88
    %v6372 = vpop.permute.xlu0 %6371
    %v6373 = vsel %vm230, %v6366, 0
    %v6375 = vsel %vm230, %v6368, 0
    %v6377 = vsel %vm230, %v6370, 0
    %v6379 = vsel %vm230, %v6372, 0
    %6381 = vmatprep.subr.mxu0 0.0
    %6382 = vmatpush1.xpose.msra.mxu0 %v6377
    %6383 = vmatprep.subr.mxu0 0.0
    %6384 = vmatpush1.xpose.msra.mxu0 %v6379
    %6385 = vmatprep.subr.mxu0 0.0
    %6386 = vmatpush1.xpose.msra.mxu0 0.0
    %6387 = vmatprep.subr.mxu0 0.0
    %6388 = vmatpush1.xpose.msra.mxu0 0.0
    %6389 = vmatprep.subr.mxu0 0.0
    %6390 = vmatpush1.xpose.msra.mxu0 0.0
    %6391 = vmatprep.subr.mxu0 0.0
    %6392 = vmatpush1.xpose.msra.mxu0 0.0
    %6393 = vmatprep.subr.mxu0 0.0
    %6394 = vmatpush1.xpose.msra.mxu0 0.0
    %6395 = vmatprep.subr.mxu0 0.0
    %6396 = vmatpush1.xpose.msra.mxu0 0.0
    %6397 = vmatprep.subr.mxu0 0.0
    %6398 = vmatpush1.xpose.msra.mxu0 0.0
    %6399 = vmatprep.subr.mxu0 0.0
    %6400 = vmatpush1.xpose.msra.mxu0 0.0
    %6401 = vmatprep.subr.mxu0 0.0
    %6402 = vmatpush1.xpose.msra.mxu0 0.0
    %6403 = vmatprep.subr.mxu0 0.0
    %6404 = vmatpush1.xpose.msra.mxu0 0.0
    %6405 = vmatprep.subr.mxu0 0.0
    %6406 = vmatpush1.xpose.msra.mxu0 0.0
    %6407 = vmatprep.subr.mxu0 0.0
    %6408 = vmatpush1.xpose.msra.mxu0 0.0
    %6409 = vmatprep.subr.mxu0 0.0
    %6410 = vmatpush1.xpose.msra.mxu0 0.0
    %6411 = vmatprep.subr.mxu0 0.0
    %6412 = vmatpush1.xpose.msra.mxu0 0.0
    %6413 = vmatprep.subr.mxu0 0.0
    %6414 = vmatpush1.xpose.msra.mxu0 0.0
    %6415 = vmatprep.subr.mxu0 0.0
    %6416 = vmatpush1.xpose.msra.mxu0 0.0
    %6417 = vmatprep.subr.mxu0 0.0
    %6418 = vmatpush1.xpose.msra.mxu0 0.0
    %6419 = vmatprep.subr.mxu0 0.0
    %6420 = vmatpush1.xpose.msra.mxu0 0.0
    %6421 = vmatprep.subr.mxu0 0.0
    %6422 = vmatpush1.xpose.msra.mxu0 0.0
    %6423 = vmatprep.subr.mxu0 0.0
    %6424 = vmatpush1.xpose.msra.mxu0 0.0
    %6425 = vmatprep.subr.mxu0 0.0
    %6426 = vmatpush1.xpose.msra.mxu0 0.0
    %6427 = vmatprep.subr.mxu0 0.0
    %6428 = vmatpush1.xpose.msra.mxu0 0.0
    %6429 = vmatprep.subr.mxu0 0.0
    %6430 = vmatpush1.xpose.msra.mxu0 0.0
    %6431 = vmatprep.subr.mxu0 0.0
    %6432 = vmatpush1.xpose.msra.mxu0 0.0
    %6433 = vmatprep.subr.mxu0 0.0
    %6434 = vmatpush1.xpose.msra.mxu0 0.0
    %6435 = vmatprep.subr.mxu0 0.0
    %6436 = vmatpush1.xpose.msra.mxu0 0.0
    %6437 = vmatprep.subr.mxu0 0.0
    %6438 = vmatpush1.xpose.msra.mxu0 0.0
    %6439 = vmatprep.subr.mxu0 0.0
    %6440 = vmatpush1.xpose.msra.mxu0 0.0
    %6441 = vmatprep.subr.mxu0 0.0
    %6442 = vmatpush1.xpose.msra.mxu0 0.0
    %6443 = vmatprep.subr.mxu0 0.0
    %6444 = vmatpush1.xpose.msra.mxu0 0.0
    %6445 = vmatprep.mubr.f32.mxu0 0.0
    %6446 = vmatmul.mubr.f32.gmra.mrb[0].mxu0 %v6373
    %v6447 = vpop.f32.mrb[0].mxu0
    %v6448 = vadd.f32 %v27, %v6447
    %v6449 = vpop.f32.mrb[0].mxu0
    %6450 = vmatprep.mubr.f32.mxu0 0.0
    %6451 = vmatmul.mubr.f32.gmra.mrb[0].mxu0 %v6375
    %v6452 = vpop.f32.mrb[0].mxu0
    %v6453 = vadd.f32 %v28, %v6452
    %v6454 = vpop.f32.mrb[0].mxu0
    %6455 = vdwg.mxu0
    %v6456 = vsel %vm314, %v6448, -inf
    %6457 = vmax.xlane.f32.xlu0 %v6456
    %v6458 = vpop.xlane.xlu0 %6457
    %v6459 = vsel %vm314, %v6453, -inf
    %6460 = vmax.xlane.f32.xlu0 %v6459
    %v6461 = vpop.xlane.xlu0 %6460
    %v6462 = vsub.f32 %v6448, %v6458
    %v6463 = vsub.f32 %v6453, %v6461
    %v6464 = vmul.f32 %v6462, 1.442695
    %v6465 = vpow.pop %v6464
    %v6466 = vmul.f32 %v6463, 1.442695
    %v6467 = vpow.pop %v6466
    %v6468 = vsel %vm314, %v6465, 0.0
    %6469 = vadd.xlane.f32.xlu0 %v6468
    %v6470 = vpop.xlane.xlu0 %6469
    %v6471 = vsel %vm314, %v6467, 0.0
    %6472 = vadd.xlane.f32.xlu0 %v6471
    %v6473 = vpop.xlane.xlu0 %6472
    %v6474 = vrcp.pop %v6470
    %v6475 = vrcp.pop %v6473
    %v6476 = vmul.f32 %v6465, %v6474
    %v6477 = vmul.f32 %v6467, %v6475
    %6478 = vrot.lane.b32.xlu0 %v6067, 56
    %v6479 = vpop.permute.xlu0 %6478
    %6480 = vrot.lane.b32.xlu0 %v6072, 56
    %v6481 = vpop.permute.xlu0 %6480
    %v6485 = vsel %vm314, %v6476, 0
    %v6488 = vsel %vm314, %v6477, 0
    %6490 = vmatprep.subr.mxu0 0.0
    %6491 = vmatpush1.msra.mxu0 %v6479
    %6492 = vmatprep.subr.mxu0 0.0
    %6493 = vmatpush1.msra.mxu0 %v6481
    %6494 = vmatprep.subr.mxu0 0.0
    %6495 = vmatpush1.msra.mxu0 0.0
    %6496 = vmatprep.subr.mxu0 0.0
    %6497 = vmatpush1.msra.mxu0 0.0
    %6498 = vmatprep.subr.mxu0 0.0
    %6499 = vmatpush1.msra.mxu0 0.0
    %6500 = vmatprep.subr.mxu0 0.0
    %6501 = vmatpush1.msra.mxu0 0.0
    %6502 = vmatprep.subr.mxu0 0.0
    %6503 = vmatpush1.msra.mxu0 0.0
    %6504 = vmatprep.subr.mxu0 0.0
    %6505 = vmatpush1.msra.mxu0 0.0
    %6506 = vmatprep.subr.mxu0 0.0
    %6507 = vmatpush1.msra.mxu0 0.0
    %6508 = vmatprep.subr.mxu0 0.0
    %6509 = vmatpush1.msra.mxu0 0.0
    %6510 = vmatprep.subr.mxu0 0.0
    %6511 = vmatpush1.msra.mxu0 0.0
    %6512 = vmatprep.subr.mxu0 0.0
    %6513 = vmatpush1.msra.mxu0 0.0
    %6514 = vmatprep.subr.mxu0 0.0
    %6515 = vmatpush1.msra.mxu0 0.0
    %6516 = vmatprep.subr.mxu0 0.0
    %6517 = vmatpush1.msra.mxu0 0.0
    %6518 = vmatprep.subr.mxu0 0.0
    %6519 = vmatpush1.msra.mxu0 0.0
    %6520 = vmatprep.subr.mxu0 0.0
    %6521 = vmatpush1.msra.mxu0 0.0
    %6522 = vmatprep.subr.mxu0 0.0
    %6523 = vmatpush1.msra.mxu0 0.0
    %6524 = vmatprep.subr.mxu0 0.0
    %6525 = vmatpush1.msra.mxu0 0.0
    %6526 = vmatprep.subr.mxu0 0.0
    %6527 = vmatpush1.msra.mxu0 0.0
    %6528 = vmatprep.subr.mxu0 0.0
    %6529 = vmatpush1.msra.mxu0 0.0
    %6530 = vmatprep.subr.mxu0 0.0
    %6531 = vmatpush1.msra.mxu0 0.0
    %6532 = vmatprep.subr.mxu0 0.0
    %6533 = vmatpush1.msra.mxu0 0.0
    %6534 = vmatprep.subr.mxu0 0.0
    %6535 = vmatpush1.msra.mxu0 0.0
    %6536 = vmatprep.subr.mxu0 0.0
    %6537 = vmatpush1.msra.mxu0 0.0
    %6538 = vmatprep.subr.mxu0 0.0
    %6539 = vmatpush1.msra.mxu0 0.0
    %6540 = vmatprep.subr.mxu0 0.0
    %6541 = vmatpush1.msra.mxu0 0.0
    %6542 = vmatprep.subr.mxu0 0.0
    %6543 = vmatpush1.msra.mxu0 0.0
    %6544 = vmatprep.subr.mxu0 0.0
    %6545 = vmatpush1.msra.mxu0 0.0
    %6546 = vmatprep.subr.mxu0 0.0
    %6547 = vmatpush1.msra.mxu0 0.0
    %6548 = vmatprep.subr.mxu0 0.0
    %6549 = vmatpush1.msra.mxu0 0.0
    %6550 = vmatprep.subr.mxu0 0.0
    %6551 = vmatpush1.msra.mxu0 0.0
    %6552 = vmatprep.subr.mxu0 0.0
    %6553 = vmatpush1.msra.mxu0 0.0
    %6554 = vmatprep.mubr.f32.mxu0 0.0
    %6555 = vmatmul.mubr.f32.gmra.mrb[0].mxu0 %v6485
    %v6556 = vpop.f32.mrb[0].mxu0
    %v6557 = vadd.f32 0.0, %v6556
    %v6558 = vpop.f32.mrb[0].mxu0
    %6559 = vmatprep.mubr.f32.mxu0 0.0
    %6560 = vmatmul.mubr.f32.gmra.mrb[0].mxu0 %v6488
    %v6561 = vpop.f32.mrb[0].mxu0
    %v6562 = vadd.f32 0.0, %v6561
    %v6563 = vpop.f32.mrb[0].mxu0
    %6564 = vdwg.mxu0
    %v6566 = vsel %vm230, %v6557, 0
    %v6569 = vsel %vm230, %v6562, 0
    %6571 = vmatprep.subr.mxu0 0.0
    %6572 = vmatpush1.msra.mxu0 %v6076
    %6573 = vmatprep.subr.mxu0 0.0
    %6574 = vmatpush1.msra.mxu0 0.0
    %6575 = vmatprep.subr.mxu0 0.0
    %6576 = vmatpush1.msra.mxu0 0.0
    %6577 = vmatprep.subr.mxu0 0.0
    %6578 = vmatpush1.msra.mxu0 0.0
    %6579 = vmatprep.subr.mxu0 0.0
    %6580 = vmatpush1.msra.mxu0 0.0
    %6581 = vmatprep.subr.mxu0 0.0
    %6582 = vmatpush1.msra.mxu0 0.0
    %6583 = vmatprep.subr.mxu0 0.0
    %6584 = vmatpush1.msra.mxu0 0.0
    %6585 = vmatprep.subr.mxu0 0.0
    %6586 = vmatpush1.msra.mxu0 0.0
    %6587 = vmatprep.subr.mxu0 0.0
    %6588 = vmatpush1.msra.mxu0 0.0
    %6589 = vmatprep.subr.mxu0 0.0
    %6590 = vmatpush1.msra.mxu0 0.0
    %6591 = vmatprep.subr.mxu0 0.0
    %6592 = vmatpush1.msra.mxu0 0.0
    %6593 = vmatprep.subr.mxu0 0.0
    %6594 = vmatpush1.msra.mxu0 0.0
    %6595 = vmatprep.subr.mxu0 0.0
    %6596 = vmatpush1.msra.mxu0 0.0
    %6597 = vmatprep.subr.mxu0 0.0
    %6598 = vmatpush1.msra.mxu0 0.0
    %6599 = vmatprep.subr.mxu0 0.0
    %6600 = vmatpush1.msra.mxu0 0.0
    %6601 = vmatprep.subr.mxu0 0.0
    %6602 = vmatpush1.msra.mxu0 0.0
    %6603 = vmatprep.subr.mxu0 0.0
    %6604 = vmatpush1.msra.mxu0 0.0
    %6605 = vmatprep.subr.mxu0 0.0
    %6606 = vmatpush1.msra.mxu0 0.0
    %6607 = vmatprep.subr.mxu0 0.0
    %6608 = vmatpush1.msra.mxu0 0.0
    %6609 = vmatprep.subr.mxu0 0.0
    %6610 = vmatpush1.msra.mxu0 0.0
    %6611 = vmatprep.subr.mxu0 0.0
    %6612 = vmatpush1.msra.mxu0 0.0
    %6613 = vmatprep.subr.mxu0 0.0
    %6614 = vmatpush1.msra.mxu0 0.0
    %6615 = vmatprep.subr.mxu0 0.0
    %6616 = vmatpush1.msra.mxu0 0.0
    %6617 = vmatprep.subr.mxu0 0.0
    %6618 = vmatpush1.msra.mxu0 0.0
    %6619 = vmatprep.subr.mxu0 0.0
    %6620 = vmatpush1.msra.mxu0 0.0
    %6621 = vmatprep.subr.mxu0 0.0
    %6622 = vmatpush1.msra.mxu0 0.0
    %6623 = vmatprep.subr.mxu0 0.0
    %6624 = vmatpush1.msra.mxu0 0.0
    %6625 = vmatprep.subr.mxu0 0.0
    %6626 = vmatpush1.msra.mxu0 0.0
    %6627 = vmatprep.subr.mxu0 0.0
    %6628 = vmatpush1.msra.mxu0 0.0
    %6629 = vmatprep.subr.mxu0 0.0
    %6630 = vmatpush1.msra.mxu0 0.0
    %6631 = vmatprep.subr.mxu0 0.0
    %6632 = vmatpush1.msra.mxu0 0.0
    %6633 = vmatprep.subr.mxu0 0.0
    %6634 = vmatpush1.msra.mxu0 0.0
    %6635 = vmatprep.mubr.f32.mxu0 0.0
    %6636 = vmatmul.mubr.f32.gmra.mrb[0].mxu0 %v6566
    %v6637 = vpop.f32.mrb[0].mxu0
    %v6638 = vadd.f32 0.0, %v6637
    %v6639 = vpop.f32.mrb[0].mxu0
    %6640 = vmatprep.mubr.f32.mxu0 0.0
    %6641 = vmatmul.mubr.f32.gmra.mrb[0].mxu0 %v6569
    %v6642 = vpop.f32.mrb[0].mxu0
    %v6643 = vadd.f32 0.0, %v6642
    %v6644 = vpop.f32.mrb[0].mxu0
    %6645 = vdwg.mxu0
    %v6646 = vadd.f32 %v6363, %v6638
    %v6647 = vadd.f32 %v6364, %v6643
    %6648 = vrot.lane.b32.xlu0 %v6067, 112
    %v6649 = vpop.permute.xlu0 %6648
    %6650 = vrot.lane.b32.xlu0 %v6072, 112
    %v6651 = vpop.permute.xlu0 %6650
    %6652 = vrot.lane.b32.xlu0 %v6067, 80
    %v6653 = vpop.permute.xlu0 %6652
    %6654 = vrot.lane.b32.xlu0 %v6072, 80
    %v6655 = vpop.permute.xlu0 %6654
    %v6656 = vsel %vm230, %v6649, 0
    %v6658 = vsel %vm230, %v6651, 0
    %v6660 = vsel %vm230, %v6653, 0
    %v6662 = vsel %vm230, %v6655, 0
    %6664 = vmatprep.subr.mxu0 0.0
    %6665 = vmatpush1.xpose.msra.mxu0 %v6660
    %6666 = vmatprep.subr.mxu0 0.0
    %6667 = vmatpush1.xpose.msra.mxu0 %v6662
    %6668 = vmatprep.subr.mxu0 0.0
    %6669 = vmatpush1.xpose.msra.mxu0 0.0
    %6670 = vmatprep.subr.mxu0 0.0
    %6671 = vmatpush1.xpose.msra.mxu0 0.0
    %6672 = vmatprep.subr.mxu0 0.0
    %6673 = vmatpush1.xpose.msra.mxu0 0.0
    %6674 = vmatprep.subr.mxu0 0.0
    %6675 = vmatpush1.xpose.msra.mxu0 0.0
    %6676 = vmatprep.subr.mxu0 0.0
    %6677 = vmatpush1.xpose.msra.mxu0 0.0
    %6678 = vmatprep.subr.mxu0 0.0
    %6679 = vmatpush1.xpose.msra.mxu0 0.0
    %6680 = vmatprep.subr.mxu0 0.0
    %6681 = vmatpush1.xpose.msra.mxu0 0.0
    %6682 = vmatprep.subr.mxu0 0.0
    %6683 = vmatpush1.xpose.msra.mxu0 0.0
    %6684 = vmatprep.subr.mxu0 0.0
    %6685 = vmatpush1.xpose.msra.mxu0 0.0
    %6686 = vmatprep.subr.mxu0 0.0
    %6687 = vmatpush1.xpose.msra.mxu0 0.0
    %6688 = vmatprep.subr.mxu0 0.0
    %6689 = vmatpush1.xpose.msra.mxu0 0.0
    %6690 = vmatprep.subr.mxu0 0.0
    %6691 = vmatpush1.xpose.msra.mxu0 0.0
    %6692 = vmatprep.subr.mxu0 0.0
    %6693 = vmatpush1.xpose.msra.mxu0 0.0
    %6694 = vmatprep.subr.mxu0 0.0
    %6695 = vmatpush1.xpose.msra.mxu0 0.0
    %6696 = vmatprep.subr.mxu0 0.0
    %6697 = vmatpush1.xpose.msra.mxu0 0.0
    %6698 = vmatprep.subr.mxu0 0.0
    %6699 = vmatpush1.xpose.msra.mxu0 0.0
    %6700 = vmatprep.subr.mxu0 0.0
    %6701 = vmatpush1.xpose.msra.mxu0 0.0
    %6702 = vmatprep.subr.mxu0 0.0
    %6703 = vmatpush1.xpose.msra.mxu0 0.0
    %6704 = vmatprep.subr.mxu0 0.0
    %6705 = vmatpush1.xpose.msra.mxu0 0.0
    %6706 = vmatprep.subr.mxu0 0.0
    %6707 = vmatpush1.xpose.msra.mxu0 0.0
    %6708 = vmatprep.subr.mxu0 0.0
    %6709 = vmatpush1.xpose.msra.mxu0 0.0
    %6710 = vmatprep.subr.mxu0 0.0
    %6711 = vmatpush1.xpose.msra.mxu0 0.0
    %6712 = vmatprep.subr.mxu0 0.0
    %6713 = vmatpush1.xpose.msra.mxu0 0.0
    %6714 = vmatprep.subr.mxu0 0.0
    %6715 = vmatpush1.xpose.msra.mxu0 0.0
    %6716 = vmatprep.subr.mxu0 0.0
    %6717 = vmatpush1.xpose.msra.mxu0 0.0
    %6718 = vmatprep.subr.mxu0 0.0
    %6719 = vmatpush1.xpose.msra.mxu0 0.0
    %6720 = vmatprep.subr.mxu0 0.0
    %6721 = vmatpush1.xpose.msra.mxu0 0.0
    %6722 = vmatprep.subr.mxu0 0.0
    %6723 = vmatpush1.xpose.msra.mxu0 0.0
    %6724 = vmatprep.subr.mxu0 0.0
    %6725 = vmatpush1.xpose.msra.mxu0 0.0
    %6726 = vmatprep.subr.mxu0 0.0
    %6727 = vmatpush1.xpose.msra.mxu0 0.0
    %6728 = vmatprep.mubr.f32.mxu0 0.0
    %6729 = vmatmul.mubr.f32.gmra.mrb[0].mxu0 %v6656
    %v6730 = vpop.f32.mrb[0].mxu0
    %v6731 = vadd.f32 %v27, %v6730
    %v6732 = vpop.f32.mrb[0].mxu0
    %6733 = vmatprep.mubr.f32.mxu0 0.0
    %6734 = vmatmul.mubr.f32.gmra.mrb[0].mxu0 %v6658
    %v6735 = vpop.f32.mrb[0].mxu0
    %v6736 = vadd.f32 %v28, %v6735
    %v6737 = vpop.f32.mrb[0].mxu0
    %6738 = vdwg.mxu0
    %v6739 = vsel %vm314, %v6731, -inf
    %6740 = vmax.xlane.f32.xlu0 %v6739
    %v6741 = vpop.xlane.xlu0 %6740
    %v6742 = vsel %vm314, %v6736, -inf
    %6743 = vmax.xlane.f32.xlu0 %v6742
    %v6744 = vpop.xlane.xlu0 %6743
    %v6745 = vsub.f32 %v6731, %v6741
    %v6746 = vsub.f32 %v6736, %v6744
    %v6747 = vmul.f32 %v6745, 1.442695
    %v6748 = vpow.pop %v6747
    %v6749 = vmul.f32 %v6746, 1.442695
    %v6750 = vpow.pop %v6749
    %v6751 = vsel %vm314, %v6748, 0.0
    %6752 = vadd.xlane.f32.xlu0 %v6751
    %v6753 = vpop.xlane.xlu0 %6752
    %v6754 = vsel %vm314, %v6750, 0.0
    %6755 = vadd.xlane.f32.xlu0 %v6754
    %v6756 = vpop.xlane.xlu0 %6755
    %v6757 = vrcp.pop %v6753
    %v6758 = vrcp.pop %v6756
    %v6759 = vmul.f32 %v6748, %v6757
    %v6760 = vmul.f32 %v6750, %v6758
    %6761 = vrot.lane.b32.xlu0 %v6067, 48
    %v6762 = vpop.permute.xlu0 %6761
    %6763 = vrot.lane.b32.xlu0 %v6072, 48
    %v6764 = vpop.permute.xlu0 %6763
    %v6768 = vsel %vm314, %v6759, 0
    %v6771 = vsel %vm314, %v6760, 0
    %6773 = vmatprep.subr.mxu0 0.0
    %6774 = vmatpush1.msra.mxu0 %v6762
    %6775 = vmatprep.subr.mxu0 0.0
    %6776 = vmatpush1.msra.mxu0 %v6764
    %6777 = vmatprep.subr.mxu0 0.0
    %6778 = vmatpush1.msra.mxu0 0.0
    %6779 = vmatprep.subr.mxu0 0.0
    %6780 = vmatpush1.msra.mxu0 0.0
    %6781 = vmatprep.subr.mxu0 0.0
    %6782 = vmatpush1.msra.mxu0 0.0
    %6783 = vmatprep.subr.mxu0 0.0
    %6784 = vmatpush1.msra.mxu0 0.0
    %6785 = vmatprep.subr.mxu0 0.0
    %6786 = vmatpush1.msra.mxu0 0.0
    %6787 = vmatprep.subr.mxu0 0.0
    %6788 = vmatpush1.msra.mxu0 0.0
    %6789 = vmatprep.subr.mxu0 0.0
    %6790 = vmatpush1.msra.mxu0 0.0
    %6791 = vmatprep.subr.mxu0 0.0
    %6792 = vmatpush1.msra.mxu0 0.0
    %6793 = vmatprep.subr.mxu0 0.0
    %6794 = vmatpush1.msra.mxu0 0.0
    %6795 = vmatprep.subr.mxu0 0.0
    %6796 = vmatpush1.msra.mxu0 0.0
    %6797 = vmatprep.subr.mxu0 0.0
    %6798 = vmatpush1.msra.mxu0 0.0
    %6799 = vmatprep.subr.mxu0 0.0
    %6800 = vmatpush1.msra.mxu0 0.0
    %6801 = vmatprep.subr.mxu0 0.0
    %6802 = vmatpush1.msra.mxu0 0.0
    %6803 = vmatprep.subr.mxu0 0.0
    %6804 = vmatpush1.msra.mxu0 0.0
    %6805 = vmatprep.subr.mxu0 0.0
    %6806 = vmatpush1.msra.mxu0 0.0
    %6807 = vmatprep.subr.mxu0 0.0
    %6808 = vmatpush1.msra.mxu0 0.0
    %6809 = vmatprep.subr.mxu0 0.0
    %6810 = vmatpush1.msra.mxu0 0.0
    %6811 = vmatprep.subr.mxu0 0.0
    %6812 = vmatpush1.msra.mxu0 0.0
    %6813 = vmatprep.subr.mxu0 0.0
    %6814 = vmatpush1.msra.mxu0 0.0
    %6815 = vmatprep.subr.mxu0 0.0
    %6816 = vmatpush1.msra.mxu0 0.0
    %6817 = vmatprep.subr.mxu0 0.0
    %6818 = vmatpush1.msra.mxu0 0.0
    %6819 = vmatprep.subr.mxu0 0.0
    %6820 = vmatpush1.msra.mxu0 0.0
    %6821 = vmatprep.subr.mxu0 0.0
    %6822 = vmatpush1.msra.mxu0 0.0
    %6823 = vmatprep.subr.mxu0 0.0
    %6824 = vmatpush1.msra.mxu0 0.0
    %6825 = vmatprep.subr.mxu0 0.0
    %6826 = vmatpush1.msra.mxu0 0.0
    %6827 = vmatprep.subr.mxu0 0.0
    %6828 = vmatpush1.msra.mxu0 0.0
    %6829 = vmatprep.subr.mxu0 0.0
    %6830 = vmatpush1.msra.mxu0 0.0
    %6831 = vmatprep.subr.mxu0 0.0
    %6832 = vmatpush1.msra.mxu0 0.0
    %6833 = vmatprep.subr.mxu0 0.0
    %6834 = vmatpush1.msra.mxu0 0.0
    %6835 = vmatprep.subr.mxu0 0.0
    %6836 = vmatpush1.msra.mxu0 0.0
    %6837 = vmatprep.mubr.f32.mxu0 0.0
    %6838 = vmatmul.mubr.f32.gmra.mrb[0].mxu0 %v6768
    %v6839 = vpop.f32.mrb[0].mxu0
    %v6840 = vadd.f32 0.0, %v6839
    %v6841 = vpop.f32.mrb[0].mxu0
    %6842 = vmatprep.mubr.f32.mxu0 0.0
    %6843 = vmatmul.mubr.f32.gmra.mrb[0].mxu0 %v6771
    %v6844 = vpop.f32.mrb[0].mxu0
    %v6845 = vadd.f32 0.0, %v6844
    %v6846 = vpop.f32.mrb[0].mxu0
    %6847 = vdwg.mxu0
    %v6849 = vsel %vm230, %v6840, 0
    %v6852 = vsel %vm230, %v6845, 0
    %6854 = vmatprep.subr.mxu0 0.0
    %6855 = vmatpush1.msra.mxu0 %v6077
    %6856 = vmatprep.subr.mxu0 0.0
    %6857 = vmatpush1.msra.mxu0 0.0
    %6858 = vmatprep.subr.mxu0 0.0
    %6859 = vmatpush1.msra.mxu0 0.0
    %6860 = vmatprep.subr.mxu0 0.0
    %6861 = vmatpush1.msra.mxu0 0.0
    %6862 = vmatprep.subr.mxu0 0.0
    %6863 = vmatpush1.msra.mxu0 0.0
    %6864 = vmatprep.subr.mxu0 0.0
    %6865 = vmatpush1.msra.mxu0 0.0
    %6866 = vmatprep.subr.mxu0 0.0
    %6867 = vmatpush1.msra.mxu0 0.0
    %6868 = vmatprep.subr.mxu0 0.0
    %6869 = vmatpush1.msra.mxu0 0.0
    %6870 = vmatprep.subr.mxu0 0.0
    %6871 = vmatpush1.msra.mxu0 0.0
    %6872 = vmatprep.subr.mxu0 0.0
    %6873 = vmatpush1.msra.mxu0 0.0
    %6874 = vmatprep.subr.mxu0 0.0
    %6875 = vmatpush1.msra.mxu0 0.0
    %6876 = vmatprep.subr.mxu0 0.0
    %6877 = vmatpush1.msra.mxu0 0.0
    %6878 = vmatprep.subr.mxu0 0.0
    %6879 = vmatpush1.msra.mxu0 0.0
    %6880 = vmatprep.subr.mxu0 0.0
    %6881 = vmatpush1.msra.mxu0 0.0
    %6882 = vmatprep.subr.mxu0 0.0
    %6883 = vmatpush1.msra.mxu0 0.0
    %6884 = vmatprep.subr.mxu0 0.0
    %6885 = vmatpush1.msra.mxu0 0.0
    %6886 = vmatprep.subr.mxu0 0.0
    %6887 = vmatpush1.msra.mxu0 0.0
    %6888 = vmatprep.subr.mxu0 0.0
    %6889 = vmatpush1.msra.mxu0 0.0
    %6890 = vmatprep.subr.mxu0 0.0
    %6891 = vmatpush1.msra.mxu0 0.0
    %6892 = vmatprep.subr.mxu0 0.0
    %6893 = vmatpush1.msra.mxu0 0.0
    %6894 = vmatprep.subr.mxu0 0.0
    %6895 = vmatpush1.msra.mxu0 0.0
    %6896 = vmatprep.subr.mxu0 0.0
    %6897 = vmatpush1.msra.mxu0 0.0
    %6898 = vmatprep.subr.mxu0 0.0
    %6899 = vmatpush1.msra.mxu0 0.0
    %6900 = vmatprep.subr.mxu0 0.0
    %6901 = vmatpush1.msra.mxu0 0.0
    %6902 = vmatprep.subr.mxu0 0.0
    %6903 = vmatpush1.msra.mxu0 0.0
    %6904 = vmatprep.subr.mxu0 0.0
    %6905 = vmatpush1.msra.mxu0 0.0
    %6906 = vmatprep.subr.mxu0 0.0
    %6907 = vmatpush1.msra.mxu0 0.0
    %6908 = vmatprep.subr.mxu0 0.0
    %6909 = vmatpush1.msra.mxu0 0.0
    %6910 = vmatprep.subr.mxu0 0.0
    %6911 = vmatpush1.msra.mxu0 0.0
    %6912 = vmatprep.subr.mxu0 0.0
    %6913 = vmatpush1.msra.mxu0 0.0
    %6914 = vmatprep.subr.mxu0 0.0
    %6915 = vmatpush1.msra.mxu0 0.0
    %6916 = vmatprep.subr.mxu0 0.0
    %6917 = vmatpush1.msra.mxu0 0.0
    %6918 = vmatprep.mubr.f32.mxu0 0.0
    %6919 = vmatmul.mubr.f32.gmra.mrb[0].mxu0 %v6849
    %v6920 = vpop.f32.mrb[0].mxu0
    %v6921 = vadd.f32 0.0, %v6920
    %v6922 = vpop.f32.mrb[0].mxu0
    %6923 = vmatprep.mubr.f32.mxu0 0.0
    %6924 = vmatmul.mubr.f32.gmra.mrb[0].mxu0 %v6852
    %v6925 = vpop.f32.mrb[0].mxu0
    %v6926 = vadd.f32 0.0, %v6925
    %v6927 = vpop.f32.mrb[0].mxu0
    %6928 = vdwg.mxu0
    %v6929 = vadd.f32 %v6646, %v6921
    %v6930 = vadd.f32 %v6647, %v6926
    %6931 = vrot.lane.b32.xlu0 %v6067, 104
    %v6932 = vpop.permute.xlu0 %6931
    %6933 = vrot.lane.b32.xlu0 %v6072, 104
    %v6934 = vpop.permute.xlu0 %6933
    %6935 = vrot.lane.b32.xlu0 %v6067, 72
    %v6936 = vpop.permute.xlu0 %6935
    %6937 = vrot.lane.b32.xlu0 %v6072, 72
    %v6938 = vpop.permute.xlu0 %6937
    %v6939 = vsel %vm230, %v6932, 0
    %v6941 = vsel %vm230, %v6934, 0
    %v6943 = vsel %vm230, %v6936, 0
    %v6945 = vsel %vm230, %v6938, 0
    %6947 = vmatprep.subr.mxu0 0.0
    %6948 = vmatpush1.xpose.msra.mxu0 %v6943
    %6949 = vmatprep.subr.mxu0 0.0
    %6950 = vmatpush1.xpose.msra.mxu0 %v6945
    %6951 = vmatprep.subr.mxu0 0.0
    %6952 = vmatpush1.xpose.msra.mxu0 0.0
    %6953 = vmatprep.subr.mxu0 0.0
    %6954 = vmatpush1.xpose.msra.mxu0 0.0
    %6955 = vmatprep.subr.mxu0 0.0
    %6956 = vmatpush1.xpose.msra.mxu0 0.0
    %6957 = vmatprep.subr.mxu0 0.0
    %6958 = vmatpush1.xpose.msra.mxu0 0.0
    %6959 = vmatprep.subr.mxu0 0.0
    %6960 = vmatpush1.xpose.msra.mxu0 0.0
    %6961 = vmatprep.subr.mxu0 0.0
    %6962 = vmatpush1.xpose.msra.mxu0 0.0
    %6963 = vmatprep.subr.mxu0 0.0
    %6964 = vmatpush1.xpose.msra.mxu0 0.0
    %6965 = vmatprep.subr.mxu0 0.0
    %6966 = vmatpush1.xpose.msra.mxu0 0.0
    %6967 = vmatprep.subr.mxu0 0.0
    %6968 = vmatpush1.xpose.msra.mxu0 0.0
    %6969 = vmatprep.subr.mxu0 0.0
    %6970 = vmatpush1.xpose.msra.mxu0 0.0
    %6971 = vmatprep.subr.mxu0 0.0
    %6972 = vmatpush1.xpose.msra.mxu0 0.0
    %6973 = vmatprep.subr.mxu0 0.0
    %6974 = vmatpush1.xpose.msra.mxu0 0.0
    %6975 = vmatprep.subr.mxu0 0.0
    %6976 = vmatpush1.xpose.msra.mxu0 0.0
    %6977 = vmatprep.subr.mxu0 0.0
    %6978 = vmatpush1.xpose.msra.mxu0 0.0
    %6979 = vmatprep.subr.mxu0 0.0
    %6980 = vmatpush1.xpose.msra.mxu0 0.0
    %6981 = vmatprep.subr.mxu0 0.0
    %6982 = vmatpush1.xpose.msra.mxu0 0.0
    %6983 = vmatprep.subr.mxu0 0.0
    %6984 = vmatpush1.xpose.msra.mxu0 0.0
    %6985 = vmatprep.subr.mxu0 0.0
    %6986 = vmatpush1.xpose.msra.mxu0 0.0
    %6987 = vmatprep.subr.mxu0 0.0
    %6988 = vmatpush1.xpose.msra.mxu0 0.0
    %6989 = vmatprep.subr.mxu0 0.0
    %6990 = vmatpush1.xpose.msra.mxu0 0.0
    %6991 = vmatprep.subr.mxu0 0.0
    %6992 = vmatpush1.xpose.msra.mxu0 0.0
    %6993 = vmatprep.subr.mxu0 0.0
    %6994 = vmatpush1.xpose.msra.mxu0 0.0
    %6995 = vmatprep.subr.mxu0 0.0
    %6996 = vmatpush1.xpose.msra.mxu0 0.0
    %6997 = vmatprep.subr.mxu0 0.0
    %6998 = vmatpush1.xpose.msra.mxu0 0.0
    %6999 = vmatprep.subr.mxu0 0.0
    %7000 = vmatpush1.xpose.msra.mxu0 0.0
    %7001 = vmatprep.subr.mxu0 0.0
    %7002 = vmatpush1.xpose.msra.mxu0 0.0
    %7003 = vmatprep.subr.mxu0 0.0
    %7004 = vmatpush1.xpose.msra.mxu0 0.0
    %7005 = vmatprep.subr.mxu0 0.0
    %7006 = vmatpush1.xpose.msra.mxu0 0.0
    %7007 = vmatprep.subr.mxu0 0.0
    %7008 = vmatpush1.xpose.msra.mxu0 0.0
    %7009 = vmatprep.subr.mxu0 0.0
    %7010 = vmatpush1.xpose.msra.mxu0 0.0
    %7011 = vmatprep.mubr.f32.mxu0 0.0
    %7012 = vmatmul.mubr.f32.gmra.mrb[0].mxu0 %v6939
    %v7013 = vpop.f32.mrb[0].mxu0
    %v7014 = vadd.f32 %v27, %v7013
    %v7015 = vpop.f32.mrb[0].mxu0
    %7016 = vmatprep.mubr.f32.mxu0 0.0
    %7017 = vmatmul.mubr.f32.gmra.mrb[0].mxu0 %v6941
    %v7018 = vpop.f32.mrb[0].mxu0
    %v7019 = vadd.f32 %v28, %v7018
    %v7020 = vpop.f32.mrb[0].mxu0
    %7021 = vdwg.mxu0
    %v7022 = vsel %vm314, %v7014, -inf
    %7023 = vmax.xlane.f32.xlu0 %v7022
    %v7024 = vpop.xlane.xlu0 %7023
    %v7025 = vsel %vm314, %v7019, -inf
    %7026 = vmax.xlane.f32.xlu0 %v7025
    %v7027 = vpop.xlane.xlu0 %7026
    %v7028 = vsub.f32 %v7014, %v7024
    %v7029 = vsub.f32 %v7019, %v7027
    %v7030 = vmul.f32 %v7028, 1.442695
    %v7031 = vpow.pop %v7030
    %v7032 = vmul.f32 %v7029, 1.442695
    %v7033 = vpow.pop %v7032
    %v7034 = vsel %vm314, %v7031, 0.0
    %7035 = vadd.xlane.f32.xlu0 %v7034
    %v7036 = vpop.xlane.xlu0 %7035
    %v7037 = vsel %vm314, %v7033, 0.0
    %7038 = vadd.xlane.f32.xlu0 %v7037
    %v7039 = vpop.xlane.xlu0 %7038
    %v7040 = vrcp.pop %v7036
    %v7041 = vrcp.pop %v7039
    %v7042 = vmul.f32 %v7031, %v7040
    %v7043 = vmul.f32 %v7033, %v7041
    %7044 = vrot.lane.b32.xlu0 %v6067, 40
    %v7045 = vpop.permute.xlu0 %7044
    %7046 = vrot.lane.b32.xlu0 %v6072, 40
    %v7047 = vpop.permute.xlu0 %7046
    %v7051 = vsel %vm314, %v7042, 0
    %v7054 = vsel %vm314, %v7043, 0
    %7056 = vmatprep.subr.mxu0 0.0
    %7057 = vmatpush1.msra.mxu0 %v7045
    %7058 = vmatprep.subr.mxu0 0.0
    %7059 = vmatpush1.msra.mxu0 %v7047
    %7060 = vmatprep.subr.mxu0 0.0
    %7061 = vmatpush1.msra.mxu0 0.0
    %7062 = vmatprep.subr.mxu0 0.0
    %7063 = vmatpush1.msra.mxu0 0.0
    %7064 = vmatprep.subr.mxu0 0.0
    %7065 = vmatpush1.msra.mxu0 0.0
    %7066 = vmatprep.subr.mxu0 0.0
    %7067 = vmatpush1.msra.mxu0 0.0
    %7068 = vmatprep.subr.mxu0 0.0
    %7069 = vmatpush1.msra.mxu0 0.0
    %7070 = vmatprep.subr.mxu0 0.0
    %7071 = vmatpush1.msra.mxu0 0.0
    %7072 = vmatprep.subr.mxu0 0.0
    %7073 = vmatpush1.msra.mxu0 0.0
    %7074 = vmatprep.subr.mxu0 0.0
    %7075 = vmatpush1.msra.mxu0 0.0
    %7076 = vmatprep.subr.mxu0 0.0
    %7077 = vmatpush1.msra.mxu0 0.0
    %7078 = vmatprep.subr.mxu0 0.0
    %7079 = vmatpush1.msra.mxu0 0.0
    %7080 = vmatprep.subr.mxu0 0.0
    %7081 = vmatpush1.msra.mxu0 0.0
    %7082 = vmatprep.subr.mxu0 0.0
    %7083 = vmatpush1.msra.mxu0 0.0
    %7084 = vmatprep.subr.mxu0 0.0
    %7085 = vmatpush1.msra.mxu0 0.0
    %7086 = vmatprep.subr.mxu0 0.0
    %7087 = vmatpush1.msra.mxu0 0.0
    %7088 = vmatprep.subr.mxu0 0.0
    %7089 = vmatpush1.msra.mxu0 0.0
    %7090 = vmatprep.subr.mxu0 0.0
    %7091 = vmatpush1.msra.mxu0 0.0
    %7092 = vmatprep.subr.mxu0 0.0
    %7093 = vmatpush1.msra.mxu0 0.0
    %7094 = vmatprep.subr.mxu0 0.0
    %7095 = vmatpush1.msra.mxu0 0.0
    %7096 = vmatprep.subr.mxu0 0.0
    %7097 = vmatpush1.msra.mxu0 0.0
    %7098 = vmatprep.subr.mxu0 0.0
    %7099 = vmatpush1.msra.mxu0 0.0
    %7100 = vmatprep.subr.mxu0 0.0
    %7101 = vmatpush1.msra.mxu0 0.0
    %7102 = vmatprep.subr.mxu0 0.0
    %7103 = vmatpush1.msra.mxu0 0.0
    %7104 = vmatprep.subr.mxu0 0.0
    %7105 = vmatpush1.msra.mxu0 0.0
    %7106 = vmatprep.subr.mxu0 0.0
    %7107 = vmatpush1.msra.mxu0 0.0
    %7108 = vmatprep.subr.mxu0 0.0
    %7109 = vmatpush1.msra.mxu0 0.0
    %7110 = vmatprep.subr.mxu0 0.0
    %7111 = vmatpush1.msra.mxu0 0.0
    %7112 = vmatprep.subr.mxu0 0.0
    %7113 = vmatpush1.msra.mxu0 0.0
    %7114 = vmatprep.subr.mxu0 0.0
    %7115 = vmatpush1.msra.mxu0 0.0
    %7116 = vmatprep.subr.mxu0 0.0
    %7117 = vmatpush1.msra.mxu0 0.0
    %7118 = vmatprep.subr.mxu0 0.0
    %7119 = vmatpush1.msra.mxu0 0.0
    %7120 = vmatprep.mubr.f32.mxu0 0.0
    %7121 = vmatmul.mubr.f32.gmra.mrb[0].mxu0 %v7051
    %v7122 = vpop.f32.mrb[0].mxu0
    %v7123 = vadd.f32 0.0, %v7122
    %v7124 = vpop.f32.mrb[0].mxu0
    %7125 = vmatprep.mubr.f32.mxu0 0.0
    %7126 = vmatmul.mubr.f32.gmra.mrb[0].mxu0 %v7054
    %v7127 = vpop.f32.mrb[0].mxu0
    %v7128 = vadd.f32 0.0, %v7127
    %v7129 = vpop.f32.mrb[0].mxu0
    %7130 = vdwg.mxu0
    %v7132 = vsel %vm230, %v7123, 0
    %v7135 = vsel %vm230, %v7128, 0
    %7137 = vmatprep.subr.mxu0 0.0
    %7138 = vmatpush1.msra.mxu0 %v6078
    %7139 = vmatprep.subr.mxu0 0.0
    %7140 = vmatpush1.msra.mxu0 0.0
    %7141 = vmatprep.subr.mxu0 0.0
    %7142 = vmatpush1.msra.mxu0 0.0
    %7143 = vmatprep.subr.mxu0 0.0
    %7144 = vmatpush1.msra.mxu0 0.0
    %7145 = vmatprep.subr.mxu0 0.0
    %7146 = vmatpush1.msra.mxu0 0.0
    %7147 = vmatprep.subr.mxu0 0.0
    %7148 = vmatpush1.msra.mxu0 0.0
    %7149 = vmatprep.subr.mxu0 0.0
    %7150 = vmatpush1.msra.mxu0 0.0
    %7151 = vmatprep.subr.mxu0 0.0
    %7152 = vmatpush1.msra.mxu0 0.0
    %7153 = vmatprep.subr.mxu0 0.0
    %7154 = vmatpush1.msra.mxu0 0.0
    %7155 = vmatprep.subr.mxu0 0.0
    %7156 = vmatpush1.msra.mxu0 0.0
    %7157 = vmatprep.subr.mxu0 0.0
    %7158 = vmatpush1.msra.mxu0 0.0
    %7159 = vmatprep.subr.mxu0 0.0
    %7160 = vmatpush1.msra.mxu0 0.0
    %7161 = vmatprep.subr.mxu0 0.0
    %7162 = vmatpush1.msra.mxu0 0.0
    %7163 = vmatprep.subr.mxu0 0.0
    %7164 = vmatpush1.msra.mxu0 0.0
    %7165 = vmatprep.subr.mxu0 0.0
    %7166 = vmatpush1.msra.mxu0 0.0
    %7167 = vmatprep.subr.mxu0 0.0
    %7168 = vmatpush1.msra.mxu0 0.0
    %7169 = vmatprep.subr.mxu0 0.0
    %7170 = vmatpush1.msra.mxu0 0.0
    %7171 = vmatprep.subr.mxu0 0.0
    %7172 = vmatpush1.msra.mxu0 0.0
    %7173 = vmatprep.subr.mxu0 0.0
    %7174 = vmatpush1.msra.mxu0 0.0
    %7175 = vmatprep.subr.mxu0 0.0
    %7176 = vmatpush1.msra.mxu0 0.0
    %7177 = vmatprep.subr.mxu0 0.0
    %7178 = vmatpush1.msra.mxu0 0.0
    %7179 = vmatprep.subr.mxu0 0.0
    %7180 = vmatpush1.msra.mxu0 0.0
    %7181 = vmatprep.subr.mxu0 0.0
    %7182 = vmatpush1.msra.mxu0 0.0
    %7183 = vmatprep.subr.mxu0 0.0
    %7184 = vmatpush1.msra.mxu0 0.0
    %7185 = vmatprep.subr.mxu0 0.0
    %7186 = vmatpush1.msra.mxu0 0.0
    %7187 = vmatprep.subr.mxu0 0.0
    %7188 = vmatpush1.msra.mxu0 0.0
    %7189 = vmatprep.subr.mxu0 0.0
    %7190 = vmatpush1.msra.mxu0 0.0
    %7191 = vmatprep.subr.mxu0 0.0
    %7192 = vmatpush1.msra.mxu0 0.0
    %7193 = vmatprep.subr.mxu0 0.0
    %7194 = vmatpush1.msra.mxu0 0.0
    %7195 = vmatprep.subr.mxu0 0.0
    %7196 = vmatpush1.msra.mxu0 0.0
    %7197 = vmatprep.subr.mxu0 0.0
    %7198 = vmatpush1.msra.mxu0 0.0
    %7199 = vmatprep.subr.mxu0 0.0
    %7200 = vmatpush1.msra.mxu0 0.0
    %7201 = vmatprep.mubr.f32.mxu0 0.0
    %7202 = vmatmul.mubr.f32.gmra.mrb[0].mxu0 %v7132
    %v7203 = vpop.f32.mrb[0].mxu0
    %v7204 = vadd.f32 0.0, %v7203
    %v7205 = vpop.f32.mrb[0].mxu0
    %7206 = vmatprep.mubr.f32.mxu0 0.0
    %7207 = vmatmul.mubr.f32.gmra.mrb[0].mxu0 %v7135
    %v7208 = vpop.f32.mrb[0].mxu0
    %v7209 = vadd.f32 0.0, %v7208
    %v7210 = vpop.f32.mrb[0].mxu0
    %7211 = vdwg.mxu0
    %v7212 = vadd.f32 %v6929, %v7204
    %v7213 = vadd.f32 %v6930, %v7209
    %v7214 = vadd.f32 %v5983, %v7212
    %v7215 = vadd.f32 %v5984, %v7213
    %v7216 = vld [vmem:[#allocation2 + $0x448] sm:$0x1]
    %v7217 = vld [vmem:[#allocation2 + $0x450] sm:$0x1]
    %v7218 = vsel %vm137, %v7214, 0.0
    %7219 = vadd.xlane.f32.xlu0 %v7218
    %v7220 = vpop.xlane.xlu0 %7219
    %v7221 = vsel %vm137, %v7215, 0.0
    %7222 = vadd.xlane.f32.xlu0 %v7221
    %v7223 = vpop.xlane.xlu0 %7222
    %v7224 = vmul.f32 %v7220, %v1370
    %v7225 = vmul.f32 %v7223, %v1370
    %v7226 = vsub.f32 %v7214, %v7224
    %v7227 = vsub.f32 %v7215, %v7225
    %v7228 = vmul.f32 %v7226, %v7226
    %v7229 = vmul.f32 %v7227, %v7227
    %v7230 = vsel %vm137, %v7228, 0.0
    %7231 = vadd.xlane.f32.xlu0 %v7230
    %v7232 = vpop.xlane.xlu0 %7231
    %v7233 = vsel %vm137, %v7229, 0.0
    %7234 = vadd.xlane.f32.xlu0 %v7233
    %v7235 = vpop.xlane.xlu0 %7234
    %v7236 = vmul.f32 %v7232, %v1370
    %v7237 = vmul.f32 %v7235, %v1370
    %v7238 = vadd.f32 %v7236, 1e-05
    %v7239 = vadd.f32 %v7237, 1e-05
    %v7240 = vrsqrt.pop %v7238
    %v7241 = vrsqrt.pop %v7239
    %v7242 = vmul.f32 %v7226, %v7240
    %v7243 = vmul.f32 %v7227, %v7241
    %v7244 = vlaneseq
    %v7245 = vshrl.u32 %v7244, 7
    %v7246 = vsub.s32 0, %v7245
    %v7247 = vrot.slane %v7216, %v7246
    %v7248 = vmul.f32 %v7242, %v7247
    %v7249 = vmul.f32 %v7243, %v7247
    %v7250 = vlaneseq
    %v7251 = vshrl.u32 %v7250, 7
    %v7252 = vsub.s32 0, %v7251
    %v7253 = vrot.slane %v7217, %v7252
    %v7254 = vadd.f32 %v7248, %v7253
    %v7255 = vadd.f32 %v7249, %v7253
    %v7256 = vld [vmem:[#allocation2 + $0x3d0] sm:$0xff]
    %v7257 = vld [vmem:[#allocation2 + $0x3d8] sm:$0xff]
    %v7258 = vld [vmem:[#allocation2 + $0x3e0] sm:$0xff]
    %v7259 = vld [vmem:[#allocation2 + $0x3e8] sm:$0xff]
    %v7260 = vld [vmem:[#allocation2 + $0x3f0] sm:$0x1]
    %v7261 = vlaneseq
    %v7262 = vshrl.u32 %v7261, 7
    %v7263 = vsub.s32 0, %v7262
    %v7264 = vrot.slane %v7260, %v7263
    %v7266 = vsel %vm137, %v7254, 0
    %v7269 = vsel %vm137, %v7255, 0
    %7271 = vmatprep.subr.mxu0 0.0
    %7272 = vmatpush1.msra.mxu0 %v7256
    %7273 = vmatprep.subr.mxu0 0.0
    %7274 = vmatpush1.msra.mxu0 %v7257
    %7275 = vmatprep.subr.mxu0 0.0
    %7276 = vmatpush1.msra.mxu0 %v7258
    %7277 = vmatprep.subr.mxu0 0.0
    %7278 = vmatpush1.msra.mxu0 %v7259
    %7279 = vmatprep.subr.mxu0 0.0
    %7280 = vmatpush1.msra.mxu0 0.0
    %7281 = vmatprep.subr.mxu0 0.0
    %7282 = vmatpush1.msra.mxu0 0.0
    %7283 = vmatprep.subr.mxu0 0.0
    %7284 = vmatpush1.msra.mxu0 0.0
    %7285 = vmatprep.subr.mxu0 0.0
    %7286 = vmatpush1.msra.mxu0 0.0
    %7287 = vmatprep.subr.mxu0 0.0
    %7288 = vmatpush1.msra.mxu0 0.0
    %7289 = vmatprep.subr.mxu0 0.0
    %7290 = vmatpush1.msra.mxu0 0.0
    %7291 = vmatprep.subr.mxu0 0.0
    %7292 = vmatpush1.msra.mxu0 0.0
    %7293 = vmatprep.subr.mxu0 0.0
    %7294 = vmatpush1.msra.mxu0 0.0
    %7295 = vmatprep.subr.mxu0 0.0
    %7296 = vmatpush1.msra.mxu0 0.0
    %7297 = vmatprep.subr.mxu0 0.0
    %7298 = vmatpush1.msra.mxu0 0.0
    %7299 = vmatprep.subr.mxu0 0.0
    %7300 = vmatpush1.msra.mxu0 0.0
    %7301 = vmatprep.subr.mxu0 0.0
    %7302 = vmatpush1.msra.mxu0 0.0
    %7303 = vmatprep.subr.mxu0 0.0
    %7304 = vmatpush1.msra.mxu0 0.0
    %7305 = vmatprep.subr.mxu0 0.0
    %7306 = vmatpush1.msra.mxu0 0.0
    %7307 = vmatprep.subr.mxu0 0.0
    %7308 = vmatpush1.msra.mxu0 0.0
    %7309 = vmatprep.subr.mxu0 0.0
    %7310 = vmatpush1.msra.mxu0 0.0
    %7311 = vmatprep.subr.mxu0 0.0
    %7312 = vmatpush1.msra.mxu0 0.0
    %7313 = vmatprep.subr.mxu0 0.0
    %7314 = vmatpush1.msra.mxu0 0.0
    %7315 = vmatprep.subr.mxu0 0.0
    %7316 = vmatpush1.msra.mxu0 0.0
    %7317 = vmatprep.subr.mxu0 0.0
    %7318 = vmatpush1.msra.mxu0 0.0
    %7319 = vmatprep.subr.mxu0 0.0
    %7320 = vmatpush1.msra.mxu0 0.0
    %7321 = vmatprep.subr.mxu0 0.0
    %7322 = vmatpush1.msra.mxu0 0.0
    %7323 = vmatprep.subr.mxu0 0.0
    %7324 = vmatpush1.msra.mxu0 0.0
    %7325 = vmatprep.subr.mxu0 0.0
    %7326 = vmatpush1.msra.mxu0 0.0
    %7327 = vmatprep.subr.mxu0 0.0
    %7328 = vmatpush1.msra.mxu0 0.0
    %7329 = vmatprep.subr.mxu0 0.0
    %7330 = vmatpush1.msra.mxu0 0.0
    %7331 = vmatprep.subr.mxu0 0.0
    %7332 = vmatpush1.msra.mxu0 0.0
    %7333 = vmatprep.subr.mxu0 0.0
    %7334 = vmatpush1.msra.mxu0 0.0
    %7335 = vmatprep.mubr.f32.mxu0 0.0
    %7336 = vmatmul.mubr.f32.gmra.mrb[0].mxu0 %v7266
    %v7337 = vpop.f32.mrb[0].mxu0
    %v7338 = vadd.f32 %v7264, %v7337
    %v7339 = vpop.f32.mrb[0].mxu0
    %7340 = vmatprep.mubr.f32.mxu0 0.0
    %7341 = vmatmul.mubr.f32.gmra.mrb[0].mxu0 %v7269
    %v7342 = vpop.f32.mrb[0].mxu0
    %v7343 = vadd.f32 %v7264, %v7342
    %v7344 = vpop.f32.mrb[0].mxu0
    %7345 = vdwg.mxu0
    %v7346 = vld [vmem:[#allocation2 + $0x3f8] sm:$0xff]
    %v7347 = vld [vmem:[#allocation2 + $0x400] sm:$0xff]
    %v7348 = vld [vmem:[#allocation2 + $0x408] sm:$0xff]
    %v7349 = vld [vmem:[#allocation2 + $0x410] sm:$0xff]
    %v7350 = vld [vmem:[#allocation2 + $0x418] sm:$0x1]
    %v7351 = vlaneseq
    %v7352 = vshrl.u32 %v7351, 7
    %v7353 = vsub.s32 0, %v7352
    %v7354 = vrot.slane %v7350, %v7353
    %7355 = vmatprep.subr.mxu0 0.0
    %7356 = vmatpush1.msra.mxu0 %v7346
    %7357 = vmatprep.subr.mxu0 0.0
    %7358 = vmatpush1.msra.mxu0 %v7347
    %7359 = vmatprep.subr.mxu0 0.0
    %7360 = vmatpush1.msra.mxu0 %v7348
    %7361 = vmatprep.subr.mxu0 0.0
    %7362 = vmatpush1.msra.mxu0 %v7349
    %7363 = vmatprep.subr.mxu0 0.0
    %7364 = vmatpush1.msra.mxu0 0.0
    %7365 = vmatprep.subr.mxu0 0.0
    %7366 = vmatpush1.msra.mxu0 0.0
    %7367 = vmatprep.subr.mxu0 0.0
    %7368 = vmatpush1.msra.mxu0 0.0
    %7369 = vmatprep.subr.mxu0 0.0
    %7370 = vmatpush1.msra.mxu0 0.0
    %7371 = vmatprep.subr.mxu0 0.0
    %7372 = vmatpush1.msra.mxu0 0.0
    %7373 = vmatprep.subr.mxu0 0.0
    %7374 = vmatpush1.msra.mxu0 0.0
    %7375 = vmatprep.subr.mxu0 0.0
    %7376 = vmatpush1.msra.mxu0 0.0
    %7377 = vmatprep.subr.mxu0 0.0
    %7378 = vmatpush1.msra.mxu0 0.0
    %7379 = vmatprep.subr.mxu0 0.0
    %7380 = vmatpush1.msra.mxu0 0.0
    %7381 = vmatprep.subr.mxu0 0.0
    %7382 = vmatpush1.msra.mxu0 0.0
    %7383 = vmatprep.subr.mxu0 0.0
    %7384 = vmatpush1.msra.mxu0 0.0
    %7385 = vmatprep.subr.mxu0 0.0
    %7386 = vmatpush1.msra.mxu0 0.0
    %7387 = vmatprep.subr.mxu0 0.0
    %7388 = vmatpush1.msra.mxu0 0.0
    %7389 = vmatprep.subr.mxu0 0.0
    %7390 = vmatpush1.msra.mxu0 0.0
    %7391 = vmatprep.subr.mxu0 0.0
    %7392 = vmatpush1.msra.mxu0 0.0
    %7393 = vmatprep.subr.mxu0 0.0
    %7394 = vmatpush1.msra.mxu0 0.0
    %7395 = vmatprep.subr.mxu0 0.0
    %7396 = vmatpush1.msra.mxu0 0.0
    %7397 = vmatprep.subr.mxu0 0.0
    %7398 = vmatpush1.msra.mxu0 0.0
    %7399 = vmatprep.subr.mxu0 0.0
    %7400 = vmatpush1.msra.mxu0 0.0
    %7401 = vmatprep.subr.mxu0 0.0
    %7402 = vmatpush1.msra.mxu0 0.0
    %7403 = vmatprep.subr.mxu0 0.0
    %7404 = vmatpush1.msra.mxu0 0.0
    %7405 = vmatprep.subr.mxu0 0.0
    %7406 = vmatpush1.msra.mxu0 0.0
    %7407 = vmatprep.subr.mxu0 0.0
    %7408 = vmatpush1.msra.mxu0 0.0
    %7409 = vmatprep.subr.mxu0 0.0
    %7410 = vmatpush1.msra.mxu0 0.0
    %7411 = vmatprep.subr.mxu0 0.0
    %7412 = vmatpush1.msra.mxu0 0.0
    %7413 = vmatprep.subr.mxu0 0.0
    %7414 = vmatpush1.msra.mxu0 0.0
    %7415 = vmatprep.subr.mxu0 0.0
    %7416 = vmatpush1.msra.mxu0 0.0
    %7417 = vmatprep.subr.mxu0 0.0
    %7418 = vmatpush1.msra.mxu0 0.0
    %7419 = vmatprep.mubr.f32.mxu0 0.0
    %7420 = vmatmul.mubr.f32.gmra.mrb[0].mxu0 %v3143
    %v7421 = vpop.f32.mrb[0].mxu0
    %v7422 = vadd.f32 %v7354, %v7421
    %v7423 = vpop.f32.mrb[0].mxu0
    %7424 = vmatprep.mubr.f32.mxu0 0.0
    %7425 = vmatmul.mubr.f32.gmra.mrb[0].mxu0 %v3146
    %v7426 = vpop.f32.mrb[0].mxu0
    %v7427 = vadd.f32 %v7354, %v7426
    %v7428 = vpop.f32.mrb[0].mxu0
    %7429 = vdwg.mxu0
    %v7430 = vld [vmem:[#allocation2 + $0x420] sm:$0xff]
    %v7431 = vld [vmem:[#allocation2 + $0x428] sm:$0xff]
    %v7432 = vld [vmem:[#allocation2 + $0x430] sm:$0xff]
    %v7433 = vld [vmem:[#allocation2 + $0x438] sm:$0xff]
    %v7434 = vld [vmem:[#allocation2 + $0x440] sm:$0x1]
    %v7436 = vsel %vm230, %v7338, 0
    %v7439 = vsel %vm230, %v7343, 0
    %v7442 = vsel %vm230, %v7422, 0
    %v7445 = vsel %vm230, %v7427, 0
    %7447 = vmatprep.subr.mxu0 0.0
    %7448 = vmatpush1.xpose.msra.mxu0 %v7442
    %7449 = vmatprep.subr.mxu0 0.0
    %7450 = vmatpush1.xpose.msra.mxu0 %v7445
    %7451 = vmatprep.subr.mxu0 0.0
    %7452 = vmatpush1.xpose.msra.mxu0 0.0
    %7453 = vmatprep.subr.mxu0 0.0
    %7454 = vmatpush1.xpose.msra.mxu0 0.0
    %7455 = vmatprep.subr.mxu0 0.0
    %7456 = vmatpush1.xpose.msra.mxu0 0.0
    %7457 = vmatprep.subr.mxu0 0.0
    %7458 = vmatpush1.xpose.msra.mxu0 0.0
    %7459 = vmatprep.subr.mxu0 0.0
    %7460 = vmatpush1.xpose.msra.mxu0 0.0
    %7461 = vmatprep.subr.mxu0 0.0
    %7462 = vmatpush1.xpose.msra.mxu0 0.0
    %7463 = vmatprep.subr.mxu0 0.0
    %7464 = vmatpush1.xpose.msra.mxu0 0.0
    %7465 = vmatprep.subr.mxu0 0.0
    %7466 = vmatpush1.xpose.msra.mxu0 0.0
    %7467 = vmatprep.subr.mxu0 0.0
    %7468 = vmatpush1.xpose.msra.mxu0 0.0
    %7469 = vmatprep.subr.mxu0 0.0
    %7470 = vmatpush1.xpose.msra.mxu0 0.0
    %7471 = vmatprep.subr.mxu0 0.0
    %7472 = vmatpush1.xpose.msra.mxu0 0.0
    %7473 = vmatprep.subr.mxu0 0.0
    %7474 = vmatpush1.xpose.msra.mxu0 0.0
    %7475 = vmatprep.subr.mxu0 0.0
    %7476 = vmatpush1.xpose.msra.mxu0 0.0
    %7477 = vmatprep.subr.mxu0 0.0
    %7478 = vmatpush1.xpose.msra.mxu0 0.0
    %7479 = vmatprep.subr.mxu0 0.0
    %7480 = vmatpush1.xpose.msra.mxu0 0.0
    %7481 = vmatprep.subr.mxu0 0.0
    %7482 = vmatpush1.xpose.msra.mxu0 0.0
    %7483 = vmatprep.subr.mxu0 0.0
    %7484 = vmatpush1.xpose.msra.mxu0 0.0
    %7485 = vmatprep.subr.mxu0 0.0
    %7486 = vmatpush1.xpose.msra.mxu0 0.0
    %7487 = vmatprep.subr.mxu0 0.0
    %7488 = vmatpush1.xpose.msra.mxu0 0.0
    %7489 = vmatprep.subr.mxu0 0.0
    %7490 = vmatpush1.xpose.msra.mxu0 0.0
    %7491 = vmatprep.subr.mxu0 0.0
    %7492 = vmatpush1.xpose.msra.mxu0 0.0
    %7493 = vmatprep.subr.mxu0 0.0
    %7494 = vmatpush1.xpose.msra.mxu0 0.0
    %7495 = vmatprep.subr.mxu0 0.0
    %7496 = vmatpush1.xpose.msra.mxu0 0.0
    %7497 = vmatprep.subr.mxu0 0.0
    %7498 = vmatpush1.xpose.msra.mxu0 0.0
    %7499 = vmatprep.subr.mxu0 0.0
    %7500 = vmatpush1.xpose.msra.mxu0 0.0
    %7501 = vmatprep.subr.mxu0 0.0
    %7502 = vmatpush1.xpose.msra.mxu0 0.0
    %7503 = vmatprep.subr.mxu0 0.0
    %7504 = vmatpush1.xpose.msra.mxu0 0.0
    %7505 = vmatprep.subr.mxu0 0.0
    %7506 = vmatpush1.xpose.msra.mxu0 0.0
    %7507 = vmatprep.subr.mxu0 0.0
    %7508 = vmatpush1.xpose.msra.mxu0 0.0
    %7509 = vmatprep.subr.mxu0 0.0
    %7510 = vmatpush1.xpose.msra.mxu0 0.0
    %7511 = vmatprep.mubr.f32.mxu0 0.0
    %7512 = vmatmul.mubr.f32.gmra.mrb[0].mxu0 %v7436
    %v7513 = vpop.f32.mrb[0].mxu0
    %v7514 = vadd.f32 %v27, %v7513
    %v7515 = vpop.f32.mrb[0].mxu0
    %7516 = vmatprep.mubr.f32.mxu0 0.0
    %7517 = vmatmul.mubr.f32.gmra.mrb[0].mxu0 %v7439
    %v7518 = vpop.f32.mrb[0].mxu0
    %v7519 = vadd.f32 %v28, %v7518
    %v7520 = vpop.f32.mrb[0].mxu0
    %7521 = vdwg.mxu0
    %v7522 = vsel %vm314, %v7514, -inf
    %7523 = vmax.xlane.f32.xlu0 %v7522
    %v7524 = vpop.xlane.xlu0 %7523
    %v7525 = vsel %vm314, %v7519, -inf
    %7526 = vmax.xlane.f32.xlu0 %v7525
    %v7527 = vpop.xlane.xlu0 %7526
    %v7528 = vsub.f32 %v7514, %v7524
    %v7529 = vsub.f32 %v7519, %v7527
    %v7530 = vmul.f32 %v7528, 1.442695
    %v7531 = vpow.pop %v7530
    %v7532 = vmul.f32 %v7529, 1.442695
    %v7533 = vpow.pop %v7532
    %v7534 = vsel %vm314, %v7531, 0.0
    %7535 = vadd.xlane.f32.xlu0 %v7534
    %v7536 = vpop.xlane.xlu0 %7535
    %v7537 = vsel %vm314, %v7533, 0.0
    %7538 = vadd.xlane.f32.xlu0 %v7537
    %v7539 = vpop.xlane.xlu0 %7538
    %v7540 = vrcp.pop %v7536
    %v7541 = vrcp.pop %v7539
    %v7542 = vmul.f32 %v7531, %v7540
    %v7543 = vmul.f32 %v7533, %v7541
    %7544 = vrot.lane.b32.xlu0 %v7422, 96
    %v7545 = vpop.permute.xlu0 %7544
    %7546 = vrot.lane.b32.xlu0 %v7427, 96
    %v7547 = vpop.permute.xlu0 %7546
    %v7551 = vsel %vm314, %v7542, 0
    %v7554 = vsel %vm314, %v7543, 0
    %7556 = vmatprep.subr.mxu0 0.0
    %7557 = vmatpush1.msra.mxu0 %v7545
    %7558 = vmatprep.subr.mxu0 0.0
    %7559 = vmatpush1.msra.mxu0 %v7547
    %7560 = vmatprep.subr.mxu0 0.0
    %7561 = vmatpush1.msra.mxu0 0.0
    %7562 = vmatprep.subr.mxu0 0.0
    %7563 = vmatpush1.msra.mxu0 0.0
    %7564 = vmatprep.subr.mxu0 0.0
    %7565 = vmatpush1.msra.mxu0 0.0
    %7566 = vmatprep.subr.mxu0 0.0
    %7567 = vmatpush1.msra.mxu0 0.0
    %7568 = vmatprep.subr.mxu0 0.0
    %7569 = vmatpush1.msra.mxu0 0.0
    %7570 = vmatprep.subr.mxu0 0.0
    %7571 = vmatpush1.msra.mxu0 0.0
    %7572 = vmatprep.subr.mxu0 0.0
    %7573 = vmatpush1.msra.mxu0 0.0
    %7574 = vmatprep.subr.mxu0 0.0
    %7575 = vmatpush1.msra.mxu0 0.0
    %7576 = vmatprep.subr.mxu0 0.0
    %7577 = vmatpush1.msra.mxu0 0.0
    %7578 = vmatprep.subr.mxu0 0.0
    %7579 = vmatpush1.msra.mxu0 0.0
    %7580 = vmatprep.subr.mxu0 0.0
    %7581 = vmatpush1.msra.mxu0 0.0
    %7582 = vmatprep.subr.mxu0 0.0
    %7583 = vmatpush1.msra.mxu0 0.0
    %7584 = vmatprep.subr.mxu0 0.0
    %7585 = vmatpush1.msra.mxu0 0.0
    %7586 = vmatprep.subr.mxu0 0.0
    %7587 = vmatpush1.msra.mxu0 0.0
    %7588 = vmatprep.subr.mxu0 0.0
    %7589 = vmatpush1.msra.mxu0 0.0
    %7590 = vmatprep.subr.mxu0 0.0
    %7591 = vmatpush1.msra.mxu0 0.0
    %7592 = vmatprep.subr.mxu0 0.0
    %7593 = vmatpush1.msra.mxu0 0.0
    %7594 = vmatprep.subr.mxu0 0.0
    %7595 = vmatpush1.msra.mxu0 0.0
    %7596 = vmatprep.subr.mxu0 0.0
    %7597 = vmatpush1.msra.mxu0 0.0
    %7598 = vmatprep.subr.mxu0 0.0
    %7599 = vmatpush1.msra.mxu0 0.0
    %7600 = vmatprep.subr.mxu0 0.0
    %7601 = vmatpush1.msra.mxu0 0.0
    %7602 = vmatprep.subr.mxu0 0.0
    %7603 = vmatpush1.msra.mxu0 0.0
    %7604 = vmatprep.subr.mxu0 0.0
    %7605 = vmatpush1.msra.mxu0 0.0
    %7606 = vmatprep.subr.mxu0 0.0
    %7607 = vmatpush1.msra.mxu0 0.0
    %7608 = vmatprep.subr.mxu0 0.0
    %7609 = vmatpush1.msra.mxu0 0.0
    %7610 = vmatprep.subr.mxu0 0.0
    %7611 = vmatpush1.msra.mxu0 0.0
    %7612 = vmatprep.subr.mxu0 0.0
    %7613 = vmatpush1.msra.mxu0 0.0
    %7614 = vmatprep.subr.mxu0 0.0
    %7615 = vmatpush1.msra.mxu0 0.0
    %7616 = vmatprep.subr.mxu0 0.0
    %7617 = vmatpush1.msra.mxu0 0.0
    %7618 = vmatprep.subr.mxu0 0.0
    %7619 = vmatpush1.msra.mxu0 0.0
    %7620 = vmatprep.mubr.f32.mxu0 0.0
    %7621 = vmatmul.mubr.f32.gmra.mrb[0].mxu0 %v7551
    %v7622 = vpop.f32.mrb[0].mxu0
    %v7623 = vadd.f32 0.0, %v7622
    %v7624 = vpop.f32.mrb[0].mxu0
    %7625 = vmatprep.mubr.f32.mxu0 0.0
    %7626 = vmatmul.mubr.f32.gmra.mrb[0].mxu0 %v7554
    %v7627 = vpop.f32.mrb[0].mxu0
    %v7628 = vadd.f32 0.0, %v7627
    %v7629 = vpop.f32.mrb[0].mxu0
    %7630 = vdwg.mxu0
    %v7632 = vsel %vm230, %v7623, 0
    %v7635 = vsel %vm230, %v7628, 0
    %7637 = vmatprep.subr.mxu0 0.0
    %7638 = vmatpush1.msra.mxu0 %v7430
    %7639 = vmatprep.subr.mxu0 0.0
    %7640 = vmatpush1.msra.mxu0 0.0
    %7641 = vmatprep.subr.mxu0 0.0
    %7642 = vmatpush1.msra.mxu0 0.0
    %7643 = vmatprep.subr.mxu0 0.0
    %7644 = vmatpush1.msra.mxu0 0.0
    %7645 = vmatprep.subr.mxu0 0.0
    %7646 = vmatpush1.msra.mxu0 0.0
    %7647 = vmatprep.subr.mxu0 0.0
    %7648 = vmatpush1.msra.mxu0 0.0
    %7649 = vmatprep.subr.mxu0 0.0
    %7650 = vmatpush1.msra.mxu0 0.0
    %7651 = vmatprep.subr.mxu0 0.0
    %7652 = vmatpush1.msra.mxu0 0.0
    %7653 = vmatprep.subr.mxu0 0.0
    %7654 = vmatpush1.msra.mxu0 0.0
    %7655 = vmatprep.subr.mxu0 0.0
    %7656 = vmatpush1.msra.mxu0 0.0
    %7657 = vmatprep.subr.mxu0 0.0
    %7658 = vmatpush1.msra.mxu0 0.0
    %7659 = vmatprep.subr.mxu0 0.0
    %7660 = vmatpush1.msra.mxu0 0.0
    %7661 = vmatprep.subr.mxu0 0.0
    %7662 = vmatpush1.msra.mxu0 0.0
    %7663 = vmatprep.subr.mxu0 0.0
    %7664 = vmatpush1.msra.mxu0 0.0
    %7665 = vmatprep.subr.mxu0 0.0
    %7666 = vmatpush1.msra.mxu0 0.0
    %7667 = vmatprep.subr.mxu0 0.0
    %7668 = vmatpush1.msra.mxu0 0.0
    %7669 = vmatprep.subr.mxu0 0.0
    %7670 = vmatpush1.msra.mxu0 0.0
    %7671 = vmatprep.subr.mxu0 0.0
    %7672 = vmatpush1.msra.mxu0 0.0
    %7673 = vmatprep.subr.mxu0 0.0
    %7674 = vmatpush1.msra.mxu0 0.0
    %7675 = vmatprep.subr.mxu0 0.0
    %7676 = vmatpush1.msra.mxu0 0.0
    %7677 = vmatprep.subr.mxu0 0.0
    %7678 = vmatpush1.msra.mxu0 0.0
    %7679 = vmatprep.subr.mxu0 0.0
    %7680 = vmatpush1.msra.mxu0 0.0
    %7681 = vmatprep.subr.mxu0 0.0
    %7682 = vmatpush1.msra.mxu0 0.0
    %7683 = vmatprep.subr.mxu0 0.0
    %7684 = vmatpush1.msra.mxu0 0.0
    %7685 = vmatprep.subr.mxu0 0.0
    %7686 = vmatpush1.msra.mxu0 0.0
    %7687 = vmatprep.subr.mxu0 0.0
    %7688 = vmatpush1.msra.mxu0 0.0
    %7689 = vmatprep.subr.mxu0 0.0
    %7690 = vmatpush1.msra.mxu0 0.0
    %7691 = vmatprep.subr.mxu0 0.0
    %7692 = vmatpush1.msra.mxu0 0.0
    %7693 = vmatprep.subr.mxu0 0.0
    %7694 = vmatpush1.msra.mxu0 0.0
    %7695 = vmatprep.subr.mxu0 0.0
    %7696 = vmatpush1.msra.mxu0 0.0
    %7697 = vmatprep.subr.mxu0 0.0
    %7698 = vmatpush1.msra.mxu0 0.0
    %7699 = vmatprep.subr.mxu0 0.0
    %7700 = vmatpush1.msra.mxu0 0.0
    %7701 = vmatprep.mubr.f32.mxu0 0.0
    %7702 = vmatmul.mubr.f32.gmra.mrb[0].mxu0 %v7632
    %v7703 = vpop.f32.mrb[0].mxu0
    %v7704 = vadd.f32 0.0, %v7703
    %v7705 = vpop.f32.mrb[0].mxu0
    %7706 = vmatprep.mubr.f32.mxu0 0.0
    %7707 = vmatmul.mubr.f32.gmra.mrb[0].mxu0 %v7635
    %v7708 = vpop.f32.mrb[0].mxu0
    %v7709 = vadd.f32 0.0, %v7708
    %v7710 = vpop.f32.mrb[0].mxu0
    %7711 = vdwg.mxu0
    %v7712 = vlaneseq
    %v7713 = vshrl.u32 %v7712, 7
    %v7714 = vsub.s32 0, %v7713
    %v7715 = vrot.slane %v7434, %v7714
    %v7716 = vadd.f32 %v7715, %v7704
    %v7717 = vadd.f32 %v7715, %v7709
    %7718 = vrot.lane.b32.xlu0 %v7338, 120
    %v7719 = vpop.permute.xlu0 %7718
    %7720 = vrot.lane.b32.xlu0 %v7343, 120
    %v7721 = vpop.permute.xlu0 %7720
    %7722 = vrot.lane.b32.xlu0 %v7422, 120
    %v7723 = vpop.permute.xlu0 %7722
    %7724 = vrot.lane.b32.xlu0 %v7427, 120
    %v7725 = vpop.permute.xlu0 %7724
    %v7726 = vsel %vm230, %v7719, 0
    %v7728 = vsel %vm230, %v7721, 0
    %v7730 = vsel %vm230, %v7723, 0
    %v7732 = vsel %vm230, %v7725, 0
    %7734 = vmatprep.subr.mxu0 0.0
    %7735 = vmatpush1.xpose.msra.mxu0 %v7730
    %7736 = vmatprep.subr.mxu0 0.0
    %7737 = vmatpush1.xpose.msra.mxu0 %v7732
    %7738 = vmatprep.subr.mxu0 0.0
    %7739 = vmatpush1.xpose.msra.mxu0 0.0
    %7740 = vmatprep.subr.mxu0 0.0
    %7741 = vmatpush1.xpose.msra.mxu0 0.0
    %7742 = vmatprep.subr.mxu0 0.0
    %7743 = vmatpush1.xpose.msra.mxu0 0.0
    %7744 = vmatprep.subr.mxu0 0.0
    %7745 = vmatpush1.xpose.msra.mxu0 0.0
    %7746 = vmatprep.subr.mxu0 0.0
    %7747 = vmatpush1.xpose.msra.mxu0 0.0
    %7748 = vmatprep.subr.mxu0 0.0
    %7749 = vmatpush1.xpose.msra.mxu0 0.0
    %7750 = vmatprep.subr.mxu0 0.0
    %7751 = vmatpush1.xpose.msra.mxu0 0.0
    %7752 = vmatprep.subr.mxu0 0.0
    %7753 = vmatpush1.xpose.msra.mxu0 0.0
    %7754 = vmatprep.subr.mxu0 0.0
    %7755 = vmatpush1.xpose.msra.mxu0 0.0
    %7756 = vmatprep.subr.mxu0 0.0
    %7757 = vmatpush1.xpose.msra.mxu0 0.0
    %7758 = vmatprep.subr.mxu0 0.0
    %7759 = vmatpush1.xpose.msra.mxu0 0.0
    %7760 = vmatprep.subr.mxu0 0.0
    %7761 = vmatpush1.xpose.msra.mxu0 0.0
    %7762 = vmatprep.subr.mxu0 0.0
    %7763 = vmatpush1.xpose.msra.mxu0 0.0
    %7764 = vmatprep.subr.mxu0 0.0
    %7765 = vmatpush1.xpose.msra.mxu0 0.0
    %7766 = vmatprep.subr.mxu0 0.0
    %7767 = vmatpush1.xpose.msra.mxu0 0.0
    %7768 = vmatprep.subr.mxu0 0.0
    %7769 = vmatpush1.xpose.msra.mxu0 0.0
    %7770 = vmatprep.subr.mxu0 0.0
    %7771 = vmatpush1.xpose.msra.mxu0 0.0
    %7772 = vmatprep.subr.mxu0 0.0
    %7773 = vmatpush1.xpose.msra.mxu0 0.0
    %7774 = vmatprep.subr.mxu0 0.0
    %7775 = vmatpush1.xpose.msra.mxu0 0.0
    %7776 = vmatprep.subr.mxu0 0.0
    %7777 = vmatpush1.xpose.msra.mxu0 0.0
    %7778 = vmatprep.subr.mxu0 0.0
    %7779 = vmatpush1.xpose.msra.mxu0 0.0
    %7780 = vmatprep.subr.mxu0 0.0
    %7781 = vmatpush1.xpose.msra.mxu0 0.0
    %7782 = vmatprep.subr.mxu0 0.0
    %7783 = vmatpush1.xpose.msra.mxu0 0.0
    %7784 = vmatprep.subr.mxu0 0.0
    %7785 = vmatpush1.xpose.msra.mxu0 0.0
    %7786 = vmatprep.subr.mxu0 0.0
    %7787 = vmatpush1.xpose.msra.mxu0 0.0
    %7788 = vmatprep.subr.mxu0 0.0
    %7789 = vmatpush1.xpose.msra.mxu0 0.0
    %7790 = vmatprep.subr.mxu0 0.0
    %7791 = vmatpush1.xpose.msra.mxu0 0.0
    %7792 = vmatprep.subr.mxu0 0.0
    %7793 = vmatpush1.xpose.msra.mxu0 0.0
    %7794 = vmatprep.subr.mxu0 0.0
    %7795 = vmatpush1.xpose.msra.mxu0 0.0
    %7796 = vmatprep.subr.mxu0 0.0
    %7797 = vmatpush1.xpose.msra.mxu0 0.0
    %7798 = vmatprep.mubr.f32.mxu0 0.0
    %7799 = vmatmul.mubr.f32.gmra.mrb[0].mxu0 %v7726
    %v7800 = vpop.f32.mrb[0].mxu0
    %v7801 = vadd.f32 %v27, %v7800
    %v7802 = vpop.f32.mrb[0].mxu0
    %7803 = vmatprep.mubr.f32.mxu0 0.0
    %7804 = vmatmul.mubr.f32.gmra.mrb[0].mxu0 %v7728
    %v7805 = vpop.f32.mrb[0].mxu0
    %v7806 = vadd.f32 %v28, %v7805
    %v7807 = vpop.f32.mrb[0].mxu0
    %7808 = vdwg.mxu0
    %v7809 = vsel %vm314, %v7801, -inf
    %7810 = vmax.xlane.f32.xlu0 %v7809
    %v7811 = vpop.xlane.xlu0 %7810
    %v7812 = vsel %vm314, %v7806, -inf
    %7813 = vmax.xlane.f32.xlu0 %v7812
    %v7814 = vpop.xlane.xlu0 %7813
    %v7815 = vsub.f32 %v7801, %v7811
    %v7816 = vsub.f32 %v7806, %v7814
    %v7817 = vmul.f32 %v7815, 1.442695
    %v7818 = vpow.pop %v7817
    %v7819 = vmul.f32 %v7816, 1.442695
    %v7820 = vpow.pop %v7819
    %v7821 = vsel %vm314, %v7818, 0.0
    %7822 = vadd.xlane.f32.xlu0 %v7821
    %v7823 = vpop.xlane.xlu0 %7822
    %v7824 = vsel %vm314, %v7820, 0.0
    %7825 = vadd.xlane.f32.xlu0 %v7824
    %v7826 = vpop.xlane.xlu0 %7825
    %v7827 = vrcp.pop %v7823
    %v7828 = vrcp.pop %v7826
    %v7829 = vmul.f32 %v7818, %v7827
    %v7830 = vmul.f32 %v7820, %v7828
    %7831 = vrot.lane.b32.xlu0 %v7422, 88
    %v7832 = vpop.permute.xlu0 %7831
    %7833 = vrot.lane.b32.xlu0 %v7427, 88
    %v7834 = vpop.permute.xlu0 %7833
    %v7838 = vsel %vm314, %v7829, 0
    %v7841 = vsel %vm314, %v7830, 0
    %7843 = vmatprep.subr.mxu0 0.0
    %7844 = vmatpush1.msra.mxu0 %v7832
    %7845 = vmatprep.subr.mxu0 0.0
    %7846 = vmatpush1.msra.mxu0 %v7834
    %7847 = vmatprep.subr.mxu0 0.0
    %7848 = vmatpush1.msra.mxu0 0.0
    %7849 = vmatprep.subr.mxu0 0.0
    %7850 = vmatpush1.msra.mxu0 0.0
    %7851 = vmatprep.subr.mxu0 0.0
    %7852 = vmatpush1.msra.mxu0 0.0
    %7853 = vmatprep.subr.mxu0 0.0
    %7854 = vmatpush1.msra.mxu0 0.0
    %7855 = vmatprep.subr.mxu0 0.0
    %7856 = vmatpush1.msra.mxu0 0.0
    %7857 = vmatprep.subr.mxu0 0.0
    %7858 = vmatpush1.msra.mxu0 0.0
    %7859 = vmatprep.subr.mxu0 0.0
    %7860 = vmatpush1.msra.mxu0 0.0
    %7861 = vmatprep.subr.mxu0 0.0
    %7862 = vmatpush1.msra.mxu0 0.0
    %7863 = vmatprep.subr.mxu0 0.0
    %7864 = vmatpush1.msra.mxu0 0.0
    %7865 = vmatprep.subr.mxu0 0.0
    %7866 = vmatpush1.msra.mxu0 0.0
    %7867 = vmatprep.subr.mxu0 0.0
    %7868 = vmatpush1.msra.mxu0 0.0
    %7869 = vmatprep.subr.mxu0 0.0
    %7870 = vmatpush1.msra.mxu0 0.0
    %7871 = vmatprep.subr.mxu0 0.0
    %7872 = vmatpush1.msra.mxu0 0.0
    %7873 = vmatprep.subr.mxu0 0.0
    %7874 = vmatpush1.msra.mxu0 0.0
    %7875 = vmatprep.subr.mxu0 0.0
    %7876 = vmatpush1.msra.mxu0 0.0
    %7877 = vmatprep.subr.mxu0 0.0
    %7878 = vmatpush1.msra.mxu0 0.0
    %7879 = vmatprep.subr.mxu0 0.0
    %7880 = vmatpush1.msra.mxu0 0.0
    %7881 = vmatprep.subr.mxu0 0.0
    %7882 = vmatpush1.msra.mxu0 0.0
    %7883 = vmatprep.subr.mxu0 0.0
    %7884 = vmatpush1.msra.mxu0 0.0
    %7885 = vmatprep.subr.mxu0 0.0
    %7886 = vmatpush1.msra.mxu0 0.0
    %7887 = vmatprep.subr.mxu0 0.0
    %7888 = vmatpush1.msra.mxu0 0.0
    %7889 = vmatprep.subr.mxu0 0.0
    %7890 = vmatpush1.msra.mxu0 0.0
    %7891 = vmatprep.subr.mxu0 0.0
    %7892 = vmatpush1.msra.mxu0 0.0
    %7893 = vmatprep.subr.mxu0 0.0
    %7894 = vmatpush1.msra.mxu0 0.0
    %7895 = vmatprep.subr.mxu0 0.0
    %7896 = vmatpush1.msra.mxu0 0.0
    %7897 = vmatprep.subr.mxu0 0.0
    %7898 = vmatpush1.msra.mxu0 0.0
    %7899 = vmatprep.subr.mxu0 0.0
    %7900 = vmatpush1.msra.mxu0 0.0
    %7901 = vmatprep.subr.mxu0 0.0
    %7902 = vmatpush1.msra.mxu0 0.0
    %7903 = vmatprep.subr.mxu0 0.0
    %7904 = vmatpush1.msra.mxu0 0.0
    %7905 = vmatprep.subr.mxu0 0.0
    %7906 = vmatpush1.msra.mxu0 0.0
    %7907 = vmatprep.mubr.f32.mxu0 0.0
    %7908 = vmatmul.mubr.f32.gmra.mrb[0].mxu0 %v7838
    %v7909 = vpop.f32.mrb[0].mxu0
    %v7910 = vadd.f32 0.0, %v7909
    %v7911 = vpop.f32.mrb[0].mxu0
    %7912 = vmatprep.mubr.f32.mxu0 0.0
    %7913 = vmatmul.mubr.f32.gmra.mrb[0].mxu0 %v7841
    %v7914 = vpop.f32.mrb[0].mxu0
    %v7915 = vadd.f32 0.0, %v7914
    %v7916 = vpop.f32.mrb[0].mxu0
    %7917 = vdwg.mxu0
    %v7919 = vsel %vm230, %v7910, 0
    %v7922 = vsel %vm230, %v7915, 0
    %7924 = vmatprep.subr.mxu0 0.0
    %7925 = vmatpush1.msra.mxu0 %v7431
    %7926 = vmatprep.subr.mxu0 0.0
    %7927 = vmatpush1.msra.mxu0 0.0
    %7928 = vmatprep.subr.mxu0 0.0
    %7929 = vmatpush1.msra.mxu0 0.0
    %7930 = vmatprep.subr.mxu0 0.0
    %7931 = vmatpush1.msra.mxu0 0.0
    %7932 = vmatprep.subr.mxu0 0.0
    %7933 = vmatpush1.msra.mxu0 0.0
    %7934 = vmatprep.subr.mxu0 0.0
    %7935 = vmatpush1.msra.mxu0 0.0
    %7936 = vmatprep.subr.mxu0 0.0
    %7937 = vmatpush1.msra.mxu0 0.0
    %7938 = vmatprep.subr.mxu0 0.0
    %7939 = vmatpush1.msra.mxu0 0.0
    %7940 = vmatprep.subr.mxu0 0.0
    %7941 = vmatpush1.msra.mxu0 0.0
    %7942 = vmatprep.subr.mxu0 0.0
    %7943 = vmatpush1.msra.mxu0 0.0
    %7944 = vmatprep.subr.mxu0 0.0
    %7945 = vmatpush1.msra.mxu0 0.0
    %7946 = vmatprep.subr.mxu0 0.0
    %7947 = vmatpush1.msra.mxu0 0.0
    %7948 = vmatprep.subr.mxu0 0.0
    %7949 = vmatpush1.msra.mxu0 0.0
    %7950 = vmatprep.subr.mxu0 0.0
    %7951 = vmatpush1.msra.mxu0 0.0
    %7952 = vmatprep.subr.mxu0 0.0
    %7953 = vmatpush1.msra.mxu0 0.0
    %7954 = vmatprep.subr.mxu0 0.0
    %7955 = vmatpush1.msra.mxu0 0.0
    %7956 = vmatprep.subr.mxu0 0.0
    %7957 = vmatpush1.msra.mxu0 0.0
    %7958 = vmatprep.subr.mxu0 0.0
    %7959 = vmatpush1.msra.mxu0 0.0
    %7960 = vmatprep.subr.mxu0 0.0
    %7961 = vmatpush1.msra.mxu0 0.0
    %7962 = vmatprep.subr.mxu0 0.0
    %7963 = vmatpush1.msra.mxu0 0.0
    %7964 = vmatprep.subr.mxu0 0.0
    %7965 = vmatpush1.msra.mxu0 0.0
    %7966 = vmatprep.subr.mxu0 0.0
    %7967 = vmatpush1.msra.mxu0 0.0
    %7968 = vmatprep.subr.mxu0 0.0
    %7969 = vmatpush1.msra.mxu0 0.0
    %7970 = vmatprep.subr.mxu0 0.0
    %7971 = vmatpush1.msra.mxu0 0.0
    %7972 = vmatprep.subr.mxu0 0.0
    %7973 = vmatpush1.msra.mxu0 0.0
    %7974 = vmatprep.subr.mxu0 0.0
    %7975 = vmatpush1.msra.mxu0 0.0
    %7976 = vmatprep.subr.mxu0 0.0
    %7977 = vmatpush1.msra.mxu0 0.0
    %7978 = vmatprep.subr.mxu0 0.0
    %7979 = vmatpush1.msra.mxu0 0.0
    %7980 = vmatprep.subr.mxu0 0.0
    %7981 = vmatpush1.msra.mxu0 0.0
    %7982 = vmatprep.subr.mxu0 0.0
    %7983 = vmatpush1.msra.mxu0 0.0
    %7984 = vmatprep.subr.mxu0 0.0
    %7985 = vmatpush1.msra.mxu0 0.0
    %7986 = vmatprep.subr.mxu0 0.0
    %7987 = vmatpush1.msra.mxu0 0.0
    %7988 = vmatprep.mubr.f32.mxu0 0.0
    %7989 = vmatmul.mubr.f32.gmra.mrb[0].mxu0 %v7919
    %v7990 = vpop.f32.mrb[0].mxu0
    %v7991 = vadd.f32 0.0, %v7990
    %v7992 = vpop.f32.mrb[0].mxu0
    %7993 = vmatprep.mubr.f32.mxu0 0.0
    %7994 = vmatmul.mubr.f32.gmra.mrb[0].mxu0 %v7922
    %v7995 = vpop.f32.mrb[0].mxu0
    %v7996 = vadd.f32 0.0, %v7995
    %v7997 = vpop.f32.mrb[0].mxu0
    %7998 = vdwg.mxu0
    %v7999 = vadd.f32 %v7716, %v7991
    %v8000 = vadd.f32 %v7717, %v7996
    %8001 = vrot.lane.b32.xlu0 %v7338, 112
    %v8002 = vpop.permute.xlu0 %8001
    %8003 = vrot.lane.b32.xlu0 %v7343, 112
    %v8004 = vpop.permute.xlu0 %8003
    %8005 = vrot.lane.b32.xlu0 %v7422, 112
    %v8006 = vpop.permute.xlu0 %8005
    %8007 = vrot.lane.b32.xlu0 %v7427, 112
    %v8008 = vpop.permute.xlu0 %8007
    %v8009 = vsel %vm230, %v8002, 0
    %v8011 = vsel %vm230, %v8004, 0
    %v8013 = vsel %vm230, %v8006, 0
    %v8015 = vsel %vm230, %v8008, 0
    %8017 = vmatprep.subr.mxu0 0.0
    %8018 = vmatpush1.xpose.msra.mxu0 %v8013
    %8019 = vmatprep.subr.mxu0 0.0
    %8020 = vmatpush1.xpose.msra.mxu0 %v8015
    %8021 = vmatprep.subr.mxu0 0.0
    %8022 = vmatpush1.xpose.msra.mxu0 0.0
    %8023 = vmatprep.subr.mxu0 0.0
    %8024 = vmatpush1.xpose.msra.mxu0 0.0
    %8025 = vmatprep.subr.mxu0 0.0
    %8026 = vmatpush1.xpose.msra.mxu0 0.0
    %8027 = vmatprep.subr.mxu0 0.0
    %8028 = vmatpush1.xpose.msra.mxu0 0.0
    %8029 = vmatprep.subr.mxu0 0.0
    %8030 = vmatpush1.xpose.msra.mxu0 0.0
    %8031 = vmatprep.subr.mxu0 0.0
    %8032 = vmatpush1.xpose.msra.mxu0 0.0
    %8033 = vmatprep.subr.mxu0 0.0
    %8034 = vmatpush1.xpose.msra.mxu0 0.0
    %8035 = vmatprep.subr.mxu0 0.0
    %8036 = vmatpush1.xpose.msra.mxu0 0.0
    %8037 = vmatprep.subr.mxu0 0.0
    %8038 = vmatpush1.xpose.msra.mxu0 0.0
    %8039 = vmatprep.subr.mxu0 0.0
    %8040 = vmatpush1.xpose.msra.mxu0 0.0
    %8041 = vmatprep.subr.mxu0 0.0
    %8042 = vmatpush1.xpose.msra.mxu0 0.0
    %8043 = vmatprep.subr.mxu0 0.0
    %8044 = vmatpush1.xpose.msra.mxu0 0.0
    %8045 = vmatprep.subr.mxu0 0.0
    %8046 = vmatpush1.xpose.msra.mxu0 0.0
    %8047 = vmatprep.subr.mxu0 0.0
    %8048 = vmatpush1.xpose.msra.mxu0 0.0
    %8049 = vmatprep.subr.mxu0 0.0
    %8050 = vmatpush1.xpose.msra.mxu0 0.0
    %8051 = vmatprep.subr.mxu0 0.0
    %8052 = vmatpush1.xpose.msra.mxu0 0.0
    %8053 = vmatprep.subr.mxu0 0.0
    %8054 = vmatpush1.xpose.msra.mxu0 0.0
    %8055 = vmatprep.subr.mxu0 0.0
    %8056 = vmatpush1.xpose.msra.mxu0 0.0
    %8057 = vmatprep.subr.mxu0 0.0
    %8058 = vmatpush1.xpose.msra.mxu0 0.0
    %8059 = vmatprep.subr.mxu0 0.0
    %8060 = vmatpush1.xpose.msra.mxu0 0.0
    %8061 = vmatprep.subr.mxu0 0.0
    %8062 = vmatpush1.xpose.msra.mxu0 0.0
    %8063 = vmatprep.subr.mxu0 0.0
    %8064 = vmatpush1.xpose.msra.mxu0 0.0
    %8065 = vmatprep.subr.mxu0 0.0
    %8066 = vmatpush1.xpose.msra.mxu0 0.0
    %8067 = vmatprep.subr.mxu0 0.0
    %8068 = vmatpush1.xpose.msra.mxu0 0.0
    %8069 = vmatprep.subr.mxu0 0.0
    %8070 = vmatpush1.xpose.msra.mxu0 0.0
    %8071 = vmatprep.subr.mxu0 0.0
    %8072 = vmatpush1.xpose.msra.mxu0 0.0
    %8073 = vmatprep.subr.mxu0 0.0
    %8074 = vmatpush1.xpose.msra.mxu0 0.0
    %8075 = vmatprep.subr.mxu0 0.0
    %8076 = vmatpush1.xpose.msra.mxu0 0.0
    %8077 = vmatprep.subr.mxu0 0.0
    %8078 = vmatpush1.xpose.msra.mxu0 0.0
    %8079 = vmatprep.subr.mxu0 0.0
    %8080 = vmatpush1.xpose.msra.mxu0 0.0
    %8081 = vmatprep.mubr.f32.mxu0 0.0
    %8082 = vmatmul.mubr.f32.gmra.mrb[0].mxu0 %v8009
    %v8083 = vpop.f32.mrb[0].mxu0
    %v8084 = vadd.f32 %v27, %v8083
    %v8085 = vpop.f32.mrb[0].mxu0
    %8086 = vmatprep.mubr.f32.mxu0 0.0
    %8087 = vmatmul.mubr.f32.gmra.mrb[0].mxu0 %v8011
    %v8088 = vpop.f32.mrb[0].mxu0
    %v8089 = vadd.f32 %v28, %v8088
    %v8090 = vpop.f32.mrb[0].mxu0
    %8091 = vdwg.mxu0
    %v8092 = vsel %vm314, %v8084, -inf
    %8093 = vmax.xlane.f32.xlu0 %v8092
    %v8094 = vpop.xlane.xlu0 %8093
    %v8095 = vsel %vm314, %v8089, -inf
    %8096 = vmax.xlane.f32.xlu0 %v8095
    %v8097 = vpop.xlane.xlu0 %8096
    %v8098 = vsub.f32 %v8084, %v8094
    %v8099 = vsub.f32 %v8089, %v8097
    %v8100 = vmul.f32 %v8098, 1.442695
    %v8101 = vpow.pop %v8100
    %v8102 = vmul.f32 %v8099, 1.442695
    %v8103 = vpow.pop %v8102
    %v8104 = vsel %vm314, %v8101, 0.0
    %8105 = vadd.xlane.f32.xlu0 %v8104
    %v8106 = vpop.xlane.xlu0 %8105
    %v8107 = vsel %vm314, %v8103, 0.0
    %8108 = vadd.xlane.f32.xlu0 %v8107
    %v8109 = vpop.xlane.xlu0 %8108
    %v8110 = vrcp.pop %v8106
    %v8111 = vrcp.pop %v8109
    %v8112 = vmul.f32 %v8101, %v8110
    %v8113 = vmul.f32 %v8103, %v8111
    %8114 = vrot.lane.b32.xlu0 %v7422, 80
    %v8115 = vpop.permute.xlu0 %8114
    %8116 = vrot.lane.b32.xlu0 %v7427, 80
    %v8117 = vpop.permute.xlu0 %8116
    %v8121 = vsel %vm314, %v8112, 0
    %v8124 = vsel %vm314, %v8113, 0
    %8126 = vmatprep.subr.mxu0 0.0
    %8127 = vmatpush1.msra.mxu0 %v8115
    %8128 = vmatprep.subr.mxu0 0.0
    %8129 = vmatpush1.msra.mxu0 %v8117
    %8130 = vmatprep.subr.mxu0 0.0
    %8131 = vmatpush1.msra.mxu0 0.0
    %8132 = vmatprep.subr.mxu0 0.0
    %8133 = vmatpush1.msra.mxu0 0.0
    %8134 = vmatprep.subr.mxu0 0.0
    %8135 = vmatpush1.msra.mxu0 0.0
    %8136 = vmatprep.subr.mxu0 0.0
    %8137 = vmatpush1.msra.mxu0 0.0
    %8138 = vmatprep.subr.mxu0 0.0
    %8139 = vmatpush1.msra.mxu0 0.0
    %8140 = vmatprep.subr.mxu0 0.0
    %8141 = vmatpush1.msra.mxu0 0.0
    %8142 = vmatprep.subr.mxu0 0.0
    %8143 = vmatpush1.msra.mxu0 0.0
    %8144 = vmatprep.subr.mxu0 0.0
    %8145 = vmatpush1.msra.mxu0 0.0
    %8146 = vmatprep.subr.mxu0 0.0
    %8147 = vmatpush1.msra.mxu0 0.0
    %8148 = vmatprep.subr.mxu0 0.0
    %8149 = vmatpush1.msra.mxu0 0.0
    %8150 = vmatprep.subr.mxu0 0.0
    %8151 = vmatpush1.msra.mxu0 0.0
    %8152 = vmatprep.subr.mxu0 0.0
    %8153 = vmatpush1.msra.mxu0 0.0
    %8154 = vmatprep.subr.mxu0 0.0
    %8155 = vmatpush1.msra.mxu0 0.0
    %8156 = vmatprep.subr.mxu0 0.0
    %8157 = vmatpush1.msra.mxu0 0.0
    %8158 = vmatprep.subr.mxu0 0.0
    %8159 = vmatpush1.msra.mxu0 0.0
    %8160 = vmatprep.subr.mxu0 0.0
    %8161 = vmatpush1.msra.mxu0 0.0
    %8162 = vmatprep.subr.mxu0 0.0
    %8163 = vmatpush1.msra.mxu0 0.0
    %8164 = vmatprep.subr.mxu0 0.0
    %8165 = vmatpush1.msra.mxu0 0.0
    %8166 = vmatprep.subr.mxu0 0.0
    %8167 = vmatpush1.msra.mxu0 0.0
    %8168 = vmatprep.subr.mxu0 0.0
    %8169 = vmatpush1.msra.mxu0 0.0
    %8170 = vmatprep.subr.mxu0 0.0
    %8171 = vmatpush1.msra.mxu0 0.0
    %8172 = vmatprep.subr.mxu0 0.0
    %8173 = vmatpush1.msra.mxu0 0.0
    %8174 = vmatprep.subr.mxu0 0.0
    %8175 = vmatpush1.msra.mxu0 0.0
    %8176 = vmatprep.subr.mxu0 0.0
    %8177 = vmatpush1.msra.mxu0 0.0
    %8178 = vmatprep.subr.mxu0 0.0
    %8179 = vmatpush1.msra.mxu0 0.0
    %8180 = vmatprep.subr.mxu0 0.0
    %8181 = vmatpush1.msra.mxu0 0.0
    %8182 = vmatprep.subr.mxu0 0.0
    %8183 = vmatpush1.msra.mxu0 0.0
    %8184 = vmatprep.subr.mxu0 0.0
    %8185 = vmatpush1.msra.mxu0 0.0
    %8186 = vmatprep.subr.mxu0 0.0
    %8187 = vmatpush1.msra.mxu0 0.0
    %8188 = vmatprep.subr.mxu0 0.0
    %8189 = vmatpush1.msra.mxu0 0.0
    %8190 = vmatprep.mubr.f32.mxu0 0.0
    %8191 = vmatmul.mubr.f32.gmra.mrb[0].mxu0 %v8121
    %v8192 = vpop.f32.mrb[0].mxu0
    %v8193 = vadd.f32 0.0, %v8192
    %v8194 = vpop.f32.mrb[0].mxu0
    %8195 = vmatprep.mubr.f32.mxu0 0.0
    %8196 = vmatmul.mubr.f32.gmra.mrb[0].mxu0 %v8124
    %v8197 = vpop.f32.mrb[0].mxu0
    %v8198 = vadd.f32 0.0, %v8197
    %v8199 = vpop.f32.mrb[0].mxu0
    %8200 = vdwg.mxu0
    %v8202 = vsel %vm230, %v8193, 0
    %v8205 = vsel %vm230, %v8198, 0
    %8207 = vmatprep.subr.mxu0 0.0
    %8208 = vmatpush1.msra.mxu0 %v7432
    %8209 = vmatprep.subr.mxu0 0.0
    %8210 = vmatpush1.msra.mxu0 0.0
    %8211 = vmatprep.subr.mxu0 0.0
    %8212 = vmatpush1.msra.mxu0 0.0
    %8213 = vmatprep.subr.mxu0 0.0
    %8214 = vmatpush1.msra.mxu0 0.0
    %8215 = vmatprep.subr.mxu0 0.0
    %8216 = vmatpush1.msra.mxu0 0.0
    %8217 = vmatprep.subr.mxu0 0.0
    %8218 = vmatpush1.msra.mxu0 0.0
    %8219 = vmatprep.subr.mxu0 0.0
    %8220 = vmatpush1.msra.mxu0 0.0
    %8221 = vmatprep.subr.mxu0 0.0
    %8222 = vmatpush1.msra.mxu0 0.0
    %8223 = vmatprep.subr.mxu0 0.0
    %8224 = vmatpush1.msra.mxu0 0.0
    %8225 = vmatprep.subr.mxu0 0.0
    %8226 = vmatpush1.msra.mxu0 0.0
    %8227 = vmatprep.subr.mxu0 0.0
    %8228 = vmatpush1.msra.mxu0 0.0
    %8229 = vmatprep.subr.mxu0 0.0
    %8230 = vmatpush1.msra.mxu0 0.0
    %8231 = vmatprep.subr.mxu0 0.0
    %8232 = vmatpush1.msra.mxu0 0.0
    %8233 = vmatprep.subr.mxu0 0.0
    %8234 = vmatpush1.msra.mxu0 0.0
    %8235 = vmatprep.subr.mxu0 0.0
    %8236 = vmatpush1.msra.mxu0 0.0
    %8237 = vmatprep.subr.mxu0 0.0
    %8238 = vmatpush1.msra.mxu0 0.0
    %8239 = vmatprep.subr.mxu0 0.0
    %8240 = vmatpush1.msra.mxu0 0.0
    %8241 = vmatprep.subr.mxu0 0.0
    %8242 = vmatpush1.msra.mxu0 0.0
    %8243 = vmatprep.subr.mxu0 0.0
    %8244 = vmatpush1.msra.mxu0 0.0
    %8245 = vmatprep.subr.mxu0 0.0
    %8246 = vmatpush1.msra.mxu0 0.0
    %8247 = vmatprep.subr.mxu0 0.0
    %8248 = vmatpush1.msra.mxu0 0.0
    %8249 = vmatprep.subr.mxu0 0.0
    %8250 = vmatpush1.msra.mxu0 0.0
    %8251 = vmatprep.subr.mxu0 0.0
    %8252 = vmatpush1.msra.mxu0 0.0
    %8253 = vmatprep.subr.mxu0 0.0
    %8254 = vmatpush1.msra.mxu0 0.0
    %8255 = vmatprep.subr.mxu0 0.0
    %8256 = vmatpush1.msra.mxu0 0.0
    %8257 = vmatprep.subr.mxu0 0.0
    %8258 = vmatpush1.msra.mxu0 0.0
    %8259 = vmatprep.subr.mxu0 0.0
    %8260 = vmatpush1.msra.mxu0 0.0
    %8261 = vmatprep.subr.mxu0 0.0
    %8262 = vmatpush1.msra.mxu0 0.0
    %8263 = vmatprep.subr.mxu0 0.0
    %8264 = vmatpush1.msra.mxu0 0.0
    %8265 = vmatprep.subr.mxu0 0.0
    %8266 = vmatpush1.msra.mxu0 0.0
    %8267 = vmatprep.subr.mxu0 0.0
    %8268 = vmatpush1.msra.mxu0 0.0
    %8269 = vmatprep.subr.mxu0 0.0
    %8270 = vmatpush1.msra.mxu0 0.0
    %8271 = vmatprep.mubr.f32.mxu0 0.0
    %8272 = vmatmul.mubr.f32.gmra.mrb[0].mxu0 %v8202
    %v8273 = vpop.f32.mrb[0].mxu0
    %v8274 = vadd.f32 0.0, %v8273
    %v8275 = vpop.f32.mrb[0].mxu0
    %8276 = vmatprep.mubr.f32.mxu0 0.0
    %8277 = vmatmul.mubr.f32.gmra.mrb[0].mxu0 %v8205
    %v8278 = vpop.f32.mrb[0].mxu0
    %v8279 = vadd.f32 0.0, %v8278
    %v8280 = vpop.f32.mrb[0].mxu0
    %8281 = vdwg.mxu0
    %v8282 = vadd.f32 %v7999, %v8274
    %v8283 = vadd.f32 %v8000, %v8279
    %8284 = vrot.lane.b32.xlu0 %v7338, 104
    %v8285 = vpop.permute.xlu0 %8284
    %8286 = vrot.lane.b32.xlu0 %v7343, 104
    %v8287 = vpop.permute.xlu0 %8286
    %8288 = vrot.lane.b32.xlu0 %v7422, 104
    %v8289 = vpop.permute.xlu0 %8288
    %8290 = vrot.lane.b32.xlu0 %v7427, 104
    %v8291 = vpop.permute.xlu0 %8290
    %v8292 = vsel %vm230, %v8285, 0
    %v8294 = vsel %vm230, %v8287, 0
    %v8296 = vsel %vm230, %v8289, 0
    %v8298 = vsel %vm230, %v8291, 0
    %8300 = vmatprep.subr.mxu0 0.0
    %8301 = vmatpush1.xpose.msra.mxu0 %v8296
    %8302 = vmatprep.subr.mxu0 0.0
    %8303 = vmatpush1.xpose.msra.mxu0 %v8298
    %8304 = vmatprep.subr.mxu0 0.0
    %8305 = vmatpush1.xpose.msra.mxu0 0.0
    %8306 = vmatprep.subr.mxu0 0.0
    %8307 = vmatpush1.xpose.msra.mxu0 0.0
    %8308 = vmatprep.subr.mxu0 0.0
    %8309 = vmatpush1.xpose.msra.mxu0 0.0
    %8310 = vmatprep.subr.mxu0 0.0
    %8311 = vmatpush1.xpose.msra.mxu0 0.0
    %8312 = vmatprep.subr.mxu0 0.0
    %8313 = vmatpush1.xpose.msra.mxu0 0.0
    %8314 = vmatprep.subr.mxu0 0.0
    %8315 = vmatpush1.xpose.msra.mxu0 0.0
    %8316 = vmatprep.subr.mxu0 0.0
    %8317 = vmatpush1.xpose.msra.mxu0 0.0
    %8318 = vmatprep.subr.mxu0 0.0
    %8319 = vmatpush1.xpose.msra.mxu0 0.0
    %8320 = vmatprep.subr.mxu0 0.0
    %8321 = vmatpush1.xpose.msra.mxu0 0.0
    %8322 = vmatprep.subr.mxu0 0.0
    %8323 = vmatpush1.xpose.msra.mxu0 0.0
    %8324 = vmatprep.subr.mxu0 0.0
    %8325 = vmatpush1.xpose.msra.mxu0 0.0
    %8326 = vmatprep.subr.mxu0 0.0
    %8327 = vmatpush1.xpose.msra.mxu0 0.0
    %8328 = vmatprep.subr.mxu0 0.0
    %8329 = vmatpush1.xpose.msra.mxu0 0.0
    %8330 = vmatprep.subr.mxu0 0.0
    %8331 = vmatpush1.xpose.msra.mxu0 0.0
    %8332 = vmatprep.subr.mxu0 0.0
    %8333 = vmatpush1.xpose.msra.mxu0 0.0
    %8334 = vmatprep.subr.mxu0 0.0
    %8335 = vmatpush1.xpose.msra.mxu0 0.0
    %8336 = vmatprep.subr.mxu0 0.0
    %8337 = vmatpush1.xpose.msra.mxu0 0.0
    %8338 = vmatprep.subr.mxu0 0.0
    %8339 = vmatpush1.xpose.msra.mxu0 0.0
    %8340 = vmatprep.subr.mxu0 0.0
    %8341 = vmatpush1.xpose.msra.mxu0 0.0
    %8342 = vmatprep.subr.mxu0 0.0
    %8343 = vmatpush1.xpose.msra.mxu0 0.0
    %8344 = vmatprep.subr.mxu0 0.0
    %8345 = vmatpush1.xpose.msra.mxu0 0.0
    %8346 = vmatprep.subr.mxu0 0.0
    %8347 = vmatpush1.xpose.msra.mxu0 0.0
    %8348 = vmatprep.subr.mxu0 0.0
    %8349 = vmatpush1.xpose.msra.mxu0 0.0
    %8350 = vmatprep.subr.mxu0 0.0
    %8351 = vmatpush1.xpose.msra.mxu0 0.0
    %8352 = vmatprep.subr.mxu0 0.0
    %8353 = vmatpush1.xpose.msra.mxu0 0.0
    %8354 = vmatprep.subr.mxu0 0.0
    %8355 = vmatpush1.xpose.msra.mxu0 0.0
    %8356 = vmatprep.subr.mxu0 0.0
    %8357 = vmatpush1.xpose.msra.mxu0 0.0
    %8358 = vmatprep.subr.mxu0 0.0
    %8359 = vmatpush1.xpose.msra.mxu0 0.0
    %8360 = vmatprep.subr.mxu0 0.0
    %8361 = vmatpush1.xpose.msra.mxu0 0.0
    %8362 = vmatprep.subr.mxu0 0.0
    %8363 = vmatpush1.xpose.msra.mxu0 0.0
    %8364 = vmatprep.mubr.f32.mxu0 0.0
    %8365 = vmatmul.mubr.f32.gmra.mrb[0].mxu0 %v8292
    %v8366 = vpop.f32.mrb[0].mxu0
    %v8367 = vadd.f32 %v27, %v8366
    %v8368 = vpop.f32.mrb[0].mxu0
    %8369 = vmatprep.mubr.f32.mxu0 0.0
    %8370 = vmatmul.mubr.f32.gmra.mrb[0].mxu0 %v8294
    %v8371 = vpop.f32.mrb[0].mxu0
    %v8372 = vadd.f32 %v28, %v8371
    %v8373 = vpop.f32.mrb[0].mxu0
    %8374 = vdwg.mxu0
    %v8375 = vsel %vm314, %v8367, -inf
    %8376 = vmax.xlane.f32.xlu0 %v8375
    %v8377 = vpop.xlane.xlu0 %8376
    %v8378 = vsel %vm314, %v8372, -inf
    %8379 = vmax.xlane.f32.xlu0 %v8378
    %v8380 = vpop.xlane.xlu0 %8379
    %v8381 = vsub.f32 %v8367, %v8377
    %v8382 = vsub.f32 %v8372, %v8380
    %v8383 = vmul.f32 %v8381, 1.442695
    %v8384 = vpow.pop %v8383
    %v8385 = vmul.f32 %v8382, 1.442695
    %v8386 = vpow.pop %v8385
    %v8387 = vsel %vm314, %v8384, 0.0
    %8388 = vadd.xlane.f32.xlu0 %v8387
    %v8389 = vpop.xlane.xlu0 %8388
    %v8390 = vsel %vm314, %v8386, 0.0
    %8391 = vadd.xlane.f32.xlu0 %v8390
    %v8392 = vpop.xlane.xlu0 %8391
    %v8393 = vrcp.pop %v8389
    %v8394 = vrcp.pop %v8392
    %v8395 = vmul.f32 %v8384, %v8393
    %v8396 = vmul.f32 %v8386, %v8394
    %8397 = vrot.lane.b32.xlu0 %v7422, 72
    %v8398 = vpop.permute.xlu0 %8397
    %8399 = vrot.lane.b32.xlu0 %v7427, 72
    %v8400 = vpop.permute.xlu0 %8399
    %v8404 = vsel %vm314, %v8395, 0
    %v8407 = vsel %vm314, %v8396, 0
    %8409 = vmatprep.subr.mxu0 0.0
    %8410 = vmatpush1.msra.mxu0 %v8398
    %8411 = vmatprep.subr.mxu0 0.0
    %8412 = vmatpush1.msra.mxu0 %v8400
    %8413 = vmatprep.subr.mxu0 0.0
    %8414 = vmatpush1.msra.mxu0 0.0
    %8415 = vmatprep.subr.mxu0 0.0
    %8416 = vmatpush1.msra.mxu0 0.0
    %8417 = vmatprep.subr.mxu0 0.0
    %8418 = vmatpush1.msra.mxu0 0.0
    %8419 = vmatprep.subr.mxu0 0.0
    %8420 = vmatpush1.msra.mxu0 0.0
    %8421 = vmatprep.subr.mxu0 0.0
    %8422 = vmatpush1.msra.mxu0 0.0
    %8423 = vmatprep.subr.mxu0 0.0
    %8424 = vmatpush1.msra.mxu0 0.0
    %8425 = vmatprep.subr.mxu0 0.0
    %8426 = vmatpush1.msra.mxu0 0.0
    %8427 = vmatprep.subr.mxu0 0.0
    %8428 = vmatpush1.msra.mxu0 0.0
    %8429 = vmatprep.subr.mxu0 0.0
    %8430 = vmatpush1.msra.mxu0 0.0
    %8431 = vmatprep.subr.mxu0 0.0
    %8432 = vmatpush1.msra.mxu0 0.0
    %8433 = vmatprep.subr.mxu0 0.0
    %8434 = vmatpush1.msra.mxu0 0.0
    %8435 = vmatprep.subr.mxu0 0.0
    %8436 = vmatpush1.msra.mxu0 0.0
    %8437 = vmatprep.subr.mxu0 0.0
    %8438 = vmatpush1.msra.mxu0 0.0
    %8439 = vmatprep.subr.mxu0 0.0
    %8440 = vmatpush1.msra.mxu0 0.0
    %8441 = vmatprep.subr.mxu0 0.0
    %8442 = vmatpush1.msra.mxu0 0.0
    %8443 = vmatprep.subr.mxu0 0.0
    %8444 = vmatpush1.msra.mxu0 0.0
    %8445 = vmatprep.subr.mxu0 0.0
    %8446 = vmatpush1.msra.mxu0 0.0
    %8447 = vmatprep.subr.mxu0 0.0
    %8448 = vmatpush1.msra.mxu0 0.0
    %8449 = vmatprep.subr.mxu0 0.0
    %8450 = vmatpush1.msra.mxu0 0.0
    %8451 = vmatprep.subr.mxu0 0.0
    %8452 = vmatpush1.msra.mxu0 0.0
    %8453 = vmatprep.subr.mxu0 0.0
    %8454 = vmatpush1.msra.mxu0 0.0
    %8455 = vmatprep.subr.mxu0 0.0
    %8456 = vmatpush1.msra.mxu0 0.0
    %8457 = vmatprep.subr.mxu0 0.0
    %8458 = vmatpush1.msra.mxu0 0.0
    %8459 = vmatprep.subr.mxu0 0.0
    %8460 = vmatpush1.msra.mxu0 0.0
    %8461 = vmatprep.subr.mxu0 0.0
    %8462 = vmatpush1.msra.mxu0 0.0
    %8463 = vmatprep.subr.mxu0 0.0
    %8464 = vmatpush1.msra.mxu0 0.0
    %8465 = vmatprep.subr.mxu0 0.0
    %8466 = vmatpush1.msra.mxu0 0.0
    %8467 = vmatprep.subr.mxu0 0.0
    %8468 = vmatpush1.msra.mxu0 0.0
    %8469 = vmatprep.subr.mxu0 0.0
    %8470 = vmatpush1.msra.mxu0 0.0
    %8471 = vmatprep.subr.mxu0 0.0
    %8472 = vmatpush1.msra.mxu0 0.0
    %8473 = vmatprep.mubr.f32.mxu0 0.0
    %8474 = vmatmul.mubr.f32.gmra.mrb[0].mxu0 %v8404
    %v8475 = vpop.f32.mrb[0].mxu0
    %v8476 = vadd.f32 0.0, %v8475
    %v8477 = vpop.f32.mrb[0].mxu0
    %8478 = vmatprep.mubr.f32.mxu0 0.0
    %8479 = vmatmul.mubr.f32.gmra.mrb[0].mxu0 %v8407
    %v8480 = vpop.f32.mrb[0].mxu0
    %v8481 = vadd.f32 0.0, %v8480
    %v8482 = vpop.f32.mrb[0].mxu0
    %8483 = vdwg.mxu0
    %v8485 = vsel %vm230, %v8476, 0
    %v8488 = vsel %vm230, %v8481, 0
    %8490 = vmatprep.subr.mxu0 0.0
    %8491 = vmatpush1.msra.mxu0 %v7433
    %8492 = vmatprep.subr.mxu0 0.0
    %8493 = vmatpush1.msra.mxu0 0.0
    %8494 = vmatprep.subr.mxu0 0.0
    %8495 = vmatpush1.msra.mxu0 0.0
    %8496 = vmatprep.subr.mxu0 0.0
    %8497 = vmatpush1.msra.mxu0 0.0
    %8498 = vmatprep.subr.mxu0 0.0
    %8499 = vmatpush1.msra.mxu0 0.0
    %8500 = vmatprep.subr.mxu0 0.0
    %8501 = vmatpush1.msra.mxu0 0.0
    %8502 = vmatprep.subr.mxu0 0.0
    %8503 = vmatpush1.msra.mxu0 0.0
    %8504 = vmatprep.subr.mxu0 0.0
    %8505 = vmatpush1.msra.mxu0 0.0
    %8506 = vmatprep.subr.mxu0 0.0
    %8507 = vmatpush1.msra.mxu0 0.0
    %8508 = vmatprep.subr.mxu0 0.0
    %8509 = vmatpush1.msra.mxu0 0.0
    %8510 = vmatprep.subr.mxu0 0.0
    %8511 = vmatpush1.msra.mxu0 0.0
    %8512 = vmatprep.subr.mxu0 0.0
    %8513 = vmatpush1.msra.mxu0 0.0
    %8514 = vmatprep.subr.mxu0 0.0
    %8515 = vmatpush1.msra.mxu0 0.0
    %8516 = vmatprep.subr.mxu0 0.0
    %8517 = vmatpush1.msra.mxu0 0.0
    %8518 = vmatprep.subr.mxu0 0.0
    %8519 = vmatpush1.msra.mxu0 0.0
    %8520 = vmatprep.subr.mxu0 0.0
    %8521 = vmatpush1.msra.mxu0 0.0
    %8522 = vmatprep.subr.mxu0 0.0
    %8523 = vmatpush1.msra.mxu0 0.0
    %8524 = vmatprep.subr.mxu0 0.0
    %8525 = vmatpush1.msra.mxu0 0.0
    %8526 = vmatprep.subr.mxu0 0.0
    %8527 = vmatpush1.msra.mxu0 0.0
    %8528 = vmatprep.subr.mxu0 0.0
    %8529 = vmatpush1.msra.mxu0 0.0
    %8530 = vmatprep.subr.mxu0 0.0
    %8531 = vmatpush1.msra.mxu0 0.0
    %8532 = vmatprep.subr.mxu0 0.0
    %8533 = vmatpush1.msra.mxu0 0.0
    %8534 = vmatprep.subr.mxu0 0.0
    %8535 = vmatpush1.msra.mxu0 0.0
    %8536 = vmatprep.subr.mxu0 0.0
    %8537 = vmatpush1.msra.mxu0 0.0
    %8538 = vmatprep.subr.mxu0 0.0
    %8539 = vmatpush1.msra.mxu0 0.0
    %8540 = vmatprep.subr.mxu0 0.0
    %8541 = vmatpush1.msra.mxu0 0.0
    %8542 = vmatprep.subr.mxu0 0.0
    %8543 = vmatpush1.msra.mxu0 0.0
    %8544 = vmatprep.subr.mxu0 0.0
    %8545 = vmatpush1.msra.mxu0 0.0
    %8546 = vmatprep.subr.mxu0 0.0
    %8547 = vmatpush1.msra.mxu0 0.0
    %8548 = vmatprep.subr.mxu0 0.0
    %8549 = vmatpush1.msra.mxu0 0.0
    %8550 = vmatprep.subr.mxu0 0.0
    %8551 = vmatpush1.msra.mxu0 0.0
    %8552 = vmatprep.subr.mxu0 0.0
    %8553 = vmatpush1.msra.mxu0 0.0
    %8554 = vmatprep.mubr.f32.mxu0 0.0
    %8555 = vmatmul.mubr.f32.gmra.mrb[0].mxu0 %v8485
    %v8556 = vpop.f32.mrb[0].mxu0
    %v8557 = vadd.f32 0.0, %v8556
    %v8558 = vpop.f32.mrb[0].mxu0
    %8559 = vmatprep.mubr.f32.mxu0 0.0
    %8560 = vmatmul.mubr.f32.gmra.mrb[0].mxu0 %v8488
    %v8561 = vpop.f32.mrb[0].mxu0
    %v8562 = vadd.f32 0.0, %v8561
    %v8563 = vpop.f32.mrb[0].mxu0
    %8564 = vdwg.mxu0
    %v8565 = vadd.f32 %v8282, %v8557
    %v8566 = vadd.f32 %v8283, %v8562
    %v8567 = vadd.f32 %v7254, %v8565
    %v8568 = vadd.f32 %v7255, %v8566
    %v8569 = vld [vmem:[#allocation2 + $0x458] sm:$0x1]
    %v8570 = vld [vmem:[#allocation2 + $0x460] sm:$0x1]
    %v8571 = vsel %vm137, %v8567, 0.0
    %8572 = vadd.xlane.f32.xlu0 %v8571
    %v8573 = vpop.xlane.xlu0 %8572
    %v8574 = vsel %vm137, %v8568, 0.0
    %8575 = vadd.xlane.f32.xlu0 %v8574
    %v8576 = vpop.xlane.xlu0 %8575
    %v8577 = vmul.f32 %v8573, %v1370
    %v8578 = vmul.f32 %v8576, %v1370
    %v8579 = vsub.f32 %v8567, %v8577
    %v8580 = vsub.f32 %v8568, %v8578
    %v8581 = vmul.f32 %v8579, %v8579
    %v8582 = vmul.f32 %v8580, %v8580
    %v8583 = vsel %vm137, %v8581, 0.0
    %8584 = vadd.xlane.f32.xlu0 %v8583
    %v8585 = vpop.xlane.xlu0 %8584
    %v8586 = vsel %vm137, %v8582, 0.0
    %8587 = vadd.xlane.f32.xlu0 %v8586
    %v8588 = vpop.xlane.xlu0 %8587
    %v8589 = vmul.f32 %v8585, %v1370
    %v8590 = vmul.f32 %v8588, %v1370
    %v8591 = vadd.f32 %v8589, 1e-05
    %v8592 = vadd.f32 %v8590, 1e-05
    %v8593 = vrsqrt.pop %v8591
    %v8594 = vrsqrt.pop %v8592
    %v8595 = vmul.f32 %v8579, %v8593
    %v8596 = vmul.f32 %v8580, %v8594
    %v8597 = vlaneseq
    %v8598 = vshrl.u32 %v8597, 7
    %v8599 = vsub.s32 0, %v8598
    %v8600 = vrot.slane %v8569, %v8599
    %v8601 = vmul.f32 %v8595, %v8600
    %v8602 = vmul.f32 %v8596, %v8600
    %v8603 = vlaneseq
    %v8604 = vshrl.u32 %v8603, 7
    %v8605 = vsub.s32 0, %v8604
    %v8606 = vrot.slane %v8570, %v8605
    %v8607 = vadd.f32 %v8601, %v8606
    %v8608 = vadd.f32 %v8602, %v8606
    %v8609 = vld [vmem:[#allocation2 + $0x468] sm:$0xff]
    %v8610 = vld [vmem:[#allocation2 + $0x470] sm:$0xff]
    %v8611 = vld [vmem:[#allocation2 + $0x478] sm:$0xff]
    %v8612 = vld [vmem:[#allocation2 + $0x480] sm:$0xff]
    %v8613 = vld [vmem:[#allocation2 + $0x488] sm:$0x1]
    %v8614 = vlaneseq
    %v8615 = vshrl.u32 %v8614, 7
    %v8616 = vsub.s32 0, %v8615
    %v8617 = vrot.slane %v8613, %v8616
    %v8619 = vsel %vm137, %v8607, 0
    %v8622 = vsel %vm137, %v8608, 0
    %8624 = vmatprep.subr.mxu0 0.0
    %8625 = vmatpush1.msra.mxu0 %v8609
    %8626 = vmatprep.subr.mxu0 0.0
    %8627 = vmatpush1.msra.mxu0 %v8610
    %8628 = vmatprep.subr.mxu0 0.0
    %8629 = vmatpush1.msra.mxu0 %v8611
    %8630 = vmatprep.subr.mxu0 0.0
    %8631 = vmatpush1.msra.mxu0 %v8612
    %8632 = vmatprep.subr.mxu0 0.0
    %8633 = vmatpush1.msra.mxu0 0.0
    %8634 = vmatprep.subr.mxu0 0.0
    %8635 = vmatpush1.msra.mxu0 0.0
    %8636 = vmatprep.subr.mxu0 0.0
    %8637 = vmatpush1.msra.mxu0 0.0
    %8638 = vmatprep.subr.mxu0 0.0
    %8639 = vmatpush1.msra.mxu0 0.0
    %8640 = vmatprep.subr.mxu0 0.0
    %8641 = vmatpush1.msra.mxu0 0.0
    %8642 = vmatprep.subr.mxu0 0.0
    %8643 = vmatpush1.msra.mxu0 0.0
    %8644 = vmatprep.subr.mxu0 0.0
    %8645 = vmatpush1.msra.mxu0 0.0
    %8646 = vmatprep.subr.mxu0 0.0
    %8647 = vmatpush1.msra.mxu0 0.0
    %8648 = vmatprep.subr.mxu0 0.0
    %8649 = vmatpush1.msra.mxu0 0.0
    %8650 = vmatprep.subr.mxu0 0.0
    %8651 = vmatpush1.msra.mxu0 0.0
    %8652 = vmatprep.subr.mxu0 0.0
    %8653 = vmatpush1.msra.mxu0 0.0
    %8654 = vmatprep.subr.mxu0 0.0
    %8655 = vmatpush1.msra.mxu0 0.0
    %8656 = vmatprep.subr.mxu0 0.0
    %8657 = vmatpush1.msra.mxu0 0.0
    %8658 = vmatprep.subr.mxu0 0.0
    %8659 = vmatpush1.msra.mxu0 0.0
    %8660 = vmatprep.subr.mxu0 0.0
    %8661 = vmatpush1.msra.mxu0 0.0
    %8662 = vmatprep.subr.mxu0 0.0
    %8663 = vmatpush1.msra.mxu0 0.0
    %8664 = vmatprep.subr.mxu0 0.0
    %8665 = vmatpush1.msra.mxu0 0.0
    %8666 = vmatprep.subr.mxu0 0.0
    %8667 = vmatpush1.msra.mxu0 0.0
    %8668 = vmatprep.subr.mxu0 0.0
    %8669 = vmatpush1.msra.mxu0 0.0
    %8670 = vmatprep.subr.mxu0 0.0
    %8671 = vmatpush1.msra.mxu0 0.0
    %8672 = vmatprep.subr.mxu0 0.0
    %8673 = vmatpush1.msra.mxu0 0.0
    %8674 = vmatprep.subr.mxu0 0.0
    %8675 = vmatpush1.msra.mxu0 0.0
    %8676 = vmatprep.subr.mxu0 0.0
    %8677 = vmatpush1.msra.mxu0 0.0
    %8678 = vmatprep.subr.mxu0 0.0
    %8679 = vmatpush1.msra.mxu0 0.0
    %8680 = vmatprep.subr.mxu0 0.0
    %8681 = vmatpush1.msra.mxu0 0.0
    %8682 = vmatprep.subr.mxu0 0.0
    %8683 = vmatpush1.msra.mxu0 0.0
    %8684 = vmatprep.subr.mxu0 0.0
    %8685 = vmatpush1.msra.mxu0 0.0
    %8686 = vmatprep.subr.mxu0 0.0
    %8687 = vmatpush1.msra.mxu0 0.0
    %8688 = vmatprep.mubr.f32.mxu0 0.0
    %8689 = vmatmul.mubr.f32.gmra.mrb[0].mxu0 %v8619
    %v8690 = vpop.f32.mrb[0].mxu0
    %v8691 = vadd.f32 %v8617, %v8690
    %v8692 = vpop.f32.mrb[0].mxu0
    %8693 = vmatprep.mubr.f32.mxu0 0.0
    %8694 = vmatmul.mubr.f32.gmra.mrb[0].mxu0 %v8622
    %v8695 = vpop.f32.mrb[0].mxu0
    %v8696 = vadd.f32 %v8617, %v8695
    %v8697 = vpop.f32.mrb[0].mxu0
    %8698 = vdwg.mxu0
    %v8699 = vmax.f32 %v8691, 0.0
    %v8700 = vmax.f32 %v8696, 0.0
    %v8701 = vld [vmem:[#allocation2 + $0x490] sm:$0xff]
    %v8702 = vld [vmem:[#allocation2 + $0x498] sm:$0xff]
    %v8703 = vld [vmem:[#allocation2 + $0x4a0] sm:$0xff]
    %v8704 = vld [vmem:[#allocation2 + $0x4a8] sm:$0xff]
    %v8705 = vld [vmem:[#allocation2 + $0x4b0] sm:$0xff]
    %v8706 = vld [vmem:[#allocation2 + $0x4b8] sm:$0xff]
    %v8707 = vld [vmem:[#allocation2 + $0x4c0] sm:$0xff]
    %v8708 = vld [vmem:[#allocation2 + $0x4c8] sm:$0xff]
    %v8709 = vld [vmem:[#allocation2 + $0x4d0] sm:$0x1]
    %v8710 = vlaneseq
    %v8711 = vshrl.u32 %v8710, 7
    %v8712 = vsub.s32 0, %v8711
    %v8713 = vrot.slane %v8709, %v8712
    %v8715 = vsel %vm1508, %v8699, 0
    %v8718 = vsel %vm1508, %v8700, 0
    %8720 = vmatprep.subr.mxu0 0.0
    %8721 = vmatpush1.msra.mxu0 %v8701
    %8722 = vmatprep.subr.mxu0 0.0
    %8723 = vmatpush1.msra.mxu0 %v8702
    %8724 = vmatprep.subr.mxu0 0.0
    %8725 = vmatpush1.msra.mxu0 %v8703
    %8726 = vmatprep.subr.mxu0 0.0
    %8727 = vmatpush1.msra.mxu0 %v8704
    %8728 = vmatprep.subr.mxu0 0.0
    %8729 = vmatpush1.msra.mxu0 %v8705
    %8730 = vmatprep.subr.mxu0 0.0
    %8731 = vmatpush1.msra.mxu0 %v8706
    %8732 = vmatprep.subr.mxu0 0.0
    %8733 = vmatpush1.msra.mxu0 %v8707
    %8734 = vmatprep.subr.mxu0 0.0
    %8735 = vmatpush1.msra.mxu0 %v8708
    %8736 = vmatprep.subr.mxu0 0.0
    %8737 = vmatpush1.msra.mxu0 0.0
    %8738 = vmatprep.subr.mxu0 0.0
    %8739 = vmatpush1.msra.mxu0 0.0
    %8740 = vmatprep.subr.mxu0 0.0
    %8741 = vmatpush1.msra.mxu0 0.0
    %8742 = vmatprep.subr.mxu0 0.0
    %8743 = vmatpush1.msra.mxu0 0.0
    %8744 = vmatprep.subr.mxu0 0.0
    %8745 = vmatpush1.msra.mxu0 0.0
    %8746 = vmatprep.subr.mxu0 0.0
    %8747 = vmatpush1.msra.mxu0 0.0
    %8748 = vmatprep.subr.mxu0 0.0
    %8749 = vmatpush1.msra.mxu0 0.0
    %8750 = vmatprep.subr.mxu0 0.0
    %8751 = vmatpush1.msra.mxu0 0.0
    %8752 = vmatprep.subr.mxu0 0.0
    %8753 = vmatpush1.msra.mxu0 0.0
    %8754 = vmatprep.subr.mxu0 0.0
    %8755 = vmatpush1.msra.mxu0 0.0
    %8756 = vmatprep.subr.mxu0 0.0
    %8757 = vmatpush1.msra.mxu0 0.0
    %8758 = vmatprep.subr.mxu0 0.0
    %8759 = vmatpush1.msra.mxu0 0.0
    %8760 = vmatprep.subr.mxu0 0.0
    %8761 = vmatpush1.msra.mxu0 0.0
    %8762 = vmatprep.subr.mxu0 0.0
    %8763 = vmatpush1.msra.mxu0 0.0
    %8764 = vmatprep.subr.mxu0 0.0
    %8765 = vmatpush1.msra.mxu0 0.0
    %8766 = vmatprep.subr.mxu0 0.0
    %8767 = vmatpush1.msra.mxu0 0.0
    %8768 = vmatprep.subr.mxu0 0.0
    %8769 = vmatpush1.msra.mxu0 0.0
    %8770 = vmatprep.subr.mxu0 0.0
    %8771 = vmatpush1.msra.mxu0 0.0
    %8772 = vmatprep.subr.mxu0 0.0
    %8773 = vmatpush1.msra.mxu0 0.0
    %8774 = vmatprep.subr.mxu0 0.0
    %8775 = vmatpush1.msra.mxu0 0.0
    %8776 = vmatprep.subr.mxu0 0.0
    %8777 = vmatpush1.msra.mxu0 0.0
    %8778 = vmatprep.subr.mxu0 0.0
    %8779 = vmatpush1.msra.mxu0 0.0
    %8780 = vmatprep.subr.mxu0 0.0
    %8781 = vmatpush1.msra.mxu0 0.0
    %8782 = vmatprep.subr.mxu0 0.0
    %8783 = vmatpush1.msra.mxu0 0.0
    %8784 = vmatprep.mubr.f32.mxu0 0.0
    %8785 = vmatmul.mubr.f32.gmra.mrb[0].mxu0 %v8715
    %v8786 = vpop.f32.mrb[0].mxu0
    %v8787 = vadd.f32 %v8713, %v8786
    %v8788 = vpop.f32.mrb[0].mxu0
    %8789 = vmatprep.mubr.f32.mxu0 0.0
    %8790 = vmatmul.mubr.f32.gmra.mrb[0].mxu0 %v8718
    %v8791 = vpop.f32.mrb[0].mxu0
    %v8792 = vadd.f32 %v8713, %v8791
    %v8793 = vpop.f32.mrb[0].mxu0
    %8794 = vdwg.mxu0
    %v8795 = vadd.f32 %v8607, %v8787
    %v8796 = vadd.f32 %v8608, %v8792
    %v8797 = vld [vmem:[#allocation2 + $0x4d8] sm:$0x1]
    %v8798 = vld [vmem:[#allocation2 + $0x4e0] sm:$0x1]
    %v8799 = vsel %vm137, %v8795, 0.0
    %8800 = vadd.xlane.f32.xlu0 %v8799
    %v8801 = vpop.xlane.xlu0 %8800
    %v8802 = vsel %vm137, %v8796, 0.0
    %8803 = vadd.xlane.f32.xlu0 %v8802
    %v8804 = vpop.xlane.xlu0 %8803
    %v8805 = vmul.f32 %v8801, %v1370
    %v8806 = vmul.f32 %v8804, %v1370
    %v8807 = vsub.f32 %v8795, %v8805
    %v8808 = vsub.f32 %v8796, %v8806
    %v8809 = vmul.f32 %v8807, %v8807
    %v8810 = vmul.f32 %v8808, %v8808
    %v8811 = vsel %vm137, %v8809, 0.0
    %8812 = vadd.xlane.f32.xlu0 %v8811
    %v8813 = vpop.xlane.xlu0 %8812
    %v8814 = vsel %vm137, %v8810, 0.0
    %8815 = vadd.xlane.f32.xlu0 %v8814
    %v8816 = vpop.xlane.xlu0 %8815
    %v8817 = vmul.f32 %v8813, %v1370
    %v8818 = vmul.f32 %v8816, %v1370
    %v8819 = vadd.f32 %v8817, 1e-05
    %v8820 = vadd.f32 %v8818, 1e-05
    %v8821 = vrsqrt.pop %v8819
    %v8822 = vrsqrt.pop %v8820
    %v8823 = vmul.f32 %v8807, %v8821
    %v8824 = vmul.f32 %v8808, %v8822
    %v8825 = vlaneseq
    %v8826 = vshrl.u32 %v8825, 7
    %v8827 = vsub.s32 0, %v8826
    %v8828 = vrot.slane %v8797, %v8827
    %v8829 = vmul.f32 %v8823, %v8828
    %v8830 = vmul.f32 %v8824, %v8828
    %v8831 = vlaneseq
    %v8832 = vshrl.u32 %v8831, 7
    %v8833 = vsub.s32 0, %v8832
    %v8834 = vrot.slane %v8798, %v8833
    %v8835 = vadd.f32 %v8829, %v8834
    %v8836 = vadd.f32 %v8830, %v8834
    %v8837 = vld [vmem:[#allocation2 + $0x4e8] sm:$0xff]
    %v8838 = vld [vmem:[#allocation2 + $0x4f0] sm:$0xff]
    %v8839 = vld [vmem:[#allocation2 + $0x4f8] sm:$0xff]
    %v8840 = vld [vmem:[#allocation2 + $0x500] sm:$0xff]
    %v8841 = vld [vmem:[#allocation2 + $0x508] sm:$0x1]
    %v8842 = vlaneseq
    %v8843 = vshrl.u32 %v8842, 7
    %v8844 = vsub.s32 0, %v8843
    %v8845 = vrot.slane %v8841, %v8844
    %v8847 = vsel %vm137, %v8835, 0
    %v8850 = vsel %vm137, %v8836, 0
    %8852 = vmatprep.subr.mxu0 0.0
    %8853 = vmatpush1.msra.mxu0 %v8837
    %8854 = vmatprep.subr.mxu0 0.0
    %8855 = vmatpush1.msra.mxu0 %v8838
    %8856 = vmatprep.subr.mxu0 0.0
    %8857 = vmatpush1.msra.mxu0 %v8839
    %8858 = vmatprep.subr.mxu0 0.0
    %8859 = vmatpush1.msra.mxu0 %v8840
    %8860 = vmatprep.subr.mxu0 0.0
    %8861 = vmatpush1.msra.mxu0 0.0
    %8862 = vmatprep.subr.mxu0 0.0
    %8863 = vmatpush1.msra.mxu0 0.0
    %8864 = vmatprep.subr.mxu0 0.0
    %8865 = vmatpush1.msra.mxu0 0.0
    %8866 = vmatprep.subr.mxu0 0.0
    %8867 = vmatpush1.msra.mxu0 0.0
    %8868 = vmatprep.subr.mxu0 0.0
    %8869 = vmatpush1.msra.mxu0 0.0
    %8870 = vmatprep.subr.mxu0 0.0
    %8871 = vmatpush1.msra.mxu0 0.0
    %8872 = vmatprep.subr.mxu0 0.0
    %8873 = vmatpush1.msra.mxu0 0.0
    %8874 = vmatprep.subr.mxu0 0.0
    %8875 = vmatpush1.msra.mxu0 0.0
    %8876 = vmatprep.subr.mxu0 0.0
    %8877 = vmatpush1.msra.mxu0 0.0
    %8878 = vmatprep.subr.mxu0 0.0
    %8879 = vmatpush1.msra.mxu0 0.0
    %8880 = vmatprep.subr.mxu0 0.0
    %8881 = vmatpush1.msra.mxu0 0.0
    %8882 = vmatprep.subr.mxu0 0.0
    %8883 = vmatpush1.msra.mxu0 0.0
    %8884 = vmatprep.subr.mxu0 0.0
    %8885 = vmatpush1.msra.mxu0 0.0
    %8886 = vmatprep.subr.mxu0 0.0
    %8887 = vmatpush1.msra.mxu0 0.0
    %8888 = vmatprep.subr.mxu0 0.0
    %8889 = vmatpush1.msra.mxu0 0.0
    %8890 = vmatprep.subr.mxu0 0.0
    %8891 = vmatpush1.msra.mxu0 0.0
    %8892 = vmatprep.subr.mxu0 0.0
    %8893 = vmatpush1.msra.mxu0 0.0
    %8894 = vmatprep.subr.mxu0 0.0
    %8895 = vmatpush1.msra.mxu0 0.0
    %8896 = vmatprep.subr.mxu0 0.0
    %8897 = vmatpush1.msra.mxu0 0.0
    %8898 = vmatprep.subr.mxu0 0.0
    %8899 = vmatpush1.msra.mxu0 0.0
    %8900 = vmatprep.subr.mxu0 0.0
    %8901 = vmatpush1.msra.mxu0 0.0
    %8902 = vmatprep.subr.mxu0 0.0
    %8903 = vmatpush1.msra.mxu0 0.0
    %8904 = vmatprep.subr.mxu0 0.0
    %8905 = vmatpush1.msra.mxu0 0.0
    %8906 = vmatprep.subr.mxu0 0.0
    %8907 = vmatpush1.msra.mxu0 0.0
    %8908 = vmatprep.subr.mxu0 0.0
    %8909 = vmatpush1.msra.mxu0 0.0
    %8910 = vmatprep.subr.mxu0 0.0
    %8911 = vmatpush1.msra.mxu0 0.0
    %8912 = vmatprep.subr.mxu0 0.0
    %8913 = vmatpush1.msra.mxu0 0.0
    %8914 = vmatprep.subr.mxu0 0.0
    %8915 = vmatpush1.msra.mxu0 0.0
    %8916 = vmatprep.mubr.f32.mxu0 0.0
    %8917 = vmatmul.mubr.f32.gmra.mrb[0].mxu0 %v8847
    %v8918 = vpop.f32.mrb[0].mxu0
    %v8919 = vadd.f32 %v8845, %v8918
    %v8920 = vpop.f32.mrb[0].mxu0
    %8921 = vmatprep.mubr.f32.mxu0 0.0
    %8922 = vmatmul.mubr.f32.gmra.mrb[0].mxu0 %v8850
    %v8923 = vpop.f32.mrb[0].mxu0
    %v8924 = vadd.f32 %v8845, %v8923
    %v8925 = vpop.f32.mrb[0].mxu0
    %8926 = vdwg.mxu0
    %8927 = vst.msk [vmem:[%s2] sm:$0xff] %vm42, %v8919
    %8928 = vst.msk [vmem:[%s2 + $0x8] sm:$0xff] %vm42, %v8924
    // Predicated region
    $region14: #{vit_tiny_autoencoder_forward.1} parent=1 // pred_check
      _
    $region15: #{vit_tiny_autoencoder_forward.1} parent=1 // pred_check_branch
      %8930 = sbr.rel (0) target = $region17
    $region16: #{vit_tiny_autoencoder_forward.1} parent=1 // pred_region
      _
    $region17: #{vit_tiny_autoencoder_forward.1} parent=1 // pred_fallthru
      _
    // Predicated region
    $region18: #{vit_tiny_autoencoder_forward.1} parent=1 // pred_check
      _
    $region19: #{vit_tiny_autoencoder_forward.1} parent=1 // pred_check_branch
      %8932 = sbr.rel (0) target = $region21
    $region20: #{vit_tiny_autoencoder_forward.1} parent=1 // pred_region
      _
    $region21: #{vit_tiny_autoencoder_forward.1} parent=1 // pred_fallthru
      _
    // Predicated region
    $region22: #{vit_tiny_autoencoder_forward.1} parent=1 // pred_check
      _
    $region23: #{vit_tiny_autoencoder_forward.1} parent=1 // pred_check_branch
      %8934 = sbr.rel (0) target = $region25
    $region24: #{vit_tiny_autoencoder_forward.1} parent=1 // pred_region
      _
    $region25: #{vit_tiny_autoencoder_forward.1} parent=1 // pred_fallthru
      _
    // Predicated region
    $region26: #{vit_tiny_autoencoder_forward.1} parent=1 // pred_check
      _
    $region27: #{vit_tiny_autoencoder_forward.1} parent=1 // pred_check_branch
      %8936 = sbr.rel (0) target = $region29
    $region28: #{vit_tiny_autoencoder_forward.1} parent=1 // pred_region
      _
    $region29: #{vit_tiny_autoencoder_forward.1} parent=1 // pred_fallthru
      _
    %8937 = vsyncpa [#allocation3], 1

</llo_original>
